<compile_context>
chip_gen: v7x
topology: tpu7x:2x2x1
jax: 0.10.0
libtpu: 0.0.40
codegen_flags: <defaults>
</compile_context>

<pallas_src>
from functools import partial

import numpy as np
import jax
import jax.numpy as jnp
from jax import lax
from jax.experimental import pallas as pl
from jax.experimental.pallas import tpu as pltpu

BN_EPS = 1e-5
LANE = 128


def _round_up_lanes(c: int) -> int:
    return max(LANE, ((c + LANE - 1) // LANE) * LANE)


# ---------------------------------------------------------------------------
# Fused kernel: 3x3 conv (im2col, single MXU matmul) + bias + SiLU + BatchNorm2d
# (training-mode batch stats) + optional residual add.
#
# Grid = (2, N):
#   pass 0 (p == 0): per image, build the (H*W, 9*Cin) patch tile, one matmul,
#                    bias + SiLU, keep the activation resident in VMEM scratch
#                    and accumulate per-channel sum / sum-of-squares.
#                    No output store (epilogue deferred to pass 1).
#   pass 1 (p == 1): normalize with the full-batch statistics, optionally add
#                    the residual, scatter into the zero-haloed frame and store.
# ---------------------------------------------------------------------------
def _conv_silu_bn_kernel(x_ref, w_ref, b_ref, g_ref, bt_ref, e_ref, *rest,
                         H, W, n_batch, with_residual):
    if with_residual:
        r_ref, o_ref, act_ref, s1_ref, s2_ref = rest
    else:
        o_ref, act_ref, s1_ref, s2_ref = rest
        r_ref = None

    p = pl.program_id(0)          # 0 = conv + SiLU + stats, 1 = BN + store
    n = pl.program_id(1)          # image index within the batch
    S = H * W
    hp, wp = H + 2, W + 2
    cin_p = x_ref.shape[-1]       # lane-padded input channels
    cout_p = o_ref.shape[-1]      # lane-padded output channels

    @pl.when(p == 0)
    def conv_pass():
        @pl.when(n == 0)
        def init_stats():
            s1_ref[...] = jnp.zeros_like(s1_ref)
            s2_ref[...] = jnp.zeros_like(s2_ref)

        xv = x_ref[0]                                     # (H+2, W+2, Cin_p), zero halo
        # im2col: ONE (H*W, 9*Cin_p) patch tile -> a single MXU matmul.
        cols = []
        for kh in range(3):
            for kw in range(3):
                cols.append(xv[kh:kh + H, kw:kw + W, :].reshape(S, cin_p))
        patches = jnp.concatenate(cols, axis=-1)          # (S, 9*Cin_p)
        z = jnp.dot(patches, w_ref[...],
                    preferred_element_type=jnp.float32) + b_ref[...]
        # SiLU = z * sigmoid(z): exp + approximate reciprocal run on the EUP.
        y = z * pl.reciprocal(1.0 + jnp.exp(-z), approx=True)

        act_ref[n] = y                                    # stays resident in VMEM
        s1_ref[...] += jnp.sum(y, axis=0, keepdims=True)
        s2_ref[...] += jnp.sum(y * y, axis=0, keepdims=True)
        # NOTE: no o_ref store here; the output block index for pass 0 is a
        # revisited placeholder block, so nothing is written back to HBM.

    @pl.when(p == 1)
    def bn_pass():
        y = act_ref[n]                                    # (S, Cout_p)
        inv_cnt = 1.0 / float(n_batch * S)
        mean = s1_ref[...] * inv_cnt
        var = s2_ref[...] * inv_cnt - mean * mean         # biased variance
        scale = lax.rsqrt(var + BN_EPS) * g_ref[...]
        out = (y - mean) * scale + bt_ref[...]
        # Scatter the (H*W, C) interior into the zero-haloed (H+2, W+2, C)
        # frame via a constant 0/1 matrix (MXU), keeping the store a single
        # full lane-dense block store.
        out_pad = jnp.dot(e_ref[...], out, preferred_element_type=jnp.float32)
        if with_residual:
            # Residual add in padded frame space: the residual's halo is zero,
            # so the zero-halo invariant of the output is preserved and no
            # sublane-misaligned interior slice is needed.
            out_pad = out_pad + r_ref[0].reshape(hp * wp, cout_p)
        o_ref[0] = out_pad.reshape(hp, wp, cout_p).astype(o_ref.dtype)


# ---------------------------------------------------------------------------
# Wrapper around pallas_call for one fused Conv block
# ---------------------------------------------------------------------------
def conv_silu_bn_block(x_pad, w_mat, bias, gamma, beta, emb, *, H, W,
                       residual=None):
    n, hp, wp, cin_p = x_pad.shape
    cout_p = w_mat.shape[-1]
    s = H * W
    with_res = residual is not None
    last = n - 1

    kernel = partial(_conv_silu_bn_kernel, H=H, W=W, n_batch=n,
                     with_residual=with_res)

    # x is only consumed in pass 0: during pass 1 the index collapses to the
    # block already resident in VMEM (image `last`), so each image is DMA'd
    # from HBM exactly once.
    x_map = lambda p, i: ((1 - p) * i + p * last, 0, 0, 0)
    # Residual / output are only touched in pass 1: during pass 0 the index
    # collapses to block 0 (single fetch / no writeback), so each image's
    # residual is read once and each output block is written once.
    lazy_map = lambda p, i: (p * i, 0, 0, 0)

    in_specs = [
        pl.BlockSpec((1, hp, wp, cin_p), x_map),                       # x (per image)
        pl.BlockSpec((9 * cin_p, cout_p), lambda p, i: (0, 0)),        # im2col weights
        pl.BlockSpec((1, cout_p), lambda p, i: (0, 0)),                # conv bias
        pl.BlockSpec((1, cout_p), lambda p, i: (0, 0)),                # BN gamma
        pl.BlockSpec((1, cout_p), lambda p, i: (0, 0)),                # BN beta
        pl.BlockSpec((hp * wp, s), lambda p, i: (0, 0)),               # scatter matrix
    ]
    args = [x_pad, w_mat, bias, gamma, beta, emb]
    if with_res:
        in_specs.append(pl.BlockSpec((1, hp, wp, cout_p), lazy_map))   # residual
        args.append(residual)

    return pl.pallas_call(
        kernel,
        out_shape=jax.ShapeDtypeStruct((n, hp, wp, cout_p), jnp.float32),
        grid=(2, n),
        in_specs=in_specs,
        out_specs=pl.BlockSpec((1, hp, wp, cout_p), lazy_map),
        scratch_shapes=[
            pltpu.VMEM((n, s, cout_p), jnp.float32),   # VMEM-resident activations
            pltpu.VMEM((1, cout_p), jnp.float32),      # per-channel sum
            pltpu.VMEM((1, cout_p), jnp.float32),      # per-channel sum of squares
        ],
        # Both axes are 'arbitrary': the batch axis accumulates BN statistics
        # in scratch and the pass axis orders stats before normalization.
        compiler_params=pltpu.CompilerParams(
            dimension_semantics=("arbitrary", "arbitrary"),
            vmem_limit_bytes=32 * 1024 * 1024,
        ),
    )(*args)


# ---------------------------------------------------------------------------
# Parameter preparation (lane padding) and module glue
# ---------------------------------------------------------------------------
def _prep_layer_params(lp, cp_in, cp_out):
    w = lp['w']                                    # (cout, cin, 3, 3)  torch OIHW
    cout, cin = w.shape[0], w.shape[1]
    wt = jnp.transpose(w, (2, 3, 1, 0))            # (3, 3, cin, cout)
    wt = jnp.pad(wt, ((0, 0), (0, 0), (0, cp_in - cin), (0, cp_out - cout)))
    w_mat = wt.reshape(9 * cp_in, cp_out)          # rows match im2col column order
    b = jnp.pad(lp['b'], (0, cp_out - cout)).reshape(1, cp_out)
    gamma = jnp.pad(lp['gamma'], (0, cp_out - cout),
                    constant_values=1.0).reshape(1, cp_out)
    beta = jnp.pad(lp['beta'], (0, cp_out - cout)).reshape(1, cp_out)
    return w_mat, b, gamma, beta


def _scatter_matrix(H, W):
    """Constant 0/1 matrix scattering (H*W, C) rows into the (H+2)*(W+2) frame."""
    hp, wp = H + 2, W + 2
    P = np.zeros((hp * wp, H * W), np.float32)
    rows = (np.arange(H)[:, None] + 1) * wp + (np.arange(W)[None, :] + 1)
    P[rows.reshape(-1), np.arange(H * W)] = 1.0
    return jnp.asarray(P)


def repconv_forward(x_nchw, params):
    n, c, H, W = x_nchw.shape
    layers = params['layers']
    cp0 = _round_up_lanes(layers[0]['w'].shape[1])
    emb = _scatter_matrix(H, W)

    # NCHW -> NHWC, pad channels to a lane multiple and add the 1-pixel zero
    # halo ONCE; every fused block maintains the zero halo of its output.
    x = jnp.transpose(x_nchw, (0, 2, 3, 1))
    x_pad = jnp.pad(x, ((0, 0), (1, 1), (1, 1), (0, cp0 - c)))

    h = x_pad
    for i, lp in enumerate(layers):
        cout, cin = lp['w'].shape[0], lp['w'].shape[1]
        cp_in, cp_out = _round_up_lanes(cin), _round_up_lanes(cout)
        w_mat, b, g, bt = _prep_layer_params(lp, cp_in, cp_out)
        res = x_pad if i == len(layers) - 1 else None   # fused residual x_ + x
        h = conv_silu_bn_block(h, w_mat, b, g, bt, emb, H=H, W=W, residual=res)

    out = h[:, 1:H + 1, 1:W + 1, :c]                    # drop halo + channel pad
    return jnp.transpose(out, (0, 3, 1, 2))             # NHWC -> NCHW


# ---------------------------------------------------------------------------
# Deterministic parameter initialization (matches the module __init__ shapes)
# ---------------------------------------------------------------------------
def init_repconv_params(key, c, e=0.5, n=2):
    c_ = int(c * e)
    layers = []
    keys = jax.random.split(key, n)
    for i in range(n):
        c1 = c if i == 0 else c_
        c2 = c_ if i == 0 else c
        kw_key, kb_key = jax.random.split(keys[i])
        fan_in, fan_out = c1 * 9, c2 * 9
        std = (2.0 / (fan_in + fan_out)) ** 0.5          # xavier_normal_
        w = std * jax.random.normal(kw_key, (c2, c1, 3, 3), jnp.float32)
        bound = 1.0 / (fan_in ** 0.5)                    # torch Conv2d bias default
        b = jax.random.uniform(kb_key, (c2,), jnp.float32, -bound, bound)
        layers.append(dict(w=w, b=b,
                           gamma=jnp.ones((c2,), jnp.float32),
                           beta=jnp.zeros((c2,), jnp.float32)))
    return dict(layers=layers)


# ---------------------------------------------------------------------------
# Pure-JAX reference (correctness check only)
# ---------------------------------------------------------------------------
def _ref_conv_block(x, lp):
    y = lax.conv_general_dilated(
        x, lp['w'], window_strides=(1, 1), padding=((1, 1), (1, 1)),
        dimension_numbers=('NCHW', 'OIHW', 'NCHW'),
        precision=lax.Precision.HIGHEST)
    y = y + lp['b'][None, :, None, None]
    y = y * (1.0 / (1.0 + jnp.exp(-y)))                  # SiLU
    mean = jnp.mean(y, axis=(0, 2, 3), keepdims=True)
    var = jnp.mean((y - mean) ** 2, axis=(0, 2, 3), keepdims=True)
    return ((y - mean) * lax.rsqrt(var + BN_EPS)
            * lp['gamma'][None, :, None, None]
            + lp['beta'][None, :, None, None])


def ref_repconv(x, params):
    h = x
    for lp in params['layers']:
        h = _ref_conv_block(h, lp)
    return x + h


# ---------------------------------------------------------------------------

if __name__ == "__main__":
    key = jax.random.PRNGKey(0)
    pkey, xkey = jax.random.split(key)

    N, C, H, W = 2, 4, 16, 16
    # n=2 gives the well-formed chain c -> c_ -> c (see TODO(synk) above about
    # the ill-formed default n=3 configuration of the source module).
    params = init_repconv_params(pkey, c=C, e=0.5, n=2)
    x = jax.random.normal(xkey, (N, C, H, W), jnp.float32)

    fwd = jax.jit(repconv_forward)
    out = jax.block_until_ready(fwd(x, params))
    ref = jax.block_until_ready(ref_repconv(x, params))

    assert out.shape == (N, C, H, W), out.shape
    np.testing.assert_allclose(np.asarray(out), np.asarray(ref),
                               rtol=2e-2, atol=2e-2)
    print("KERNEL_OK")
</pallas_src>

<mosaic_0001>
module attributes {stable_mosaic.version = 11 : i64} {
  func.func @_conv_silu_bn_kernel(%arg0: i32, %arg1: i32, %arg2: memref<1x18x18x128xf32, #tpu.memory_space<vmem>>, %arg3: memref<1152x128xf32, #tpu.memory_space<vmem>>, %arg4: memref<1x128xf32, #tpu.memory_space<vmem>>, %arg5: memref<1x128xf32, #tpu.memory_space<vmem>>, %arg6: memref<1x128xf32, #tpu.memory_space<vmem>>, %arg7: memref<324x256xf32, #tpu.memory_space<vmem>>, %arg8: memref<1x18x18x128xf32, #tpu.memory_space<vmem>>, %arg9: memref<2x256x128xf32, #tpu.memory_space<vmem>>, %arg10: memref<1x128xf32, #tpu.memory_space<vmem>>, %arg11: memref<1x128xf32, #tpu.memory_space<vmem>>) attributes {dimension_semantics = [#tpu.dimension_semantics<arbitrary>, #tpu.dimension_semantics<arbitrary>], iteration_bounds = array<i64: 2, 2>, scalar_prefetch = 0 : i64, scratch_operands = 3 : i64, tpu.core_type = #tpu.core_type<tc>, window_params = [{transform_indices = @transform_0, window_bounds = array<i64: 1, 18, 18, 128>}, {pipeline_mode = #tpu.pipeline_mode<synchronous>, transform_indices = @transform_1, window_bounds = array<i64: 1152, 128>}, {pipeline_mode = #tpu.pipeline_mode<synchronous>, transform_indices = @transform_2, window_bounds = array<i64: 1, 128>}, {pipeline_mode = #tpu.pipeline_mode<synchronous>, transform_indices = @transform_3, window_bounds = array<i64: 1, 128>}, {pipeline_mode = #tpu.pipeline_mode<synchronous>, transform_indices = @transform_4, window_bounds = array<i64: 1, 128>}, {pipeline_mode = #tpu.pipeline_mode<synchronous>, transform_indices = @transform_5, window_bounds = array<i64: 324, 256>}, {transform_indices = @transform_6, window_bounds = array<i64: 1, 18, 18, 128>}]} {
    %c0_i32 = arith.constant 0 : i32
    %0 = arith.cmpi eq, %arg0, %c0_i32 : i32
    %1 = arith.extui %0 : i1 to i32
    %c0_i32_0 = arith.constant 0 : i32
    %2 = arith.cmpi ne, %1, %c0_i32_0 : i32
    scf.if %2 {
      %c0_i32_2 = arith.constant 0 : i32
      %6 = arith.cmpi eq, %arg1, %c0_i32_2 : i32
      %7 = arith.extui %6 : i1 to i32
      %c0_i32_3 = arith.constant 0 : i32
      %8 = arith.cmpi ne, %7, %c0_i32_3 : i32
      scf.if %8 {
        %cst_25 = arith.constant 0.000000e+00 : f32
        %57 = vector.broadcast %cst_25 : f32 to vector<1x128xf32>
        %c0_26 = arith.constant 0 : index
        %c0_27 = arith.constant 0 : index
        %58 = vector.load %arg10[%c0_26, %c0_27] : memref<1x128xf32, #tpu.memory_space<vmem>>, vector<1x128xf32>
        tpu.vector_store %arg10[%c0_26, %c0_27], %57 {strides = array<i32>} : memref<1x128xf32, #tpu.memory_space<vmem>>, vector<1x128xf32>,
        %cst_28 = arith.constant 0.000000e+00 : f32
        %59 = vector.broadcast %cst_28 : f32 to vector<1x128xf32>
        %c0_29 = arith.constant 0 : index
        %c0_30 = arith.constant 0 : index
        %60 = vector.load %arg11[%c0_29, %c0_30] : memref<1x128xf32, #tpu.memory_space<vmem>>, vector<1x128xf32>
        tpu.vector_store %arg11[%c0_29, %c0_30], %59 {strides = array<i32>} : memref<1x128xf32, #tpu.memory_space<vmem>>, vector<1x128xf32>,
      } else {
      }
      %c0 = arith.constant 0 : index
      %c0_4 = arith.constant 0 : index
      %c0_5 = arith.constant 0 : index
      %c0_6 = arith.constant 0 : index
      %9 = vector.load %arg2[%c0, %c0_4, %c0_5, %c0_6] : memref<1x18x18x128xf32, #tpu.memory_space<vmem>>, vector<1x18x18x128xf32>
      %10 = vector.shape_cast %9 : vector<1x18x18x128xf32> to vector<18x18x128xf32>
      %11 = vector.extract_strided_slice %10 {offsets = [0, 0, 0], sizes = [16, 16, 128], strides = [1, 1, 1]} : vector<18x18x128xf32> to vector<16x16x128xf32>
      %12 = vector.shape_cast %11 : vector<16x16x128xf32> to vector<256x128xf32>
      %13 = vector.extract_strided_slice %10 {offsets = [0, 1, 0], sizes = [16, 16, 128], strides = [1, 1, 1]} : vector<18x18x128xf32> to vector<16x16x128xf32>
      %14 = vector.shape_cast %13 : vector<16x16x128xf32> to vector<256x128xf32>
      %15 = vector.extract_strided_slice %10 {offsets = [0, 2, 0], sizes = [16, 16, 128], strides = [1, 1, 1]} : vector<18x18x128xf32> to vector<16x16x128xf32>
      %16 = vector.shape_cast %15 : vector<16x16x128xf32> to vector<256x128xf32>
      %17 = vector.extract_strided_slice %10 {offsets = [1, 0, 0], sizes = [16, 16, 128], strides = [1, 1, 1]} : vector<18x18x128xf32> to vector<16x16x128xf32>
      %18 = vector.shape_cast %17 : vector<16x16x128xf32> to vector<256x128xf32>
      %19 = vector.extract_strided_slice %10 {offsets = [1, 1, 0], sizes = [16, 16, 128], strides = [1, 1, 1]} : vector<18x18x128xf32> to vector<16x16x128xf32>
      %20 = vector.shape_cast %19 : vector<16x16x128xf32> to vector<256x128xf32>
      %21 = vector.extract_strided_slice %10 {offsets = [1, 2, 0], sizes = [16, 16, 128], strides = [1, 1, 1]} : vector<18x18x128xf32> to vector<16x16x128xf32>
      %22 = vector.shape_cast %21 : vector<16x16x128xf32> to vector<256x128xf32>
      %23 = vector.extract_strided_slice %10 {offsets = [2, 0, 0], sizes = [16, 16, 128], strides = [1, 1, 1]} : vector<18x18x128xf32> to vector<16x16x128xf32>
      %24 = vector.shape_cast %23 : vector<16x16x128xf32> to vector<256x128xf32>
      %25 = vector.extract_strided_slice %10 {offsets = [2, 1, 0], sizes = [16, 16, 128], strides = [1, 1, 1]} : vector<18x18x128xf32> to vector<16x16x128xf32>
      %26 = vector.shape_cast %25 : vector<16x16x128xf32> to vector<256x128xf32>
      %27 = vector.extract_strided_slice %10 {offsets = [2, 2, 0], sizes = [16, 16, 128], strides = [1, 1, 1]} : vector<18x18x128xf32> to vector<16x16x128xf32>
      %28 = vector.shape_cast %27 : vector<16x16x128xf32> to vector<256x128xf32>
      %29 = tpu.concatenate %12, %14, %16, %18, %20, %22, %24, %26, %28 in 1 : vector<256x128xf32>, vector<256x128xf32>, vector<256x128xf32>, vector<256x128xf32>, vector<256x128xf32>, vector<256x128xf32>, vector<256x128xf32>, vector<256x128xf32>, vector<256x128xf32> -> vector<256x1152xf32>
      %c0_7 = arith.constant 0 : index
      %c0_8 = arith.constant 0 : index
      %30 = vector.load %arg3[%c0_7, %c0_8] : memref<1152x128xf32, #tpu.memory_space<vmem>>, vector<1152x128xf32>
      %cst = arith.constant dense<0.000000e+00> : vector<256x128xf32>
      %31 = tpu.matmul %29, %30, %cst {dimension_numbers = #tpu.dot_dimension_numbers<[1], [0], [0], [1], [0, 0, 1, 1], [], []>} : vector<256x1152xf32>, vector<1152x128xf32>, vector<256x128xf32> -> vector<256x128xf32>
      %c0_9 = arith.constant 0 : index
      %c0_10 = arith.constant 0 : index
      %32 = vector.load %arg4[%c0_9, %c0_10] : memref<1x128xf32, #tpu.memory_space<vmem>>, vector<1x128xf32>
      %33 = vector.broadcast %32 : vector<1x128xf32> to vector<256x128xf32>
      %34 = arith.addf %31, %33 : vector<256x128xf32>
      %cst_11 = arith.constant 0.000000e+00 : f32
      %35 = vector.broadcast %cst_11 : f32 to vector<256x128xf32>
      %36 = arith.subf %35, %34 : vector<256x128xf32>
      %37 = math.exp %36 : vector<256x128xf32>
      %cst_12 = arith.constant 1.000000e+00 : f32
      %38 = vector.broadcast %cst_12 : f32 to vector<256x128xf32>
      %39 = arith.addf %38, %37 : vector<256x128xf32>
      %40 = tpu.reciprocal %39 {approx = true} : vector<256x128xf32> -> vector<256x128xf32>
      %41 = arith.mulf %34, %40 : vector<256x128xf32>
      %42 = arith.index_cast %arg1 : i32 to index
      %c0_13 = arith.constant 0 : index
      %c0_14 = arith.constant 0 : index
      %43 = vector.load %arg9[%42, %c0_13, %c0_14] : memref<2x256x128xf32, #tpu.memory_space<vmem>>, vector<1x256x128xf32>
      %44 = vector.shape_cast %43 : vector<1x256x128xf32> to vector<256x128xf32>
      %45 = vector.shape_cast %41 : vector<256x128xf32> to vector<1x256x128xf32>
      tpu.vector_store %arg9[%42, %c0_13, %c0_14], %45 {strides = array<i32>} : memref<2x256x128xf32, #tpu.memory_space<vmem>>, vector<1x256x128xf32>,
      %c0_15 = arith.constant 0 : index
      %c0_16 = arith.constant 0 : index
      %46 = vector.load %arg10[%c0_15, %c0_16] : memref<1x128xf32, #tpu.memory_space<vmem>>, vector<1x128xf32>
      %cst_17 = arith.constant dense<0.000000e+00> : vector<128xf32>
      %47 = vector.multi_reduction <add>, %41, %cst_17 [0] : vector<256x128xf32> to vector<128xf32>
      %48 = vector.shape_cast %47 : vector<128xf32> to vector<1x128xf32>
      %49 = arith.addf %46, %48 : vector<1x128xf32>
      %c0_18 = arith.constant 0 : index
      %c0_19 = arith.constant 0 : index
      %50 = vector.load %arg10[%c0_18, %c0_19] : memref<1x128xf32, #tpu.memory_space<vmem>>, vector<1x128xf32>
      tpu.vector_store %arg10[%c0_18, %c0_19], %49 {strides = array<i32>} : memref<1x128xf32, #tpu.memory_space<vmem>>, vector<1x128xf32>,
      %c0_20 = arith.constant 0 : index
      %c0_21 = arith.constant 0 : index
      %51 = vector.load %arg11[%c0_20, %c0_21] : memref<1x128xf32, #tpu.memory_space<vmem>>, vector<1x128xf32>
      %52 = arith.mulf %41, %41 : vector<256x128xf32>
      %cst_22 = arith.constant dense<0.000000e+00> : vector<128xf32>
      %53 = vector.multi_reduction <add>, %52, %cst_22 [0] : vector<256x128xf32> to vector<128xf32>
      %54 = vector.shape_cast %53 : vector<128xf32> to vector<1x128xf32>
      %55 = arith.addf %51, %54 : vector<1x128xf32>
      %c0_23 = arith.constant 0 : index
      %c0_24 = arith.constant 0 : index
      %56 = vector.load %arg11[%c0_23, %c0_24] : memref<1x128xf32, #tpu.memory_space<vmem>>, vector<1x128xf32>
      tpu.vector_store %arg11[%c0_23, %c0_24], %55 {strides = array<i32>} : memref<1x128xf32, #tpu.memory_space<vmem>>, vector<1x128xf32>,
    } else {
    }
    %c1_i32 = arith.constant 1 : i32
    %3 = arith.cmpi eq, %arg0, %c1_i32 : i32
    %4 = arith.extui %3 : i1 to i32
    %c0_i32_1 = arith.constant 0 : i32
    %5 = arith.cmpi ne, %4, %c0_i32_1 : i32
    scf.if %5 {
      %6 = arith.index_cast %arg1 : i32 to index
      %c0 = arith.constant 0 : index
      %c0_2 = arith.constant 0 : index
      %7 = vector.load %arg9[%6, %c0, %c0_2] : memref<2x256x128xf32, #tpu.memory_space<vmem>>, vector<1x256x128xf32>
      %8 = vector.shape_cast %7 : vector<1x256x128xf32> to vector<256x128xf32>
      %c0_3 = arith.constant 0 : index
      %c0_4 = arith.constant 0 : index
      %9 = vector.load %arg10[%c0_3, %c0_4] : memref<1x128xf32, #tpu.memory_space<vmem>>, vector<1x128xf32>
      %cst = arith.constant 0.001953125 : f32
      %10 = vector.broadcast %cst : f32 to vector<1x128xf32>
      %11 = arith.mulf %9, %10 : vector<1x128xf32>
      %c0_5 = arith.constant 0 : index
      %c0_6 = arith.constant 0 : index
      %12 = vector.load %arg11[%c0_5, %c0_6] : memref<1x128xf32, #tpu.memory_space<vmem>>, vector<1x128xf32>
      %cst_7 = arith.constant 0.001953125 : f32
      %13 = vector.broadcast %cst_7 : f32 to vector<1x128xf32>
      %14 = arith.mulf %12, %13 : vector<1x128xf32>
      %15 = arith.mulf %11, %11 : vector<1x128xf32>
      %16 = arith.subf %14, %15 : vector<1x128xf32>
      %cst_8 = arith.constant 9.99999974E-6 : f32
      %17 = vector.broadcast %cst_8 : f32 to vector<1x128xf32>
      %18 = arith.addf %16, %17 : vector<1x128xf32>
      %19 = math.rsqrt %18 : vector<1x128xf32>
      %c0_9 = arith.constant 0 : index
      %c0_10 = arith.constant 0 : index
      %20 = vector.load %arg5[%c0_9, %c0_10] : memref<1x128xf32, #tpu.memory_space<vmem>>, vector<1x128xf32>
      %21 = arith.mulf %19, %20 : vector<1x128xf32>
      %22 = vector.broadcast %11 : vector<1x128xf32> to vector<256x128xf32>
      %23 = arith.subf %8, %22 : vector<256x128xf32>
      %24 = vector.broadcast %21 : vector<1x128xf32> to vector<256x128xf32>
      %25 = arith.mulf %23, %24 : vector<256x128xf32>
      %c0_11 = arith.constant 0 : index
      %c0_12 = arith.constant 0 : index
      %26 = vector.load %arg6[%c0_11, %c0_12] : memref<1x128xf32, #tpu.memory_space<vmem>>, vector<1x128xf32>
      %27 = vector.broadcast %26 : vector<1x128xf32> to vector<256x128xf32>
      %28 = arith.addf %25, %27 : vector<256x128xf32>
      %c0_13 = arith.constant 0 : index
      %c0_14 = arith.constant 0 : index
      %29 = vector.load %arg7[%c0_13, %c0_14] : memref<324x256xf32, #tpu.memory_space<vmem>>, vector<324x256xf32>
      %cst_15 = arith.constant dense<0.000000e+00> : vector<324x128xf32>
      %30 = tpu.matmul %29, %28, %cst_15 {dimension_numbers = #tpu.dot_dimension_numbers<[1], [0], [0], [1], [0, 0, 1, 1], [], []>} : vector<324x256xf32>, vector<256x128xf32>, vector<324x128xf32> -> vector<324x128xf32>
      %31 = vector.shape_cast %30 : vector<324x128xf32> to vector<18x18x128xf32>
      %c0_16 = arith.constant 0 : index
      %c0_17 = arith.constant 0 : index
      %c0_18 = arith.constant 0 : index
      %c0_19 = arith.constant 0 : index
      %32 = vector.load %arg8[%c0_16, %c0_17, %c0_18, %c0_19] : memref<1x18x18x128xf32, #tpu.memory_space<vmem>>, vector<1x18x18x128xf32>
      %33 = vector.shape_cast %32 : vector<1x18x18x128xf32> to vector<18x18x128xf32>
      %34 = vector.shape_cast %31 : vector<18x18x128xf32> to vector<1x18x18x128xf32>
      tpu.vector_store %arg8[%c0_16, %c0_17, %c0_18, %c0_19], %34 {strides = array<i32>} : memref<1x18x18x128xf32, #tpu.memory_space<vmem>>, vector<1x18x18x128xf32>,
    } else {
    }
    return
  }
  func.func @transform_0(%arg0: i32, %arg1: i32) -> (i32, i32, i32, i32) {
    %c1_i32 = arith.constant 1 : i32
    %0 = arith.subi %c1_i32, %arg0 : i32
    %1 = arith.muli %0, %arg1 : i32
    %c1_i32_0 = arith.constant 1 : i32
    %2 = arith.muli %arg0, %c1_i32_0 : i32
    %3 = arith.addi %1, %2 : i32
    %c0_i32 = arith.constant 0 : i32
    %c0_i32_1 = arith.constant 0 : i32
    %c0_i32_2 = arith.constant 0 : i32
    %c0_i32_3 = arith.constant 0 : i32
    return %3, %c0_i32, %c0_i32_1, %c0_i32_2 : i32, i32, i32, i32
  }
  func.func @transform_1(%arg0: i32, %arg1: i32) -> (i32, i32) {
    %c0_i32 = arith.constant 0 : i32
    %c0_i32_0 = arith.constant 0 : i32
    %c0_i32_1 = arith.constant 0 : i32
    return %c0_i32, %c0_i32_0 : i32, i32
  }
  func.func @transform_2(%arg0: i32, %arg1: i32) -> (i32, i32) {
    %c0_i32 = arith.constant 0 : i32
    %c0_i32_0 = arith.constant 0 : i32
    %c0_i32_1 = arith.constant 0 : i32
    return %c0_i32, %c0_i32_0 : i32, i32
  }
  func.func @transform_3(%arg0: i32, %arg1: i32) -> (i32, i32) {
    %c0_i32 = arith.constant 0 : i32
    %c0_i32_0 = arith.constant 0 : i32
    %c0_i32_1 = arith.constant 0 : i32
    return %c0_i32, %c0_i32_0 : i32, i32
  }
  func.func @transform_4(%arg0: i32, %arg1: i32) -> (i32, i32) {
    %c0_i32 = arith.constant 0 : i32
    %c0_i32_0 = arith.constant 0 : i32
    %c0_i32_1 = arith.constant 0 : i32
    return %c0_i32, %c0_i32_0 : i32, i32
  }
  func.func @transform_5(%arg0: i32, %arg1: i32) -> (i32, i32) {
    %c0_i32 = arith.constant 0 : i32
    %c0_i32_0 = arith.constant 0 : i32
    %c0_i32_1 = arith.constant 0 : i32
    return %c0_i32, %c0_i32_0 : i32, i32
  }
  func.func @transform_6(%arg0: i32, %arg1: i32) -> (i32, i32, i32, i32) {
    %0 = arith.muli %arg0, %arg1 : i32
    %c0_i32 = arith.constant 0 : i32
    %c0_i32_0 = arith.constant 0 : i32
    %c0_i32_1 = arith.constant 0 : i32
    %c0_i32_2 = arith.constant 0 : i32
    return %0, %c0_i32, %c0_i32_0, %c0_i32_1 : i32, i32, i32, i32
  }
}

module attributes {stable_mosaic.version = 11 : i64} {
  func.func @_conv_silu_bn_kernel(%arg0: i32, %arg1: i32, %arg2: memref<1x18x18x128xf32, #tpu.memory_space<vmem>>, %arg3: memref<1152x128xf32, #tpu.memory_space<vmem>>, %arg4: memref<1x128xf32, #tpu.memory_space<vmem>>, %arg5: memref<1x128xf32, #tpu.memory_space<vmem>>, %arg6: memref<1x128xf32, #tpu.memory_space<vmem>>, %arg7: memref<324x256xf32, #tpu.memory_space<vmem>>, %arg8: memref<1x18x18x128xf32, #tpu.memory_space<vmem>>, %arg9: memref<1x18x18x128xf32, #tpu.memory_space<vmem>>, %arg10: memref<2x256x128xf32, #tpu.memory_space<vmem>>, %arg11: memref<1x128xf32, #tpu.memory_space<vmem>>, %arg12: memref<1x128xf32, #tpu.memory_space<vmem>>) attributes {dimension_semantics = [#tpu.dimension_semantics<arbitrary>, #tpu.dimension_semantics<arbitrary>], iteration_bounds = array<i64: 2, 2>, scalar_prefetch = 0 : i64, scratch_operands = 3 : i64, tpu.core_type = #tpu.core_type<tc>, window_params = [{transform_indices = @transform_0, window_bounds = array<i64: 1, 18, 18, 128>}, {pipeline_mode = #tpu.pipeline_mode<synchronous>, transform_indices = @transform_1, window_bounds = array<i64: 1152, 128>}, {pipeline_mode = #tpu.pipeline_mode<synchronous>, transform_indices = @transform_2, window_bounds = array<i64: 1, 128>}, {pipeline_mode = #tpu.pipeline_mode<synchronous>, transform_indices = @transform_3, window_bounds = array<i64: 1, 128>}, {pipeline_mode = #tpu.pipeline_mode<synchronous>, transform_indices = @transform_4, window_bounds = array<i64: 1, 128>}, {pipeline_mode = #tpu.pipeline_mode<synchronous>, transform_indices = @transform_5, window_bounds = array<i64: 324, 256>}, {transform_indices = @transform_6, window_bounds = array<i64: 1, 18, 18, 128>}, {transform_indices = @transform_7, window_bounds = array<i64: 1, 18, 18, 128>}]} {
    %c0_i32 = arith.constant 0 : i32
    %0 = arith.cmpi eq, %arg0, %c0_i32 : i32
    %1 = arith.extui %0 : i1 to i32
    %c0_i32_0 = arith.constant 0 : i32
    %2 = arith.cmpi ne, %1, %c0_i32_0 : i32
    scf.if %2 {
      %c0_i32_2 = arith.constant 0 : i32
      %6 = arith.cmpi eq, %arg1, %c0_i32_2 : i32
      %7 = arith.extui %6 : i1 to i32
      %c0_i32_3 = arith.constant 0 : i32
      %8 = arith.cmpi ne, %7, %c0_i32_3 : i32
      scf.if %8 {
        %cst_25 = arith.constant 0.000000e+00 : f32
        %57 = vector.broadcast %cst_25 : f32 to vector<1x128xf32>
        %c0_26 = arith.constant 0 : index
        %c0_27 = arith.constant 0 : index
        %58 = vector.load %arg11[%c0_26, %c0_27] : memref<1x128xf32, #tpu.memory_space<vmem>>, vector<1x128xf32>
        tpu.vector_store %arg11[%c0_26, %c0_27], %57 {strides = array<i32>} : memref<1x128xf32, #tpu.memory_space<vmem>>, vector<1x128xf32>,
        %cst_28 = arith.constant 0.000000e+00 : f32
        %59 = vector.broadcast %cst_28 : f32 to vector<1x128xf32>
        %c0_29 = arith.constant 0 : index
        %c0_30 = arith.constant 0 : index
        %60 = vector.load %arg12[%c0_29, %c0_30] : memref<1x128xf32, #tpu.memory_space<vmem>>, vector<1x128xf32>
        tpu.vector_store %arg12[%c0_29, %c0_30], %59 {strides = array<i32>} : memref<1x128xf32, #tpu.memory_space<vmem>>, vector<1x128xf32>,
      } else {
      }
      %c0 = arith.constant 0 : index
      %c0_4 = arith.constant 0 : index
      %c0_5 = arith.constant 0 : index
      %c0_6 = arith.constant 0 : index
      %9 = vector.load %arg2[%c0, %c0_4, %c0_5, %c0_6] : memref<1x18x18x128xf32, #tpu.memory_space<vmem>>, vector<1x18x18x128xf32>
      %10 = vector.shape_cast %9 : vector<1x18x18x128xf32> to vector<18x18x128xf32>
      %11 = vector.extract_strided_slice %10 {offsets = [0, 0, 0], sizes = [16, 16, 128], strides = [1, 1, 1]} : vector<18x18x128xf32> to vector<16x16x128xf32>
      %12 = vector.shape_cast %11 : vector<16x16x128xf32> to vector<256x128xf32>
      %13 = vector.extract_strided_slice %10 {offsets = [0, 1, 0], sizes = [16, 16, 128], strides = [1, 1, 1]} : vector<18x18x128xf32> to vector<16x16x128xf32>
      %14 = vector.shape_cast %13 : vector<16x16x128xf32> to vector<256x128xf32>
      %15 = vector.extract_strided_slice %10 {offsets = [0, 2, 0], sizes = [16, 16, 128], strides = [1, 1, 1]} : vector<18x18x128xf32> to vector<16x16x128xf32>
      %16 = vector.shape_cast %15 : vector<16x16x128xf32> to vector<256x128xf32>
      %17 = vector.extract_strided_slice %10 {offsets = [1, 0, 0], sizes = [16, 16, 128], strides = [1, 1, 1]} : vector<18x18x128xf32> to vector<16x16x128xf32>
      %18 = vector.shape_cast %17 : vector<16x16x128xf32> to vector<256x128xf32>
      %19 = vector.extract_strided_slice %10 {offsets = [1, 1, 0], sizes = [16, 16, 128], strides = [1, 1, 1]} : vector<18x18x128xf32> to vector<16x16x128xf32>
      %20 = vector.shape_cast %19 : vector<16x16x128xf32> to vector<256x128xf32>
      %21 = vector.extract_strided_slice %10 {offsets = [1, 2, 0], sizes = [16, 16, 128], strides = [1, 1, 1]} : vector<18x18x128xf32> to vector<16x16x128xf32>
      %22 = vector.shape_cast %21 : vector<16x16x128xf32> to vector<256x128xf32>
      %23 = vector.extract_strided_slice %10 {offsets = [2, 0, 0], sizes = [16, 16, 128], strides = [1, 1, 1]} : vector<18x18x128xf32> to vector<16x16x128xf32>
      %24 = vector.shape_cast %23 : vector<16x16x128xf32> to vector<256x128xf32>
      %25 = vector.extract_strided_slice %10 {offsets = [2, 1, 0], sizes = [16, 16, 128], strides = [1, 1, 1]} : vector<18x18x128xf32> to vector<16x16x128xf32>
      %26 = vector.shape_cast %25 : vector<16x16x128xf32> to vector<256x128xf32>
      %27 = vector.extract_strided_slice %10 {offsets = [2, 2, 0], sizes = [16, 16, 128], strides = [1, 1, 1]} : vector<18x18x128xf32> to vector<16x16x128xf32>
      %28 = vector.shape_cast %27 : vector<16x16x128xf32> to vector<256x128xf32>
      %29 = tpu.concatenate %12, %14, %16, %18, %20, %22, %24, %26, %28 in 1 : vector<256x128xf32>, vector<256x128xf32>, vector<256x128xf32>, vector<256x128xf32>, vector<256x128xf32>, vector<256x128xf32>, vector<256x128xf32>, vector<256x128xf32>, vector<256x128xf32> -> vector<256x1152xf32>
      %c0_7 = arith.constant 0 : index
      %c0_8 = arith.constant 0 : index
      %30 = vector.load %arg3[%c0_7, %c0_8] : memref<1152x128xf32, #tpu.memory_space<vmem>>, vector<1152x128xf32>
      %cst = arith.constant dense<0.000000e+00> : vector<256x128xf32>
      %31 = tpu.matmul %29, %30, %cst {dimension_numbers = #tpu.dot_dimension_numbers<[1], [0], [0], [1], [0, 0, 1, 1], [], []>} : vector<256x1152xf32>, vector<1152x128xf32>, vector<256x128xf32> -> vector<256x128xf32>
      %c0_9 = arith.constant 0 : index
      %c0_10 = arith.constant 0 : index
      %32 = vector.load %arg4[%c0_9, %c0_10] : memref<1x128xf32, #tpu.memory_space<vmem>>, vector<1x128xf32>
      %33 = vector.broadcast %32 : vector<1x128xf32> to vector<256x128xf32>
      %34 = arith.addf %31, %33 : vector<256x128xf32>
      %cst_11 = arith.constant 0.000000e+00 : f32
      %35 = vector.broadcast %cst_11 : f32 to vector<256x128xf32>
      %36 = arith.subf %35, %34 : vector<256x128xf32>
      %37 = math.exp %36 : vector<256x128xf32>
      %cst_12 = arith.constant 1.000000e+00 : f32
      %38 = vector.broadcast %cst_12 : f32 to vector<256x128xf32>
      %39 = arith.addf %38, %37 : vector<256x128xf32>
      %40 = tpu.reciprocal %39 {approx = true} : vector<256x128xf32> -> vector<256x128xf32>
      %41 = arith.mulf %34, %40 : vector<256x128xf32>
      %42 = arith.index_cast %arg1 : i32 to index
      %c0_13 = arith.constant 0 : index
      %c0_14 = arith.constant 0 : index
      %43 = vector.load %arg10[%42, %c0_13, %c0_14] : memref<2x256x128xf32, #tpu.memory_space<vmem>>, vector<1x256x128xf32>
      %44 = vector.shape_cast %43 : vector<1x256x128xf32> to vector<256x128xf32>
      %45 = vector.shape_cast %41 : vector<256x128xf32> to vector<1x256x128xf32>
      tpu.vector_store %arg10[%42, %c0_13, %c0_14], %45 {strides = array<i32>} : memref<2x256x128xf32, #tpu.memory_space<vmem>>, vector<1x256x128xf32>,
      %c0_15 = arith.constant 0 : index
      %c0_16 = arith.constant 0 : index
      %46 = vector.load %arg11[%c0_15, %c0_16] : memref<1x128xf32, #tpu.memory_space<vmem>>, vector<1x128xf32>
      %cst_17 = arith.constant dense<0.000000e+00> : vector<128xf32>
      %47 = vector.multi_reduction <add>, %41, %cst_17 [0] : vector<256x128xf32> to vector<128xf32>
      %48 = vector.shape_cast %47 : vector<128xf32> to vector<1x128xf32>
      %49 = arith.addf %46, %48 : vector<1x128xf32>
      %c0_18 = arith.constant 0 : index
      %c0_19 = arith.constant 0 : index
      %50 = vector.load %arg11[%c0_18, %c0_19] : memref<1x128xf32, #tpu.memory_space<vmem>>, vector<1x128xf32>
      tpu.vector_store %arg11[%c0_18, %c0_19], %49 {strides = array<i32>} : memref<1x128xf32, #tpu.memory_space<vmem>>, vector<1x128xf32>,
      %c0_20 = arith.constant 0 : index
      %c0_21 = arith.constant 0 : index
      %51 = vector.load %arg12[%c0_20, %c0_21] : memref<1x128xf32, #tpu.memory_space<vmem>>, vector<1x128xf32>
      %52 = arith.mulf %41, %41 : vector<256x128xf32>
      %cst_22 = arith.constant dense<0.000000e+00> : vector<128xf32>
      %53 = vector.multi_reduction <add>, %52, %cst_22 [0] : vector<256x128xf32> to vector<128xf32>
      %54 = vector.shape_cast %53 : vector<128xf32> to vector<1x128xf32>
      %55 = arith.addf %51, %54 : vector<1x128xf32>
      %c0_23 = arith.constant 0 : index
      %c0_24 = arith.constant 0 : index
      %56 = vector.load %arg12[%c0_23, %c0_24] : memref<1x128xf32, #tpu.memory_space<vmem>>, vector<1x128xf32>
      tpu.vector_store %arg12[%c0_23, %c0_24], %55 {strides = array<i32>} : memref<1x128xf32, #tpu.memory_space<vmem>>, vector<1x128xf32>,
    } else {
    }
    %c1_i32 = arith.constant 1 : i32
    %3 = arith.cmpi eq, %arg0, %c1_i32 : i32
    %4 = arith.extui %3 : i1 to i32
    %c0_i32_1 = arith.constant 0 : i32
    %5 = arith.cmpi ne, %4, %c0_i32_1 : i32
    scf.if %5 {
      %6 = arith.index_cast %arg1 : i32 to index
      %c0 = arith.constant 0 : index
      %c0_2 = arith.constant 0 : index
      %7 = vector.load %arg10[%6, %c0, %c0_2] : memref<2x256x128xf32, #tpu.memory_space<vmem>>, vector<1x256x128xf32>
      %8 = vector.shape_cast %7 : vector<1x256x128xf32> to vector<256x128xf32>
      %c0_3 = arith.constant 0 : index
      %c0_4 = arith.constant 0 : index
      %9 = vector.load %arg11[%c0_3, %c0_4] : memref<1x128xf32, #tpu.memory_space<vmem>>, vector<1x128xf32>
      %cst = arith.constant 0.001953125 : f32
      %10 = vector.broadcast %cst : f32 to vector<1x128xf32>
      %11 = arith.mulf %9, %10 : vector<1x128xf32>
      %c0_5 = arith.constant 0 : index
      %c0_6 = arith.constant 0 : index
      %12 = vector.load %arg12[%c0_5, %c0_6] : memref<1x128xf32, #tpu.memory_space<vmem>>, vector<1x128xf32>
      %cst_7 = arith.constant 0.001953125 : f32
      %13 = vector.broadcast %cst_7 : f32 to vector<1x128xf32>
      %14 = arith.mulf %12, %13 : vector<1x128xf32>
      %15 = arith.mulf %11, %11 : vector<1x128xf32>
      %16 = arith.subf %14, %15 : vector<1x128xf32>
      %cst_8 = arith.constant 9.99999974E-6 : f32
      %17 = vector.broadcast %cst_8 : f32 to vector<1x128xf32>
      %18 = arith.addf %16, %17 : vector<1x128xf32>
      %19 = math.rsqrt %18 : vector<1x128xf32>
      %c0_9 = arith.constant 0 : index
      %c0_10 = arith.constant 0 : index
      %20 = vector.load %arg5[%c0_9, %c0_10] : memref<1x128xf32, #tpu.memory_space<vmem>>, vector<1x128xf32>
      %21 = arith.mulf %19, %20 : vector<1x128xf32>
      %22 = vector.broadcast %11 : vector<1x128xf32> to vector<256x128xf32>
      %23 = arith.subf %8, %22 : vector<256x128xf32>
      %24 = vector.broadcast %21 : vector<1x128xf32> to vector<256x128xf32>
      %25 = arith.mulf %23, %24 : vector<256x128xf32>
      %c0_11 = arith.constant 0 : index
      %c0_12 = arith.constant 0 : index
      %26 = vector.load %arg6[%c0_11, %c0_12] : memref<1x128xf32, #tpu.memory_space<vmem>>, vector<1x128xf32>
      %27 = vector.broadcast %26 : vector<1x128xf32> to vector<256x128xf32>
      %28 = arith.addf %25, %27 : vector<256x128xf32>
      %c0_13 = arith.constant 0 : index
      %c0_14 = arith.constant 0 : index
      %29 = vector.load %arg7[%c0_13, %c0_14] : memref<324x256xf32, #tpu.memory_space<vmem>>, vector<324x256xf32>
      %cst_15 = arith.constant dense<0.000000e+00> : vector<324x128xf32>
      %30 = tpu.matmul %29, %28, %cst_15 {dimension_numbers = #tpu.dot_dimension_numbers<[1], [0], [0], [1], [0, 0, 1, 1], [], []>} : vector<324x256xf32>, vector<256x128xf32>, vector<324x128xf32> -> vector<324x128xf32>
      %c0_16 = arith.constant 0 : index
      %c0_17 = arith.constant 0 : index
      %c0_18 = arith.constant 0 : index
      %c0_19 = arith.constant 0 : index
      %31 = vector.load %arg8[%c0_16, %c0_17, %c0_18, %c0_19] : memref<1x18x18x128xf32, #tpu.memory_space<vmem>>, vector<1x18x18x128xf32>
      %32 = vector.shape_cast %31 : vector<1x18x18x128xf32> to vector<18x18x128xf32>
      %33 = vector.shape_cast %32 : vector<18x18x128xf32> to vector<324x128xf32>
      %34 = arith.addf %30, %33 : vector<324x128xf32>
      %35 = vector.shape_cast %34 : vector<324x128xf32> to vector<18x18x128xf32>
      %c0_20 = arith.constant 0 : index
      %c0_21 = arith.constant 0 : index
      %c0_22 = arith.constant 0 : index
      %c0_23 = arith.constant 0 : index
      %36 = vector.load %arg9[%c0_20, %c0_21, %c0_22, %c0_23] : memref<1x18x18x128xf32, #tpu.memory_space<vmem>>, vector<1x18x18x128xf32>
      %37 = vector.shape_cast %36 : vector<1x18x18x128xf32> to vector<18x18x128xf32>
      %38 = vector.shape_cast %35 : vector<18x18x128xf32> to vector<1x18x18x128xf32>
      tpu.vector_store %arg9[%c0_20, %c0_21, %c0_22, %c0_23], %38 {strides = array<i32>} : memref<1x18x18x128xf32, #tpu.memory_space<vmem>>, vector<1x18x18x128xf32>,
    } else {
    }
    return
  }
  func.func @transform_0(%arg0: i32, %arg1: i32) -> (i32, i32, i32, i32) {
    %c1_i32 = arith.constant 1 : i32
    %0 = arith.subi %c1_i32, %arg0 : i32
    %1 = arith.muli %0, %arg1 : i32
    %c1_i32_0 = arith.constant 1 : i32
    %2 = arith.muli %arg0, %c1_i32_0 : i32
    %3 = arith.addi %1, %2 : i32
    %c0_i32 = arith.constant 0 : i32
    %c0_i32_1 = arith.constant 0 : i32
    %c0_i32_2 = arith.constant 0 : i32
    %c0_i32_3 = arith.constant 0 : i32
    return %3, %c0_i32, %c0_i32_1, %c0_i32_2 : i32, i32, i32, i32
  }
  func.func @transform_1(%arg0: i32, %arg1: i32) -> (i32, i32) {
    %c0_i32 = arith.constant 0 : i32
    %c0_i32_0 = arith.constant 0 : i32
    %c0_i32_1 = arith.constant 0 : i32
    return %c0_i32, %c0_i32_0 : i32, i32
  }
  func.func @transform_2(%arg0: i32, %arg1: i32) -> (i32, i32) {
    %c0_i32 = arith.constant 0 : i32
    %c0_i32_0 = arith.constant 0 : i32
    %c0_i32_1 = arith.constant 0 : i32
    return %c0_i32, %c0_i32_0 : i32, i32
  }
  func.func @transform_3(%arg0: i32, %arg1: i32) -> (i32, i32) {
    %c0_i32 = arith.constant 0 : i32
    %c0_i32_0 = arith.constant 0 : i32
    %c0_i32_1 = arith.constant 0 : i32
    return %c0_i32, %c0_i32_0 : i32, i32
  }
  func.func @transform_4(%arg0: i32, %arg1: i32) -> (i32, i32) {
    %c0_i32 = arith.constant 0 : i32
    %c0_i32_0 = arith.constant 0 : i32
    %c0_i32_1 = arith.constant 0 : i32
    return %c0_i32, %c0_i32_0 : i32, i32
  }
  func.func @transform_5(%arg0: i32, %arg1: i32) -> (i32, i32) {
    %c0_i32 = arith.constant 0 : i32
    %c0_i32_0 = arith.constant 0 : i32
    %c0_i32_1 = arith.constant 0 : i32
    return %c0_i32, %c0_i32_0 : i32, i32
  }
  func.func @transform_6(%arg0: i32, %arg1: i32) -> (i32, i32, i32, i32) {
    %0 = arith.muli %arg0, %arg1 : i32
    %c0_i32 = arith.constant 0 : i32
    %c0_i32_0 = arith.constant 0 : i32
    %c0_i32_1 = arith.constant 0 : i32
    %c0_i32_2 = arith.constant 0 : i32
    return %0, %c0_i32, %c0_i32_0, %c0_i32_1 : i32, i32, i32, i32
  }
  func.func @transform_7(%arg0: i32, %arg1: i32) -> (i32, i32, i32, i32) {
    %0 = arith.muli %arg0, %arg1 : i32
    %c0_i32 = arith.constant 0 : i32
    %c0_i32_0 = arith.constant 0 : i32
    %c0_i32_1 = arith.constant 0 : i32
    %c0_i32_2 = arith.constant 0 : i32
    return %0, %c0_i32, %c0_i32_0, %c0_i32_1 : i32, i32, i32, i32
  }
}

</mosaic_0001>

<llo_original>
// kernel: repconv_forward.3
$region0: #{repconv_forward.3}
  #allocation0 [shape = 'u32[]', space=smem, size = 0x4, offset = 0x4, fixed_abs, tag = 'smem constant byte address 0x4 - core index']
  #allocation1 [shape = 'u32[144,128]{1,0:T(1,128)}', space=vmem, size = 0x12000, scoped, tag = 'internal scratch']
  #allocation2 [shape = 'f32[2,256,128]{2,1,0:T(8,128)}', space=vmem, size = 0x40000, scoped, tag = 'scratch operand']
  #allocation3 [shape = 'f32[1,128]{1,0:T(1,128)}', space=vmem, size = 0x200, scoped, tag = 'scratch operand']
  #allocation4 [shape = 'f32[1,128]{1,0:T(1,128)}', space=vmem, size = 0x200, scoped, tag = 'scratch operand']
  %s0 = inlined_call_operand.vmem [shape: f32[2,18,18,128], index: 0, kind: input, shape index: {}]
  %s1 = inlined_call_operand.vmem [shape: f32[1152,128], index: 1, kind: input, shape index: {}]
  %s2 = inlined_call_operand.vmem [shape: f32[1,128], index: 2, kind: input, shape index: {}]
  %s3 = inlined_call_operand.vmem [shape: f32[1,128], index: 3, kind: input, shape index: {}]
  %s4 = inlined_call_operand.vmem [shape: f32[1,128], index: 4, kind: input, shape index: {}]
  %s5 = inlined_call_operand.vmem [shape: f32[324,256], index: 5, kind: input, shape index: {}]
  %s6 = inlined_call_operand.vmem [shape: f32[2,18,18,128], index: 6, kind: input, shape index: {}]
  %s7 = inlined_call_operand.vmem [shape: f32[2,18,18,128], index: 7, kind: output, shape index: {}]
  %s8 = sld [smem:[#allocation0]]
  $region73: #{repconv_forward.3} parent=0
    _
  %s10 = ssub.s32 1, %s8
  %s11 = scalar_select 0, %s10, %s8
  loop: start=0, step=1, limit=6
  $region2: #{repconv_forward.3} parent=0 // loop_pre_header
    _
  $region3: #{repconv_forward.3} parent=0 // loop_header
    %s13 = sphi 0, %s17
    %p14 = scmp.ge.s32.totalorder %s13, 6
    %s20 = sphi 0, %s32
    %s21 = sphi 0, %s28
    %s22 = sphi 0, %s20
    %s23 = sphi 0, %s21
    %s24 = sphi 0, %s22
    %s25 = sphi 0, %s23
    %s41 = sphi 0, %s43
    %s44 = sphi 0, %s41
    %s45 = sphi 0, %s44
    %s61 = sphi 0, %s45
    %s65 = sphi 0, %s65
    %s67 = sphi 0, %s65
    %s68 = sphi 0, %s67
    %s82 = sphi 0, %s68
    %s86 = sphi 0, %s86
    %s88 = sphi 0, %s86
    %s89 = sphi 0, %s88
    %s103 = sphi 0, %s89
    %s107 = sphi 0, %s107
    %s109 = sphi 0, %s107
    %s110 = sphi 0, %s109
    %s124 = sphi 0, %s110
    %s128 = sphi 0, %s128
    %s130 = sphi 0, %s128
    %s131 = sphi 0, %s130
    %s145 = sphi 0, %s131
    %s149 = sphi 0, %s149
    %s151 = sphi 0, %s149
    %s152 = sphi 0, %s151
    %s166 = sphi 0, %s152
    %s174 = sphi 0, %s176
    %s177 = sphi 0, %s174
    %s178 = sphi 0, %s177
    %s194 = sphi 0, %s178
    %s202 = sphi 0, %s204
    %s205 = sphi 0, %s202
    %s206 = sphi 0, %s205
    %s222 = sphi 0, %s206
  $region4: #{repconv_forward.3} parent=0 // loop_header_branch
    %16 = sbr.rel (%p14) target = $region8
  $region5: #{repconv_forward.3} parent=0 // loop_body
    %s18 = ssub.s32 %s13, 1
    %s19 = ssub.s32 %s13, 2
    %s26 = sadd.s32 1, %s21
    %p27 = scmp.ge.s32.totalorder %s26, 2
    %s28 = scalar_select %p27, 0, %s26
    %s29 = sadd.s32 1, %s20
    %s30 = scalar_select %p27, %s29, %s20
    %p31 = scmp.ge.s32.totalorder %s30, 2
    %s32 = scalar_select %p31, 0, %s30
    %s33 = ssub.s32 1, %s20
    %s34 = smul.u32 %s33, %s21
    %s35 = sadd.s32 %s34, %s20
    %s36 = ssub.s32 1, %s32
    %s37 = smul.u32 %s36, %s28
    %s38 = sadd.s32 %s37, %s32
    %s39 = ssub.s32 %s35, %s38
    %p40 = scmp.eq.s32.totalorder %s39, 0
    %s42 = sadd.s32 %s41, 1
    %s43 = scalar_select %p40, %s41, %s42
    %p46 = pneg %p40
    %p47 = scmp.eq.s32.totalorder %s13, 3
    %p48 = por %p46, %p47
    %p49 = scmp.ne.s32.totalorder %s41, %s44
    %p50 = scmp.eq.s32.totalorder %s13, 0
    %p51 = por %p49, %p50
    %p52 = scmp.ne.s32.totalorder %s41, %s44
    %p53 = scmp.eq.s32.totalorder %s18, 3
    %p54 = por %p52, %p53
    %p55 = scmp.ne.s32.totalorder %s44, %s45
    %p56 = scmp.eq.s32.totalorder %s18, 0
    %p57 = por %p55, %p56
    %p58 = scmp.ne.s32.totalorder %s44, %s45
    %p59 = scmp.eq.s32.totalorder %s19, 3
    %p60 = por %p58, %p59
    %p62 = scmp.ne.s32.totalorder %s45, %s61
    %p63 = scmp.eq.s32.totalorder %s19, 0
    %p64 = por %p62, %p63
    %s66 = sadd.s32 %s65, 1
    %p69 = scmp.eq.s32.totalorder %s13, 3
    %p70 = scmp.ne.s32.totalorder %s65, %s67
    %p71 = scmp.eq.s32.totalorder %s13, 0
    %p72 = por %p70, %p71
    %p73 = scmp.ne.s32.totalorder %s65, %s67
    %p74 = scmp.eq.s32.totalorder %s18, 3
    %p75 = por %p73, %p74
    %p76 = scmp.ne.s32.totalorder %s67, %s68
    %p77 = scmp.eq.s32.totalorder %s18, 0
    %p78 = por %p76, %p77
    %p79 = scmp.ne.s32.totalorder %s67, %s68
    %p80 = scmp.eq.s32.totalorder %s19, 3
    %p81 = por %p79, %p80
    %p83 = scmp.ne.s32.totalorder %s68, %s82
    %p84 = scmp.eq.s32.totalorder %s19, 0
    %p85 = por %p83, %p84
    %s87 = sadd.s32 %s86, 1
    %p90 = scmp.eq.s32.totalorder %s13, 3
    %p91 = scmp.ne.s32.totalorder %s86, %s88
    %p92 = scmp.eq.s32.totalorder %s13, 0
    %p93 = por %p91, %p92
    %p94 = scmp.ne.s32.totalorder %s86, %s88
    %p95 = scmp.eq.s32.totalorder %s18, 3
    %p96 = por %p94, %p95
    %p97 = scmp.ne.s32.totalorder %s88, %s89
    %p98 = scmp.eq.s32.totalorder %s18, 0
    %p99 = por %p97, %p98
    %p100 = scmp.ne.s32.totalorder %s88, %s89
    %p101 = scmp.eq.s32.totalorder %s19, 3
    %p102 = por %p100, %p101
    %p104 = scmp.ne.s32.totalorder %s89, %s103
    %p105 = scmp.eq.s32.totalorder %s19, 0
    %p106 = por %p104, %p105
    %s108 = sadd.s32 %s107, 1
    %p111 = scmp.eq.s32.totalorder %s13, 3
    %p112 = scmp.ne.s32.totalorder %s107, %s109
    %p113 = scmp.eq.s32.totalorder %s13, 0
    %p114 = por %p112, %p113
    %p115 = scmp.ne.s32.totalorder %s107, %s109
    %p116 = scmp.eq.s32.totalorder %s18, 3
    %p117 = por %p115, %p116
    %p118 = scmp.ne.s32.totalorder %s109, %s110
    %p119 = scmp.eq.s32.totalorder %s18, 0
    %p120 = por %p118, %p119
    %p121 = scmp.ne.s32.totalorder %s109, %s110
    %p122 = scmp.eq.s32.totalorder %s19, 3
    %p123 = por %p121, %p122
    %p125 = scmp.ne.s32.totalorder %s110, %s124
    %p126 = scmp.eq.s32.totalorder %s19, 0
    %p127 = por %p125, %p126
    %s129 = sadd.s32 %s128, 1
    %p132 = scmp.eq.s32.totalorder %s13, 3
    %p133 = scmp.ne.s32.totalorder %s128, %s130
    %p134 = scmp.eq.s32.totalorder %s13, 0
    %p135 = por %p133, %p134
    %p136 = scmp.ne.s32.totalorder %s128, %s130
    %p137 = scmp.eq.s32.totalorder %s18, 3
    %p138 = por %p136, %p137
    %p139 = scmp.ne.s32.totalorder %s130, %s131
    %p140 = scmp.eq.s32.totalorder %s18, 0
    %p141 = por %p139, %p140
    %p142 = scmp.ne.s32.totalorder %s130, %s131
    %p143 = scmp.eq.s32.totalorder %s19, 3
    %p144 = por %p142, %p143
    %p146 = scmp.ne.s32.totalorder %s131, %s145
    %p147 = scmp.eq.s32.totalorder %s19, 0
    %p148 = por %p146, %p147
    %s150 = sadd.s32 %s149, 1
    %p153 = scmp.eq.s32.totalorder %s13, 3
    %p154 = scmp.ne.s32.totalorder %s149, %s151
    %p155 = scmp.eq.s32.totalorder %s13, 0
    %p156 = por %p154, %p155
    %p157 = scmp.ne.s32.totalorder %s149, %s151
    %p158 = scmp.eq.s32.totalorder %s18, 3
    %p159 = por %p157, %p158
    %p160 = scmp.ne.s32.totalorder %s151, %s152
    %p161 = scmp.eq.s32.totalorder %s18, 0
    %p162 = por %p160, %p161
    %p163 = scmp.ne.s32.totalorder %s151, %s152
    %p164 = scmp.eq.s32.totalorder %s19, 3
    %p165 = por %p163, %p164
    %p167 = scmp.ne.s32.totalorder %s152, %s166
    %p168 = scmp.eq.s32.totalorder %s19, 0
    %p169 = por %p167, %p168
    %s170 = smul.u32 %s20, %s21
    %s171 = smul.u32 %s32, %s28
    %s172 = ssub.s32 %s170, %s171
    %p173 = scmp.eq.s32.totalorder %s172, 0
    %s175 = sadd.s32 %s174, 1
    %s176 = scalar_select %p173, %s174, %s175
    %p179 = pneg %p173
    %p180 = scmp.eq.s32.totalorder %s13, 3
    %p181 = por %p179, %p180
    %p182 = scmp.ne.s32.totalorder %s174, %s177
    %p183 = scmp.eq.s32.totalorder %s13, 0
    %p184 = por %p182, %p183
    %p185 = scmp.ne.s32.totalorder %s174, %s177
    %p186 = scmp.eq.s32.totalorder %s18, 3
    %p187 = por %p185, %p186
    %p188 = scmp.ne.s32.totalorder %s177, %s178
    %p189 = scmp.eq.s32.totalorder %s18, 0
    %p190 = por %p188, %p189
    %p191 = scmp.ne.s32.totalorder %s177, %s178
    %p192 = scmp.eq.s32.totalorder %s19, 3
    %p193 = por %p191, %p192
    %p195 = scmp.ne.s32.totalorder %s178, %s194
    %p196 = scmp.eq.s32.totalorder %s19, 0
    %p197 = por %p195, %p196
    %s198 = smul.u32 %s20, %s21
    %s199 = smul.u32 %s32, %s28
    %s200 = ssub.s32 %s198, %s199
    %p201 = scmp.eq.s32.totalorder %s200, 0
    %s203 = sadd.s32 %s202, 1
    %s204 = scalar_select %p201, %s202, %s203
    %p207 = pneg %p201
    %p208 = scmp.eq.s32.totalorder %s13, 3
    %p209 = por %p207, %p208
    %p210 = scmp.ne.s32.totalorder %s202, %s205
    %p211 = scmp.eq.s32.totalorder %s13, 0
    %p212 = por %p210, %p211
    %p213 = scmp.ne.s32.totalorder %s202, %s205
    %p214 = scmp.eq.s32.totalorder %s18, 3
    %p215 = por %p213, %p214
    %p216 = scmp.ne.s32.totalorder %s205, %s206
    %p217 = scmp.eq.s32.totalorder %s18, 0
    %p218 = por %p216, %p217
    %p219 = scmp.ne.s32.totalorder %s205, %s206
    %p220 = scmp.eq.s32.totalorder %s19, 3
    %p221 = por %p219, %p220
    %p223 = scmp.ne.s32.totalorder %s206, %s222
    %p224 = scmp.eq.s32.totalorder %s19, 0
    %p225 = por %p223, %p224
    %p226 = scmp.le.s32.totalorder 1, %s13
    %p227 = scmp.lt.s32.totalorder %s13, 5
    %p228 = pnand %p226, %p227
    %p229 = pneg %p228
    // Predicated region
    $region9: #{repconv_forward.3} parent=5 // pred_check
      _
    $region10: #{repconv_forward.3} parent=5 // pred_check_branch
      %231 = sbr.rel (%p228) target = $region12
    $region11: #{repconv_forward.3} parent=5 // pred_region
      %s232 = ssub.s32 %s13, 1
      // Predicated region
      $region13: #{repconv_forward.3} parent=11 // pred_check
        %p233 = pneg %p78
      $region14: #{repconv_forward.3} parent=11 // pred_check_branch
        %235 = sbr.rel (%p233) target = $region16
      $region15: #{repconv_forward.3} parent=11 // pred_region
        _
      $region16: #{repconv_forward.3} parent=11 // pred_fallthru
        _
      // Predicated region
      $region17: #{repconv_forward.3} parent=11 // pred_check
        %p236 = pneg %p99
      $region18: #{repconv_forward.3} parent=11 // pred_check_branch
        %238 = sbr.rel (%p236) target = $region20
      $region19: #{repconv_forward.3} parent=11 // pred_region
        _
      $region20: #{repconv_forward.3} parent=11 // pred_fallthru
        _
      // Predicated region
      $region21: #{repconv_forward.3} parent=11 // pred_check
        %p239 = pneg %p120
      $region22: #{repconv_forward.3} parent=11 // pred_check_branch
        %241 = sbr.rel (%p239) target = $region24
      $region23: #{repconv_forward.3} parent=11 // pred_region
        _
      $region24: #{repconv_forward.3} parent=11 // pred_fallthru
        _
      // Predicated region
      $region25: #{repconv_forward.3} parent=11 // pred_check
        %p242 = pneg %p141
      $region26: #{repconv_forward.3} parent=11 // pred_check_branch
        %244 = sbr.rel (%p242) target = $region28
      $region27: #{repconv_forward.3} parent=11 // pred_region
        _
      $region28: #{repconv_forward.3} parent=11 // pred_fallthru
        _
      // Predicated region
      $region29: #{repconv_forward.3} parent=11 // pred_check
        %p245 = pneg %p162
      $region30: #{repconv_forward.3} parent=11 // pred_check_branch
        %247 = sbr.rel (%p245) target = $region32
      $region31: #{repconv_forward.3} parent=11 // pred_region
        _
      $region32: #{repconv_forward.3} parent=11 // pred_fallthru
        _
    $region12: #{repconv_forward.3} parent=5 // pred_fallthru
      _
    %p248 = scmp.lt.s32.totalorder %s13, 4
    // Predicated region
    $region33: #{repconv_forward.3} parent=5 // pred_check
      %p249 = pneg %p248
    $region34: #{repconv_forward.3} parent=5 // pred_check_branch
      %251 = sbr.rel (%p249) target = $region36
    $region35: #{repconv_forward.3} parent=5 // pred_region
      // Predicated region
      $region37: #{repconv_forward.3} parent=35 // pred_check
        %p252 = pneg %p51
      $region38: #{repconv_forward.3} parent=35 // pred_check_branch
        %254 = sbr.rel (%p252) target = $region40
      $region39: #{repconv_forward.3} parent=35 // pred_region
        %s255 = ssub.s32 1, %s20
        %s256 = smul.u32 %s255, %s21
        %s257 = sadd.s32 %s256, %s20
        %p258 = scmp.lt.s32.totalorder %s257, 1
        %s259 = scalar_select %p258, %s257, 1
        %s260 = smul.addr %s259, 54
        %s261 = smul.addr %s260, 8
        %s262 = scalar_lea.vmem %s0, %s261
        %s263 = ssub.s32 1, %s20
        %s264 = smul.u32 %s263, %s21
        %s265 = sadd.s32 %s264, %s20
      $region40: #{repconv_forward.3} parent=35 // pred_fallthru
        _
      // Predicated region
      $region41: #{repconv_forward.3} parent=35 // pred_check
        %p266 = pneg %p184
      $region42: #{repconv_forward.3} parent=35 // pred_check_branch
        %268 = sbr.rel (%p266) target = $region44
      $region43: #{repconv_forward.3} parent=35 // pred_region
        %s269 = smul.u32 %s20, %s21
        %p270 = scmp.lt.s32.totalorder %s269, 1
        %s271 = scalar_select %p270, %s269, 1
        %s272 = smul.addr %s271, 54
        %s273 = smul.addr %s272, 8
        %s274 = scalar_lea.vmem %s6, %s273
        %s275 = smul.u32 %s20, %s21
      $region44: #{repconv_forward.3} parent=35 // pred_fallthru
        _
    $region36: #{repconv_forward.3} parent=5 // pred_fallthru
      _
    %p276 = scmp.le.s32.totalorder 1, %s13
    %p277 = scmp.lt.s32.totalorder %s13, 5
    %p278 = pnand %p276, %p277
    %p279 = pneg %p278
    // Predicated region
    $region45: #{repconv_forward.3} parent=5 // pred_check
      _
    $region46: #{repconv_forward.3} parent=5 // pred_check_branch
      %281 = sbr.rel (%p278) target = $region48
    $region47: #{repconv_forward.3} parent=5 // pred_region
      %s282 = ssub.s32 %s13, 1
      %s283 = ssub.s32 1, %s22
      %s284 = smul.u32 %s283, %s23
      %s285 = sadd.s32 %s284, %s22
      %p286 = scmp.lt.s32.totalorder %s285, 1
      %s287 = scalar_select %p286, %s285, 1
      %s288 = smul.addr %s287, 54
      %s289 = smul.addr %s288, 8
      %s290 = scalar_lea.vmem %s0, %s289
      %p291 = pneg %p57
      %p292 = pneg %p54
      %p293 = pneg %p78
      %p294 = pneg %p75
      %p295 = pneg %p99
      %p296 = pneg %p96
      %p297 = pneg %p120
      %p298 = pneg %p117
      %p299 = pneg %p141
      %p300 = pneg %p138
      %p301 = pneg %p162
      %p302 = pneg %p159
      %s303 = smul.u32 %s22, %s23
      %p304 = scmp.lt.s32.totalorder %s303, 1
      %s305 = scalar_select %p304, %s303, 1
      %s306 = smul.addr %s305, 54
      %s307 = smul.addr %s306, 8
      %s308 = scalar_lea.vmem %s6, %s307
      %p309 = pneg %p190
      %p310 = pneg %p187
      %p311 = pneg %p218
      %p312 = pneg %p215
      %s313 = smul.u32 %s22, %s23
      %p314 = scmp.lt.s32.totalorder %s313, 1
      %s315 = scalar_select %p314, %s313, 1
      %s316 = smul.addr %s315, 54
      %s317 = smul.addr %s316, 8
      %s318 = scalar_lea.vmem %s7, %s317
      %s319 = ssub.s32 1, %s22
      %s320 = smul.u32 %s319, %s23
      %s321 = sadd.s32 %s320, %s22
      %p322 = scmp.lt.s32.totalorder %s321, 1
      %s323 = scalar_select %p322, %s321, 1
      %s324 = smul.addr %s323, 54
      %s325 = smul.addr %s324, 8
      %s326 = scalar_lea.vmem %s0, %s325
      %s327 = ssub.s32 1, %s22
      %s328 = smul.u32 %s327, %s23
      %s329 = sadd.s32 %s328, %s22
      %s330 = smul.u32 %s22, %s23
      %p331 = scmp.lt.s32.totalorder %s330, 1
      %s332 = scalar_select %p331, %s330, 1
      %s333 = smul.addr %s332, 54
      %s334 = smul.addr %s333, 8
      %s335 = scalar_lea.vmem %s6, %s334
      %s336 = smul.u32 %s22, %s23
      %s337 = smul.u32 %s22, %s23
      %p338 = scmp.lt.s32.totalorder %s337, 1
      %s339 = scalar_select %p338, %s337, 1
      %s340 = smul.addr %s339, 54
      %s341 = smul.addr %s340, 8
      %s342 = scalar_lea.vmem %s7, %s341
      %s343 = smul.u32 %s22, %s23
      %p344 = scmp.eq.s32.totalorder %s22, 0
      // Predicated region
      $region49: #{repconv_forward.3} parent=47 // pred_check
        %p345 = pneg %p344
      $region50: #{repconv_forward.3} parent=47 // pred_check_branch
        %347 = sbr.rel (%p345) target = $region52
      $region51: #{repconv_forward.3} parent=47 // pred_region
        %p348 = scmp.eq.s32.totalorder %s23, 0
        // Predicated region
        $region53: #{repconv_forward.3} parent=51 // pred_check
          %p349 = pneg %p348
        $region54: #{repconv_forward.3} parent=51 // pred_check_branch
          %351 = sbr.rel (%p349) target = $region56
        $region55: #{repconv_forward.3} parent=51 // pred_region
          %352 = vst [vmem:[#allocation3] sm:$0x1] 0.0
          %353 = vst [vmem:[#allocation4] sm:$0x1] 0.0
        $region56: #{repconv_forward.3} parent=51 // pred_fallthru
          _
        %v354 = vld [vmem:[%s326] sm:$0xff]
        %v355 = vld [vmem:[%s326 + $0x8] sm:$0xff]
        %v356 = vld [vmem:[%s326 + $0x10] sm:$0x3]
        %v357 = vld [vmem:[%s326 + $0x18] sm:$0xff]
        %v358 = vld [vmem:[%s326 + $0x20] sm:$0xff]
        %v359 = vld [vmem:[%s326 + $0x28] sm:$0x3]
        %v360 = vld [vmem:[%s326 + $0x30] sm:$0xff]
        %v361 = vld [vmem:[%s326 + $0x38] sm:$0xff]
        %v362 = vld [vmem:[%s326 + $0x40] sm:$0x3]
        %v363 = vld [vmem:[%s326 + $0x48] sm:$0xff]
        %v364 = vld [vmem:[%s326 + $0x50] sm:$0xff]
        %v365 = vld [vmem:[%s326 + $0x58] sm:$0x3]
        %v366 = vld [vmem:[%s326 + $0x60] sm:$0xff]
        %v367 = vld [vmem:[%s326 + $0x68] sm:$0xff]
        %v368 = vld [vmem:[%s326 + $0x70] sm:$0x3]
        %v369 = vld [vmem:[%s326 + $0x78] sm:$0xff]
        %v370 = vld [vmem:[%s326 + $0x80] sm:$0xff]
        %v371 = vld [vmem:[%s326 + $0x88] sm:$0x3]
        %v372 = vld [vmem:[%s326 + $0x90] sm:$0xff]
        %v373 = vld [vmem:[%s326 + $0x98] sm:$0xff]
        %v374 = vld [vmem:[%s326 + $0xa0] sm:$0x3]
        %v375 = vld [vmem:[%s326 + $0xa8] sm:$0xff]
        %v376 = vld [vmem:[%s326 + $0xb0] sm:$0xff]
        %v377 = vld [vmem:[%s326 + $0xb8] sm:$0x3]
        %v378 = vld [vmem:[%s326 + $0xc0] sm:$0xff]
        %v379 = vld [vmem:[%s326 + $0xc8] sm:$0xff]
        %v380 = vld [vmem:[%s326 + $0xd0] sm:$0x3]
        %v381 = vld [vmem:[%s326 + $0xd8] sm:$0xff]
        %v382 = vld [vmem:[%s326 + $0xe0] sm:$0xff]
        %v383 = vld [vmem:[%s326 + $0xe8] sm:$0x3]
        %v384 = vld [vmem:[%s326 + $0xf0] sm:$0xff]
        %v385 = vld [vmem:[%s326 + $0xf8] sm:$0xff]
        %v386 = vld [vmem:[%s326 + $0x100] sm:$0x3]
        %v387 = vld [vmem:[%s326 + $0x108] sm:$0xff]
        %v388 = vld [vmem:[%s326 + $0x110] sm:$0xff]
        %v389 = vld [vmem:[%s326 + $0x118] sm:$0x3]
        %v390 = vld [vmem:[%s326 + $0x120] sm:$0xff]
        %v391 = vld [vmem:[%s326 + $0x128] sm:$0xff]
        %v392 = vld [vmem:[%s326 + $0x130] sm:$0x3]
        %v393 = vld [vmem:[%s326 + $0x138] sm:$0xff]
        %v394 = vld [vmem:[%s326 + $0x140] sm:$0xff]
        %v395 = vld [vmem:[%s326 + $0x148] sm:$0x3]
        %v396 = vld [vmem:[%s326 + $0x150] sm:$0xff]
        %v397 = vld [vmem:[%s326 + $0x158] sm:$0xff]
        %v398 = vld [vmem:[%s326 + $0x160] sm:$0x3]
        %v399 = vld [vmem:[%s326 + $0x168] sm:$0xff]
        %v400 = vld [vmem:[%s326 + $0x170] sm:$0xff]
        %v401 = vld [vmem:[%s326 + $0x178] sm:$0x3]
        %v402 = vld [vmem:[%s326 + $0x180] sm:$0xff]
        %v403 = vld [vmem:[%s326 + $0x188] sm:$0xff]
        %v404 = vld [vmem:[%s326 + $0x190] sm:$0x3]
        %v405 = vld [vmem:[%s326 + $0x198] sm:$0xff]
        %v406 = vld [vmem:[%s326 + $0x1a0] sm:$0xff]
        %v407 = vld [vmem:[%s326 + $0x1a8] sm:$0x3]
        %vm456 = vcmask 1046528
        %v457 = vrot.slane %v354, 1
        %v458 = vrot.slane %v355, 1
        %v459 = vsel %vm456, %v457, %v458
        %v460 = vrot.slane %v356, 1
        %v461 = vsel %vm456, %v458, %v460
        %v462 = vrot.slane %v357, 1
        %v463 = vrot.slane %v358, 1
        %v464 = vsel %vm456, %v462, %v463
        %v465 = vrot.slane %v359, 1
        %v466 = vsel %vm456, %v463, %v465
        %v467 = vrot.slane %v360, 1
        %v468 = vrot.slane %v361, 1
        %v469 = vsel %vm456, %v467, %v468
        %v470 = vrot.slane %v362, 1
        %v471 = vsel %vm456, %v468, %v470
        %v472 = vrot.slane %v363, 1
        %v473 = vrot.slane %v364, 1
        %v474 = vsel %vm456, %v472, %v473
        %v475 = vrot.slane %v365, 1
        %v476 = vsel %vm456, %v473, %v475
        %v477 = vrot.slane %v366, 1
        %v478 = vrot.slane %v367, 1
        %v479 = vsel %vm456, %v477, %v478
        %v480 = vrot.slane %v368, 1
        %v481 = vsel %vm456, %v478, %v480
        %v482 = vrot.slane %v369, 1
        %v483 = vrot.slane %v370, 1
        %v484 = vsel %vm456, %v482, %v483
        %v485 = vrot.slane %v371, 1
        %v486 = vsel %vm456, %v483, %v485
        %v487 = vrot.slane %v372, 1
        %v488 = vrot.slane %v373, 1
        %v489 = vsel %vm456, %v487, %v488
        %v490 = vrot.slane %v374, 1
        %v491 = vsel %vm456, %v488, %v490
        %v492 = vrot.slane %v375, 1
        %v493 = vrot.slane %v376, 1
        %v494 = vsel %vm456, %v492, %v493
        %v495 = vrot.slane %v377, 1
        %v496 = vsel %vm456, %v493, %v495
        %v497 = vrot.slane %v378, 1
        %v498 = vrot.slane %v379, 1
        %v499 = vsel %vm456, %v497, %v498
        %v500 = vrot.slane %v380, 1
        %v501 = vsel %vm456, %v498, %v500
        %v502 = vrot.slane %v381, 1
        %v503 = vrot.slane %v382, 1
        %v504 = vsel %vm456, %v502, %v503
        %v505 = vrot.slane %v383, 1
        %v506 = vsel %vm456, %v503, %v505
        %v507 = vrot.slane %v384, 1
        %v508 = vrot.slane %v385, 1
        %v509 = vsel %vm456, %v507, %v508
        %v510 = vrot.slane %v386, 1
        %v511 = vsel %vm456, %v508, %v510
        %v512 = vrot.slane %v387, 1
        %v513 = vrot.slane %v388, 1
        %v514 = vsel %vm456, %v512, %v513
        %v515 = vrot.slane %v389, 1
        %v516 = vsel %vm456, %v513, %v515
        %v517 = vrot.slane %v390, 1
        %v518 = vrot.slane %v391, 1
        %v519 = vsel %vm456, %v517, %v518
        %v520 = vrot.slane %v392, 1
        %v521 = vsel %vm456, %v518, %v520
        %v522 = vrot.slane %v393, 1
        %v523 = vrot.slane %v394, 1
        %v524 = vsel %vm456, %v522, %v523
        %v525 = vrot.slane %v395, 1
        %v526 = vsel %vm456, %v523, %v525
        %v527 = vrot.slane %v396, 1
        %v528 = vrot.slane %v397, 1
        %v529 = vsel %vm456, %v527, %v528
        %v530 = vrot.slane %v398, 1
        %v531 = vsel %vm456, %v528, %v530
        %v532 = vrot.slane %v399, 1
        %v533 = vrot.slane %v400, 1
        %v534 = vsel %vm456, %v532, %v533
        %v535 = vrot.slane %v401, 1
        %v536 = vsel %vm456, %v533, %v535
        %vm569 = vcmask 1045504
        %v570 = vrot.slane %v354, 2
        %v571 = vrot.slane %v355, 2
        %v572 = vsel %vm569, %v570, %v571
        %v573 = vrot.slane %v356, 2
        %v574 = vsel %vm569, %v571, %v573
        %v575 = vrot.slane %v357, 2
        %v576 = vrot.slane %v358, 2
        %v577 = vsel %vm569, %v575, %v576
        %v578 = vrot.slane %v359, 2
        %v579 = vsel %vm569, %v576, %v578
        %v580 = vrot.slane %v360, 2
        %v581 = vrot.slane %v361, 2
        %v582 = vsel %vm569, %v580, %v581
        %v583 = vrot.slane %v362, 2
        %v584 = vsel %vm569, %v581, %v583
        %v585 = vrot.slane %v363, 2
        %v586 = vrot.slane %v364, 2
        %v587 = vsel %vm569, %v585, %v586
        %v588 = vrot.slane %v365, 2
        %v589 = vsel %vm569, %v586, %v588
        %v590 = vrot.slane %v366, 2
        %v591 = vrot.slane %v367, 2
        %v592 = vsel %vm569, %v590, %v591
        %v593 = vrot.slane %v368, 2
        %v594 = vsel %vm569, %v591, %v593
        %v595 = vrot.slane %v369, 2
        %v596 = vrot.slane %v370, 2
        %v597 = vsel %vm569, %v595, %v596
        %v598 = vrot.slane %v371, 2
        %v599 = vsel %vm569, %v596, %v598
        %v600 = vrot.slane %v372, 2
        %v601 = vrot.slane %v373, 2
        %v602 = vsel %vm569, %v600, %v601
        %v603 = vrot.slane %v374, 2
        %v604 = vsel %vm569, %v601, %v603
        %v605 = vrot.slane %v375, 2
        %v606 = vrot.slane %v376, 2
        %v607 = vsel %vm569, %v605, %v606
        %v608 = vrot.slane %v377, 2
        %v609 = vsel %vm569, %v606, %v608
        %v610 = vrot.slane %v378, 2
        %v611 = vrot.slane %v379, 2
        %v612 = vsel %vm569, %v610, %v611
        %v613 = vrot.slane %v380, 2
        %v614 = vsel %vm569, %v611, %v613
        %v615 = vrot.slane %v381, 2
        %v616 = vrot.slane %v382, 2
        %v617 = vsel %vm569, %v615, %v616
        %v618 = vrot.slane %v383, 2
        %v619 = vsel %vm569, %v616, %v618
        %v620 = vrot.slane %v384, 2
        %v621 = vrot.slane %v385, 2
        %v622 = vsel %vm569, %v620, %v621
        %v623 = vrot.slane %v386, 2
        %v624 = vsel %vm569, %v621, %v623
        %v625 = vrot.slane %v387, 2
        %v626 = vrot.slane %v388, 2
        %v627 = vsel %vm569, %v625, %v626
        %v628 = vrot.slane %v389, 2
        %v629 = vsel %vm569, %v626, %v628
        %v630 = vrot.slane %v390, 2
        %v631 = vrot.slane %v391, 2
        %v632 = vsel %vm569, %v630, %v631
        %v633 = vrot.slane %v392, 2
        %v634 = vsel %vm569, %v631, %v633
        %v635 = vrot.slane %v393, 2
        %v636 = vrot.slane %v394, 2
        %v637 = vsel %vm569, %v635, %v636
        %v638 = vrot.slane %v395, 2
        %v639 = vsel %vm569, %v636, %v638
        %v640 = vrot.slane %v396, 2
        %v641 = vrot.slane %v397, 2
        %v642 = vsel %vm569, %v640, %v641
        %v643 = vrot.slane %v398, 2
        %v644 = vsel %vm569, %v641, %v643
        %v645 = vrot.slane %v399, 2
        %v646 = vrot.slane %v400, 2
        %v647 = vsel %vm569, %v645, %v646
        %v648 = vrot.slane %v401, 2
        %v649 = vsel %vm569, %v646, %v648
        %v685 = vrot.slane %v402, 1
        %v686 = vrot.slane %v403, 1
        %v687 = vsel %vm456, %v685, %v686
        %v688 = vrot.slane %v404, 1
        %v689 = vsel %vm456, %v686, %v688
        %v692 = vrot.slane %v402, 2
        %v693 = vrot.slane %v403, 2
        %v694 = vsel %vm569, %v692, %v693
        %v695 = vrot.slane %v404, 2
        %v696 = vsel %vm569, %v693, %v695
        %v702 = vrot.slane %v405, 1
        %v703 = vrot.slane %v406, 1
        %v704 = vsel %vm456, %v702, %v703
        %v705 = vrot.slane %v407, 1
        %v706 = vsel %vm456, %v703, %v705
        %v709 = vrot.slane %v405, 2
        %v710 = vrot.slane %v406, 2
        %v711 = vsel %vm569, %v709, %v710
        %v712 = vrot.slane %v407, 2
        %v713 = vsel %vm569, %v710, %v712
        %v716 = vld [vmem:[%s1] sm:$0xff]
        %v717 = vld [vmem:[%s1 + $0x8] sm:$0xff]
        %v718 = vld [vmem:[%s1 + $0x10] sm:$0xff]
        %v719 = vld [vmem:[%s1 + $0x18] sm:$0xff]
        %v720 = vld [vmem:[%s1 + $0x20] sm:$0xff]
        %v721 = vld [vmem:[%s1 + $0x28] sm:$0xff]
        %v722 = vld [vmem:[%s1 + $0x30] sm:$0xff]
        %v723 = vld [vmem:[%s1 + $0x38] sm:$0xff]
        %v724 = vld [vmem:[%s1 + $0x40] sm:$0xff]
        %v725 = vld [vmem:[%s1 + $0x48] sm:$0xff]
        %v726 = vld [vmem:[%s1 + $0x50] sm:$0xff]
        %v727 = vld [vmem:[%s1 + $0x58] sm:$0xff]
        %v728 = vld [vmem:[%s1 + $0x60] sm:$0xff]
        %v729 = vld [vmem:[%s1 + $0x68] sm:$0xff]
        %v730 = vld [vmem:[%s1 + $0x70] sm:$0xff]
        %v731 = vld [vmem:[%s1 + $0x78] sm:$0xff]
        %v732 = vld [vmem:[%s1 + $0x80] sm:$0xff]
        %v733 = vld [vmem:[%s1 + $0x88] sm:$0xff]
        %v734 = vld [vmem:[%s1 + $0x90] sm:$0xff]
        %v735 = vld [vmem:[%s1 + $0x98] sm:$0xff]
        %v736 = vld [vmem:[%s1 + $0xa0] sm:$0xff]
        %v737 = vld [vmem:[%s1 + $0xa8] sm:$0xff]
        %v738 = vld [vmem:[%s1 + $0xb0] sm:$0xff]
        %v739 = vld [vmem:[%s1 + $0xb8] sm:$0xff]
        %v740 = vld [vmem:[%s1 + $0xc0] sm:$0xff]
        %v741 = vld [vmem:[%s1 + $0xc8] sm:$0xff]
        %v742 = vld [vmem:[%s1 + $0xd0] sm:$0xff]
        %v743 = vld [vmem:[%s1 + $0xd8] sm:$0xff]
        %v744 = vld [vmem:[%s1 + $0xe0] sm:$0xff]
        %v745 = vld [vmem:[%s1 + $0xe8] sm:$0xff]
        %v746 = vld [vmem:[%s1 + $0xf0] sm:$0xff]
        %v747 = vld [vmem:[%s1 + $0xf8] sm:$0xff]
        %v748 = vld [vmem:[%s1 + $0x100] sm:$0xff]
        %v749 = vld [vmem:[%s1 + $0x108] sm:$0xff]
        %v750 = vld [vmem:[%s1 + $0x110] sm:$0xff]
        %v751 = vld [vmem:[%s1 + $0x118] sm:$0xff]
        %v752 = vld [vmem:[%s1 + $0x120] sm:$0xff]
        %v753 = vld [vmem:[%s1 + $0x128] sm:$0xff]
        %v754 = vld [vmem:[%s1 + $0x130] sm:$0xff]
        %v755 = vld [vmem:[%s1 + $0x138] sm:$0xff]
        %v756 = vld [vmem:[%s1 + $0x140] sm:$0xff]
        %v757 = vld [vmem:[%s1 + $0x148] sm:$0xff]
        %v758 = vld [vmem:[%s1 + $0x150] sm:$0xff]
        %v759 = vld [vmem:[%s1 + $0x158] sm:$0xff]
        %v760 = vld [vmem:[%s1 + $0x160] sm:$0xff]
        %v761 = vld [vmem:[%s1 + $0x168] sm:$0xff]
        %v762 = vld [vmem:[%s1 + $0x170] sm:$0xff]
        %v763 = vld [vmem:[%s1 + $0x178] sm:$0xff]
        %v764 = vld [vmem:[%s1 + $0x180] sm:$0xff]
        %v765 = vld [vmem:[%s1 + $0x188] sm:$0xff]
        %v766 = vld [vmem:[%s1 + $0x190] sm:$0xff]
        %v767 = vld [vmem:[%s1 + $0x198] sm:$0xff]
        %v768 = vld [vmem:[%s1 + $0x1a0] sm:$0xff]
        %v769 = vld [vmem:[%s1 + $0x1a8] sm:$0xff]
        %v770 = vld [vmem:[%s1 + $0x1b0] sm:$0xff]
        %v771 = vld [vmem:[%s1 + $0x1b8] sm:$0xff]
        %v772 = vld [vmem:[%s1 + $0x1c0] sm:$0xff]
        %v773 = vld [vmem:[%s1 + $0x1c8] sm:$0xff]
        %v774 = vld [vmem:[%s1 + $0x1d0] sm:$0xff]
        %v775 = vld [vmem:[%s1 + $0x1d8] sm:$0xff]
        %v776 = vld [vmem:[%s1 + $0x1e0] sm:$0xff]
        %v777 = vld [vmem:[%s1 + $0x1e8] sm:$0xff]
        %v778 = vld [vmem:[%s1 + $0x1f0] sm:$0xff]
        %v779 = vld [vmem:[%s1 + $0x1f8] sm:$0xff]
        %v780 = vld [vmem:[%s1 + $0x200] sm:$0xff]
        %v781 = vld [vmem:[%s1 + $0x208] sm:$0xff]
        %v782 = vld [vmem:[%s1 + $0x210] sm:$0xff]
        %v783 = vld [vmem:[%s1 + $0x218] sm:$0xff]
        %v784 = vld [vmem:[%s1 + $0x220] sm:$0xff]
        %v785 = vld [vmem:[%s1 + $0x228] sm:$0xff]
        %v786 = vld [vmem:[%s1 + $0x230] sm:$0xff]
        %v787 = vld [vmem:[%s1 + $0x238] sm:$0xff]
        %v788 = vld [vmem:[%s1 + $0x240] sm:$0xff]
        %v789 = vld [vmem:[%s1 + $0x248] sm:$0xff]
        %v790 = vld [vmem:[%s1 + $0x250] sm:$0xff]
        %v791 = vld [vmem:[%s1 + $0x258] sm:$0xff]
        %v792 = vld [vmem:[%s1 + $0x260] sm:$0xff]
        %v793 = vld [vmem:[%s1 + $0x268] sm:$0xff]
        %v794 = vld [vmem:[%s1 + $0x270] sm:$0xff]
        %v795 = vld [vmem:[%s1 + $0x278] sm:$0xff]
        %v796 = vld [vmem:[%s1 + $0x280] sm:$0xff]
        %v797 = vld [vmem:[%s1 + $0x288] sm:$0xff]
        %v798 = vld [vmem:[%s1 + $0x290] sm:$0xff]
        %v799 = vld [vmem:[%s1 + $0x298] sm:$0xff]
        %v800 = vld [vmem:[%s1 + $0x2a0] sm:$0xff]
        %v801 = vld [vmem:[%s1 + $0x2a8] sm:$0xff]
        %v802 = vld [vmem:[%s1 + $0x2b0] sm:$0xff]
        %v803 = vld [vmem:[%s1 + $0x2b8] sm:$0xff]
        %v804 = vld [vmem:[%s1 + $0x2c0] sm:$0xff]
        %v805 = vld [vmem:[%s1 + $0x2c8] sm:$0xff]
        %v806 = vld [vmem:[%s1 + $0x2d0] sm:$0xff]
        %v807 = vld [vmem:[%s1 + $0x2d8] sm:$0xff]
        %v808 = vld [vmem:[%s1 + $0x2e0] sm:$0xff]
        %v809 = vld [vmem:[%s1 + $0x2e8] sm:$0xff]
        %v810 = vld [vmem:[%s1 + $0x2f0] sm:$0xff]
        %v811 = vld [vmem:[%s1 + $0x2f8] sm:$0xff]
        %v812 = vld [vmem:[%s1 + $0x300] sm:$0xff]
        %v813 = vld [vmem:[%s1 + $0x308] sm:$0xff]
        %v814 = vld [vmem:[%s1 + $0x310] sm:$0xff]
        %v815 = vld [vmem:[%s1 + $0x318] sm:$0xff]
        %v816 = vld [vmem:[%s1 + $0x320] sm:$0xff]
        %v817 = vld [vmem:[%s1 + $0x328] sm:$0xff]
        %v818 = vld [vmem:[%s1 + $0x330] sm:$0xff]
        %v819 = vld [vmem:[%s1 + $0x338] sm:$0xff]
        %v820 = vld [vmem:[%s1 + $0x340] sm:$0xff]
        %v821 = vld [vmem:[%s1 + $0x348] sm:$0xff]
        %v822 = vld [vmem:[%s1 + $0x350] sm:$0xff]
        %v823 = vld [vmem:[%s1 + $0x358] sm:$0xff]
        %v824 = vld [vmem:[%s1 + $0x360] sm:$0xff]
        %v825 = vld [vmem:[%s1 + $0x368] sm:$0xff]
        %v826 = vld [vmem:[%s1 + $0x370] sm:$0xff]
        %v827 = vld [vmem:[%s1 + $0x378] sm:$0xff]
        %v828 = vld [vmem:[%s1 + $0x380] sm:$0xff]
        %v829 = vld [vmem:[%s1 + $0x388] sm:$0xff]
        %v830 = vld [vmem:[%s1 + $0x390] sm:$0xff]
        %v831 = vld [vmem:[%s1 + $0x398] sm:$0xff]
        %v832 = vld [vmem:[%s1 + $0x3a0] sm:$0xff]
        %v833 = vld [vmem:[%s1 + $0x3a8] sm:$0xff]
        %v834 = vld [vmem:[%s1 + $0x3b0] sm:$0xff]
        %v835 = vld [vmem:[%s1 + $0x3b8] sm:$0xff]
        %v836 = vld [vmem:[%s1 + $0x3c0] sm:$0xff]
        %v837 = vld [vmem:[%s1 + $0x3c8] sm:$0xff]
        %v838 = vld [vmem:[%s1 + $0x3d0] sm:$0xff]
        %v839 = vld [vmem:[%s1 + $0x3d8] sm:$0xff]
        %v840 = vld [vmem:[%s1 + $0x3e0] sm:$0xff]
        %v841 = vld [vmem:[%s1 + $0x3e8] sm:$0xff]
        %v842 = vld [vmem:[%s1 + $0x3f0] sm:$0xff]
        %v843 = vld [vmem:[%s1 + $0x3f8] sm:$0xff]
        %v844 = vld [vmem:[%s1 + $0x400] sm:$0xff]
        %v845 = vld [vmem:[%s1 + $0x408] sm:$0xff]
        %v846 = vld [vmem:[%s1 + $0x410] sm:$0xff]
        %v847 = vld [vmem:[%s1 + $0x418] sm:$0xff]
        %v848 = vld [vmem:[%s1 + $0x420] sm:$0xff]
        %v849 = vld [vmem:[%s1 + $0x428] sm:$0xff]
        %v850 = vld [vmem:[%s1 + $0x430] sm:$0xff]
        %v851 = vld [vmem:[%s1 + $0x438] sm:$0xff]
        %v852 = vld [vmem:[%s1 + $0x440] sm:$0xff]
        %v853 = vld [vmem:[%s1 + $0x448] sm:$0xff]
        %v854 = vld [vmem:[%s1 + $0x450] sm:$0xff]
        %v855 = vld [vmem:[%s1 + $0x458] sm:$0xff]
        %v856 = vld [vmem:[%s1 + $0x460] sm:$0xff]
        %v857 = vld [vmem:[%s1 + $0x468] sm:$0xff]
        %v858 = vld [vmem:[%s1 + $0x470] sm:$0xff]
        %v859 = vld [vmem:[%s1 + $0x478] sm:$0xff]
        %v860 = vld [vmem:[%s2] sm:$0x1]
        %v862 = vlaneseq
        %v863 = vshrl.u32 %v862, 7
        %v864 = vsub.s32 0, %v863
        %v865 = vrot.slane %v860, %v864
        %867 = vmatprep.subr.mxu0 0.0
        %868 = vmatpush1.msra.mxu0 %v716
        %869 = vmatprep.subr.mxu0 0.0
        %870 = vmatpush1.msra.mxu0 %v717
        %871 = vmatprep.subr.mxu0 0.0
        %872 = vmatpush1.msra.mxu0 %v718
        %873 = vmatprep.subr.mxu0 0.0
        %874 = vmatpush1.msra.mxu0 %v719
        %875 = vmatprep.subr.mxu0 0.0
        %876 = vmatpush1.msra.mxu0 %v720
        %877 = vmatprep.subr.mxu0 0.0
        %878 = vmatpush1.msra.mxu0 %v721
        %879 = vmatprep.subr.mxu0 0.0
        %880 = vmatpush1.msra.mxu0 %v722
        %881 = vmatprep.subr.mxu0 0.0
        %882 = vmatpush1.msra.mxu0 %v723
        %883 = vmatprep.subr.mxu0 0.0
        %884 = vmatpush1.msra.mxu0 %v724
        %885 = vmatprep.subr.mxu0 0.0
        %886 = vmatpush1.msra.mxu0 %v725
        %887 = vmatprep.subr.mxu0 0.0
        %888 = vmatpush1.msra.mxu0 %v726
        %889 = vmatprep.subr.mxu0 0.0
        %890 = vmatpush1.msra.mxu0 %v727
        %891 = vmatprep.subr.mxu0 0.0
        %892 = vmatpush1.msra.mxu0 %v728
        %893 = vmatprep.subr.mxu0 0.0
        %894 = vmatpush1.msra.mxu0 %v729
        %895 = vmatprep.subr.mxu0 0.0
        %896 = vmatpush1.msra.mxu0 %v730
        %897 = vmatprep.subr.mxu0 0.0
        %898 = vmatpush1.msra.mxu0 %v731
        %899 = vmatprep.subr.mxu0 0.0
        %900 = vmatpush1.msra.mxu0 %v732
        %901 = vmatprep.subr.mxu0 0.0
        %902 = vmatpush1.msra.mxu0 %v733
        %903 = vmatprep.subr.mxu0 0.0
        %904 = vmatpush1.msra.mxu0 %v734
        %905 = vmatprep.subr.mxu0 0.0
        %906 = vmatpush1.msra.mxu0 %v735
        %907 = vmatprep.subr.mxu0 0.0
        %908 = vmatpush1.msra.mxu0 %v736
        %909 = vmatprep.subr.mxu0 0.0
        %910 = vmatpush1.msra.mxu0 %v737
        %911 = vmatprep.subr.mxu0 0.0
        %912 = vmatpush1.msra.mxu0 %v738
        %913 = vmatprep.subr.mxu0 0.0
        %914 = vmatpush1.msra.mxu0 %v739
        %915 = vmatprep.subr.mxu0 0.0
        %916 = vmatpush1.msra.mxu0 %v740
        %917 = vmatprep.subr.mxu0 0.0
        %918 = vmatpush1.msra.mxu0 %v741
        %919 = vmatprep.subr.mxu0 0.0
        %920 = vmatpush1.msra.mxu0 %v742
        %921 = vmatprep.subr.mxu0 0.0
        %922 = vmatpush1.msra.mxu0 %v743
        %923 = vmatprep.subr.mxu0 0.0
        %924 = vmatpush1.msra.mxu0 %v744
        %925 = vmatprep.subr.mxu0 0.0
        %926 = vmatpush1.msra.mxu0 %v745
        %927 = vmatprep.subr.mxu0 0.0
        %928 = vmatpush1.msra.mxu0 %v746
        %929 = vmatprep.subr.mxu0 0.0
        %930 = vmatpush1.msra.mxu0 %v747
        %931 = vmatprep.mubr.f32.mxu0 %v459
        %932 = vmatmul.mubr.f32.gmra.mrb[0].mxu0 %v354
        %v933 = vpop.f32.mrb[0].mxu0
        %v934 = vadd.f32 %v865, %v933
        %v935 = vpop.f32.mrb[0].mxu0
        %936 = vmatprep.mubr.f32.mxu0 %v461
        %937 = vmatmul.mubr.f32.gmra.mrb[0].mxu0 %v355
        %v938 = vpop.f32.mrb[0].mxu0
        %v939 = vadd.f32 %v865, %v938
        %v940 = vpop.f32.mrb[0].mxu0
        %941 = vmatprep.mubr.f32.mxu0 %v464
        %942 = vmatmul.mubr.f32.gmra.mrb[0].mxu0 %v357
        %v943 = vpop.f32.mrb[0].mxu0
        %v944 = vadd.f32 %v865, %v943
        %v945 = vpop.f32.mrb[0].mxu0
        %946 = vmatprep.mubr.f32.mxu0 %v466
        %947 = vmatmul.mubr.f32.gmra.mrb[0].mxu0 %v358
        %v948 = vpop.f32.mrb[0].mxu0
        %v949 = vadd.f32 %v865, %v948
        %v950 = vpop.f32.mrb[0].mxu0
        %951 = vmatprep.mubr.f32.mxu0 %v469
        %952 = vmatmul.mubr.f32.gmra.mrb[0].mxu0 %v360
        %v953 = vpop.f32.mrb[0].mxu0
        %v954 = vadd.f32 %v865, %v953
        %v955 = vpop.f32.mrb[0].mxu0
        %956 = vmatprep.mubr.f32.mxu0 %v471
        %957 = vmatmul.mubr.f32.gmra.mrb[0].mxu0 %v361
        %v958 = vpop.f32.mrb[0].mxu0
        %v959 = vadd.f32 %v865, %v958
        %v960 = vpop.f32.mrb[0].mxu0
        %961 = vmatprep.mubr.f32.mxu0 %v474
        %962 = vmatmul.mubr.f32.gmra.mrb[0].mxu0 %v363
        %v963 = vpop.f32.mrb[0].mxu0
        %v964 = vadd.f32 %v865, %v963
        %v965 = vpop.f32.mrb[0].mxu0
        %966 = vmatprep.mubr.f32.mxu0 %v476
        %967 = vmatmul.mubr.f32.gmra.mrb[0].mxu0 %v364
        %v968 = vpop.f32.mrb[0].mxu0
        %v969 = vadd.f32 %v865, %v968
        %v970 = vpop.f32.mrb[0].mxu0
        %971 = vmatprep.mubr.f32.mxu0 %v479
        %972 = vmatmul.mubr.f32.gmra.mrb[0].mxu0 %v366
        %v973 = vpop.f32.mrb[0].mxu0
        %v974 = vadd.f32 %v865, %v973
        %v975 = vpop.f32.mrb[0].mxu0
        %976 = vmatprep.mubr.f32.mxu0 %v481
        %977 = vmatmul.mubr.f32.gmra.mrb[0].mxu0 %v367
        %v978 = vpop.f32.mrb[0].mxu0
        %v979 = vadd.f32 %v865, %v978
        %v980 = vpop.f32.mrb[0].mxu0
        %981 = vmatprep.mubr.f32.mxu0 %v484
        %982 = vmatmul.mubr.f32.gmra.mrb[0].mxu0 %v369
        %v983 = vpop.f32.mrb[0].mxu0
        %v984 = vadd.f32 %v865, %v983
        %v985 = vpop.f32.mrb[0].mxu0
        %986 = vmatprep.mubr.f32.mxu0 %v486
        %987 = vmatmul.mubr.f32.gmra.mrb[0].mxu0 %v370
        %v988 = vpop.f32.mrb[0].mxu0
        %v989 = vadd.f32 %v865, %v988
        %v990 = vpop.f32.mrb[0].mxu0
        %991 = vmatprep.mubr.f32.mxu0 %v489
        %992 = vmatmul.mubr.f32.gmra.mrb[0].mxu0 %v372
        %v993 = vpop.f32.mrb[0].mxu0
        %v994 = vadd.f32 %v865, %v993
        %v995 = vpop.f32.mrb[0].mxu0
        %996 = vmatprep.mubr.f32.mxu0 %v491
        %997 = vmatmul.mubr.f32.gmra.mrb[0].mxu0 %v373
        %v998 = vpop.f32.mrb[0].mxu0
        %v999 = vadd.f32 %v865, %v998
        %v1000 = vpop.f32.mrb[0].mxu0
        %1001 = vmatprep.mubr.f32.mxu0 %v494
        %1002 = vmatmul.mubr.f32.gmra.mrb[0].mxu0 %v375
        %v1003 = vpop.f32.mrb[0].mxu0
        %v1004 = vadd.f32 %v865, %v1003
        %v1005 = vpop.f32.mrb[0].mxu0
        %1006 = vmatprep.mubr.f32.mxu0 %v496
        %1007 = vmatmul.mubr.f32.gmra.mrb[0].mxu0 %v376
        %v1008 = vpop.f32.mrb[0].mxu0
        %v1009 = vadd.f32 %v865, %v1008
        %v1010 = vpop.f32.mrb[0].mxu0
        %1011 = vmatprep.mubr.f32.mxu0 %v499
        %1012 = vmatmul.mubr.f32.gmra.mrb[0].mxu0 %v378
        %v1013 = vpop.f32.mrb[0].mxu0
        %v1014 = vadd.f32 %v865, %v1013
        %v1015 = vpop.f32.mrb[0].mxu0
        %1016 = vmatprep.mubr.f32.mxu0 %v501
        %1017 = vmatmul.mubr.f32.gmra.mrb[0].mxu0 %v379
        %v1018 = vpop.f32.mrb[0].mxu0
        %v1019 = vadd.f32 %v865, %v1018
        %v1020 = vpop.f32.mrb[0].mxu0
        %1021 = vmatprep.mubr.f32.mxu0 %v504
        %1022 = vmatmul.mubr.f32.gmra.mrb[0].mxu0 %v381
        %v1023 = vpop.f32.mrb[0].mxu0
        %v1024 = vadd.f32 %v865, %v1023
        %v1025 = vpop.f32.mrb[0].mxu0
        %1026 = vmatprep.mubr.f32.mxu0 %v506
        %1027 = vmatmul.mubr.f32.gmra.mrb[0].mxu0 %v382
        %v1028 = vpop.f32.mrb[0].mxu0
        %v1029 = vadd.f32 %v865, %v1028
        %v1030 = vpop.f32.mrb[0].mxu0
        %1031 = vmatprep.mubr.f32.mxu0 %v509
        %1032 = vmatmul.mubr.f32.gmra.mrb[0].mxu0 %v384
        %v1033 = vpop.f32.mrb[0].mxu0
        %v1034 = vadd.f32 %v865, %v1033
        %v1035 = vpop.f32.mrb[0].mxu0
        %1036 = vmatprep.mubr.f32.mxu0 %v511
        %1037 = vmatmul.mubr.f32.gmra.mrb[0].mxu0 %v385
        %v1038 = vpop.f32.mrb[0].mxu0
        %v1039 = vadd.f32 %v865, %v1038
        %v1040 = vpop.f32.mrb[0].mxu0
        %1041 = vmatprep.mubr.f32.mxu0 %v514
        %1042 = vmatmul.mubr.f32.gmra.mrb[0].mxu0 %v387
        %v1043 = vpop.f32.mrb[0].mxu0
        %v1044 = vadd.f32 %v865, %v1043
        %v1045 = vpop.f32.mrb[0].mxu0
        %1046 = vmatprep.mubr.f32.mxu0 %v516
        %1047 = vmatmul.mubr.f32.gmra.mrb[0].mxu0 %v388
        %v1048 = vpop.f32.mrb[0].mxu0
        %v1049 = vadd.f32 %v865, %v1048
        %v1050 = vpop.f32.mrb[0].mxu0
        %1051 = vmatprep.mubr.f32.mxu0 %v519
        %1052 = vmatmul.mubr.f32.gmra.mrb[0].mxu0 %v390
        %v1053 = vpop.f32.mrb[0].mxu0
        %v1054 = vadd.f32 %v865, %v1053
        %v1055 = vpop.f32.mrb[0].mxu0
        %1056 = vmatprep.mubr.f32.mxu0 %v521
        %1057 = vmatmul.mubr.f32.gmra.mrb[0].mxu0 %v391
        %v1058 = vpop.f32.mrb[0].mxu0
        %v1059 = vadd.f32 %v865, %v1058
        %v1060 = vpop.f32.mrb[0].mxu0
        %1061 = vmatprep.mubr.f32.mxu0 %v524
        %1062 = vmatmul.mubr.f32.gmra.mrb[0].mxu0 %v393
        %v1063 = vpop.f32.mrb[0].mxu0
        %v1064 = vadd.f32 %v865, %v1063
        %v1065 = vpop.f32.mrb[0].mxu0
        %1066 = vmatprep.mubr.f32.mxu0 %v526
        %1067 = vmatmul.mubr.f32.gmra.mrb[0].mxu0 %v394
        %v1068 = vpop.f32.mrb[0].mxu0
        %v1069 = vadd.f32 %v865, %v1068
        %v1070 = vpop.f32.mrb[0].mxu0
        %1071 = vmatprep.mubr.f32.mxu0 %v529
        %1072 = vmatmul.mubr.f32.gmra.mrb[0].mxu0 %v396
        %v1073 = vpop.f32.mrb[0].mxu0
        %v1074 = vadd.f32 %v865, %v1073
        %v1075 = vpop.f32.mrb[0].mxu0
        %1076 = vmatprep.mubr.f32.mxu0 %v531
        %1077 = vmatmul.mubr.f32.gmra.mrb[0].mxu0 %v397
        %v1078 = vpop.f32.mrb[0].mxu0
        %v1079 = vadd.f32 %v865, %v1078
        %v1080 = vpop.f32.mrb[0].mxu0
        %1081 = vmatprep.mubr.f32.mxu0 %v534
        %1082 = vmatmul.mubr.f32.gmra.mrb[0].mxu0 %v399
        %v1083 = vpop.f32.mrb[0].mxu0
        %v1084 = vadd.f32 %v865, %v1083
        %v1085 = vpop.f32.mrb[0].mxu0
        %1086 = vmatprep.mubr.f32.mxu0 %v536
        %1087 = vmatmul.mubr.f32.gmra.mrb[0].mxu0 %v400
        %v1088 = vpop.f32.mrb[0].mxu0
        %v1089 = vadd.f32 %v865, %v1088
        %v1090 = vpop.f32.mrb[0].mxu0
        %1091 = vdwg.mxu0
        %1092 = vmatprep.subr.mxu0 0.0
        %1093 = vmatpush1.msra.mxu0 %v748
        %1094 = vmatprep.subr.mxu0 0.0
        %1095 = vmatpush1.msra.mxu0 %v749
        %1096 = vmatprep.subr.mxu0 0.0
        %1097 = vmatpush1.msra.mxu0 %v750
        %1098 = vmatprep.subr.mxu0 0.0
        %1099 = vmatpush1.msra.mxu0 %v751
        %1100 = vmatprep.subr.mxu0 0.0
        %1101 = vmatpush1.msra.mxu0 %v752
        %1102 = vmatprep.subr.mxu0 0.0
        %1103 = vmatpush1.msra.mxu0 %v753
        %1104 = vmatprep.subr.mxu0 0.0
        %1105 = vmatpush1.msra.mxu0 %v754
        %1106 = vmatprep.subr.mxu0 0.0
        %1107 = vmatpush1.msra.mxu0 %v755
        %1108 = vmatprep.subr.mxu0 0.0
        %1109 = vmatpush1.msra.mxu0 %v756
        %1110 = vmatprep.subr.mxu0 0.0
        %1111 = vmatpush1.msra.mxu0 %v757
        %1112 = vmatprep.subr.mxu0 0.0
        %1113 = vmatpush1.msra.mxu0 %v758
        %1114 = vmatprep.subr.mxu0 0.0
        %1115 = vmatpush1.msra.mxu0 %v759
        %1116 = vmatprep.subr.mxu0 0.0
        %1117 = vmatpush1.msra.mxu0 %v760
        %1118 = vmatprep.subr.mxu0 0.0
        %1119 = vmatpush1.msra.mxu0 %v761
        %1120 = vmatprep.subr.mxu0 0.0
        %1121 = vmatpush1.msra.mxu0 %v762
        %1122 = vmatprep.subr.mxu0 0.0
        %1123 = vmatpush1.msra.mxu0 %v763
        %1124 = vmatprep.subr.mxu0 0.0
        %1125 = vmatpush1.msra.mxu0 %v764
        %1126 = vmatprep.subr.mxu0 0.0
        %1127 = vmatpush1.msra.mxu0 %v765
        %1128 = vmatprep.subr.mxu0 0.0
        %1129 = vmatpush1.msra.mxu0 %v766
        %1130 = vmatprep.subr.mxu0 0.0
        %1131 = vmatpush1.msra.mxu0 %v767
        %1132 = vmatprep.subr.mxu0 0.0
        %1133 = vmatpush1.msra.mxu0 %v768
        %1134 = vmatprep.subr.mxu0 0.0
        %1135 = vmatpush1.msra.mxu0 %v769
        %1136 = vmatprep.subr.mxu0 0.0
        %1137 = vmatpush1.msra.mxu0 %v770
        %1138 = vmatprep.subr.mxu0 0.0
        %1139 = vmatpush1.msra.mxu0 %v771
        %1140 = vmatprep.subr.mxu0 0.0
        %1141 = vmatpush1.msra.mxu0 %v772
        %1142 = vmatprep.subr.mxu0 0.0
        %1143 = vmatpush1.msra.mxu0 %v773
        %1144 = vmatprep.subr.mxu0 0.0
        %1145 = vmatpush1.msra.mxu0 %v774
        %1146 = vmatprep.subr.mxu0 0.0
        %1147 = vmatpush1.msra.mxu0 %v775
        %1148 = vmatprep.subr.mxu0 0.0
        %1149 = vmatpush1.msra.mxu0 %v776
        %1150 = vmatprep.subr.mxu0 0.0
        %1151 = vmatpush1.msra.mxu0 %v777
        %1152 = vmatprep.subr.mxu0 0.0
        %1153 = vmatpush1.msra.mxu0 %v778
        %1154 = vmatprep.subr.mxu0 0.0
        %1155 = vmatpush1.msra.mxu0 %v779
        %1156 = vmatprep.mubr.f32.mxu0 %v357
        %1157 = vmatmul.mubr.f32.gmra.mrb[0].mxu0 %v572
        %v1158 = vpop.f32.mrb[0].mxu0
        %v1159 = vadd.f32 %v934, %v1158
        %v1160 = vpop.f32.mrb[0].mxu0
        %1161 = vmatprep.mubr.f32.mxu0 %v358
        %1162 = vmatmul.mubr.f32.gmra.mrb[0].mxu0 %v574
        %v1163 = vpop.f32.mrb[0].mxu0
        %v1164 = vadd.f32 %v939, %v1163
        %v1165 = vpop.f32.mrb[0].mxu0
        %1166 = vmatprep.mubr.f32.mxu0 %v360
        %1167 = vmatmul.mubr.f32.gmra.mrb[0].mxu0 %v577
        %v1168 = vpop.f32.mrb[0].mxu0
        %v1169 = vadd.f32 %v944, %v1168
        %v1170 = vpop.f32.mrb[0].mxu0
        %1171 = vmatprep.mubr.f32.mxu0 %v361
        %1172 = vmatmul.mubr.f32.gmra.mrb[0].mxu0 %v579
        %v1173 = vpop.f32.mrb[0].mxu0
        %v1174 = vadd.f32 %v949, %v1173
        %v1175 = vpop.f32.mrb[0].mxu0
        %1176 = vmatprep.mubr.f32.mxu0 %v363
        %1177 = vmatmul.mubr.f32.gmra.mrb[0].mxu0 %v582
        %v1178 = vpop.f32.mrb[0].mxu0
        %v1179 = vadd.f32 %v954, %v1178
        %v1180 = vpop.f32.mrb[0].mxu0
        %1181 = vmatprep.mubr.f32.mxu0 %v364
        %1182 = vmatmul.mubr.f32.gmra.mrb[0].mxu0 %v584
        %v1183 = vpop.f32.mrb[0].mxu0
        %v1184 = vadd.f32 %v959, %v1183
        %v1185 = vpop.f32.mrb[0].mxu0
        %1186 = vmatprep.mubr.f32.mxu0 %v366
        %1187 = vmatmul.mubr.f32.gmra.mrb[0].mxu0 %v587
        %v1188 = vpop.f32.mrb[0].mxu0
        %v1189 = vadd.f32 %v964, %v1188
        %v1190 = vpop.f32.mrb[0].mxu0
        %1191 = vmatprep.mubr.f32.mxu0 %v367
        %1192 = vmatmul.mubr.f32.gmra.mrb[0].mxu0 %v589
        %v1193 = vpop.f32.mrb[0].mxu0
        %v1194 = vadd.f32 %v969, %v1193
        %v1195 = vpop.f32.mrb[0].mxu0
        %1196 = vmatprep.mubr.f32.mxu0 %v369
        %1197 = vmatmul.mubr.f32.gmra.mrb[0].mxu0 %v592
        %v1198 = vpop.f32.mrb[0].mxu0
        %v1199 = vadd.f32 %v974, %v1198
        %v1200 = vpop.f32.mrb[0].mxu0
        %1201 = vmatprep.mubr.f32.mxu0 %v370
        %1202 = vmatmul.mubr.f32.gmra.mrb[0].mxu0 %v594
        %v1203 = vpop.f32.mrb[0].mxu0
        %v1204 = vadd.f32 %v979, %v1203
        %v1205 = vpop.f32.mrb[0].mxu0
        %1206 = vmatprep.mubr.f32.mxu0 %v372
        %1207 = vmatmul.mubr.f32.gmra.mrb[0].mxu0 %v597
        %v1208 = vpop.f32.mrb[0].mxu0
        %v1209 = vadd.f32 %v984, %v1208
        %v1210 = vpop.f32.mrb[0].mxu0
        %1211 = vmatprep.mubr.f32.mxu0 %v373
        %1212 = vmatmul.mubr.f32.gmra.mrb[0].mxu0 %v599
        %v1213 = vpop.f32.mrb[0].mxu0
        %v1214 = vadd.f32 %v989, %v1213
        %v1215 = vpop.f32.mrb[0].mxu0
        %1216 = vmatprep.mubr.f32.mxu0 %v375
        %1217 = vmatmul.mubr.f32.gmra.mrb[0].mxu0 %v602
        %v1218 = vpop.f32.mrb[0].mxu0
        %v1219 = vadd.f32 %v994, %v1218
        %v1220 = vpop.f32.mrb[0].mxu0
        %1221 = vmatprep.mubr.f32.mxu0 %v376
        %1222 = vmatmul.mubr.f32.gmra.mrb[0].mxu0 %v604
        %v1223 = vpop.f32.mrb[0].mxu0
        %v1224 = vadd.f32 %v999, %v1223
        %v1225 = vpop.f32.mrb[0].mxu0
        %1226 = vmatprep.mubr.f32.mxu0 %v378
        %1227 = vmatmul.mubr.f32.gmra.mrb[0].mxu0 %v607
        %v1228 = vpop.f32.mrb[0].mxu0
        %v1229 = vadd.f32 %v1004, %v1228
        %v1230 = vpop.f32.mrb[0].mxu0
        %1231 = vmatprep.mubr.f32.mxu0 %v379
        %1232 = vmatmul.mubr.f32.gmra.mrb[0].mxu0 %v609
        %v1233 = vpop.f32.mrb[0].mxu0
        %v1234 = vadd.f32 %v1009, %v1233
        %v1235 = vpop.f32.mrb[0].mxu0
        %1236 = vmatprep.mubr.f32.mxu0 %v381
        %1237 = vmatmul.mubr.f32.gmra.mrb[0].mxu0 %v612
        %v1238 = vpop.f32.mrb[0].mxu0
        %v1239 = vadd.f32 %v1014, %v1238
        %v1240 = vpop.f32.mrb[0].mxu0
        %1241 = vmatprep.mubr.f32.mxu0 %v382
        %1242 = vmatmul.mubr.f32.gmra.mrb[0].mxu0 %v614
        %v1243 = vpop.f32.mrb[0].mxu0
        %v1244 = vadd.f32 %v1019, %v1243
        %v1245 = vpop.f32.mrb[0].mxu0
        %1246 = vmatprep.mubr.f32.mxu0 %v384
        %1247 = vmatmul.mubr.f32.gmra.mrb[0].mxu0 %v617
        %v1248 = vpop.f32.mrb[0].mxu0
        %v1249 = vadd.f32 %v1024, %v1248
        %v1250 = vpop.f32.mrb[0].mxu0
        %1251 = vmatprep.mubr.f32.mxu0 %v385
        %1252 = vmatmul.mubr.f32.gmra.mrb[0].mxu0 %v619
        %v1253 = vpop.f32.mrb[0].mxu0
        %v1254 = vadd.f32 %v1029, %v1253
        %v1255 = vpop.f32.mrb[0].mxu0
        %1256 = vmatprep.mubr.f32.mxu0 %v387
        %1257 = vmatmul.mubr.f32.gmra.mrb[0].mxu0 %v622
        %v1258 = vpop.f32.mrb[0].mxu0
        %v1259 = vadd.f32 %v1034, %v1258
        %v1260 = vpop.f32.mrb[0].mxu0
        %1261 = vmatprep.mubr.f32.mxu0 %v388
        %1262 = vmatmul.mubr.f32.gmra.mrb[0].mxu0 %v624
        %v1263 = vpop.f32.mrb[0].mxu0
        %v1264 = vadd.f32 %v1039, %v1263
        %v1265 = vpop.f32.mrb[0].mxu0
        %1266 = vmatprep.mubr.f32.mxu0 %v390
        %1267 = vmatmul.mubr.f32.gmra.mrb[0].mxu0 %v627
        %v1268 = vpop.f32.mrb[0].mxu0
        %v1269 = vadd.f32 %v1044, %v1268
        %v1270 = vpop.f32.mrb[0].mxu0
        %1271 = vmatprep.mubr.f32.mxu0 %v391
        %1272 = vmatmul.mubr.f32.gmra.mrb[0].mxu0 %v629
        %v1273 = vpop.f32.mrb[0].mxu0
        %v1274 = vadd.f32 %v1049, %v1273
        %v1275 = vpop.f32.mrb[0].mxu0
        %1276 = vmatprep.mubr.f32.mxu0 %v393
        %1277 = vmatmul.mubr.f32.gmra.mrb[0].mxu0 %v632
        %v1278 = vpop.f32.mrb[0].mxu0
        %v1279 = vadd.f32 %v1054, %v1278
        %v1280 = vpop.f32.mrb[0].mxu0
        %1281 = vmatprep.mubr.f32.mxu0 %v394
        %1282 = vmatmul.mubr.f32.gmra.mrb[0].mxu0 %v634
        %v1283 = vpop.f32.mrb[0].mxu0
        %v1284 = vadd.f32 %v1059, %v1283
        %v1285 = vpop.f32.mrb[0].mxu0
        %1286 = vmatprep.mubr.f32.mxu0 %v396
        %1287 = vmatmul.mubr.f32.gmra.mrb[0].mxu0 %v637
        %v1288 = vpop.f32.mrb[0].mxu0
        %v1289 = vadd.f32 %v1064, %v1288
        %v1290 = vpop.f32.mrb[0].mxu0
        %1291 = vmatprep.mubr.f32.mxu0 %v397
        %1292 = vmatmul.mubr.f32.gmra.mrb[0].mxu0 %v639
        %v1293 = vpop.f32.mrb[0].mxu0
        %v1294 = vadd.f32 %v1069, %v1293
        %v1295 = vpop.f32.mrb[0].mxu0
        %1296 = vmatprep.mubr.f32.mxu0 %v399
        %1297 = vmatmul.mubr.f32.gmra.mrb[0].mxu0 %v642
        %v1298 = vpop.f32.mrb[0].mxu0
        %v1299 = vadd.f32 %v1074, %v1298
        %v1300 = vpop.f32.mrb[0].mxu0
        %1301 = vmatprep.mubr.f32.mxu0 %v400
        %1302 = vmatmul.mubr.f32.gmra.mrb[0].mxu0 %v644
        %v1303 = vpop.f32.mrb[0].mxu0
        %v1304 = vadd.f32 %v1079, %v1303
        %v1305 = vpop.f32.mrb[0].mxu0
        %1306 = vmatprep.mubr.f32.mxu0 %v402
        %1307 = vmatmul.mubr.f32.gmra.mrb[0].mxu0 %v647
        %v1308 = vpop.f32.mrb[0].mxu0
        %v1309 = vadd.f32 %v1084, %v1308
        %v1310 = vpop.f32.mrb[0].mxu0
        %1311 = vmatprep.mubr.f32.mxu0 %v403
        %1312 = vmatmul.mubr.f32.gmra.mrb[0].mxu0 %v649
        %v1313 = vpop.f32.mrb[0].mxu0
        %v1314 = vadd.f32 %v1089, %v1313
        %v1315 = vpop.f32.mrb[0].mxu0
        %1316 = vdwg.mxu0
        %1317 = vmatprep.subr.mxu0 0.0
        %1318 = vmatpush1.msra.mxu0 %v780
        %1319 = vmatprep.subr.mxu0 0.0
        %1320 = vmatpush1.msra.mxu0 %v781
        %1321 = vmatprep.subr.mxu0 0.0
        %1322 = vmatpush1.msra.mxu0 %v782
        %1323 = vmatprep.subr.mxu0 0.0
        %1324 = vmatpush1.msra.mxu0 %v783
        %1325 = vmatprep.subr.mxu0 0.0
        %1326 = vmatpush1.msra.mxu0 %v784
        %1327 = vmatprep.subr.mxu0 0.0
        %1328 = vmatpush1.msra.mxu0 %v785
        %1329 = vmatprep.subr.mxu0 0.0
        %1330 = vmatpush1.msra.mxu0 %v786
        %1331 = vmatprep.subr.mxu0 0.0
        %1332 = vmatpush1.msra.mxu0 %v787
        %1333 = vmatprep.subr.mxu0 0.0
        %1334 = vmatpush1.msra.mxu0 %v788
        %1335 = vmatprep.subr.mxu0 0.0
        %1336 = vmatpush1.msra.mxu0 %v789
        %1337 = vmatprep.subr.mxu0 0.0
        %1338 = vmatpush1.msra.mxu0 %v790
        %1339 = vmatprep.subr.mxu0 0.0
        %1340 = vmatpush1.msra.mxu0 %v791
        %1341 = vmatprep.subr.mxu0 0.0
        %1342 = vmatpush1.msra.mxu0 %v792
        %1343 = vmatprep.subr.mxu0 0.0
        %1344 = vmatpush1.msra.mxu0 %v793
        %1345 = vmatprep.subr.mxu0 0.0
        %1346 = vmatpush1.msra.mxu0 %v794
        %1347 = vmatprep.subr.mxu0 0.0
        %1348 = vmatpush1.msra.mxu0 %v795
        %1349 = vmatprep.subr.mxu0 0.0
        %1350 = vmatpush1.msra.mxu0 %v796
        %1351 = vmatprep.subr.mxu0 0.0
        %1352 = vmatpush1.msra.mxu0 %v797
        %1353 = vmatprep.subr.mxu0 0.0
        %1354 = vmatpush1.msra.mxu0 %v798
        %1355 = vmatprep.subr.mxu0 0.0
        %1356 = vmatpush1.msra.mxu0 %v799
        %1357 = vmatprep.subr.mxu0 0.0
        %1358 = vmatpush1.msra.mxu0 %v800
        %1359 = vmatprep.subr.mxu0 0.0
        %1360 = vmatpush1.msra.mxu0 %v801
        %1361 = vmatprep.subr.mxu0 0.0
        %1362 = vmatpush1.msra.mxu0 %v802
        %1363 = vmatprep.subr.mxu0 0.0
        %1364 = vmatpush1.msra.mxu0 %v803
        %1365 = vmatprep.subr.mxu0 0.0
        %1366 = vmatpush1.msra.mxu0 %v804
        %1367 = vmatprep.subr.mxu0 0.0
        %1368 = vmatpush1.msra.mxu0 %v805
        %1369 = vmatprep.subr.mxu0 0.0
        %1370 = vmatpush1.msra.mxu0 %v806
        %1371 = vmatprep.subr.mxu0 0.0
        %1372 = vmatpush1.msra.mxu0 %v807
        %1373 = vmatprep.subr.mxu0 0.0
        %1374 = vmatpush1.msra.mxu0 %v808
        %1375 = vmatprep.subr.mxu0 0.0
        %1376 = vmatpush1.msra.mxu0 %v809
        %1377 = vmatprep.subr.mxu0 0.0
        %1378 = vmatpush1.msra.mxu0 %v810
        %1379 = vmatprep.subr.mxu0 0.0
        %1380 = vmatpush1.msra.mxu0 %v811
        %1381 = vmatprep.mubr.f32.mxu0 %v577
        %1382 = vmatmul.mubr.f32.gmra.mrb[0].mxu0 %v464
        %v1383 = vpop.f32.mrb[0].mxu0
        %v1384 = vadd.f32 %v1159, %v1383
        %v1385 = vpop.f32.mrb[0].mxu0
        %1386 = vmatprep.mubr.f32.mxu0 %v579
        %1387 = vmatmul.mubr.f32.gmra.mrb[0].mxu0 %v466
        %v1388 = vpop.f32.mrb[0].mxu0
        %v1389 = vadd.f32 %v1164, %v1388
        %v1390 = vpop.f32.mrb[0].mxu0
        %1391 = vmatprep.mubr.f32.mxu0 %v582
        %1392 = vmatmul.mubr.f32.gmra.mrb[0].mxu0 %v469
        %v1393 = vpop.f32.mrb[0].mxu0
        %v1394 = vadd.f32 %v1169, %v1393
        %v1395 = vpop.f32.mrb[0].mxu0
        %1396 = vmatprep.mubr.f32.mxu0 %v584
        %1397 = vmatmul.mubr.f32.gmra.mrb[0].mxu0 %v471
        %v1398 = vpop.f32.mrb[0].mxu0
        %v1399 = vadd.f32 %v1174, %v1398
        %v1400 = vpop.f32.mrb[0].mxu0
        %1401 = vmatprep.mubr.f32.mxu0 %v587
        %1402 = vmatmul.mubr.f32.gmra.mrb[0].mxu0 %v474
        %v1403 = vpop.f32.mrb[0].mxu0
        %v1404 = vadd.f32 %v1179, %v1403
        %v1405 = vpop.f32.mrb[0].mxu0
        %1406 = vmatprep.mubr.f32.mxu0 %v589
        %1407 = vmatmul.mubr.f32.gmra.mrb[0].mxu0 %v476
        %v1408 = vpop.f32.mrb[0].mxu0
        %v1409 = vadd.f32 %v1184, %v1408
        %v1410 = vpop.f32.mrb[0].mxu0
        %1411 = vmatprep.mubr.f32.mxu0 %v592
        %1412 = vmatmul.mubr.f32.gmra.mrb[0].mxu0 %v479
        %v1413 = vpop.f32.mrb[0].mxu0
        %v1414 = vadd.f32 %v1189, %v1413
        %v1415 = vpop.f32.mrb[0].mxu0
        %1416 = vmatprep.mubr.f32.mxu0 %v594
        %1417 = vmatmul.mubr.f32.gmra.mrb[0].mxu0 %v481
        %v1418 = vpop.f32.mrb[0].mxu0
        %v1419 = vadd.f32 %v1194, %v1418
        %v1420 = vpop.f32.mrb[0].mxu0
        %1421 = vmatprep.mubr.f32.mxu0 %v597
        %1422 = vmatmul.mubr.f32.gmra.mrb[0].mxu0 %v484
        %v1423 = vpop.f32.mrb[0].mxu0
        %v1424 = vadd.f32 %v1199, %v1423
        %v1425 = vpop.f32.mrb[0].mxu0
        %1426 = vmatprep.mubr.f32.mxu0 %v599
        %1427 = vmatmul.mubr.f32.gmra.mrb[0].mxu0 %v486
        %v1428 = vpop.f32.mrb[0].mxu0
        %v1429 = vadd.f32 %v1204, %v1428
        %v1430 = vpop.f32.mrb[0].mxu0
        %1431 = vmatprep.mubr.f32.mxu0 %v602
        %1432 = vmatmul.mubr.f32.gmra.mrb[0].mxu0 %v489
        %v1433 = vpop.f32.mrb[0].mxu0
        %v1434 = vadd.f32 %v1209, %v1433
        %v1435 = vpop.f32.mrb[0].mxu0
        %1436 = vmatprep.mubr.f32.mxu0 %v604
        %1437 = vmatmul.mubr.f32.gmra.mrb[0].mxu0 %v491
        %v1438 = vpop.f32.mrb[0].mxu0
        %v1439 = vadd.f32 %v1214, %v1438
        %v1440 = vpop.f32.mrb[0].mxu0
        %1441 = vmatprep.mubr.f32.mxu0 %v607
        %1442 = vmatmul.mubr.f32.gmra.mrb[0].mxu0 %v494
        %v1443 = vpop.f32.mrb[0].mxu0
        %v1444 = vadd.f32 %v1219, %v1443
        %v1445 = vpop.f32.mrb[0].mxu0
        %1446 = vmatprep.mubr.f32.mxu0 %v609
        %1447 = vmatmul.mubr.f32.gmra.mrb[0].mxu0 %v496
        %v1448 = vpop.f32.mrb[0].mxu0
        %v1449 = vadd.f32 %v1224, %v1448
        %v1450 = vpop.f32.mrb[0].mxu0
        %1451 = vmatprep.mubr.f32.mxu0 %v612
        %1452 = vmatmul.mubr.f32.gmra.mrb[0].mxu0 %v499
        %v1453 = vpop.f32.mrb[0].mxu0
        %v1454 = vadd.f32 %v1229, %v1453
        %v1455 = vpop.f32.mrb[0].mxu0
        %1456 = vmatprep.mubr.f32.mxu0 %v614
        %1457 = vmatmul.mubr.f32.gmra.mrb[0].mxu0 %v501
        %v1458 = vpop.f32.mrb[0].mxu0
        %v1459 = vadd.f32 %v1234, %v1458
        %v1460 = vpop.f32.mrb[0].mxu0
        %1461 = vmatprep.mubr.f32.mxu0 %v617
        %1462 = vmatmul.mubr.f32.gmra.mrb[0].mxu0 %v504
        %v1463 = vpop.f32.mrb[0].mxu0
        %v1464 = vadd.f32 %v1239, %v1463
        %v1465 = vpop.f32.mrb[0].mxu0
        %1466 = vmatprep.mubr.f32.mxu0 %v619
        %1467 = vmatmul.mubr.f32.gmra.mrb[0].mxu0 %v506
        %v1468 = vpop.f32.mrb[0].mxu0
        %v1469 = vadd.f32 %v1244, %v1468
        %v1470 = vpop.f32.mrb[0].mxu0
        %1471 = vmatprep.mubr.f32.mxu0 %v622
        %1472 = vmatmul.mubr.f32.gmra.mrb[0].mxu0 %v509
        %v1473 = vpop.f32.mrb[0].mxu0
        %v1474 = vadd.f32 %v1249, %v1473
        %v1475 = vpop.f32.mrb[0].mxu0
        %1476 = vmatprep.mubr.f32.mxu0 %v624
        %1477 = vmatmul.mubr.f32.gmra.mrb[0].mxu0 %v511
        %v1478 = vpop.f32.mrb[0].mxu0
        %v1479 = vadd.f32 %v1254, %v1478
        %v1480 = vpop.f32.mrb[0].mxu0
        %1481 = vmatprep.mubr.f32.mxu0 %v627
        %1482 = vmatmul.mubr.f32.gmra.mrb[0].mxu0 %v514
        %v1483 = vpop.f32.mrb[0].mxu0
        %v1484 = vadd.f32 %v1259, %v1483
        %v1485 = vpop.f32.mrb[0].mxu0
        %1486 = vmatprep.mubr.f32.mxu0 %v629
        %1487 = vmatmul.mubr.f32.gmra.mrb[0].mxu0 %v516
        %v1488 = vpop.f32.mrb[0].mxu0
        %v1489 = vadd.f32 %v1264, %v1488
        %v1490 = vpop.f32.mrb[0].mxu0
        %1491 = vmatprep.mubr.f32.mxu0 %v632
        %1492 = vmatmul.mubr.f32.gmra.mrb[0].mxu0 %v519
        %v1493 = vpop.f32.mrb[0].mxu0
        %v1494 = vadd.f32 %v1269, %v1493
        %v1495 = vpop.f32.mrb[0].mxu0
        %1496 = vmatprep.mubr.f32.mxu0 %v634
        %1497 = vmatmul.mubr.f32.gmra.mrb[0].mxu0 %v521
        %v1498 = vpop.f32.mrb[0].mxu0
        %v1499 = vadd.f32 %v1274, %v1498
        %v1500 = vpop.f32.mrb[0].mxu0
        %1501 = vmatprep.mubr.f32.mxu0 %v637
        %1502 = vmatmul.mubr.f32.gmra.mrb[0].mxu0 %v524
        %v1503 = vpop.f32.mrb[0].mxu0
        %v1504 = vadd.f32 %v1279, %v1503
        %v1505 = vpop.f32.mrb[0].mxu0
        %1506 = vmatprep.mubr.f32.mxu0 %v639
        %1507 = vmatmul.mubr.f32.gmra.mrb[0].mxu0 %v526
        %v1508 = vpop.f32.mrb[0].mxu0
        %v1509 = vadd.f32 %v1284, %v1508
        %v1510 = vpop.f32.mrb[0].mxu0
        %1511 = vmatprep.mubr.f32.mxu0 %v642
        %1512 = vmatmul.mubr.f32.gmra.mrb[0].mxu0 %v529
        %v1513 = vpop.f32.mrb[0].mxu0
        %v1514 = vadd.f32 %v1289, %v1513
        %v1515 = vpop.f32.mrb[0].mxu0
        %1516 = vmatprep.mubr.f32.mxu0 %v644
        %1517 = vmatmul.mubr.f32.gmra.mrb[0].mxu0 %v531
        %v1518 = vpop.f32.mrb[0].mxu0
        %v1519 = vadd.f32 %v1294, %v1518
        %v1520 = vpop.f32.mrb[0].mxu0
        %1521 = vmatprep.mubr.f32.mxu0 %v647
        %1522 = vmatmul.mubr.f32.gmra.mrb[0].mxu0 %v534
        %v1523 = vpop.f32.mrb[0].mxu0
        %v1524 = vadd.f32 %v1299, %v1523
        %v1525 = vpop.f32.mrb[0].mxu0
        %1526 = vmatprep.mubr.f32.mxu0 %v649
        %1527 = vmatmul.mubr.f32.gmra.mrb[0].mxu0 %v536
        %v1528 = vpop.f32.mrb[0].mxu0
        %v1529 = vadd.f32 %v1304, %v1528
        %v1530 = vpop.f32.mrb[0].mxu0
        %1531 = vmatprep.mubr.f32.mxu0 %v694
        %1532 = vmatmul.mubr.f32.gmra.mrb[0].mxu0 %v687
        %v1533 = vpop.f32.mrb[0].mxu0
        %v1534 = vadd.f32 %v1309, %v1533
        %v1535 = vpop.f32.mrb[0].mxu0
        %1536 = vmatprep.mubr.f32.mxu0 %v696
        %1537 = vmatmul.mubr.f32.gmra.mrb[0].mxu0 %v689
        %v1538 = vpop.f32.mrb[0].mxu0
        %v1539 = vadd.f32 %v1314, %v1538
        %v1540 = vpop.f32.mrb[0].mxu0
        %1541 = vdwg.mxu0
        %1542 = vmatprep.subr.mxu0 0.0
        %1543 = vmatpush1.msra.mxu0 %v812
        %1544 = vmatprep.subr.mxu0 0.0
        %1545 = vmatpush1.msra.mxu0 %v813
        %1546 = vmatprep.subr.mxu0 0.0
        %1547 = vmatpush1.msra.mxu0 %v814
        %1548 = vmatprep.subr.mxu0 0.0
        %1549 = vmatpush1.msra.mxu0 %v815
        %1550 = vmatprep.subr.mxu0 0.0
        %1551 = vmatpush1.msra.mxu0 %v816
        %1552 = vmatprep.subr.mxu0 0.0
        %1553 = vmatpush1.msra.mxu0 %v817
        %1554 = vmatprep.subr.mxu0 0.0
        %1555 = vmatpush1.msra.mxu0 %v818
        %1556 = vmatprep.subr.mxu0 0.0
        %1557 = vmatpush1.msra.mxu0 %v819
        %1558 = vmatprep.subr.mxu0 0.0
        %1559 = vmatpush1.msra.mxu0 %v820
        %1560 = vmatprep.subr.mxu0 0.0
        %1561 = vmatpush1.msra.mxu0 %v821
        %1562 = vmatprep.subr.mxu0 0.0
        %1563 = vmatpush1.msra.mxu0 %v822
        %1564 = vmatprep.subr.mxu0 0.0
        %1565 = vmatpush1.msra.mxu0 %v823
        %1566 = vmatprep.subr.mxu0 0.0
        %1567 = vmatpush1.msra.mxu0 %v824
        %1568 = vmatprep.subr.mxu0 0.0
        %1569 = vmatpush1.msra.mxu0 %v825
        %1570 = vmatprep.subr.mxu0 0.0
        %1571 = vmatpush1.msra.mxu0 %v826
        %1572 = vmatprep.subr.mxu0 0.0
        %1573 = vmatpush1.msra.mxu0 %v827
        %1574 = vmatprep.subr.mxu0 0.0
        %1575 = vmatpush1.msra.mxu0 %v828
        %1576 = vmatprep.subr.mxu0 0.0
        %1577 = vmatpush1.msra.mxu0 %v829
        %1578 = vmatprep.subr.mxu0 0.0
        %1579 = vmatpush1.msra.mxu0 %v830
        %1580 = vmatprep.subr.mxu0 0.0
        %1581 = vmatpush1.msra.mxu0 %v831
        %1582 = vmatprep.subr.mxu0 0.0
        %1583 = vmatpush1.msra.mxu0 %v832
        %1584 = vmatprep.subr.mxu0 0.0
        %1585 = vmatpush1.msra.mxu0 %v833
        %1586 = vmatprep.subr.mxu0 0.0
        %1587 = vmatpush1.msra.mxu0 %v834
        %1588 = vmatprep.subr.mxu0 0.0
        %1589 = vmatpush1.msra.mxu0 %v835
        %1590 = vmatprep.subr.mxu0 0.0
        %1591 = vmatpush1.msra.mxu0 %v836
        %1592 = vmatprep.subr.mxu0 0.0
        %1593 = vmatpush1.msra.mxu0 %v837
        %1594 = vmatprep.subr.mxu0 0.0
        %1595 = vmatpush1.msra.mxu0 %v838
        %1596 = vmatprep.subr.mxu0 0.0
        %1597 = vmatpush1.msra.mxu0 %v839
        %1598 = vmatprep.subr.mxu0 0.0
        %1599 = vmatpush1.msra.mxu0 %v840
        %1600 = vmatprep.subr.mxu0 0.0
        %1601 = vmatpush1.msra.mxu0 %v841
        %1602 = vmatprep.subr.mxu0 0.0
        %1603 = vmatpush1.msra.mxu0 %v842
        %1604 = vmatprep.subr.mxu0 0.0
        %1605 = vmatpush1.msra.mxu0 %v843
        %1606 = vmatprep.mubr.f32.mxu0 %v469
        %1607 = vmatmul.mubr.f32.gmra.mrb[0].mxu0 %v360
        %v1608 = vpop.f32.mrb[0].mxu0
        %v1609 = vadd.f32 %v1384, %v1608
        %v1610 = vpop.f32.mrb[0].mxu0
        %1611 = vmatprep.mubr.f32.mxu0 %v471
        %1612 = vmatmul.mubr.f32.gmra.mrb[0].mxu0 %v361
        %v1613 = vpop.f32.mrb[0].mxu0
        %v1614 = vadd.f32 %v1389, %v1613
        %v1615 = vpop.f32.mrb[0].mxu0
        %1616 = vmatprep.mubr.f32.mxu0 %v474
        %1617 = vmatmul.mubr.f32.gmra.mrb[0].mxu0 %v363
        %v1618 = vpop.f32.mrb[0].mxu0
        %v1619 = vadd.f32 %v1394, %v1618
        %v1620 = vpop.f32.mrb[0].mxu0
        %1621 = vmatprep.mubr.f32.mxu0 %v476
        %1622 = vmatmul.mubr.f32.gmra.mrb[0].mxu0 %v364
        %v1623 = vpop.f32.mrb[0].mxu0
        %v1624 = vadd.f32 %v1399, %v1623
        %v1625 = vpop.f32.mrb[0].mxu0
        %1626 = vmatprep.mubr.f32.mxu0 %v479
        %1627 = vmatmul.mubr.f32.gmra.mrb[0].mxu0 %v366
        %v1628 = vpop.f32.mrb[0].mxu0
        %v1629 = vadd.f32 %v1404, %v1628
        %v1630 = vpop.f32.mrb[0].mxu0
        %1631 = vmatprep.mubr.f32.mxu0 %v481
        %1632 = vmatmul.mubr.f32.gmra.mrb[0].mxu0 %v367
        %v1633 = vpop.f32.mrb[0].mxu0
        %v1634 = vadd.f32 %v1409, %v1633
        %v1635 = vpop.f32.mrb[0].mxu0
        %1636 = vmatprep.mubr.f32.mxu0 %v484
        %1637 = vmatmul.mubr.f32.gmra.mrb[0].mxu0 %v369
        %v1638 = vpop.f32.mrb[0].mxu0
        %v1639 = vadd.f32 %v1414, %v1638
        %v1640 = vpop.f32.mrb[0].mxu0
        %1641 = vmatprep.mubr.f32.mxu0 %v486
        %1642 = vmatmul.mubr.f32.gmra.mrb[0].mxu0 %v370
        %v1643 = vpop.f32.mrb[0].mxu0
        %v1644 = vadd.f32 %v1419, %v1643
        %v1645 = vpop.f32.mrb[0].mxu0
        %1646 = vmatprep.mubr.f32.mxu0 %v489
        %1647 = vmatmul.mubr.f32.gmra.mrb[0].mxu0 %v372
        %v1648 = vpop.f32.mrb[0].mxu0
        %v1649 = vadd.f32 %v1424, %v1648
        %v1650 = vpop.f32.mrb[0].mxu0
        %1651 = vmatprep.mubr.f32.mxu0 %v491
        %1652 = vmatmul.mubr.f32.gmra.mrb[0].mxu0 %v373
        %v1653 = vpop.f32.mrb[0].mxu0
        %v1654 = vadd.f32 %v1429, %v1653
        %v1655 = vpop.f32.mrb[0].mxu0
        %1656 = vmatprep.mubr.f32.mxu0 %v494
        %1657 = vmatmul.mubr.f32.gmra.mrb[0].mxu0 %v375
        %v1658 = vpop.f32.mrb[0].mxu0
        %v1659 = vadd.f32 %v1434, %v1658
        %v1660 = vpop.f32.mrb[0].mxu0
        %1661 = vmatprep.mubr.f32.mxu0 %v496
        %1662 = vmatmul.mubr.f32.gmra.mrb[0].mxu0 %v376
        %v1663 = vpop.f32.mrb[0].mxu0
        %v1664 = vadd.f32 %v1439, %v1663
        %v1665 = vpop.f32.mrb[0].mxu0
        %1666 = vmatprep.mubr.f32.mxu0 %v499
        %1667 = vmatmul.mubr.f32.gmra.mrb[0].mxu0 %v378
        %v1668 = vpop.f32.mrb[0].mxu0
        %v1669 = vadd.f32 %v1444, %v1668
        %v1670 = vpop.f32.mrb[0].mxu0
        %1671 = vmatprep.mubr.f32.mxu0 %v501
        %1672 = vmatmul.mubr.f32.gmra.mrb[0].mxu0 %v379
        %v1673 = vpop.f32.mrb[0].mxu0
        %v1674 = vadd.f32 %v1449, %v1673
        %v1675 = vpop.f32.mrb[0].mxu0
        %1676 = vmatprep.mubr.f32.mxu0 %v504
        %1677 = vmatmul.mubr.f32.gmra.mrb[0].mxu0 %v381
        %v1678 = vpop.f32.mrb[0].mxu0
        %v1679 = vadd.f32 %v1454, %v1678
        %v1680 = vpop.f32.mrb[0].mxu0
        %1681 = vmatprep.mubr.f32.mxu0 %v506
        %1682 = vmatmul.mubr.f32.gmra.mrb[0].mxu0 %v382
        %v1683 = vpop.f32.mrb[0].mxu0
        %v1684 = vadd.f32 %v1459, %v1683
        %v1685 = vpop.f32.mrb[0].mxu0
        %1686 = vmatprep.mubr.f32.mxu0 %v509
        %1687 = vmatmul.mubr.f32.gmra.mrb[0].mxu0 %v384
        %v1688 = vpop.f32.mrb[0].mxu0
        %v1689 = vadd.f32 %v1464, %v1688
        %v1690 = vpop.f32.mrb[0].mxu0
        %1691 = vmatprep.mubr.f32.mxu0 %v511
        %1692 = vmatmul.mubr.f32.gmra.mrb[0].mxu0 %v385
        %v1693 = vpop.f32.mrb[0].mxu0
        %v1694 = vadd.f32 %v1469, %v1693
        %v1695 = vpop.f32.mrb[0].mxu0
        %1696 = vmatprep.mubr.f32.mxu0 %v514
        %1697 = vmatmul.mubr.f32.gmra.mrb[0].mxu0 %v387
        %v1698 = vpop.f32.mrb[0].mxu0
        %v1699 = vadd.f32 %v1474, %v1698
        %v1700 = vpop.f32.mrb[0].mxu0
        %1701 = vmatprep.mubr.f32.mxu0 %v516
        %1702 = vmatmul.mubr.f32.gmra.mrb[0].mxu0 %v388
        %v1703 = vpop.f32.mrb[0].mxu0
        %v1704 = vadd.f32 %v1479, %v1703
        %v1705 = vpop.f32.mrb[0].mxu0
        %1706 = vmatprep.mubr.f32.mxu0 %v519
        %1707 = vmatmul.mubr.f32.gmra.mrb[0].mxu0 %v390
        %v1708 = vpop.f32.mrb[0].mxu0
        %v1709 = vadd.f32 %v1484, %v1708
        %v1710 = vpop.f32.mrb[0].mxu0
        %1711 = vmatprep.mubr.f32.mxu0 %v521
        %1712 = vmatmul.mubr.f32.gmra.mrb[0].mxu0 %v391
        %v1713 = vpop.f32.mrb[0].mxu0
        %v1714 = vadd.f32 %v1489, %v1713
        %v1715 = vpop.f32.mrb[0].mxu0
        %1716 = vmatprep.mubr.f32.mxu0 %v524
        %1717 = vmatmul.mubr.f32.gmra.mrb[0].mxu0 %v393
        %v1718 = vpop.f32.mrb[0].mxu0
        %v1719 = vadd.f32 %v1494, %v1718
        %v1720 = vpop.f32.mrb[0].mxu0
        %1721 = vmatprep.mubr.f32.mxu0 %v526
        %1722 = vmatmul.mubr.f32.gmra.mrb[0].mxu0 %v394
        %v1723 = vpop.f32.mrb[0].mxu0
        %v1724 = vadd.f32 %v1499, %v1723
        %v1725 = vpop.f32.mrb[0].mxu0
        %1726 = vmatprep.mubr.f32.mxu0 %v529
        %1727 = vmatmul.mubr.f32.gmra.mrb[0].mxu0 %v396
        %v1728 = vpop.f32.mrb[0].mxu0
        %v1729 = vadd.f32 %v1504, %v1728
        %v1730 = vpop.f32.mrb[0].mxu0
        %1731 = vmatprep.mubr.f32.mxu0 %v531
        %1732 = vmatmul.mubr.f32.gmra.mrb[0].mxu0 %v397
        %v1733 = vpop.f32.mrb[0].mxu0
        %v1734 = vadd.f32 %v1509, %v1733
        %v1735 = vpop.f32.mrb[0].mxu0
        %1736 = vmatprep.mubr.f32.mxu0 %v534
        %1737 = vmatmul.mubr.f32.gmra.mrb[0].mxu0 %v399
        %v1738 = vpop.f32.mrb[0].mxu0
        %v1739 = vadd.f32 %v1514, %v1738
        %v1740 = vpop.f32.mrb[0].mxu0
        %1741 = vmatprep.mubr.f32.mxu0 %v536
        %1742 = vmatmul.mubr.f32.gmra.mrb[0].mxu0 %v400
        %v1743 = vpop.f32.mrb[0].mxu0
        %v1744 = vadd.f32 %v1519, %v1743
        %v1745 = vpop.f32.mrb[0].mxu0
        %1746 = vmatprep.mubr.f32.mxu0 %v687
        %1747 = vmatmul.mubr.f32.gmra.mrb[0].mxu0 %v402
        %v1748 = vpop.f32.mrb[0].mxu0
        %v1749 = vadd.f32 %v1524, %v1748
        %v1750 = vpop.f32.mrb[0].mxu0
        %1751 = vmatprep.mubr.f32.mxu0 %v689
        %1752 = vmatmul.mubr.f32.gmra.mrb[0].mxu0 %v403
        %v1753 = vpop.f32.mrb[0].mxu0
        %v1754 = vadd.f32 %v1529, %v1753
        %v1755 = vpop.f32.mrb[0].mxu0
        %1756 = vmatprep.mubr.f32.mxu0 %v704
        %1757 = vmatmul.mubr.f32.gmra.mrb[0].mxu0 %v405
        %v1758 = vpop.f32.mrb[0].mxu0
        %v1759 = vadd.f32 %v1534, %v1758
        %v1760 = vpop.f32.mrb[0].mxu0
        %1761 = vmatprep.mubr.f32.mxu0 %v706
        %1762 = vmatmul.mubr.f32.gmra.mrb[0].mxu0 %v406
        %v1763 = vpop.f32.mrb[0].mxu0
        %v1764 = vadd.f32 %v1539, %v1763
        %v1765 = vpop.f32.mrb[0].mxu0
        %1766 = vdwg.mxu0
        %1767 = vmatprep.subr.mxu0 0.0
        %1768 = vmatpush1.msra.mxu0 %v844
        %1769 = vmatprep.subr.mxu0 0.0
        %1770 = vmatpush1.msra.mxu0 %v845
        %1771 = vmatprep.subr.mxu0 0.0
        %1772 = vmatpush1.msra.mxu0 %v846
        %1773 = vmatprep.subr.mxu0 0.0
        %1774 = vmatpush1.msra.mxu0 %v847
        %1775 = vmatprep.subr.mxu0 0.0
        %1776 = vmatpush1.msra.mxu0 %v848
        %1777 = vmatprep.subr.mxu0 0.0
        %1778 = vmatpush1.msra.mxu0 %v849
        %1779 = vmatprep.subr.mxu0 0.0
        %1780 = vmatpush1.msra.mxu0 %v850
        %1781 = vmatprep.subr.mxu0 0.0
        %1782 = vmatpush1.msra.mxu0 %v851
        %1783 = vmatprep.subr.mxu0 0.0
        %1784 = vmatpush1.msra.mxu0 %v852
        %1785 = vmatprep.subr.mxu0 0.0
        %1786 = vmatpush1.msra.mxu0 %v853
        %1787 = vmatprep.subr.mxu0 0.0
        %1788 = vmatpush1.msra.mxu0 %v854
        %1789 = vmatprep.subr.mxu0 0.0
        %1790 = vmatpush1.msra.mxu0 %v855
        %1791 = vmatprep.subr.mxu0 0.0
        %1792 = vmatpush1.msra.mxu0 %v856
        %1793 = vmatprep.subr.mxu0 0.0
        %1794 = vmatpush1.msra.mxu0 %v857
        %1795 = vmatprep.subr.mxu0 0.0
        %1796 = vmatpush1.msra.mxu0 %v858
        %1797 = vmatprep.subr.mxu0 0.0
        %1798 = vmatpush1.msra.mxu0 %v859
        %1799 = vmatprep.subr.mxu0 0.0
        %1800 = vmatpush1.msra.mxu0 0.0
        %1801 = vmatprep.subr.mxu0 0.0
        %1802 = vmatpush1.msra.mxu0 0.0
        %1803 = vmatprep.subr.mxu0 0.0
        %1804 = vmatpush1.msra.mxu0 0.0
        %1805 = vmatprep.subr.mxu0 0.0
        %1806 = vmatpush1.msra.mxu0 0.0
        %1807 = vmatprep.subr.mxu0 0.0
        %1808 = vmatpush1.msra.mxu0 0.0
        %1809 = vmatprep.subr.mxu0 0.0
        %1810 = vmatpush1.msra.mxu0 0.0
        %1811 = vmatprep.subr.mxu0 0.0
        %1812 = vmatpush1.msra.mxu0 0.0
        %1813 = vmatprep.subr.mxu0 0.0
        %1814 = vmatpush1.msra.mxu0 0.0
        %1815 = vmatprep.subr.mxu0 0.0
        %1816 = vmatpush1.msra.mxu0 0.0
        %1817 = vmatprep.subr.mxu0 0.0
        %1818 = vmatpush1.msra.mxu0 0.0
        %1819 = vmatprep.subr.mxu0 0.0
        %1820 = vmatpush1.msra.mxu0 0.0
        %1821 = vmatprep.subr.mxu0 0.0
        %1822 = vmatpush1.msra.mxu0 0.0
        %1823 = vmatprep.subr.mxu0 0.0
        %1824 = vmatpush1.msra.mxu0 0.0
        %1825 = vmatprep.subr.mxu0 0.0
        %1826 = vmatpush1.msra.mxu0 0.0
        %1827 = vmatprep.subr.mxu0 0.0
        %1828 = vmatpush1.msra.mxu0 0.0
        %1829 = vmatprep.subr.mxu0 0.0
        %1830 = vmatpush1.msra.mxu0 0.0
        %1831 = vmatprep.mubr.f32.mxu0 0.0
        %1832 = vmatmul.mubr.f32.gmra.mrb[0].mxu0 %v582
        %v1833 = vpop.f32.mrb[0].mxu0
        %v1834 = vadd.f32 %v1609, %v1833
        %v1835 = vpop.f32.mrb[0].mxu0
        %1836 = vmatprep.mubr.f32.mxu0 0.0
        %1837 = vmatmul.mubr.f32.gmra.mrb[0].mxu0 %v584
        %v1838 = vpop.f32.mrb[0].mxu0
        %v1839 = vadd.f32 %v1614, %v1838
        %v1840 = vpop.f32.mrb[0].mxu0
        %1841 = vmatprep.mubr.f32.mxu0 0.0
        %1842 = vmatmul.mubr.f32.gmra.mrb[0].mxu0 %v587
        %v1843 = vpop.f32.mrb[0].mxu0
        %v1844 = vadd.f32 %v1619, %v1843
        %v1845 = vpop.f32.mrb[0].mxu0
        %1846 = vmatprep.mubr.f32.mxu0 0.0
        %1847 = vmatmul.mubr.f32.gmra.mrb[0].mxu0 %v589
        %v1848 = vpop.f32.mrb[0].mxu0
        %v1849 = vadd.f32 %v1624, %v1848
        %v1850 = vpop.f32.mrb[0].mxu0
        %1851 = vmatprep.mubr.f32.mxu0 0.0
        %1852 = vmatmul.mubr.f32.gmra.mrb[0].mxu0 %v592
        %v1853 = vpop.f32.mrb[0].mxu0
        %v1854 = vadd.f32 %v1629, %v1853
        %v1855 = vpop.f32.mrb[0].mxu0
        %1856 = vmatprep.mubr.f32.mxu0 0.0
        %1857 = vmatmul.mubr.f32.gmra.mrb[0].mxu0 %v594
        %v1858 = vpop.f32.mrb[0].mxu0
        %v1859 = vadd.f32 %v1634, %v1858
        %v1860 = vpop.f32.mrb[0].mxu0
        %1861 = vmatprep.mubr.f32.mxu0 0.0
        %1862 = vmatmul.mubr.f32.gmra.mrb[0].mxu0 %v597
        %v1863 = vpop.f32.mrb[0].mxu0
        %v1864 = vadd.f32 %v1639, %v1863
        %v1865 = vpop.f32.mrb[0].mxu0
        %1866 = vmatprep.mubr.f32.mxu0 0.0
        %1867 = vmatmul.mubr.f32.gmra.mrb[0].mxu0 %v599
        %v1868 = vpop.f32.mrb[0].mxu0
        %v1869 = vadd.f32 %v1644, %v1868
        %v1870 = vpop.f32.mrb[0].mxu0
        %1871 = vmatprep.mubr.f32.mxu0 0.0
        %1872 = vmatmul.mubr.f32.gmra.mrb[0].mxu0 %v602
        %v1873 = vpop.f32.mrb[0].mxu0
        %v1874 = vadd.f32 %v1649, %v1873
        %v1875 = vpop.f32.mrb[0].mxu0
        %1876 = vmatprep.mubr.f32.mxu0 0.0
        %1877 = vmatmul.mubr.f32.gmra.mrb[0].mxu0 %v604
        %v1878 = vpop.f32.mrb[0].mxu0
        %v1879 = vadd.f32 %v1654, %v1878
        %v1880 = vpop.f32.mrb[0].mxu0
        %1881 = vmatprep.mubr.f32.mxu0 0.0
        %1882 = vmatmul.mubr.f32.gmra.mrb[0].mxu0 %v607
        %v1883 = vpop.f32.mrb[0].mxu0
        %v1884 = vadd.f32 %v1659, %v1883
        %v1885 = vpop.f32.mrb[0].mxu0
        %1886 = vmatprep.mubr.f32.mxu0 0.0
        %1887 = vmatmul.mubr.f32.gmra.mrb[0].mxu0 %v609
        %v1888 = vpop.f32.mrb[0].mxu0
        %v1889 = vadd.f32 %v1664, %v1888
        %v1890 = vpop.f32.mrb[0].mxu0
        %1891 = vmatprep.mubr.f32.mxu0 0.0
        %1892 = vmatmul.mubr.f32.gmra.mrb[0].mxu0 %v612
        %v1893 = vpop.f32.mrb[0].mxu0
        %v1894 = vadd.f32 %v1669, %v1893
        %v1895 = vpop.f32.mrb[0].mxu0
        %1896 = vmatprep.mubr.f32.mxu0 0.0
        %1897 = vmatmul.mubr.f32.gmra.mrb[0].mxu0 %v614
        %v1898 = vpop.f32.mrb[0].mxu0
        %v1899 = vadd.f32 %v1674, %v1898
        %v1900 = vpop.f32.mrb[0].mxu0
        %1901 = vmatprep.mubr.f32.mxu0 0.0
        %1902 = vmatmul.mubr.f32.gmra.mrb[0].mxu0 %v617
        %v1903 = vpop.f32.mrb[0].mxu0
        %v1904 = vadd.f32 %v1679, %v1903
        %v1905 = vpop.f32.mrb[0].mxu0
        %1906 = vmatprep.mubr.f32.mxu0 0.0
        %1907 = vmatmul.mubr.f32.gmra.mrb[0].mxu0 %v619
        %v1908 = vpop.f32.mrb[0].mxu0
        %v1909 = vadd.f32 %v1684, %v1908
        %v1910 = vpop.f32.mrb[0].mxu0
        %1911 = vmatprep.mubr.f32.mxu0 0.0
        %1912 = vmatmul.mubr.f32.gmra.mrb[0].mxu0 %v622
        %v1913 = vpop.f32.mrb[0].mxu0
        %v1914 = vadd.f32 %v1689, %v1913
        %v1915 = vpop.f32.mrb[0].mxu0
        %1916 = vmatprep.mubr.f32.mxu0 0.0
        %1917 = vmatmul.mubr.f32.gmra.mrb[0].mxu0 %v624
        %v1918 = vpop.f32.mrb[0].mxu0
        %v1919 = vadd.f32 %v1694, %v1918
        %v1920 = vpop.f32.mrb[0].mxu0
        %1921 = vmatprep.mubr.f32.mxu0 0.0
        %1922 = vmatmul.mubr.f32.gmra.mrb[0].mxu0 %v627
        %v1923 = vpop.f32.mrb[0].mxu0
        %v1924 = vadd.f32 %v1699, %v1923
        %v1925 = vpop.f32.mrb[0].mxu0
        %1926 = vmatprep.mubr.f32.mxu0 0.0
        %1927 = vmatmul.mubr.f32.gmra.mrb[0].mxu0 %v629
        %v1928 = vpop.f32.mrb[0].mxu0
        %v1929 = vadd.f32 %v1704, %v1928
        %v1930 = vpop.f32.mrb[0].mxu0
        %1931 = vmatprep.mubr.f32.mxu0 0.0
        %1932 = vmatmul.mubr.f32.gmra.mrb[0].mxu0 %v632
        %v1933 = vpop.f32.mrb[0].mxu0
        %v1934 = vadd.f32 %v1709, %v1933
        %v1935 = vpop.f32.mrb[0].mxu0
        %1936 = vmatprep.mubr.f32.mxu0 0.0
        %1937 = vmatmul.mubr.f32.gmra.mrb[0].mxu0 %v634
        %v1938 = vpop.f32.mrb[0].mxu0
        %v1939 = vadd.f32 %v1714, %v1938
        %v1940 = vpop.f32.mrb[0].mxu0
        %1941 = vmatprep.mubr.f32.mxu0 0.0
        %1942 = vmatmul.mubr.f32.gmra.mrb[0].mxu0 %v637
        %v1943 = vpop.f32.mrb[0].mxu0
        %v1944 = vadd.f32 %v1719, %v1943
        %v1945 = vpop.f32.mrb[0].mxu0
        %1946 = vmatprep.mubr.f32.mxu0 0.0
        %1947 = vmatmul.mubr.f32.gmra.mrb[0].mxu0 %v639
        %v1948 = vpop.f32.mrb[0].mxu0
        %v1949 = vadd.f32 %v1724, %v1948
        %v1950 = vpop.f32.mrb[0].mxu0
        %1951 = vmatprep.mubr.f32.mxu0 0.0
        %1952 = vmatmul.mubr.f32.gmra.mrb[0].mxu0 %v642
        %v1953 = vpop.f32.mrb[0].mxu0
        %v1954 = vadd.f32 %v1729, %v1953
        %v1955 = vpop.f32.mrb[0].mxu0
        %1956 = vmatprep.mubr.f32.mxu0 0.0
        %1957 = vmatmul.mubr.f32.gmra.mrb[0].mxu0 %v644
        %v1958 = vpop.f32.mrb[0].mxu0
        %v1959 = vadd.f32 %v1734, %v1958
        %v1960 = vpop.f32.mrb[0].mxu0
        %1961 = vmatprep.mubr.f32.mxu0 0.0
        %1962 = vmatmul.mubr.f32.gmra.mrb[0].mxu0 %v647
        %v1963 = vpop.f32.mrb[0].mxu0
        %v1964 = vadd.f32 %v1739, %v1963
        %v1965 = vpop.f32.mrb[0].mxu0
        %1966 = vmatprep.mubr.f32.mxu0 0.0
        %1967 = vmatmul.mubr.f32.gmra.mrb[0].mxu0 %v649
        %v1968 = vpop.f32.mrb[0].mxu0
        %v1969 = vadd.f32 %v1744, %v1968
        %v1970 = vpop.f32.mrb[0].mxu0
        %1971 = vmatprep.mubr.f32.mxu0 0.0
        %1972 = vmatmul.mubr.f32.gmra.mrb[0].mxu0 %v694
        %v1973 = vpop.f32.mrb[0].mxu0
        %v1974 = vadd.f32 %v1749, %v1973
        %v1975 = vpop.f32.mrb[0].mxu0
        %1976 = vmatprep.mubr.f32.mxu0 0.0
        %1977 = vmatmul.mubr.f32.gmra.mrb[0].mxu0 %v696
        %v1978 = vpop.f32.mrb[0].mxu0
        %v1979 = vadd.f32 %v1754, %v1978
        %v1980 = vpop.f32.mrb[0].mxu0
        %1981 = vmatprep.mubr.f32.mxu0 0.0
        %1982 = vmatmul.mubr.f32.gmra.mrb[0].mxu0 %v711
        %v1983 = vpop.f32.mrb[0].mxu0
        %v1984 = vadd.f32 %v1759, %v1983
        %v1985 = vpop.f32.mrb[0].mxu0
        %1986 = vmatprep.mubr.f32.mxu0 0.0
        %1987 = vmatmul.mubr.f32.gmra.mrb[0].mxu0 %v713
        %v1988 = vpop.f32.mrb[0].mxu0
        %v1989 = vadd.f32 %v1764, %v1988
        %v1990 = vpop.f32.mrb[0].mxu0
        %1991 = vdwg.mxu0
        %v1992 = vsub.f32 0.0, %v1834
        %v1993 = vsub.f32 0.0, %v1839
        %v1994 = vsub.f32 0.0, %v1844
        %v1995 = vsub.f32 0.0, %v1849
        %v1996 = vsub.f32 0.0, %v1854
        %v1997 = vsub.f32 0.0, %v1859
        %v1998 = vsub.f32 0.0, %v1864
        %v1999 = vsub.f32 0.0, %v1869
        %v2000 = vsub.f32 0.0, %v1874
        %v2001 = vsub.f32 0.0, %v1879
        %v2002 = vsub.f32 0.0, %v1884
        %v2003 = vsub.f32 0.0, %v1889
        %v2004 = vsub.f32 0.0, %v1894
        %v2005 = vsub.f32 0.0, %v1899
        %v2006 = vsub.f32 0.0, %v1904
        %v2007 = vsub.f32 0.0, %v1909
        %v2008 = vsub.f32 0.0, %v1914
        %v2009 = vsub.f32 0.0, %v1919
        %v2010 = vsub.f32 0.0, %v1924
        %v2011 = vsub.f32 0.0, %v1929
        %v2012 = vsub.f32 0.0, %v1934
        %v2013 = vsub.f32 0.0, %v1939
        %v2014 = vsub.f32 0.0, %v1944
        %v2015 = vsub.f32 0.0, %v1949
        %v2016 = vsub.f32 0.0, %v1954
        %v2017 = vsub.f32 0.0, %v1959
        %v2018 = vsub.f32 0.0, %v1964
        %v2019 = vsub.f32 0.0, %v1969
        %v2020 = vsub.f32 0.0, %v1974
        %v2021 = vsub.f32 0.0, %v1979
        %v2022 = vsub.f32 0.0, %v1984
        %v2023 = vsub.f32 0.0, %v1989
        %v2024 = vmul.f32 %v1992, 1.442695
        %v2025 = vpow.pop %v2024
        %v2026 = vmul.f32 %v1993, 1.442695
        %v2027 = vpow.pop %v2026
        %v2028 = vmul.f32 %v1994, 1.442695
        %v2029 = vpow.pop %v2028
        %v2030 = vmul.f32 %v1995, 1.442695
        %v2031 = vpow.pop %v2030
        %v2032 = vmul.f32 %v1996, 1.442695
        %v2033 = vpow.pop %v2032
        %v2034 = vmul.f32 %v1997, 1.442695
        %v2035 = vpow.pop %v2034
        %v2036 = vmul.f32 %v1998, 1.442695
        %v2037 = vpow.pop %v2036
        %v2038 = vmul.f32 %v1999, 1.442695
        %v2039 = vpow.pop %v2038
        %v2040 = vmul.f32 %v2000, 1.442695
        %v2041 = vpow.pop %v2040
        %v2042 = vmul.f32 %v2001, 1.442695
        %v2043 = vpow.pop %v2042
        %v2044 = vmul.f32 %v2002, 1.442695
        %v2045 = vpow.pop %v2044
        %v2046 = vmul.f32 %v2003, 1.442695
        %v2047 = vpow.pop %v2046
        %v2048 = vmul.f32 %v2004, 1.442695
        %v2049 = vpow.pop %v2048
        %v2050 = vmul.f32 %v2005, 1.442695
        %v2051 = vpow.pop %v2050
        %v2052 = vmul.f32 %v2006, 1.442695
        %v2053 = vpow.pop %v2052
        %v2054 = vmul.f32 %v2007, 1.442695
        %v2055 = vpow.pop %v2054
        %v2056 = vmul.f32 %v2008, 1.442695
        %v2057 = vpow.pop %v2056
        %v2058 = vmul.f32 %v2009, 1.442695
        %v2059 = vpow.pop %v2058
        %v2060 = vmul.f32 %v2010, 1.442695
        %v2061 = vpow.pop %v2060
        %v2062 = vmul.f32 %v2011, 1.442695
        %v2063 = vpow.pop %v2062
        %v2064 = vmul.f32 %v2012, 1.442695
        %v2065 = vpow.pop %v2064
        %v2066 = vmul.f32 %v2013, 1.442695
        %v2067 = vpow.pop %v2066
        %v2068 = vmul.f32 %v2014, 1.442695
        %v2069 = vpow.pop %v2068
        %v2070 = vmul.f32 %v2015, 1.442695
        %v2071 = vpow.pop %v2070
        %v2072 = vmul.f32 %v2016, 1.442695
        %v2073 = vpow.pop %v2072
        %v2074 = vmul.f32 %v2017, 1.442695
        %v2075 = vpow.pop %v2074
        %v2076 = vmul.f32 %v2018, 1.442695
        %v2077 = vpow.pop %v2076
        %v2078 = vmul.f32 %v2019, 1.442695
        %v2079 = vpow.pop %v2078
        %v2080 = vmul.f32 %v2020, 1.442695
        %v2081 = vpow.pop %v2080
        %v2082 = vmul.f32 %v2021, 1.442695
        %v2083 = vpow.pop %v2082
        %v2084 = vmul.f32 %v2022, 1.442695
        %v2085 = vpow.pop %v2084
        %v2086 = vmul.f32 %v2023, 1.442695
        %v2087 = vpow.pop %v2086
        %v2088 = vadd.f32 %v2025, 1.0
        %v2089 = vadd.f32 %v2027, 1.0
        %v2090 = vadd.f32 %v2029, 1.0
        %v2091 = vadd.f32 %v2031, 1.0
        %v2092 = vadd.f32 %v2033, 1.0
        %v2093 = vadd.f32 %v2035, 1.0
        %v2094 = vadd.f32 %v2037, 1.0
        %v2095 = vadd.f32 %v2039, 1.0
        %v2096 = vadd.f32 %v2041, 1.0
        %v2097 = vadd.f32 %v2043, 1.0
        %v2098 = vadd.f32 %v2045, 1.0
        %v2099 = vadd.f32 %v2047, 1.0
        %v2100 = vadd.f32 %v2049, 1.0
        %v2101 = vadd.f32 %v2051, 1.0
        %v2102 = vadd.f32 %v2053, 1.0
        %v2103 = vadd.f32 %v2055, 1.0
        %v2104 = vadd.f32 %v2057, 1.0
        %v2105 = vadd.f32 %v2059, 1.0
        %v2106 = vadd.f32 %v2061, 1.0
        %v2107 = vadd.f32 %v2063, 1.0
        %v2108 = vadd.f32 %v2065, 1.0
        %v2109 = vadd.f32 %v2067, 1.0
        %v2110 = vadd.f32 %v2069, 1.0
        %v2111 = vadd.f32 %v2071, 1.0
        %v2112 = vadd.f32 %v2073, 1.0
        %v2113 = vadd.f32 %v2075, 1.0
        %v2114 = vadd.f32 %v2077, 1.0
        %v2115 = vadd.f32 %v2079, 1.0
        %v2116 = vadd.f32 %v2081, 1.0
        %v2117 = vadd.f32 %v2083, 1.0
        %v2118 = vadd.f32 %v2085, 1.0
        %v2119 = vadd.f32 %v2087, 1.0
        %v2120 = vrcp.pop %v2088
        %v2121 = vrcp.pop %v2089
        %v2122 = vrcp.pop %v2090
        %v2123 = vrcp.pop %v2091
        %v2124 = vrcp.pop %v2092
        %v2125 = vrcp.pop %v2093
        %v2126 = vrcp.pop %v2094
        %v2127 = vrcp.pop %v2095
        %v2128 = vrcp.pop %v2096
        %v2129 = vrcp.pop %v2097
        %v2130 = vrcp.pop %v2098
        %v2131 = vrcp.pop %v2099
        %v2132 = vrcp.pop %v2100
        %v2133 = vrcp.pop %v2101
        %v2134 = vrcp.pop %v2102
        %v2135 = vrcp.pop %v2103
        %v2136 = vrcp.pop %v2104
        %v2137 = vrcp.pop %v2105
        %v2138 = vrcp.pop %v2106
        %v2139 = vrcp.pop %v2107
        %v2140 = vrcp.pop %v2108
        %v2141 = vrcp.pop %v2109
        %v2142 = vrcp.pop %v2110
        %v2143 = vrcp.pop %v2111
        %v2144 = vrcp.pop %v2112
        %v2145 = vrcp.pop %v2113
        %v2146 = vrcp.pop %v2114
        %v2147 = vrcp.pop %v2115
        %v2148 = vrcp.pop %v2116
        %v2149 = vrcp.pop %v2117
        %v2150 = vrcp.pop %v2118
        %v2151 = vrcp.pop %v2119
        %v2152 = vmul.f32 %v1834, %v2120
        %v2153 = vmul.f32 %v1839, %v2121
        %v2154 = vmul.f32 %v1844, %v2122
        %v2155 = vmul.f32 %v1849, %v2123
        %v2156 = vmul.f32 %v1854, %v2124
        %v2157 = vmul.f32 %v1859, %v2125
        %v2158 = vmul.f32 %v1864, %v2126
        %v2159 = vmul.f32 %v1869, %v2127
        %v2160 = vmul.f32 %v1874, %v2128
        %v2161 = vmul.f32 %v1879, %v2129
        %v2162 = vmul.f32 %v1884, %v2130
        %v2163 = vmul.f32 %v1889, %v2131
        %v2164 = vmul.f32 %v1894, %v2132
        %v2165 = vmul.f32 %v1899, %v2133
        %v2166 = vmul.f32 %v1904, %v2134
        %v2167 = vmul.f32 %v1909, %v2135
        %v2168 = vmul.f32 %v1914, %v2136
        %v2169 = vmul.f32 %v1919, %v2137
        %v2170 = vmul.f32 %v1924, %v2138
        %v2171 = vmul.f32 %v1929, %v2139
        %v2172 = vmul.f32 %v1934, %v2140
        %v2173 = vmul.f32 %v1939, %v2141
        %v2174 = vmul.f32 %v1944, %v2142
        %v2175 = vmul.f32 %v1949, %v2143
        %v2176 = vmul.f32 %v1954, %v2144
        %v2177 = vmul.f32 %v1959, %v2145
        %v2178 = vmul.f32 %v1964, %v2146
        %v2179 = vmul.f32 %v1969, %v2147
        %v2180 = vmul.f32 %v1974, %v2148
        %v2181 = vmul.f32 %v1979, %v2149
        %v2182 = vmul.f32 %v1984, %v2150
        %v2183 = vmul.f32 %v1989, %v2151
        %s2184 = smul.u32 %s23, 256
        %s2185 = scalar_lea.vmem [#allocation2], %s2184
        %2186 = vst [vmem:[%s2185] sm:$0xff] %v2152
        %2187 = vst [vmem:[%s2185 + $0x8] sm:$0xff] %v2153
        %2188 = vst [vmem:[%s2185 + $0x10] sm:$0xff] %v2154
        %2189 = vst [vmem:[%s2185 + $0x18] sm:$0xff] %v2155
        %2190 = vst [vmem:[%s2185 + $0x20] sm:$0xff] %v2156
        %2191 = vst [vmem:[%s2185 + $0x28] sm:$0xff] %v2157
        %2192 = vst [vmem:[%s2185 + $0x30] sm:$0xff] %v2158
        %2193 = vst [vmem:[%s2185 + $0x38] sm:$0xff] %v2159
        %2194 = vst [vmem:[%s2185 + $0x40] sm:$0xff] %v2160
        %2195 = vst [vmem:[%s2185 + $0x48] sm:$0xff] %v2161
        %2196 = vst [vmem:[%s2185 + $0x50] sm:$0xff] %v2162
        %2197 = vst [vmem:[%s2185 + $0x58] sm:$0xff] %v2163
        %2198 = vst [vmem:[%s2185 + $0x60] sm:$0xff] %v2164
        %2199 = vst [vmem:[%s2185 + $0x68] sm:$0xff] %v2165
        %2200 = vst [vmem:[%s2185 + $0x70] sm:$0xff] %v2166
        %2201 = vst [vmem:[%s2185 + $0x78] sm:$0xff] %v2167
        %2202 = vst [vmem:[%s2185 + $0x80] sm:$0xff] %v2168
        %2203 = vst [vmem:[%s2185 + $0x88] sm:$0xff] %v2169
        %2204 = vst [vmem:[%s2185 + $0x90] sm:$0xff] %v2170
        %2205 = vst [vmem:[%s2185 + $0x98] sm:$0xff] %v2171
        %2206 = vst [vmem:[%s2185 + $0xa0] sm:$0xff] %v2172
        %2207 = vst [vmem:[%s2185 + $0xa8] sm:$0xff] %v2173
        %2208 = vst [vmem:[%s2185 + $0xb0] sm:$0xff] %v2174
        %2209 = vst [vmem:[%s2185 + $0xb8] sm:$0xff] %v2175
        %2210 = vst [vmem:[%s2185 + $0xc0] sm:$0xff] %v2176
        %2211 = vst [vmem:[%s2185 + $0xc8] sm:$0xff] %v2177
        %2212 = vst [vmem:[%s2185 + $0xd0] sm:$0xff] %v2178
        %2213 = vst [vmem:[%s2185 + $0xd8] sm:$0xff] %v2179
        %2214 = vst [vmem:[%s2185 + $0xe0] sm:$0xff] %v2180
        %2215 = vst [vmem:[%s2185 + $0xe8] sm:$0xff] %v2181
        %2216 = vst [vmem:[%s2185 + $0xf0] sm:$0xff] %v2182
        %2217 = vst [vmem:[%s2185 + $0xf8] sm:$0xff] %v2183
        %v2218 = vld [vmem:[#allocation3] sm:$0x1]
        %v2219 = vadd.f32 %v2152, %v2153
        %v2220 = vadd.f32 %v2219, %v2154
        %v2221 = vadd.f32 %v2220, %v2155
        %v2222 = vadd.f32 %v2221, %v2156
        %v2223 = vadd.f32 %v2222, %v2157
        %v2224 = vadd.f32 %v2223, %v2158
        %v2225 = vadd.f32 %v2224, %v2159
        %v2226 = vadd.f32 %v2225, %v2160
        %v2227 = vadd.f32 %v2226, %v2161
        %v2228 = vadd.f32 %v2227, %v2162
        %v2229 = vadd.f32 %v2228, %v2163
        %v2230 = vadd.f32 %v2229, %v2164
        %v2231 = vadd.f32 %v2230, %v2165
        %v2232 = vadd.f32 %v2231, %v2166
        %v2233 = vadd.f32 %v2232, %v2167
        %v2234 = vadd.f32 %v2233, %v2168
        %v2235 = vadd.f32 %v2234, %v2169
        %v2236 = vadd.f32 %v2235, %v2170
        %v2237 = vadd.f32 %v2236, %v2171
        %v2238 = vadd.f32 %v2237, %v2172
        %v2239 = vadd.f32 %v2238, %v2173
        %v2240 = vadd.f32 %v2239, %v2174
        %v2241 = vadd.f32 %v2240, %v2175
        %v2242 = vadd.f32 %v2241, %v2176
        %v2243 = vadd.f32 %v2242, %v2177
        %v2244 = vadd.f32 %v2243, %v2178
        %v2245 = vadd.f32 %v2244, %v2179
        %v2246 = vadd.f32 %v2245, %v2180
        %v2247 = vadd.f32 %v2246, %v2181
        %v2248 = vadd.f32 %v2247, %v2182
        %v2249 = vadd.f32 %v2248, %v2183
        %v2250 = vrot.slane %v2249, 4
        %v2251 = vadd.f32 %v2249, %v2250
        %v2252 = vrot.slane %v2251, 2
        %v2253 = vadd.f32 %v2251, %v2252
        %v2254 = vrot.slane %v2253, 1
        %v2255 = vadd.f32 %v2253, %v2254
        %v2256 = vadd.f32 %v2218, %v2255
        %2257 = vst [vmem:[#allocation3] sm:$0x1] %v2256
        %v2258 = vld [vmem:[#allocation4] sm:$0x1]
        %v2259 = vmul.f32 %v2152, %v2152
        %v2260 = vmul.f32 %v2153, %v2153
        %v2261 = vmul.f32 %v2154, %v2154
        %v2262 = vmul.f32 %v2155, %v2155
        %v2263 = vmul.f32 %v2156, %v2156
        %v2264 = vmul.f32 %v2157, %v2157
        %v2265 = vmul.f32 %v2158, %v2158
        %v2266 = vmul.f32 %v2159, %v2159
        %v2267 = vmul.f32 %v2160, %v2160
        %v2268 = vmul.f32 %v2161, %v2161
        %v2269 = vmul.f32 %v2162, %v2162
        %v2270 = vmul.f32 %v2163, %v2163
        %v2271 = vmul.f32 %v2164, %v2164
        %v2272 = vmul.f32 %v2165, %v2165
        %v2273 = vmul.f32 %v2166, %v2166
        %v2274 = vmul.f32 %v2167, %v2167
        %v2275 = vmul.f32 %v2168, %v2168
        %v2276 = vmul.f32 %v2169, %v2169
        %v2277 = vmul.f32 %v2170, %v2170
        %v2278 = vmul.f32 %v2171, %v2171
        %v2279 = vmul.f32 %v2172, %v2172
        %v2280 = vmul.f32 %v2173, %v2173
        %v2281 = vmul.f32 %v2174, %v2174
        %v2282 = vmul.f32 %v2175, %v2175
        %v2283 = vmul.f32 %v2176, %v2176
        %v2284 = vmul.f32 %v2177, %v2177
        %v2285 = vmul.f32 %v2178, %v2178
        %v2286 = vmul.f32 %v2179, %v2179
        %v2287 = vmul.f32 %v2180, %v2180
        %v2288 = vmul.f32 %v2181, %v2181
        %v2289 = vmul.f32 %v2182, %v2182
        %v2290 = vmul.f32 %v2183, %v2183
        %v2291 = vadd.f32 %v2259, %v2260
        %v2292 = vadd.f32 %v2291, %v2261
        %v2293 = vadd.f32 %v2292, %v2262
        %v2294 = vadd.f32 %v2293, %v2263
        %v2295 = vadd.f32 %v2294, %v2264
        %v2296 = vadd.f32 %v2295, %v2265
        %v2297 = vadd.f32 %v2296, %v2266
        %v2298 = vadd.f32 %v2297, %v2267
        %v2299 = vadd.f32 %v2298, %v2268
        %v2300 = vadd.f32 %v2299, %v2269
        %v2301 = vadd.f32 %v2300, %v2270
        %v2302 = vadd.f32 %v2301, %v2271
        %v2303 = vadd.f32 %v2302, %v2272
        %v2304 = vadd.f32 %v2303, %v2273
        %v2305 = vadd.f32 %v2304, %v2274
        %v2306 = vadd.f32 %v2305, %v2275
        %v2307 = vadd.f32 %v2306, %v2276
        %v2308 = vadd.f32 %v2307, %v2277
        %v2309 = vadd.f32 %v2308, %v2278
        %v2310 = vadd.f32 %v2309, %v2279
        %v2311 = vadd.f32 %v2310, %v2280
        %v2312 = vadd.f32 %v2311, %v2281
        %v2313 = vadd.f32 %v2312, %v2282
        %v2314 = vadd.f32 %v2313, %v2283
        %v2315 = vadd.f32 %v2314, %v2284
        %v2316 = vadd.f32 %v2315, %v2285
        %v2317 = vadd.f32 %v2316, %v2286
        %v2318 = vadd.f32 %v2317, %v2287
        %v2319 = vadd.f32 %v2318, %v2288
        %v2320 = vadd.f32 %v2319, %v2289
        %v2321 = vadd.f32 %v2320, %v2290
        %v2322 = vrot.slane %v2321, 4
        %v2323 = vadd.f32 %v2321, %v2322
        %v2324 = vrot.slane %v2323, 2
        %v2325 = vadd.f32 %v2323, %v2324
        %v2326 = vrot.slane %v2325, 1
        %v2327 = vadd.f32 %v2325, %v2326
        %v2328 = vadd.f32 %v2258, %v2327
        %2329 = vst [vmem:[#allocation4] sm:$0x1] %v2328
      $region52: #{repconv_forward.3} parent=47 // pred_fallthru
        _
      %p2330 = scmp.eq.s32.totalorder %s22, 1
      // Predicated region
      $region57: #{repconv_forward.3} parent=47 // pred_check
        %p2331 = pneg %p2330
      $region58: #{repconv_forward.3} parent=47 // pred_check_branch
        %2333 = sbr.rel (%p2331) target = $region60
      $region59: #{repconv_forward.3} parent=47 // pred_region
        %s2334 = smul.u32 %s23, 256
        %s2335 = scalar_lea.vmem [#allocation2], %s2334
        %v2336 = vld [vmem:[%s2335] sm:$0xff]
        %v2337 = vld [vmem:[%s2335 + $0x8] sm:$0xff]
        %v2338 = vld [vmem:[%s2335 + $0x10] sm:$0xff]
        %v2339 = vld [vmem:[%s2335 + $0x18] sm:$0xff]
        %v2340 = vld [vmem:[%s2335 + $0x20] sm:$0xff]
        %v2341 = vld [vmem:[%s2335 + $0x28] sm:$0xff]
        %v2342 = vld [vmem:[%s2335 + $0x30] sm:$0xff]
        %v2343 = vld [vmem:[%s2335 + $0x38] sm:$0xff]
        %v2344 = vld [vmem:[%s2335 + $0x40] sm:$0xff]
        %v2345 = vld [vmem:[%s2335 + $0x48] sm:$0xff]
        %v2346 = vld [vmem:[%s2335 + $0x50] sm:$0xff]
        %v2347 = vld [vmem:[%s2335 + $0x58] sm:$0xff]
        %v2348 = vld [vmem:[%s2335 + $0x60] sm:$0xff]
        %v2349 = vld [vmem:[%s2335 + $0x68] sm:$0xff]
        %v2350 = vld [vmem:[%s2335 + $0x70] sm:$0xff]
        %v2351 = vld [vmem:[%s2335 + $0x78] sm:$0xff]
        %v2352 = vld [vmem:[%s2335 + $0x80] sm:$0xff]
        %v2353 = vld [vmem:[%s2335 + $0x88] sm:$0xff]
        %v2354 = vld [vmem:[%s2335 + $0x90] sm:$0xff]
        %v2355 = vld [vmem:[%s2335 + $0x98] sm:$0xff]
        %v2356 = vld [vmem:[%s2335 + $0xa0] sm:$0xff]
        %v2357 = vld [vmem:[%s2335 + $0xa8] sm:$0xff]
        %v2358 = vld [vmem:[%s2335 + $0xb0] sm:$0xff]
        %v2359 = vld [vmem:[%s2335 + $0xb8] sm:$0xff]
        %v2360 = vld [vmem:[%s2335 + $0xc0] sm:$0xff]
        %v2361 = vld [vmem:[%s2335 + $0xc8] sm:$0xff]
        %v2362 = vld [vmem:[%s2335 + $0xd0] sm:$0xff]
        %v2363 = vld [vmem:[%s2335 + $0xd8] sm:$0xff]
        %v2364 = vld [vmem:[%s2335 + $0xe0] sm:$0xff]
        %v2365 = vld [vmem:[%s2335 + $0xe8] sm:$0xff]
        %v2366 = vld [vmem:[%s2335 + $0xf0] sm:$0xff]
        %v2367 = vld [vmem:[%s2335 + $0xf8] sm:$0xff]
        %v2368 = vld [vmem:[#allocation3] sm:$0x1]
        %v2369 = vmul.f32 %v2368, 0.001953125
        %v2370 = vld [vmem:[#allocation4] sm:$0x1]
        %v2371 = vmul.f32 %v2370, 0.001953125
        %v2372 = vmul.f32 %v2369, %v2369
        %v2373 = vsub.f32 %v2371, %v2372
        %v2374 = vadd.f32 %v2373, 1e-05
        %v2375 = vrsqrt.pop %v2374
        %v2376 = vld [vmem:[%s3] sm:$0x1]
        %v2377 = vmul.f32 %v2375, %v2376
        %v2379 = vlaneseq
        %v2380 = vshrl.u32 %v2379, 7
        %v2381 = vsub.s32 0, %v2380
        %v2382 = vrot.slane %v2369, %v2381
        %v2384 = vsub.f32 %v2336, %v2382
        %v2385 = vsub.f32 %v2337, %v2382
        %v2386 = vsub.f32 %v2338, %v2382
        %v2387 = vsub.f32 %v2339, %v2382
        %v2388 = vsub.f32 %v2340, %v2382
        %v2389 = vsub.f32 %v2341, %v2382
        %v2390 = vsub.f32 %v2342, %v2382
        %v2391 = vsub.f32 %v2343, %v2382
        %v2392 = vsub.f32 %v2344, %v2382
        %v2393 = vsub.f32 %v2345, %v2382
        %v2394 = vsub.f32 %v2346, %v2382
        %v2395 = vsub.f32 %v2347, %v2382
        %v2396 = vsub.f32 %v2348, %v2382
        %v2397 = vsub.f32 %v2349, %v2382
        %v2398 = vsub.f32 %v2350, %v2382
        %v2399 = vsub.f32 %v2351, %v2382
        %v2400 = vsub.f32 %v2352, %v2382
        %v2401 = vsub.f32 %v2353, %v2382
        %v2402 = vsub.f32 %v2354, %v2382
        %v2403 = vsub.f32 %v2355, %v2382
        %v2404 = vsub.f32 %v2356, %v2382
        %v2405 = vsub.f32 %v2357, %v2382
        %v2406 = vsub.f32 %v2358, %v2382
        %v2407 = vsub.f32 %v2359, %v2382
        %v2408 = vsub.f32 %v2360, %v2382
        %v2409 = vsub.f32 %v2361, %v2382
        %v2410 = vsub.f32 %v2362, %v2382
        %v2411 = vsub.f32 %v2363, %v2382
        %v2412 = vsub.f32 %v2364, %v2382
        %v2413 = vsub.f32 %v2365, %v2382
        %v2414 = vsub.f32 %v2366, %v2382
        %v2415 = vsub.f32 %v2367, %v2382
        %v2417 = vlaneseq
        %v2418 = vshrl.u32 %v2417, 7
        %v2419 = vsub.s32 0, %v2418
        %v2420 = vrot.slane %v2377, %v2419
        %v2422 = vmul.f32 %v2384, %v2420
        %v2423 = vmul.f32 %v2385, %v2420
        %v2424 = vmul.f32 %v2386, %v2420
        %v2425 = vmul.f32 %v2387, %v2420
        %v2426 = vmul.f32 %v2388, %v2420
        %v2427 = vmul.f32 %v2389, %v2420
        %v2428 = vmul.f32 %v2390, %v2420
        %v2429 = vmul.f32 %v2391, %v2420
        %v2430 = vmul.f32 %v2392, %v2420
        %v2431 = vmul.f32 %v2393, %v2420
        %v2432 = vmul.f32 %v2394, %v2420
        %v2433 = vmul.f32 %v2395, %v2420
        %v2434 = vmul.f32 %v2396, %v2420
        %v2435 = vmul.f32 %v2397, %v2420
        %v2436 = vmul.f32 %v2398, %v2420
        %v2437 = vmul.f32 %v2399, %v2420
        %v2438 = vmul.f32 %v2400, %v2420
        %v2439 = vmul.f32 %v2401, %v2420
        %v2440 = vmul.f32 %v2402, %v2420
        %v2441 = vmul.f32 %v2403, %v2420
        %v2442 = vmul.f32 %v2404, %v2420
        %v2443 = vmul.f32 %v2405, %v2420
        %v2444 = vmul.f32 %v2406, %v2420
        %v2445 = vmul.f32 %v2407, %v2420
        %v2446 = vmul.f32 %v2408, %v2420
        %v2447 = vmul.f32 %v2409, %v2420
        %v2448 = vmul.f32 %v2410, %v2420
        %v2449 = vmul.f32 %v2411, %v2420
        %v2450 = vmul.f32 %v2412, %v2420
        %v2451 = vmul.f32 %v2413, %v2420
        %v2452 = vmul.f32 %v2414, %v2420
        %v2453 = vmul.f32 %v2415, %v2420
        %v2454 = vld [vmem:[%s4] sm:$0x1]
        %v2456 = vlaneseq
        %v2457 = vshrl.u32 %v2456, 7
        %v2458 = vsub.s32 0, %v2457
        %v2459 = vrot.slane %v2454, %v2458
        %v2461 = vadd.f32 %v2422, %v2459
        %v2462 = vadd.f32 %v2423, %v2459
        %v2463 = vadd.f32 %v2424, %v2459
        %v2464 = vadd.f32 %v2425, %v2459
        %v2465 = vadd.f32 %v2426, %v2459
        %v2466 = vadd.f32 %v2427, %v2459
        %v2467 = vadd.f32 %v2428, %v2459
        %v2468 = vadd.f32 %v2429, %v2459
        %v2469 = vadd.f32 %v2430, %v2459
        %v2470 = vadd.f32 %v2431, %v2459
        %v2471 = vadd.f32 %v2432, %v2459
        %v2472 = vadd.f32 %v2433, %v2459
        %v2473 = vadd.f32 %v2434, %v2459
        %v2474 = vadd.f32 %v2435, %v2459
        %v2475 = vadd.f32 %v2436, %v2459
        %v2476 = vadd.f32 %v2437, %v2459
        %v2477 = vadd.f32 %v2438, %v2459
        %v2478 = vadd.f32 %v2439, %v2459
        %v2479 = vadd.f32 %v2440, %v2459
        %v2480 = vadd.f32 %v2441, %v2459
        %v2481 = vadd.f32 %v2442, %v2459
        %v2482 = vadd.f32 %v2443, %v2459
        %v2483 = vadd.f32 %v2444, %v2459
        %v2484 = vadd.f32 %v2445, %v2459
        %v2485 = vadd.f32 %v2446, %v2459
        %v2486 = vadd.f32 %v2447, %v2459
        %v2487 = vadd.f32 %v2448, %v2459
        %v2488 = vadd.f32 %v2449, %v2459
        %v2489 = vadd.f32 %v2450, %v2459
        %v2490 = vadd.f32 %v2451, %v2459
        %v2491 = vadd.f32 %v2452, %v2459
        %v2492 = vadd.f32 %v2453, %v2459
        %v2493 = vld [vmem:[%s5] sm:$0xff]
        %v2494 = vld [vmem:[%s5 + $0x8] sm:$0xff]
        %v2495 = vld [vmem:[%s5 + $0x10] sm:$0xff]
        %v2496 = vld [vmem:[%s5 + $0x18] sm:$0xff]
        %v2497 = vld [vmem:[%s5 + $0x20] sm:$0xff]
        %v2498 = vld [vmem:[%s5 + $0x28] sm:$0xff]
        %v2499 = vld [vmem:[%s5 + $0x30] sm:$0xff]
        %v2500 = vld [vmem:[%s5 + $0x38] sm:$0xff]
        %v2501 = vld [vmem:[%s5 + $0x40] sm:$0xff]
        %v2502 = vld [vmem:[%s5 + $0x48] sm:$0xff]
        %v2503 = vld [vmem:[%s5 + $0x50] sm:$0xff]
        %v2504 = vld [vmem:[%s5 + $0x58] sm:$0xff]
        %v2505 = vld [vmem:[%s5 + $0x60] sm:$0xff]
        %v2506 = vld [vmem:[%s5 + $0x68] sm:$0xff]
        %v2507 = vld [vmem:[%s5 + $0x70] sm:$0xff]
        %v2508 = vld [vmem:[%s5 + $0x78] sm:$0xff]
        %v2509 = vld [vmem:[%s5 + $0x80] sm:$0xff]
        %v2510 = vld [vmem:[%s5 + $0x88] sm:$0xff]
        %v2511 = vld [vmem:[%s5 + $0x90] sm:$0xff]
        %v2512 = vld [vmem:[%s5 + $0x98] sm:$0xff]
        %v2513 = vld [vmem:[%s5 + $0xa0] sm:$0xff]
        %v2514 = vld [vmem:[%s5 + $0xa8] sm:$0xff]
        %v2515 = vld [vmem:[%s5 + $0xb0] sm:$0xff]
        %v2516 = vld [vmem:[%s5 + $0xb8] sm:$0xff]
        %v2517 = vld [vmem:[%s5 + $0xc0] sm:$0xff]
        %v2518 = vld [vmem:[%s5 + $0xc8] sm:$0xff]
        %v2519 = vld [vmem:[%s5 + $0xd0] sm:$0xff]
        %v2520 = vld [vmem:[%s5 + $0xd8] sm:$0xff]
        %v2521 = vld [vmem:[%s5 + $0xe0] sm:$0xff]
        %v2522 = vld [vmem:[%s5 + $0xe8] sm:$0xff]
        %v2523 = vld [vmem:[%s5 + $0xf0] sm:$0xff]
        %v2524 = vld [vmem:[%s5 + $0xf8] sm:$0xff]
        %v2525 = vld [vmem:[%s5 + $0x100] sm:$0xff]
        %v2526 = vld [vmem:[%s5 + $0x108] sm:$0xff]
        %v2527 = vld [vmem:[%s5 + $0x110] sm:$0xff]
        %v2528 = vld [vmem:[%s5 + $0x118] sm:$0xff]
        %v2529 = vld [vmem:[%s5 + $0x120] sm:$0xff]
        %v2530 = vld [vmem:[%s5 + $0x128] sm:$0xff]
        %v2531 = vld [vmem:[%s5 + $0x130] sm:$0xff]
        %v2532 = vld [vmem:[%s5 + $0x138] sm:$0xff]
        %v2533 = vld [vmem:[%s5 + $0x140] sm:$0xff]
        %v2534 = vld [vmem:[%s5 + $0x148] sm:$0xff]
        %v2535 = vld [vmem:[%s5 + $0x150] sm:$0xff]
        %v2536 = vld [vmem:[%s5 + $0x158] sm:$0xff]
        %v2537 = vld [vmem:[%s5 + $0x160] sm:$0xff]
        %v2538 = vld [vmem:[%s5 + $0x168] sm:$0xff]
        %v2539 = vld [vmem:[%s5 + $0x170] sm:$0xff]
        %v2540 = vld [vmem:[%s5 + $0x178] sm:$0xff]
        %v2541 = vld [vmem:[%s5 + $0x180] sm:$0xff]
        %v2542 = vld [vmem:[%s5 + $0x188] sm:$0xff]
        %v2543 = vld [vmem:[%s5 + $0x190] sm:$0xff]
        %v2544 = vld [vmem:[%s5 + $0x198] sm:$0xff]
        %v2545 = vld [vmem:[%s5 + $0x1a0] sm:$0xff]
        %v2546 = vld [vmem:[%s5 + $0x1a8] sm:$0xff]
        %v2547 = vld [vmem:[%s5 + $0x1b0] sm:$0xff]
        %v2548 = vld [vmem:[%s5 + $0x1b8] sm:$0xff]
        %v2549 = vld [vmem:[%s5 + $0x1c0] sm:$0xff]
        %v2550 = vld [vmem:[%s5 + $0x1c8] sm:$0xff]
        %v2551 = vld [vmem:[%s5 + $0x1d0] sm:$0xff]
        %v2552 = vld [vmem:[%s5 + $0x1d8] sm:$0xff]
        %v2553 = vld [vmem:[%s5 + $0x1e0] sm:$0xff]
        %v2554 = vld [vmem:[%s5 + $0x1e8] sm:$0xff]
        %v2555 = vld [vmem:[%s5 + $0x1f0] sm:$0xff]
        %v2556 = vld [vmem:[%s5 + $0x1f8] sm:$0xff]
        %v2557 = vld [vmem:[%s5 + $0x200] sm:$0xff]
        %v2558 = vld [vmem:[%s5 + $0x208] sm:$0xff]
        %v2559 = vld [vmem:[%s5 + $0x210] sm:$0xff]
        %v2560 = vld [vmem:[%s5 + $0x218] sm:$0xff]
        %v2561 = vld [vmem:[%s5 + $0x220] sm:$0xff]
        %v2562 = vld [vmem:[%s5 + $0x228] sm:$0xff]
        %v2563 = vld [vmem:[%s5 + $0x230] sm:$0xff]
        %v2564 = vld [vmem:[%s5 + $0x238] sm:$0xff]
        %v2565 = vld [vmem:[%s5 + $0x240] sm:$0xff]
        %v2566 = vld [vmem:[%s5 + $0x248] sm:$0xff]
        %v2567 = vld [vmem:[%s5 + $0x250] sm:$0xff]
        %v2568 = vld [vmem:[%s5 + $0x258] sm:$0xff]
        %v2569 = vld [vmem:[%s5 + $0x260] sm:$0xff]
        %v2570 = vld [vmem:[%s5 + $0x268] sm:$0xff]
        %v2571 = vld [vmem:[%s5 + $0x270] sm:$0xff]
        %v2572 = vld [vmem:[%s5 + $0x278] sm:$0xff]
        %v2573 = vld [vmem:[%s5 + $0x280] sm:$0xf]
        %v2574 = vld [vmem:[%s5 + $0x288] sm:$0xf]
        %v2575 = vld [vmem:[%s335] sm:$0xff]
        %v2576 = vld [vmem:[%s335 + $0x8] sm:$0xff]
        %v2577 = vld [vmem:[%s335 + $0x10] sm:$0x3]
        %v2578 = vld [vmem:[%s335 + $0x18] sm:$0xff]
        %v2579 = vld [vmem:[%s335 + $0x20] sm:$0xff]
        %v2580 = vld [vmem:[%s335 + $0x28] sm:$0x3]
        %v2581 = vld [vmem:[%s335 + $0x30] sm:$0xff]
        %v2582 = vld [vmem:[%s335 + $0x38] sm:$0xff]
        %v2583 = vld [vmem:[%s335 + $0x40] sm:$0x3]
        %v2584 = vld [vmem:[%s335 + $0x48] sm:$0xff]
        %v2585 = vld [vmem:[%s335 + $0x50] sm:$0xff]
        %v2586 = vld [vmem:[%s335 + $0x58] sm:$0x3]
        %v2587 = vld [vmem:[%s335 + $0x60] sm:$0xff]
        %v2588 = vld [vmem:[%s335 + $0x68] sm:$0xff]
        %v2589 = vld [vmem:[%s335 + $0x70] sm:$0x3]
        %v2590 = vld [vmem:[%s335 + $0x78] sm:$0xff]
        %v2591 = vld [vmem:[%s335 + $0x80] sm:$0xff]
        %v2592 = vld [vmem:[%s335 + $0x88] sm:$0x3]
        %v2593 = vld [vmem:[%s335 + $0x90] sm:$0xff]
        %v2594 = vld [vmem:[%s335 + $0x98] sm:$0xff]
        %v2595 = vld [vmem:[%s335 + $0xa0] sm:$0x3]
        %v2596 = vld [vmem:[%s335 + $0xa8] sm:$0xff]
        %v2597 = vld [vmem:[%s335 + $0xb0] sm:$0xff]
        %v2598 = vld [vmem:[%s335 + $0xb8] sm:$0x3]
        %v2599 = vld [vmem:[%s335 + $0xc0] sm:$0xff]
        %v2600 = vld [vmem:[%s335 + $0xc8] sm:$0xff]
        %v2601 = vld [vmem:[%s335 + $0xd0] sm:$0x3]
        %v2602 = vld [vmem:[%s335 + $0xd8] sm:$0xff]
        %v2603 = vld [vmem:[%s335 + $0xe0] sm:$0xff]
        %v2604 = vld [vmem:[%s335 + $0xe8] sm:$0x3]
        %v2605 = vld [vmem:[%s335 + $0xf0] sm:$0xff]
        %v2606 = vld [vmem:[%s335 + $0xf8] sm:$0xff]
        %v2607 = vld [vmem:[%s335 + $0x100] sm:$0x3]
        %v2608 = vld [vmem:[%s335 + $0x108] sm:$0xff]
        %v2609 = vld [vmem:[%s335 + $0x110] sm:$0xff]
        %v2610 = vld [vmem:[%s335 + $0x118] sm:$0x3]
        %v2611 = vld [vmem:[%s335 + $0x120] sm:$0xff]
        %v2612 = vld [vmem:[%s335 + $0x128] sm:$0xff]
        %v2613 = vld [vmem:[%s335 + $0x130] sm:$0x3]
        %v2614 = vld [vmem:[%s335 + $0x138] sm:$0xff]
        %v2615 = vld [vmem:[%s335 + $0x140] sm:$0xff]
        %v2616 = vld [vmem:[%s335 + $0x148] sm:$0x3]
        %v2617 = vld [vmem:[%s335 + $0x150] sm:$0xff]
        %v2618 = vld [vmem:[%s335 + $0x158] sm:$0xff]
        %v2619 = vld [vmem:[%s335 + $0x160] sm:$0x3]
        %v2620 = vld [vmem:[%s335 + $0x168] sm:$0xff]
        %v2621 = vld [vmem:[%s335 + $0x170] sm:$0xff]
        %v2622 = vld [vmem:[%s335 + $0x178] sm:$0x3]
        %v2623 = vld [vmem:[%s335 + $0x180] sm:$0xff]
        %v2624 = vld [vmem:[%s335 + $0x188] sm:$0xff]
        %v2625 = vld [vmem:[%s335 + $0x190] sm:$0x3]
        %v2626 = vld [vmem:[%s335 + $0x198] sm:$0xff]
        %v2627 = vld [vmem:[%s335 + $0x1a0] sm:$0xff]
        %v2628 = vld [vmem:[%s335 + $0x1a8] sm:$0x3]
        %v2683 = vcombine.high %v2575, %v2575
        %v2685 = vunpack.c.l.s4 1983009808
        %v2686 = vunpack.c.0.s8 %v2685
        %v2687 = vlaneseq
        %v2688 = vshrl.u32 %v2687, 7
        %v2689 = vsub.s32 %v2686, %v2688
        %v2690 = vrot.slane %v2575, %v2689
        %v2692 = vunpack.c.l.s4 1983009808
        %v2693 = vunpack.c.0.s8 %v2692
        %v2694 = vlaneseq
        %v2695 = vshrl.u32 %v2694, 7
        %v2696 = vsub.s32 %v2693, %v2695
        %v2697 = vrot.slane %v2683, %v2696
        %v2698 = vcombine.high %v2690, %v2690
        %v2699 = vcombine.high %v2697, %v2697
        %v2700 = vcombine.high %v2576, %v2576
        %v2702 = vunpack.c.l.s4 1983009808
        %v2703 = vunpack.c.0.s8 %v2702
        %v2704 = vlaneseq
        %v2705 = vshrl.u32 %v2704, 7
        %v2706 = vsub.s32 %v2703, %v2705
        %v2707 = vrot.slane %v2576, %v2706
        %v2709 = vunpack.c.l.s4 1983009808
        %v2710 = vunpack.c.0.s8 %v2709
        %v2711 = vlaneseq
        %v2712 = vshrl.u32 %v2711, 7
        %v2713 = vsub.s32 %v2710, %v2712
        %v2714 = vrot.slane %v2700, %v2713
        %v2715 = vcombine.high %v2707, %v2707
        %v2716 = vcombine.high %v2714, %v2714
        %v2718 = vunpack.c.l.s4 1983009808
        %v2719 = vunpack.c.0.s8 %v2718
        %v2720 = vlaneseq
        %v2721 = vshrl.u32 %v2720, 7
        %v2722 = vsub.s32 %v2719, %v2721
        %v2723 = vrot.slane %v2577, %v2722
        %v2724 = vcombine.high %v2578, %v2578
        %v2726 = vunpack.c.l.s4 1983009808
        %v2727 = vunpack.c.0.s8 %v2726
        %v2728 = vlaneseq
        %v2729 = vshrl.u32 %v2728, 7
        %v2730 = vsub.s32 %v2727, %v2729
        %v2731 = vrot.slane %v2578, %v2730
        %v2733 = vunpack.c.l.s4 1983009808
        %v2734 = vunpack.c.0.s8 %v2733
        %v2735 = vlaneseq
        %v2736 = vshrl.u32 %v2735, 7
        %v2737 = vsub.s32 %v2734, %v2736
        %v2738 = vrot.slane %v2724, %v2737
        %v2739 = vcombine.high %v2731, %v2731
        %v2740 = vcombine.high %v2738, %v2738
        %v2741 = vcombine.high %v2579, %v2579
        %v2743 = vunpack.c.l.s4 1983009808
        %v2744 = vunpack.c.0.s8 %v2743
        %v2745 = vlaneseq
        %v2746 = vshrl.u32 %v2745, 7
        %v2747 = vsub.s32 %v2744, %v2746
        %v2748 = vrot.slane %v2579, %v2747
        %v2750 = vunpack.c.l.s4 1983009808
        %v2751 = vunpack.c.0.s8 %v2750
        %v2752 = vlaneseq
        %v2753 = vshrl.u32 %v2752, 7
        %v2754 = vsub.s32 %v2751, %v2753
        %v2755 = vrot.slane %v2741, %v2754
        %v2756 = vcombine.high %v2748, %v2748
        %v2757 = vcombine.high %v2755, %v2755
        %v2759 = vunpack.c.l.s4 1983009808
        %v2760 = vunpack.c.0.s8 %v2759
        %v2761 = vlaneseq
        %v2762 = vshrl.u32 %v2761, 7
        %v2763 = vsub.s32 %v2760, %v2762
        %v2764 = vrot.slane %v2580, %v2763
        %v2765 = vcombine.high %v2581, %v2581
        %v2767 = vunpack.c.l.s4 1983009808
        %v2768 = vunpack.c.0.s8 %v2767
        %v2769 = vlaneseq
        %v2770 = vshrl.u32 %v2769, 7
        %v2771 = vsub.s32 %v2768, %v2770
        %v2772 = vrot.slane %v2581, %v2771
        %v2774 = vunpack.c.l.s4 1983009808
        %v2775 = vunpack.c.0.s8 %v2774
        %v2776 = vlaneseq
        %v2777 = vshrl.u32 %v2776, 7
        %v2778 = vsub.s32 %v2775, %v2777
        %v2779 = vrot.slane %v2765, %v2778
        %v2780 = vcombine.high %v2772, %v2772
        %v2781 = vcombine.high %v2779, %v2779
        %v2782 = vcombine.high %v2582, %v2582
        %v2784 = vunpack.c.l.s4 1983009808
        %v2785 = vunpack.c.0.s8 %v2784
        %v2786 = vlaneseq
        %v2787 = vshrl.u32 %v2786, 7
        %v2788 = vsub.s32 %v2785, %v2787
        %v2789 = vrot.slane %v2582, %v2788
        %v2791 = vunpack.c.l.s4 1983009808
        %v2792 = vunpack.c.0.s8 %v2791
        %v2793 = vlaneseq
        %v2794 = vshrl.u32 %v2793, 7
        %v2795 = vsub.s32 %v2792, %v2794
        %v2796 = vrot.slane %v2782, %v2795
        %v2797 = vcombine.high %v2789, %v2789
        %v2798 = vcombine.high %v2796, %v2796
        %v2800 = vunpack.c.l.s4 1983009808
        %v2801 = vunpack.c.0.s8 %v2800
        %v2802 = vlaneseq
        %v2803 = vshrl.u32 %v2802, 7
        %v2804 = vsub.s32 %v2801, %v2803
        %v2805 = vrot.slane %v2583, %v2804
        %v2806 = vcombine.high %v2584, %v2584
        %v2808 = vunpack.c.l.s4 1983009808
        %v2809 = vunpack.c.0.s8 %v2808
        %v2810 = vlaneseq
        %v2811 = vshrl.u32 %v2810, 7
        %v2812 = vsub.s32 %v2809, %v2811
        %v2813 = vrot.slane %v2584, %v2812
        %v2815 = vunpack.c.l.s4 1983009808
        %v2816 = vunpack.c.0.s8 %v2815
        %v2817 = vlaneseq
        %v2818 = vshrl.u32 %v2817, 7
        %v2819 = vsub.s32 %v2816, %v2818
        %v2820 = vrot.slane %v2806, %v2819
        %v2821 = vcombine.high %v2813, %v2813
        %v2822 = vcombine.high %v2820, %v2820
        %v2823 = vcombine.high %v2585, %v2585
        %v2825 = vunpack.c.l.s4 1983009808
        %v2826 = vunpack.c.0.s8 %v2825
        %v2827 = vlaneseq
        %v2828 = vshrl.u32 %v2827, 7
        %v2829 = vsub.s32 %v2826, %v2828
        %v2830 = vrot.slane %v2585, %v2829
        %v2832 = vunpack.c.l.s4 1983009808
        %v2833 = vunpack.c.0.s8 %v2832
        %v2834 = vlaneseq
        %v2835 = vshrl.u32 %v2834, 7
        %v2836 = vsub.s32 %v2833, %v2835
        %v2837 = vrot.slane %v2823, %v2836
        %v2838 = vcombine.high %v2830, %v2830
        %v2839 = vcombine.high %v2837, %v2837
        %v2841 = vunpack.c.l.s4 1983009808
        %v2842 = vunpack.c.0.s8 %v2841
        %v2843 = vlaneseq
        %v2844 = vshrl.u32 %v2843, 7
        %v2845 = vsub.s32 %v2842, %v2844
        %v2846 = vrot.slane %v2586, %v2845
        %v2847 = vcombine.high %v2587, %v2587
        %v2849 = vunpack.c.l.s4 1983009808
        %v2850 = vunpack.c.0.s8 %v2849
        %v2851 = vlaneseq
        %v2852 = vshrl.u32 %v2851, 7
        %v2853 = vsub.s32 %v2850, %v2852
        %v2854 = vrot.slane %v2587, %v2853
        %v2856 = vunpack.c.l.s4 1983009808
        %v2857 = vunpack.c.0.s8 %v2856
        %v2858 = vlaneseq
        %v2859 = vshrl.u32 %v2858, 7
        %v2860 = vsub.s32 %v2857, %v2859
        %v2861 = vrot.slane %v2847, %v2860
        %v2862 = vcombine.high %v2854, %v2854
        %v2863 = vcombine.high %v2861, %v2861
        %v2864 = vcombine.high %v2588, %v2588
        %v2866 = vunpack.c.l.s4 1983009808
        %v2867 = vunpack.c.0.s8 %v2866
        %v2868 = vlaneseq
        %v2869 = vshrl.u32 %v2868, 7
        %v2870 = vsub.s32 %v2867, %v2869
        %v2871 = vrot.slane %v2588, %v2870
        %v2873 = vunpack.c.l.s4 1983009808
        %v2874 = vunpack.c.0.s8 %v2873
        %v2875 = vlaneseq
        %v2876 = vshrl.u32 %v2875, 7
        %v2877 = vsub.s32 %v2874, %v2876
        %v2878 = vrot.slane %v2864, %v2877
        %v2879 = vcombine.high %v2871, %v2871
        %v2880 = vcombine.high %v2878, %v2878
        %v2882 = vunpack.c.l.s4 1983009808
        %v2883 = vunpack.c.0.s8 %v2882
        %v2884 = vlaneseq
        %v2885 = vshrl.u32 %v2884, 7
        %v2886 = vsub.s32 %v2883, %v2885
        %v2887 = vrot.slane %v2589, %v2886
        %v2888 = vcombine.high %v2590, %v2590
        %v2890 = vunpack.c.l.s4 1983009808
        %v2891 = vunpack.c.0.s8 %v2890
        %v2892 = vlaneseq
        %v2893 = vshrl.u32 %v2892, 7
        %v2894 = vsub.s32 %v2891, %v2893
        %v2895 = vrot.slane %v2590, %v2894
        %v2897 = vunpack.c.l.s4 1983009808
        %v2898 = vunpack.c.0.s8 %v2897
        %v2899 = vlaneseq
        %v2900 = vshrl.u32 %v2899, 7
        %v2901 = vsub.s32 %v2898, %v2900
        %v2902 = vrot.slane %v2888, %v2901
        %v2903 = vcombine.high %v2895, %v2895
        %v2904 = vcombine.high %v2902, %v2902
        %v2905 = vcombine.high %v2591, %v2591
        %v2907 = vunpack.c.l.s4 1983009808
        %v2908 = vunpack.c.0.s8 %v2907
        %v2909 = vlaneseq
        %v2910 = vshrl.u32 %v2909, 7
        %v2911 = vsub.s32 %v2908, %v2910
        %v2912 = vrot.slane %v2591, %v2911
        %v2914 = vunpack.c.l.s4 1983009808
        %v2915 = vunpack.c.0.s8 %v2914
        %v2916 = vlaneseq
        %v2917 = vshrl.u32 %v2916, 7
        %v2918 = vsub.s32 %v2915, %v2917
        %v2919 = vrot.slane %v2905, %v2918
        %v2920 = vcombine.high %v2912, %v2912
        %v2921 = vcombine.high %v2919, %v2919
        %v2923 = vunpack.c.l.s4 1983009808
        %v2924 = vunpack.c.0.s8 %v2923
        %v2925 = vlaneseq
        %v2926 = vshrl.u32 %v2925, 7
        %v2927 = vsub.s32 %v2924, %v2926
        %v2928 = vrot.slane %v2592, %v2927
        %v2929 = vcombine.high %v2593, %v2593
        %v2931 = vunpack.c.l.s4 1983009808
        %v2932 = vunpack.c.0.s8 %v2931
        %v2933 = vlaneseq
        %v2934 = vshrl.u32 %v2933, 7
        %v2935 = vsub.s32 %v2932, %v2934
        %v2936 = vrot.slane %v2593, %v2935
        %v2938 = vunpack.c.l.s4 1983009808
        %v2939 = vunpack.c.0.s8 %v2938
        %v2940 = vlaneseq
        %v2941 = vshrl.u32 %v2940, 7
        %v2942 = vsub.s32 %v2939, %v2941
        %v2943 = vrot.slane %v2929, %v2942
        %v2944 = vcombine.high %v2936, %v2936
        %v2945 = vcombine.high %v2943, %v2943
        %v2946 = vcombine.high %v2594, %v2594
        %v2948 = vunpack.c.l.s4 1983009808
        %v2949 = vunpack.c.0.s8 %v2948
        %v2950 = vlaneseq
        %v2951 = vshrl.u32 %v2950, 7
        %v2952 = vsub.s32 %v2949, %v2951
        %v2953 = vrot.slane %v2594, %v2952
        %v2955 = vunpack.c.l.s4 1983009808
        %v2956 = vunpack.c.0.s8 %v2955
        %v2957 = vlaneseq
        %v2958 = vshrl.u32 %v2957, 7
        %v2959 = vsub.s32 %v2956, %v2958
        %v2960 = vrot.slane %v2946, %v2959
        %v2961 = vcombine.high %v2953, %v2953
        %v2962 = vcombine.high %v2960, %v2960
        %v2964 = vunpack.c.l.s4 1983009808
        %v2965 = vunpack.c.0.s8 %v2964
        %v2966 = vlaneseq
        %v2967 = vshrl.u32 %v2966, 7
        %v2968 = vsub.s32 %v2965, %v2967
        %v2969 = vrot.slane %v2595, %v2968
        %v2970 = vcombine.high %v2596, %v2596
        %v2972 = vunpack.c.l.s4 1983009808
        %v2973 = vunpack.c.0.s8 %v2972
        %v2974 = vlaneseq
        %v2975 = vshrl.u32 %v2974, 7
        %v2976 = vsub.s32 %v2973, %v2975
        %v2977 = vrot.slane %v2596, %v2976
        %v2979 = vunpack.c.l.s4 1983009808
        %v2980 = vunpack.c.0.s8 %v2979
        %v2981 = vlaneseq
        %v2982 = vshrl.u32 %v2981, 7
        %v2983 = vsub.s32 %v2980, %v2982
        %v2984 = vrot.slane %v2970, %v2983
        %v2985 = vcombine.high %v2977, %v2977
        %v2986 = vcombine.high %v2984, %v2984
        %v2987 = vcombine.high %v2597, %v2597
        %v2989 = vunpack.c.l.s4 1983009808
        %v2990 = vunpack.c.0.s8 %v2989
        %v2991 = vlaneseq
        %v2992 = vshrl.u32 %v2991, 7
        %v2993 = vsub.s32 %v2990, %v2992
        %v2994 = vrot.slane %v2597, %v2993
        %v2996 = vunpack.c.l.s4 1983009808
        %v2997 = vunpack.c.0.s8 %v2996
        %v2998 = vlaneseq
        %v2999 = vshrl.u32 %v2998, 7
        %v3000 = vsub.s32 %v2997, %v2999
        %v3001 = vrot.slane %v2987, %v3000
        %v3002 = vcombine.high %v2994, %v2994
        %v3003 = vcombine.high %v3001, %v3001
        %v3005 = vunpack.c.l.s4 1983009808
        %v3006 = vunpack.c.0.s8 %v3005
        %v3007 = vlaneseq
        %v3008 = vshrl.u32 %v3007, 7
        %v3009 = vsub.s32 %v3006, %v3008
        %v3010 = vrot.slane %v2598, %v3009
        %v3011 = vcombine.high %v2599, %v2599
        %v3013 = vunpack.c.l.s4 1983009808
        %v3014 = vunpack.c.0.s8 %v3013
        %v3015 = vlaneseq
        %v3016 = vshrl.u32 %v3015, 7
        %v3017 = vsub.s32 %v3014, %v3016
        %v3018 = vrot.slane %v2599, %v3017
        %v3020 = vunpack.c.l.s4 1983009808
        %v3021 = vunpack.c.0.s8 %v3020
        %v3022 = vlaneseq
        %v3023 = vshrl.u32 %v3022, 7
        %v3024 = vsub.s32 %v3021, %v3023
        %v3025 = vrot.slane %v3011, %v3024
        %v3026 = vcombine.high %v3018, %v3018
        %v3027 = vcombine.high %v3025, %v3025
        %v3028 = vcombine.high %v2600, %v2600
        %v3030 = vunpack.c.l.s4 1983009808
        %v3031 = vunpack.c.0.s8 %v3030
        %v3032 = vlaneseq
        %v3033 = vshrl.u32 %v3032, 7
        %v3034 = vsub.s32 %v3031, %v3033
        %v3035 = vrot.slane %v2600, %v3034
        %v3037 = vunpack.c.l.s4 1983009808
        %v3038 = vunpack.c.0.s8 %v3037
        %v3039 = vlaneseq
        %v3040 = vshrl.u32 %v3039, 7
        %v3041 = vsub.s32 %v3038, %v3040
        %v3042 = vrot.slane %v3028, %v3041
        %v3043 = vcombine.high %v3035, %v3035
        %v3044 = vcombine.high %v3042, %v3042
        %v3046 = vunpack.c.l.s4 1983009808
        %v3047 = vunpack.c.0.s8 %v3046
        %v3048 = vlaneseq
        %v3049 = vshrl.u32 %v3048, 7
        %v3050 = vsub.s32 %v3047, %v3049
        %v3051 = vrot.slane %v2601, %v3050
        %v3052 = vcombine.high %v2602, %v2602
        %v3054 = vunpack.c.l.s4 1983009808
        %v3055 = vunpack.c.0.s8 %v3054
        %v3056 = vlaneseq
        %v3057 = vshrl.u32 %v3056, 7
        %v3058 = vsub.s32 %v3055, %v3057
        %v3059 = vrot.slane %v2602, %v3058
        %v3061 = vunpack.c.l.s4 1983009808
        %v3062 = vunpack.c.0.s8 %v3061
        %v3063 = vlaneseq
        %v3064 = vshrl.u32 %v3063, 7
        %v3065 = vsub.s32 %v3062, %v3064
        %v3066 = vrot.slane %v3052, %v3065
        %v3067 = vcombine.high %v3059, %v3059
        %v3068 = vcombine.high %v3066, %v3066
        %v3069 = vcombine.high %v2603, %v2603
        %v3071 = vunpack.c.l.s4 1983009808
        %v3072 = vunpack.c.0.s8 %v3071
        %v3073 = vlaneseq
        %v3074 = vshrl.u32 %v3073, 7
        %v3075 = vsub.s32 %v3072, %v3074
        %v3076 = vrot.slane %v2603, %v3075
        %v3078 = vunpack.c.l.s4 1983009808
        %v3079 = vunpack.c.0.s8 %v3078
        %v3080 = vlaneseq
        %v3081 = vshrl.u32 %v3080, 7
        %v3082 = vsub.s32 %v3079, %v3081
        %v3083 = vrot.slane %v3069, %v3082
        %v3084 = vcombine.high %v3076, %v3076
        %v3085 = vcombine.high %v3083, %v3083
        %v3087 = vunpack.c.l.s4 1983009808
        %v3088 = vunpack.c.0.s8 %v3087
        %v3089 = vlaneseq
        %v3090 = vshrl.u32 %v3089, 7
        %v3091 = vsub.s32 %v3088, %v3090
        %v3092 = vrot.slane %v2604, %v3091
        %v3093 = vcombine.high %v2605, %v2605
        %v3095 = vunpack.c.l.s4 1983009808
        %v3096 = vunpack.c.0.s8 %v3095
        %v3097 = vlaneseq
        %v3098 = vshrl.u32 %v3097, 7
        %v3099 = vsub.s32 %v3096, %v3098
        %v3100 = vrot.slane %v2605, %v3099
        %v3102 = vunpack.c.l.s4 1983009808
        %v3103 = vunpack.c.0.s8 %v3102
        %v3104 = vlaneseq
        %v3105 = vshrl.u32 %v3104, 7
        %v3106 = vsub.s32 %v3103, %v3105
        %v3107 = vrot.slane %v3093, %v3106
        %v3108 = vcombine.high %v3100, %v3100
        %v3109 = vcombine.high %v3107, %v3107
        %v3110 = vcombine.high %v2606, %v2606
        %v3112 = vunpack.c.l.s4 1983009808
        %v3113 = vunpack.c.0.s8 %v3112
        %v3114 = vlaneseq
        %v3115 = vshrl.u32 %v3114, 7
        %v3116 = vsub.s32 %v3113, %v3115
        %v3117 = vrot.slane %v2606, %v3116
        %v3119 = vunpack.c.l.s4 1983009808
        %v3120 = vunpack.c.0.s8 %v3119
        %v3121 = vlaneseq
        %v3122 = vshrl.u32 %v3121, 7
        %v3123 = vsub.s32 %v3120, %v3122
        %v3124 = vrot.slane %v3110, %v3123
        %v3125 = vcombine.high %v3117, %v3117
        %v3126 = vcombine.high %v3124, %v3124
        %v3128 = vunpack.c.l.s4 1983009808
        %v3129 = vunpack.c.0.s8 %v3128
        %v3130 = vlaneseq
        %v3131 = vshrl.u32 %v3130, 7
        %v3132 = vsub.s32 %v3129, %v3131
        %v3133 = vrot.slane %v2607, %v3132
        %v3134 = vcombine.high %v2608, %v2608
        %v3136 = vunpack.c.l.s4 1983009808
        %v3137 = vunpack.c.0.s8 %v3136
        %v3138 = vlaneseq
        %v3139 = vshrl.u32 %v3138, 7
        %v3140 = vsub.s32 %v3137, %v3139
        %v3141 = vrot.slane %v2608, %v3140
        %v3143 = vunpack.c.l.s4 1983009808
        %v3144 = vunpack.c.0.s8 %v3143
        %v3145 = vlaneseq
        %v3146 = vshrl.u32 %v3145, 7
        %v3147 = vsub.s32 %v3144, %v3146
        %v3148 = vrot.slane %v3134, %v3147
        %v3149 = vcombine.high %v3141, %v3141
        %v3150 = vcombine.high %v3148, %v3148
        %v3151 = vcombine.high %v2609, %v2609
        %v3153 = vunpack.c.l.s4 1983009808
        %v3154 = vunpack.c.0.s8 %v3153
        %v3155 = vlaneseq
        %v3156 = vshrl.u32 %v3155, 7
        %v3157 = vsub.s32 %v3154, %v3156
        %v3158 = vrot.slane %v2609, %v3157
        %v3160 = vunpack.c.l.s4 1983009808
        %v3161 = vunpack.c.0.s8 %v3160
        %v3162 = vlaneseq
        %v3163 = vshrl.u32 %v3162, 7
        %v3164 = vsub.s32 %v3161, %v3163
        %v3165 = vrot.slane %v3151, %v3164
        %v3166 = vcombine.high %v3158, %v3158
        %v3167 = vcombine.high %v3165, %v3165
        %v3169 = vunpack.c.l.s4 1983009808
        %v3170 = vunpack.c.0.s8 %v3169
        %v3171 = vlaneseq
        %v3172 = vshrl.u32 %v3171, 7
        %v3173 = vsub.s32 %v3170, %v3172
        %v3174 = vrot.slane %v2610, %v3173
        %v3175 = vcombine.high %v2611, %v2611
        %v3177 = vunpack.c.l.s4 1983009808
        %v3178 = vunpack.c.0.s8 %v3177
        %v3179 = vlaneseq
        %v3180 = vshrl.u32 %v3179, 7
        %v3181 = vsub.s32 %v3178, %v3180
        %v3182 = vrot.slane %v2611, %v3181
        %v3184 = vunpack.c.l.s4 1983009808
        %v3185 = vunpack.c.0.s8 %v3184
        %v3186 = vlaneseq
        %v3187 = vshrl.u32 %v3186, 7
        %v3188 = vsub.s32 %v3185, %v3187
        %v3189 = vrot.slane %v3175, %v3188
        %v3190 = vcombine.high %v3182, %v3182
        %v3191 = vcombine.high %v3189, %v3189
        %v3192 = vcombine.high %v2612, %v2612
        %v3194 = vunpack.c.l.s4 1983009808
        %v3195 = vunpack.c.0.s8 %v3194
        %v3196 = vlaneseq
        %v3197 = vshrl.u32 %v3196, 7
        %v3198 = vsub.s32 %v3195, %v3197
        %v3199 = vrot.slane %v2612, %v3198
        %v3201 = vunpack.c.l.s4 1983009808
        %v3202 = vunpack.c.0.s8 %v3201
        %v3203 = vlaneseq
        %v3204 = vshrl.u32 %v3203, 7
        %v3205 = vsub.s32 %v3202, %v3204
        %v3206 = vrot.slane %v3192, %v3205
        %v3207 = vcombine.high %v3199, %v3199
        %v3208 = vcombine.high %v3206, %v3206
        %v3210 = vunpack.c.l.s4 1983009808
        %v3211 = vunpack.c.0.s8 %v3210
        %v3212 = vlaneseq
        %v3213 = vshrl.u32 %v3212, 7
        %v3214 = vsub.s32 %v3211, %v3213
        %v3215 = vrot.slane %v2613, %v3214
        %v3216 = vcombine.high %v2614, %v2614
        %v3218 = vunpack.c.l.s4 1983009808
        %v3219 = vunpack.c.0.s8 %v3218
        %v3220 = vlaneseq
        %v3221 = vshrl.u32 %v3220, 7
        %v3222 = vsub.s32 %v3219, %v3221
        %v3223 = vrot.slane %v2614, %v3222
        %v3225 = vunpack.c.l.s4 1983009808
        %v3226 = vunpack.c.0.s8 %v3225
        %v3227 = vlaneseq
        %v3228 = vshrl.u32 %v3227, 7
        %v3229 = vsub.s32 %v3226, %v3228
        %v3230 = vrot.slane %v3216, %v3229
        %v3231 = vcombine.high %v3223, %v3223
        %v3232 = vcombine.high %v3230, %v3230
        %v3233 = vcombine.high %v2615, %v2615
        %v3235 = vunpack.c.l.s4 1983009808
        %v3236 = vunpack.c.0.s8 %v3235
        %v3237 = vlaneseq
        %v3238 = vshrl.u32 %v3237, 7
        %v3239 = vsub.s32 %v3236, %v3238
        %v3240 = vrot.slane %v2615, %v3239
        %v3242 = vunpack.c.l.s4 1983009808
        %v3243 = vunpack.c.0.s8 %v3242
        %v3244 = vlaneseq
        %v3245 = vshrl.u32 %v3244, 7
        %v3246 = vsub.s32 %v3243, %v3245
        %v3247 = vrot.slane %v3233, %v3246
        %v3248 = vcombine.high %v3240, %v3240
        %v3249 = vcombine.high %v3247, %v3247
        %v3251 = vunpack.c.l.s4 1983009808
        %v3252 = vunpack.c.0.s8 %v3251
        %v3253 = vlaneseq
        %v3254 = vshrl.u32 %v3253, 7
        %v3255 = vsub.s32 %v3252, %v3254
        %v3256 = vrot.slane %v2616, %v3255
        %v3257 = vcombine.high %v2617, %v2617
        %v3259 = vunpack.c.l.s4 1983009808
        %v3260 = vunpack.c.0.s8 %v3259
        %v3261 = vlaneseq
        %v3262 = vshrl.u32 %v3261, 7
        %v3263 = vsub.s32 %v3260, %v3262
        %v3264 = vrot.slane %v2617, %v3263
        %v3266 = vunpack.c.l.s4 1983009808
        %v3267 = vunpack.c.0.s8 %v3266
        %v3268 = vlaneseq
        %v3269 = vshrl.u32 %v3268, 7
        %v3270 = vsub.s32 %v3267, %v3269
        %v3271 = vrot.slane %v3257, %v3270
        %v3272 = vcombine.high %v3264, %v3264
        %v3273 = vcombine.high %v3271, %v3271
        %v3274 = vcombine.high %v2618, %v2618
        %v3276 = vunpack.c.l.s4 1983009808
        %v3277 = vunpack.c.0.s8 %v3276
        %v3278 = vlaneseq
        %v3279 = vshrl.u32 %v3278, 7
        %v3280 = vsub.s32 %v3277, %v3279
        %v3281 = vrot.slane %v2618, %v3280
        %v3283 = vunpack.c.l.s4 1983009808
        %v3284 = vunpack.c.0.s8 %v3283
        %v3285 = vlaneseq
        %v3286 = vshrl.u32 %v3285, 7
        %v3287 = vsub.s32 %v3284, %v3286
        %v3288 = vrot.slane %v3274, %v3287
        %v3289 = vcombine.high %v3281, %v3281
        %v3290 = vcombine.high %v3288, %v3288
        %v3292 = vunpack.c.l.s4 1983009808
        %v3293 = vunpack.c.0.s8 %v3292
        %v3294 = vlaneseq
        %v3295 = vshrl.u32 %v3294, 7
        %v3296 = vsub.s32 %v3293, %v3295
        %v3297 = vrot.slane %v2619, %v3296
        %v3298 = vcombine.high %v2620, %v2620
        %v3300 = vunpack.c.l.s4 1983009808
        %v3301 = vunpack.c.0.s8 %v3300
        %v3302 = vlaneseq
        %v3303 = vshrl.u32 %v3302, 7
        %v3304 = vsub.s32 %v3301, %v3303
        %v3305 = vrot.slane %v2620, %v3304
        %v3307 = vunpack.c.l.s4 1983009808
        %v3308 = vunpack.c.0.s8 %v3307
        %v3309 = vlaneseq
        %v3310 = vshrl.u32 %v3309, 7
        %v3311 = vsub.s32 %v3308, %v3310
        %v3312 = vrot.slane %v3298, %v3311
        %v3313 = vcombine.high %v3305, %v3305
        %v3314 = vcombine.high %v3312, %v3312
        %v3315 = vcombine.high %v2621, %v2621
        %v3317 = vunpack.c.l.s4 1983009808
        %v3318 = vunpack.c.0.s8 %v3317
        %v3319 = vlaneseq
        %v3320 = vshrl.u32 %v3319, 7
        %v3321 = vsub.s32 %v3318, %v3320
        %v3322 = vrot.slane %v2621, %v3321
        %v3324 = vunpack.c.l.s4 1983009808
        %v3325 = vunpack.c.0.s8 %v3324
        %v3326 = vlaneseq
        %v3327 = vshrl.u32 %v3326, 7
        %v3328 = vsub.s32 %v3325, %v3327
        %v3329 = vrot.slane %v3315, %v3328
        %v3330 = vcombine.high %v3322, %v3322
        %v3331 = vcombine.high %v3329, %v3329
        %v3333 = vunpack.c.l.s4 1983009808
        %v3334 = vunpack.c.0.s8 %v3333
        %v3335 = vlaneseq
        %v3336 = vshrl.u32 %v3335, 7
        %v3337 = vsub.s32 %v3334, %v3336
        %v3338 = vrot.slane %v2622, %v3337
        %v3339 = vcombine.high %v2623, %v2623
        %v3341 = vunpack.c.l.s4 1983009808
        %v3342 = vunpack.c.0.s8 %v3341
        %v3343 = vlaneseq
        %v3344 = vshrl.u32 %v3343, 7
        %v3345 = vsub.s32 %v3342, %v3344
        %v3346 = vrot.slane %v2623, %v3345
        %v3348 = vunpack.c.l.s4 1983009808
        %v3349 = vunpack.c.0.s8 %v3348
        %v3350 = vlaneseq
        %v3351 = vshrl.u32 %v3350, 7
        %v3352 = vsub.s32 %v3349, %v3351
        %v3353 = vrot.slane %v3339, %v3352
        %v3354 = vcombine.high %v3346, %v3346
        %v3355 = vcombine.high %v3353, %v3353
        %v3356 = vcombine.high %v2624, %v2624
        %v3358 = vunpack.c.l.s4 1983009808
        %v3359 = vunpack.c.0.s8 %v3358
        %v3360 = vlaneseq
        %v3361 = vshrl.u32 %v3360, 7
        %v3362 = vsub.s32 %v3359, %v3361
        %v3363 = vrot.slane %v2624, %v3362
        %v3365 = vunpack.c.l.s4 1983009808
        %v3366 = vunpack.c.0.s8 %v3365
        %v3367 = vlaneseq
        %v3368 = vshrl.u32 %v3367, 7
        %v3369 = vsub.s32 %v3366, %v3368
        %v3370 = vrot.slane %v3356, %v3369
        %v3371 = vcombine.high %v3363, %v3363
        %v3372 = vcombine.high %v3370, %v3370
        %v3374 = vunpack.c.l.s4 1983009808
        %v3375 = vunpack.c.0.s8 %v3374
        %v3376 = vlaneseq
        %v3377 = vshrl.u32 %v3376, 7
        %v3378 = vsub.s32 %v3375, %v3377
        %v3379 = vrot.slane %v2625, %v3378
        %v3380 = vcombine.high %v2626, %v2626
        %v3382 = vunpack.c.l.s4 1983009808
        %v3383 = vunpack.c.0.s8 %v3382
        %v3384 = vlaneseq
        %v3385 = vshrl.u32 %v3384, 7
        %v3386 = vsub.s32 %v3383, %v3385
        %v3387 = vrot.slane %v2626, %v3386
        %v3389 = vunpack.c.l.s4 1983009808
        %v3390 = vunpack.c.0.s8 %v3389
        %v3391 = vlaneseq
        %v3392 = vshrl.u32 %v3391, 7
        %v3393 = vsub.s32 %v3390, %v3392
        %v3394 = vrot.slane %v3380, %v3393
        %v3395 = vcombine.high %v3387, %v3387
        %v3396 = vcombine.high %v3394, %v3394
        %v3397 = vcombine.high %v2627, %v2627
        %v3399 = vunpack.c.l.s4 1983009808
        %v3400 = vunpack.c.0.s8 %v3399
        %v3401 = vlaneseq
        %v3402 = vshrl.u32 %v3401, 7
        %v3403 = vsub.s32 %v3400, %v3402
        %v3404 = vrot.slane %v2627, %v3403
        %v3406 = vunpack.c.l.s4 1983009808
        %v3407 = vunpack.c.0.s8 %v3406
        %v3408 = vlaneseq
        %v3409 = vshrl.u32 %v3408, 7
        %v3410 = vsub.s32 %v3407, %v3409
        %v3411 = vrot.slane %v3397, %v3410
        %v3412 = vcombine.high %v3404, %v3404
        %v3413 = vcombine.high %v3411, %v3411
        %v3415 = vunpack.c.l.s4 1983009808
        %v3416 = vunpack.c.0.s8 %v3415
        %v3417 = vlaneseq
        %v3418 = vshrl.u32 %v3417, 7
        %v3419 = vsub.s32 %v3416, %v3418
        %v3420 = vrot.slane %v2628, %v3419
        %v3421 = vcombine.low %v2690, %v2698
        %v3422 = vcombine.low %v2697, %v2699
        %v3424 = vunpack.c.l.s4 1983009808
        %v3425 = vunpack.c.0.s8 %v3424
        %v3426 = vlaneseq
        %v3427 = vshrl.u32 %v3426, 7
        %v3428 = vsub.s32 %v3425, %v3427
        %v3429 = vrot.slane %v3421, %v3428
        %v3431 = vunpack.c.l.s4 1983009808
        %v3432 = vunpack.c.0.s8 %v3431
        %v3433 = vlaneseq
        %v3434 = vshrl.u32 %v3433, 7
        %v3435 = vsub.s32 %v3432, %v3434
        %v3436 = vrot.slane %v3422, %v3435
        %v3437 = vcombine.low %v3429, %v3436
        %v3438 = vcombine.low %v2707, %v2715
        %v3439 = vcombine.low %v2714, %v2716
        %v3441 = vunpack.c.l.s4 1983009808
        %v3442 = vunpack.c.0.s8 %v3441
        %v3443 = vlaneseq
        %v3444 = vshrl.u32 %v3443, 7
        %v3445 = vsub.s32 %v3442, %v3444
        %v3446 = vrot.slane %v3438, %v3445
        %v3448 = vunpack.c.l.s4 1983009808
        %v3449 = vunpack.c.0.s8 %v3448
        %v3450 = vlaneseq
        %v3451 = vshrl.u32 %v3450, 7
        %v3452 = vsub.s32 %v3449, %v3451
        %v3453 = vrot.slane %v3439, %v3452
        %v3454 = vcombine.low %v3446, %v3453
        %v3455 = vcombine.low %v2723, %v2731
        %v3456 = vcombine.low %v2739, %v2738
        %v3458 = vunpack.c.l.s4 1983009808
        %v3459 = vunpack.c.0.s8 %v3458
        %v3460 = vlaneseq
        %v3461 = vshrl.u32 %v3460, 7
        %v3462 = vsub.s32 %v3459, %v3461
        %v3463 = vrot.slane %v3455, %v3462
        %v3465 = vunpack.c.l.s4 1983009808
        %v3466 = vunpack.c.0.s8 %v3465
        %v3467 = vlaneseq
        %v3468 = vshrl.u32 %v3467, 7
        %v3469 = vsub.s32 %v3466, %v3468
        %v3470 = vrot.slane %v3456, %v3469
        %v3471 = vcombine.low %v3463, %v3470
        %v3472 = vcombine.low %v2740, %v2748
        %v3473 = vcombine.low %v2756, %v2755
        %v3475 = vunpack.c.l.s4 1983009808
        %v3476 = vunpack.c.0.s8 %v3475
        %v3477 = vlaneseq
        %v3478 = vshrl.u32 %v3477, 7
        %v3479 = vsub.s32 %v3476, %v3478
        %v3480 = vrot.slane %v3472, %v3479
        %v3482 = vunpack.c.l.s4 1983009808
        %v3483 = vunpack.c.0.s8 %v3482
        %v3484 = vlaneseq
        %v3485 = vshrl.u32 %v3484, 7
        %v3486 = vsub.s32 %v3483, %v3485
        %v3487 = vrot.slane %v3473, %v3486
        %v3488 = vcombine.low %v3480, %v3487
        %v3489 = vcombine.low %v2757, %v2764
        %v3490 = vcombine.low %v2772, %v2780
        %v3492 = vunpack.c.l.s4 1983009808
        %v3493 = vunpack.c.0.s8 %v3492
        %v3494 = vlaneseq
        %v3495 = vshrl.u32 %v3494, 7
        %v3496 = vsub.s32 %v3493, %v3495
        %v3497 = vrot.slane %v3489, %v3496
        %v3499 = vunpack.c.l.s4 1983009808
        %v3500 = vunpack.c.0.s8 %v3499
        %v3501 = vlaneseq
        %v3502 = vshrl.u32 %v3501, 7
        %v3503 = vsub.s32 %v3500, %v3502
        %v3504 = vrot.slane %v3490, %v3503
        %v3505 = vcombine.low %v3497, %v3504
        %v3506 = vcombine.low %v2779, %v2781
        %v3507 = vcombine.low %v2789, %v2797
        %v3509 = vunpack.c.l.s4 1983009808
        %v3510 = vunpack.c.0.s8 %v3509
        %v3511 = vlaneseq
        %v3512 = vshrl.u32 %v3511, 7
        %v3513 = vsub.s32 %v3510, %v3512
        %v3514 = vrot.slane %v3506, %v3513
        %v3516 = vunpack.c.l.s4 1983009808
        %v3517 = vunpack.c.0.s8 %v3516
        %v3518 = vlaneseq
        %v3519 = vshrl.u32 %v3518, 7
        %v3520 = vsub.s32 %v3517, %v3519
        %v3521 = vrot.slane %v3507, %v3520
        %v3522 = vcombine.low %v3514, %v3521
        %v3523 = vcombine.low %v2796, %v2798
        %v3524 = vcombine.low %v2805, %v2813
        %v3526 = vunpack.c.l.s4 1983009808
        %v3527 = vunpack.c.0.s8 %v3526
        %v3528 = vlaneseq
        %v3529 = vshrl.u32 %v3528, 7
        %v3530 = vsub.s32 %v3527, %v3529
        %v3531 = vrot.slane %v3523, %v3530
        %v3533 = vunpack.c.l.s4 1983009808
        %v3534 = vunpack.c.0.s8 %v3533
        %v3535 = vlaneseq
        %v3536 = vshrl.u32 %v3535, 7
        %v3537 = vsub.s32 %v3534, %v3536
        %v3538 = vrot.slane %v3524, %v3537
        %v3539 = vcombine.low %v3531, %v3538
        %v3540 = vcombine.low %v2821, %v2820
        %v3541 = vcombine.low %v2822, %v2830
        %v3543 = vunpack.c.l.s4 1983009808
        %v3544 = vunpack.c.0.s8 %v3543
        %v3545 = vlaneseq
        %v3546 = vshrl.u32 %v3545, 7
        %v3547 = vsub.s32 %v3544, %v3546
        %v3548 = vrot.slane %v3540, %v3547
        %v3550 = vunpack.c.l.s4 1983009808
        %v3551 = vunpack.c.0.s8 %v3550
        %v3552 = vlaneseq
        %v3553 = vshrl.u32 %v3552, 7
        %v3554 = vsub.s32 %v3551, %v3553
        %v3555 = vrot.slane %v3541, %v3554
        %v3556 = vcombine.low %v3548, %v3555
        %v3557 = vcombine.low %v2838, %v2837
        %v3558 = vcombine.low %v2839, %v2846
        %v3560 = vunpack.c.l.s4 1983009808
        %v3561 = vunpack.c.0.s8 %v3560
        %v3562 = vlaneseq
        %v3563 = vshrl.u32 %v3562, 7
        %v3564 = vsub.s32 %v3561, %v3563
        %v3565 = vrot.slane %v3557, %v3564
        %v3567 = vunpack.c.l.s4 1983009808
        %v3568 = vunpack.c.0.s8 %v3567
        %v3569 = vlaneseq
        %v3570 = vshrl.u32 %v3569, 7
        %v3571 = vsub.s32 %v3568, %v3570
        %v3572 = vrot.slane %v3558, %v3571
        %v3573 = vcombine.low %v3565, %v3572
        %v3574 = vcombine.low %v2854, %v2862
        %v3575 = vcombine.low %v2861, %v2863
        %v3577 = vunpack.c.l.s4 1983009808
        %v3578 = vunpack.c.0.s8 %v3577
        %v3579 = vlaneseq
        %v3580 = vshrl.u32 %v3579, 7
        %v3581 = vsub.s32 %v3578, %v3580
        %v3582 = vrot.slane %v3574, %v3581
        %v3584 = vunpack.c.l.s4 1983009808
        %v3585 = vunpack.c.0.s8 %v3584
        %v3586 = vlaneseq
        %v3587 = vshrl.u32 %v3586, 7
        %v3588 = vsub.s32 %v3585, %v3587
        %v3589 = vrot.slane %v3575, %v3588
        %v3590 = vcombine.low %v3582, %v3589
        %v3591 = vcombine.low %v2871, %v2879
        %v3592 = vcombine.low %v2878, %v2880
        %v3594 = vunpack.c.l.s4 1983009808
        %v3595 = vunpack.c.0.s8 %v3594
        %v3596 = vlaneseq
        %v3597 = vshrl.u32 %v3596, 7
        %v3598 = vsub.s32 %v3595, %v3597
        %v3599 = vrot.slane %v3591, %v3598
        %v3601 = vunpack.c.l.s4 1983009808
        %v3602 = vunpack.c.0.s8 %v3601
        %v3603 = vlaneseq
        %v3604 = vshrl.u32 %v3603, 7
        %v3605 = vsub.s32 %v3602, %v3604
        %v3606 = vrot.slane %v3592, %v3605
        %v3607 = vcombine.low %v3599, %v3606
        %v3608 = vcombine.low %v2887, %v2895
        %v3609 = vcombine.low %v2903, %v2902
        %v3611 = vunpack.c.l.s4 1983009808
        %v3612 = vunpack.c.0.s8 %v3611
        %v3613 = vlaneseq
        %v3614 = vshrl.u32 %v3613, 7
        %v3615 = vsub.s32 %v3612, %v3614
        %v3616 = vrot.slane %v3608, %v3615
        %v3618 = vunpack.c.l.s4 1983009808
        %v3619 = vunpack.c.0.s8 %v3618
        %v3620 = vlaneseq
        %v3621 = vshrl.u32 %v3620, 7
        %v3622 = vsub.s32 %v3619, %v3621
        %v3623 = vrot.slane %v3609, %v3622
        %v3624 = vcombine.low %v3616, %v3623
        %v3625 = vcombine.low %v2904, %v2912
        %v3626 = vcombine.low %v2920, %v2919
        %v3628 = vunpack.c.l.s4 1983009808
        %v3629 = vunpack.c.0.s8 %v3628
        %v3630 = vlaneseq
        %v3631 = vshrl.u32 %v3630, 7
        %v3632 = vsub.s32 %v3629, %v3631
        %v3633 = vrot.slane %v3625, %v3632
        %v3635 = vunpack.c.l.s4 1983009808
        %v3636 = vunpack.c.0.s8 %v3635
        %v3637 = vlaneseq
        %v3638 = vshrl.u32 %v3637, 7
        %v3639 = vsub.s32 %v3636, %v3638
        %v3640 = vrot.slane %v3626, %v3639
        %v3641 = vcombine.low %v3633, %v3640
        %v3642 = vcombine.low %v2921, %v2928
        %v3643 = vcombine.low %v2936, %v2944
        %v3645 = vunpack.c.l.s4 1983009808
        %v3646 = vunpack.c.0.s8 %v3645
        %v3647 = vlaneseq
        %v3648 = vshrl.u32 %v3647, 7
        %v3649 = vsub.s32 %v3646, %v3648
        %v3650 = vrot.slane %v3642, %v3649
        %v3652 = vunpack.c.l.s4 1983009808
        %v3653 = vunpack.c.0.s8 %v3652
        %v3654 = vlaneseq
        %v3655 = vshrl.u32 %v3654, 7
        %v3656 = vsub.s32 %v3653, %v3655
        %v3657 = vrot.slane %v3643, %v3656
        %v3658 = vcombine.low %v3650, %v3657
        %v3659 = vcombine.low %v2943, %v2945
        %v3660 = vcombine.low %v2953, %v2961
        %v3662 = vunpack.c.l.s4 1983009808
        %v3663 = vunpack.c.0.s8 %v3662
        %v3664 = vlaneseq
        %v3665 = vshrl.u32 %v3664, 7
        %v3666 = vsub.s32 %v3663, %v3665
        %v3667 = vrot.slane %v3659, %v3666
        %v3669 = vunpack.c.l.s4 1983009808
        %v3670 = vunpack.c.0.s8 %v3669
        %v3671 = vlaneseq
        %v3672 = vshrl.u32 %v3671, 7
        %v3673 = vsub.s32 %v3670, %v3672
        %v3674 = vrot.slane %v3660, %v3673
        %v3675 = vcombine.low %v3667, %v3674
        %v3676 = vcombine.low %v2960, %v2962
        %v3677 = vcombine.low %v2969, %v2977
        %v3679 = vunpack.c.l.s4 1983009808
        %v3680 = vunpack.c.0.s8 %v3679
        %v3681 = vlaneseq
        %v3682 = vshrl.u32 %v3681, 7
        %v3683 = vsub.s32 %v3680, %v3682
        %v3684 = vrot.slane %v3676, %v3683
        %v3686 = vunpack.c.l.s4 1983009808
        %v3687 = vunpack.c.0.s8 %v3686
        %v3688 = vlaneseq
        %v3689 = vshrl.u32 %v3688, 7
        %v3690 = vsub.s32 %v3687, %v3689
        %v3691 = vrot.slane %v3677, %v3690
        %v3692 = vcombine.low %v3684, %v3691
        %v3693 = vcombine.low %v2985, %v2984
        %v3694 = vcombine.low %v2986, %v2994
        %v3696 = vunpack.c.l.s4 1983009808
        %v3697 = vunpack.c.0.s8 %v3696
        %v3698 = vlaneseq
        %v3699 = vshrl.u32 %v3698, 7
        %v3700 = vsub.s32 %v3697, %v3699
        %v3701 = vrot.slane %v3693, %v3700
        %v3703 = vunpack.c.l.s4 1983009808
        %v3704 = vunpack.c.0.s8 %v3703
        %v3705 = vlaneseq
        %v3706 = vshrl.u32 %v3705, 7
        %v3707 = vsub.s32 %v3704, %v3706
        %v3708 = vrot.slane %v3694, %v3707
        %v3709 = vcombine.low %v3701, %v3708
        %v3710 = vcombine.low %v3002, %v3001
        %v3711 = vcombine.low %v3003, %v3010
        %v3713 = vunpack.c.l.s4 1983009808
        %v3714 = vunpack.c.0.s8 %v3713
        %v3715 = vlaneseq
        %v3716 = vshrl.u32 %v3715, 7
        %v3717 = vsub.s32 %v3714, %v3716
        %v3718 = vrot.slane %v3710, %v3717
        %v3720 = vunpack.c.l.s4 1983009808
        %v3721 = vunpack.c.0.s8 %v3720
        %v3722 = vlaneseq
        %v3723 = vshrl.u32 %v3722, 7
        %v3724 = vsub.s32 %v3721, %v3723
        %v3725 = vrot.slane %v3711, %v3724
        %v3726 = vcombine.low %v3718, %v3725
        %v3727 = vcombine.low %v3018, %v3026
        %v3728 = vcombine.low %v3025, %v3027
        %v3730 = vunpack.c.l.s4 1983009808
        %v3731 = vunpack.c.0.s8 %v3730
        %v3732 = vlaneseq
        %v3733 = vshrl.u32 %v3732, 7
        %v3734 = vsub.s32 %v3731, %v3733
        %v3735 = vrot.slane %v3727, %v3734
        %v3737 = vunpack.c.l.s4 1983009808
        %v3738 = vunpack.c.0.s8 %v3737
        %v3739 = vlaneseq
        %v3740 = vshrl.u32 %v3739, 7
        %v3741 = vsub.s32 %v3738, %v3740
        %v3742 = vrot.slane %v3728, %v3741
        %v3743 = vcombine.low %v3735, %v3742
        %v3744 = vcombine.low %v3035, %v3043
        %v3745 = vcombine.low %v3042, %v3044
        %v3747 = vunpack.c.l.s4 1983009808
        %v3748 = vunpack.c.0.s8 %v3747
        %v3749 = vlaneseq
        %v3750 = vshrl.u32 %v3749, 7
        %v3751 = vsub.s32 %v3748, %v3750
        %v3752 = vrot.slane %v3744, %v3751
        %v3754 = vunpack.c.l.s4 1983009808
        %v3755 = vunpack.c.0.s8 %v3754
        %v3756 = vlaneseq
        %v3757 = vshrl.u32 %v3756, 7
        %v3758 = vsub.s32 %v3755, %v3757
        %v3759 = vrot.slane %v3745, %v3758
        %v3760 = vcombine.low %v3752, %v3759
        %v3761 = vcombine.low %v3051, %v3059
        %v3762 = vcombine.low %v3067, %v3066
        %v3764 = vunpack.c.l.s4 1983009808
        %v3765 = vunpack.c.0.s8 %v3764
        %v3766 = vlaneseq
        %v3767 = vshrl.u32 %v3766, 7
        %v3768 = vsub.s32 %v3765, %v3767
        %v3769 = vrot.slane %v3761, %v3768
        %v3771 = vunpack.c.l.s4 1983009808
        %v3772 = vunpack.c.0.s8 %v3771
        %v3773 = vlaneseq
        %v3774 = vshrl.u32 %v3773, 7
        %v3775 = vsub.s32 %v3772, %v3774
        %v3776 = vrot.slane %v3762, %v3775
        %v3777 = vcombine.low %v3769, %v3776
        %v3778 = vcombine.low %v3068, %v3076
        %v3779 = vcombine.low %v3084, %v3083
        %v3781 = vunpack.c.l.s4 1983009808
        %v3782 = vunpack.c.0.s8 %v3781
        %v3783 = vlaneseq
        %v3784 = vshrl.u32 %v3783, 7
        %v3785 = vsub.s32 %v3782, %v3784
        %v3786 = vrot.slane %v3778, %v3785
        %v3788 = vunpack.c.l.s4 1983009808
        %v3789 = vunpack.c.0.s8 %v3788
        %v3790 = vlaneseq
        %v3791 = vshrl.u32 %v3790, 7
        %v3792 = vsub.s32 %v3789, %v3791
        %v3793 = vrot.slane %v3779, %v3792
        %v3794 = vcombine.low %v3786, %v3793
        %v3795 = vcombine.low %v3085, %v3092
        %v3796 = vcombine.low %v3100, %v3108
        %v3798 = vunpack.c.l.s4 1983009808
        %v3799 = vunpack.c.0.s8 %v3798
        %v3800 = vlaneseq
        %v3801 = vshrl.u32 %v3800, 7
        %v3802 = vsub.s32 %v3799, %v3801
        %v3803 = vrot.slane %v3795, %v3802
        %v3805 = vunpack.c.l.s4 1983009808
        %v3806 = vunpack.c.0.s8 %v3805
        %v3807 = vlaneseq
        %v3808 = vshrl.u32 %v3807, 7
        %v3809 = vsub.s32 %v3806, %v3808
        %v3810 = vrot.slane %v3796, %v3809
        %v3811 = vcombine.low %v3803, %v3810
        %v3812 = vcombine.low %v3107, %v3109
        %v3813 = vcombine.low %v3117, %v3125
        %v3815 = vunpack.c.l.s4 1983009808
        %v3816 = vunpack.c.0.s8 %v3815
        %v3817 = vlaneseq
        %v3818 = vshrl.u32 %v3817, 7
        %v3819 = vsub.s32 %v3816, %v3818
        %v3820 = vrot.slane %v3812, %v3819
        %v3822 = vunpack.c.l.s4 1983009808
        %v3823 = vunpack.c.0.s8 %v3822
        %v3824 = vlaneseq
        %v3825 = vshrl.u32 %v3824, 7
        %v3826 = vsub.s32 %v3823, %v3825
        %v3827 = vrot.slane %v3813, %v3826
        %v3828 = vcombine.low %v3820, %v3827
        %v3829 = vcombine.low %v3124, %v3126
        %v3830 = vcombine.low %v3133, %v3141
        %v3832 = vunpack.c.l.s4 1983009808
        %v3833 = vunpack.c.0.s8 %v3832
        %v3834 = vlaneseq
        %v3835 = vshrl.u32 %v3834, 7
        %v3836 = vsub.s32 %v3833, %v3835
        %v3837 = vrot.slane %v3829, %v3836
        %v3839 = vunpack.c.l.s4 1983009808
        %v3840 = vunpack.c.0.s8 %v3839
        %v3841 = vlaneseq
        %v3842 = vshrl.u32 %v3841, 7
        %v3843 = vsub.s32 %v3840, %v3842
        %v3844 = vrot.slane %v3830, %v3843
        %v3845 = vcombine.low %v3837, %v3844
        %v3846 = vcombine.low %v3149, %v3148
        %v3847 = vcombine.low %v3150, %v3158
        %v3849 = vunpack.c.l.s4 1983009808
        %v3850 = vunpack.c.0.s8 %v3849
        %v3851 = vlaneseq
        %v3852 = vshrl.u32 %v3851, 7
        %v3853 = vsub.s32 %v3850, %v3852
        %v3854 = vrot.slane %v3846, %v3853
        %v3856 = vunpack.c.l.s4 1983009808
        %v3857 = vunpack.c.0.s8 %v3856
        %v3858 = vlaneseq
        %v3859 = vshrl.u32 %v3858, 7
        %v3860 = vsub.s32 %v3857, %v3859
        %v3861 = vrot.slane %v3847, %v3860
        %v3862 = vcombine.low %v3854, %v3861
        %v3863 = vcombine.low %v3166, %v3165
        %v3864 = vcombine.low %v3167, %v3174
        %v3866 = vunpack.c.l.s4 1983009808
        %v3867 = vunpack.c.0.s8 %v3866
        %v3868 = vlaneseq
        %v3869 = vshrl.u32 %v3868, 7
        %v3870 = vsub.s32 %v3867, %v3869
        %v3871 = vrot.slane %v3863, %v3870
        %v3873 = vunpack.c.l.s4 1983009808
        %v3874 = vunpack.c.0.s8 %v3873
        %v3875 = vlaneseq
        %v3876 = vshrl.u32 %v3875, 7
        %v3877 = vsub.s32 %v3874, %v3876
        %v3878 = vrot.slane %v3864, %v3877
        %v3879 = vcombine.low %v3871, %v3878
        %v3880 = vcombine.low %v3182, %v3190
        %v3881 = vcombine.low %v3189, %v3191
        %v3883 = vunpack.c.l.s4 1983009808
        %v3884 = vunpack.c.0.s8 %v3883
        %v3885 = vlaneseq
        %v3886 = vshrl.u32 %v3885, 7
        %v3887 = vsub.s32 %v3884, %v3886
        %v3888 = vrot.slane %v3880, %v3887
        %v3890 = vunpack.c.l.s4 1983009808
        %v3891 = vunpack.c.0.s8 %v3890
        %v3892 = vlaneseq
        %v3893 = vshrl.u32 %v3892, 7
        %v3894 = vsub.s32 %v3891, %v3893
        %v3895 = vrot.slane %v3881, %v3894
        %v3896 = vcombine.low %v3888, %v3895
        %v3897 = vcombine.low %v3199, %v3207
        %v3898 = vcombine.low %v3206, %v3208
        %v3900 = vunpack.c.l.s4 1983009808
        %v3901 = vunpack.c.0.s8 %v3900
        %v3902 = vlaneseq
        %v3903 = vshrl.u32 %v3902, 7
        %v3904 = vsub.s32 %v3901, %v3903
        %v3905 = vrot.slane %v3897, %v3904
        %v3907 = vunpack.c.l.s4 1983009808
        %v3908 = vunpack.c.0.s8 %v3907
        %v3909 = vlaneseq
        %v3910 = vshrl.u32 %v3909, 7
        %v3911 = vsub.s32 %v3908, %v3910
        %v3912 = vrot.slane %v3898, %v3911
        %v3913 = vcombine.low %v3905, %v3912
        %v3914 = vcombine.low %v3215, %v3223
        %v3915 = vcombine.low %v3231, %v3230
        %v3917 = vunpack.c.l.s4 1983009808
        %v3918 = vunpack.c.0.s8 %v3917
        %v3919 = vlaneseq
        %v3920 = vshrl.u32 %v3919, 7
        %v3921 = vsub.s32 %v3918, %v3920
        %v3922 = vrot.slane %v3914, %v3921
        %v3924 = vunpack.c.l.s4 1983009808
        %v3925 = vunpack.c.0.s8 %v3924
        %v3926 = vlaneseq
        %v3927 = vshrl.u32 %v3926, 7
        %v3928 = vsub.s32 %v3925, %v3927
        %v3929 = vrot.slane %v3915, %v3928
        %v3930 = vcombine.low %v3922, %v3929
        %v3931 = vcombine.low %v3232, %v3240
        %v3932 = vcombine.low %v3248, %v3247
        %v3934 = vunpack.c.l.s4 1983009808
        %v3935 = vunpack.c.0.s8 %v3934
        %v3936 = vlaneseq
        %v3937 = vshrl.u32 %v3936, 7
        %v3938 = vsub.s32 %v3935, %v3937
        %v3939 = vrot.slane %v3931, %v3938
        %v3941 = vunpack.c.l.s4 1983009808
        %v3942 = vunpack.c.0.s8 %v3941
        %v3943 = vlaneseq
        %v3944 = vshrl.u32 %v3943, 7
        %v3945 = vsub.s32 %v3942, %v3944
        %v3946 = vrot.slane %v3932, %v3945
        %v3947 = vcombine.low %v3939, %v3946
        %v3948 = vcombine.low %v3249, %v3256
        %v3949 = vcombine.low %v3264, %v3272
        %v3951 = vunpack.c.l.s4 1983009808
        %v3952 = vunpack.c.0.s8 %v3951
        %v3953 = vlaneseq
        %v3954 = vshrl.u32 %v3953, 7
        %v3955 = vsub.s32 %v3952, %v3954
        %v3956 = vrot.slane %v3948, %v3955
        %v3958 = vunpack.c.l.s4 1983009808
        %v3959 = vunpack.c.0.s8 %v3958
        %v3960 = vlaneseq
        %v3961 = vshrl.u32 %v3960, 7
        %v3962 = vsub.s32 %v3959, %v3961
        %v3963 = vrot.slane %v3949, %v3962
        %v3964 = vcombine.low %v3956, %v3963
        %v3965 = vcombine.low %v3271, %v3273
        %v3966 = vcombine.low %v3281, %v3289
        %v3968 = vunpack.c.l.s4 1983009808
        %v3969 = vunpack.c.0.s8 %v3968
        %v3970 = vlaneseq
        %v3971 = vshrl.u32 %v3970, 7
        %v3972 = vsub.s32 %v3969, %v3971
        %v3973 = vrot.slane %v3965, %v3972
        %v3975 = vunpack.c.l.s4 1983009808
        %v3976 = vunpack.c.0.s8 %v3975
        %v3977 = vlaneseq
        %v3978 = vshrl.u32 %v3977, 7
        %v3979 = vsub.s32 %v3976, %v3978
        %v3980 = vrot.slane %v3966, %v3979
        %v3981 = vcombine.low %v3973, %v3980
        %v3982 = vcombine.low %v3288, %v3290
        %v3983 = vcombine.low %v3297, %v3305
        %v3985 = vunpack.c.l.s4 1983009808
        %v3986 = vunpack.c.0.s8 %v3985
        %v3987 = vlaneseq
        %v3988 = vshrl.u32 %v3987, 7
        %v3989 = vsub.s32 %v3986, %v3988
        %v3990 = vrot.slane %v3982, %v3989
        %v3992 = vunpack.c.l.s4 1983009808
        %v3993 = vunpack.c.0.s8 %v3992
        %v3994 = vlaneseq
        %v3995 = vshrl.u32 %v3994, 7
        %v3996 = vsub.s32 %v3993, %v3995
        %v3997 = vrot.slane %v3983, %v3996
        %v3998 = vcombine.low %v3990, %v3997
        %v3999 = vcombine.low %v3313, %v3312
        %v4000 = vcombine.low %v3314, %v3322
        %v4002 = vunpack.c.l.s4 1983009808
        %v4003 = vunpack.c.0.s8 %v4002
        %v4004 = vlaneseq
        %v4005 = vshrl.u32 %v4004, 7
        %v4006 = vsub.s32 %v4003, %v4005
        %v4007 = vrot.slane %v3999, %v4006
        %v4009 = vunpack.c.l.s4 1983009808
        %v4010 = vunpack.c.0.s8 %v4009
        %v4011 = vlaneseq
        %v4012 = vshrl.u32 %v4011, 7
        %v4013 = vsub.s32 %v4010, %v4012
        %v4014 = vrot.slane %v4000, %v4013
        %v4015 = vcombine.low %v4007, %v4014
        %v4016 = vcombine.low %v3330, %v3329
        %v4017 = vcombine.low %v3331, %v3338
        %v4019 = vunpack.c.l.s4 1983009808
        %v4020 = vunpack.c.0.s8 %v4019
        %v4021 = vlaneseq
        %v4022 = vshrl.u32 %v4021, 7
        %v4023 = vsub.s32 %v4020, %v4022
        %v4024 = vrot.slane %v4016, %v4023
        %v4026 = vunpack.c.l.s4 1983009808
        %v4027 = vunpack.c.0.s8 %v4026
        %v4028 = vlaneseq
        %v4029 = vshrl.u32 %v4028, 7
        %v4030 = vsub.s32 %v4027, %v4029
        %v4031 = vrot.slane %v4017, %v4030
        %v4032 = vcombine.low %v4024, %v4031
        %v4033 = vcombine.low %v3346, %v3354
        %v4034 = vcombine.low %v3353, %v3355
        %v4036 = vunpack.c.l.s4 1983009808
        %v4037 = vunpack.c.0.s8 %v4036
        %v4038 = vlaneseq
        %v4039 = vshrl.u32 %v4038, 7
        %v4040 = vsub.s32 %v4037, %v4039
        %v4041 = vrot.slane %v4033, %v4040
        %v4043 = vunpack.c.l.s4 1983009808
        %v4044 = vunpack.c.0.s8 %v4043
        %v4045 = vlaneseq
        %v4046 = vshrl.u32 %v4045, 7
        %v4047 = vsub.s32 %v4044, %v4046
        %v4048 = vrot.slane %v4034, %v4047
        %v4049 = vcombine.low %v4041, %v4048
        %v4050 = vcombine.low %v3363, %v3371
        %v4051 = vcombine.low %v3370, %v3372
        %v4053 = vunpack.c.l.s4 1983009808
        %v4054 = vunpack.c.0.s8 %v4053
        %v4055 = vlaneseq
        %v4056 = vshrl.u32 %v4055, 7
        %v4057 = vsub.s32 %v4054, %v4056
        %v4058 = vrot.slane %v4050, %v4057
        %v4060 = vunpack.c.l.s4 1983009808
        %v4061 = vunpack.c.0.s8 %v4060
        %v4062 = vlaneseq
        %v4063 = vshrl.u32 %v4062, 7
        %v4064 = vsub.s32 %v4061, %v4063
        %v4065 = vrot.slane %v4051, %v4064
        %v4066 = vcombine.low %v4058, %v4065
        %v4067 = vcombine.low %v3379, %v3387
        %v4068 = vcombine.low %v3395, %v3394
        %v4070 = vunpack.c.l.s4 1983009808
        %v4071 = vunpack.c.0.s8 %v4070
        %v4072 = vlaneseq
        %v4073 = vshrl.u32 %v4072, 7
        %v4074 = vsub.s32 %v4071, %v4073
        %v4075 = vrot.slane %v4067, %v4074
        %v4077 = vunpack.c.l.s4 1983009808
        %v4078 = vunpack.c.0.s8 %v4077
        %v4079 = vlaneseq
        %v4080 = vshrl.u32 %v4079, 7
        %v4081 = vsub.s32 %v4078, %v4080
        %v4082 = vrot.slane %v4068, %v4081
        %v4083 = vcombine.low %v4075, %v4082
        %v4084 = vcombine.low %v3396, %v3404
        %v4085 = vcombine.low %v3412, %v3411
        %v4087 = vunpack.c.l.s4 1983009808
        %v4088 = vunpack.c.0.s8 %v4087
        %v4089 = vlaneseq
        %v4090 = vshrl.u32 %v4089, 7
        %v4091 = vsub.s32 %v4088, %v4090
        %v4092 = vrot.slane %v4084, %v4091
        %v4094 = vunpack.c.l.s4 1983009808
        %v4095 = vunpack.c.0.s8 %v4094
        %v4096 = vlaneseq
        %v4097 = vshrl.u32 %v4096, 7
        %v4098 = vsub.s32 %v4095, %v4097
        %v4099 = vrot.slane %v4085, %v4098
        %v4100 = vcombine.low %v4092, %v4099
        %v4101 = vcombine.low %v3413, %v3420
        %v4103 = vunpack.c.l.s4 1983009808
        %v4104 = vunpack.c.0.s8 %v4103
        %v4105 = vlaneseq
        %v4106 = vshrl.u32 %v4105, 7
        %v4107 = vsub.s32 %v4104, %v4106
        %v4108 = vrot.slane %v4101, %v4107
        %4150 = vmatprep.subr.mxu0 0.0
        %4151 = vmatpush1.msra.mxu0 %v2461
        %4152 = vmatprep.subr.mxu0 0.0
        %4153 = vmatpush1.msra.mxu0 %v2462
        %4154 = vmatprep.subr.mxu0 0.0
        %4155 = vmatpush1.msra.mxu0 %v2463
        %4156 = vmatprep.subr.mxu0 0.0
        %4157 = vmatpush1.msra.mxu0 %v2464
        %4158 = vmatprep.subr.mxu0 0.0
        %4159 = vmatpush1.msra.mxu0 %v2465
        %4160 = vmatprep.subr.mxu0 0.0
        %4161 = vmatpush1.msra.mxu0 %v2466
        %4162 = vmatprep.subr.mxu0 0.0
        %4163 = vmatpush1.msra.mxu0 %v2467
        %4164 = vmatprep.subr.mxu0 0.0
        %4165 = vmatpush1.msra.mxu0 %v2468
        %4166 = vmatprep.subr.mxu0 0.0
        %4167 = vmatpush1.msra.mxu0 %v2469
        %4168 = vmatprep.subr.mxu0 0.0
        %4169 = vmatpush1.msra.mxu0 %v2470
        %4170 = vmatprep.subr.mxu0 0.0
        %4171 = vmatpush1.msra.mxu0 %v2471
        %4172 = vmatprep.subr.mxu0 0.0
        %4173 = vmatpush1.msra.mxu0 %v2472
        %4174 = vmatprep.subr.mxu0 0.0
        %4175 = vmatpush1.msra.mxu0 %v2473
        %4176 = vmatprep.subr.mxu0 0.0
        %4177 = vmatpush1.msra.mxu0 %v2474
        %4178 = vmatprep.subr.mxu0 0.0
        %4179 = vmatpush1.msra.mxu0 %v2475
        %4180 = vmatprep.subr.mxu0 0.0
        %4181 = vmatpush1.msra.mxu0 %v2476
        %4182 = vmatprep.subr.mxu0 0.0
        %4183 = vmatpush1.msra.mxu0 %v2477
        %4184 = vmatprep.subr.mxu0 0.0
        %4185 = vmatpush1.msra.mxu0 %v2478
        %4186 = vmatprep.subr.mxu0 0.0
        %4187 = vmatpush1.msra.mxu0 %v2479
        %4188 = vmatprep.subr.mxu0 0.0
        %4189 = vmatpush1.msra.mxu0 %v2480
        %4190 = vmatprep.subr.mxu0 0.0
        %4191 = vmatpush1.msra.mxu0 %v2481
        %4192 = vmatprep.subr.mxu0 0.0
        %4193 = vmatpush1.msra.mxu0 %v2482
        %4194 = vmatprep.subr.mxu0 0.0
        %4195 = vmatpush1.msra.mxu0 %v2483
        %4196 = vmatprep.subr.mxu0 0.0
        %4197 = vmatpush1.msra.mxu0 %v2484
        %4198 = vmatprep.subr.mxu0 0.0
        %4199 = vmatpush1.msra.mxu0 %v2485
        %4200 = vmatprep.subr.mxu0 0.0
        %4201 = vmatpush1.msra.mxu0 %v2486
        %4202 = vmatprep.subr.mxu0 0.0
        %4203 = vmatpush1.msra.mxu0 %v2487
        %4204 = vmatprep.subr.mxu0 0.0
        %4205 = vmatpush1.msra.mxu0 %v2488
        %4206 = vmatprep.subr.mxu0 0.0
        %4207 = vmatpush1.msra.mxu0 %v2489
        %4208 = vmatprep.subr.mxu0 0.0
        %4209 = vmatpush1.msra.mxu0 %v2490
        %4210 = vmatprep.subr.mxu0 0.0
        %4211 = vmatpush1.msra.mxu0 %v2491
        %4212 = vmatprep.subr.mxu0 0.0
        %4213 = vmatpush1.msra.mxu0 %v2492
        %4214 = vmatprep.mubr.f32.mxu0 %v2494
        %4215 = vmatmul.mubr.f32.gmra.mrb[0].mxu0 %v2493
        %v4216 = vpop.f32.mrb[0].mxu0
        %v4217 = vadd.f32 %v3437, %v4216
        %v4218 = vpop.f32.mrb[0].mxu0
        %4219 = vmatprep.mubr.f32.mxu0 %v2496
        %4220 = vmatmul.mubr.f32.gmra.mrb[0].mxu0 %v2495
        %v4221 = vpop.f32.mrb[0].mxu0
        %v4222 = vadd.f32 %v3454, %v4221
        %v4223 = vpop.f32.mrb[0].mxu0
        %4224 = vmatprep.mubr.f32.mxu0 %v2498
        %4225 = vmatmul.mubr.f32.gmra.mrb[0].mxu0 %v2497
        %v4226 = vpop.f32.mrb[0].mxu0
        %v4227 = vadd.f32 %v3471, %v4226
        %v4228 = vpop.f32.mrb[0].mxu0
        %4229 = vmatprep.mubr.f32.mxu0 %v2500
        %4230 = vmatmul.mubr.f32.gmra.mrb[0].mxu0 %v2499
        %v4231 = vpop.f32.mrb[0].mxu0
        %v4232 = vadd.f32 %v3488, %v4231
        %v4233 = vpop.f32.mrb[0].mxu0
        %4234 = vmatprep.mubr.f32.mxu0 %v2502
        %4235 = vmatmul.mubr.f32.gmra.mrb[0].mxu0 %v2501
        %v4236 = vpop.f32.mrb[0].mxu0
        %v4237 = vadd.f32 %v3505, %v4236
        %v4238 = vpop.f32.mrb[0].mxu0
        %4239 = vmatprep.mubr.f32.mxu0 %v2504
        %4240 = vmatmul.mubr.f32.gmra.mrb[0].mxu0 %v2503
        %v4241 = vpop.f32.mrb[0].mxu0
        %v4242 = vadd.f32 %v3522, %v4241
        %v4243 = vpop.f32.mrb[0].mxu0
        %4244 = vmatprep.mubr.f32.mxu0 %v2506
        %4245 = vmatmul.mubr.f32.gmra.mrb[0].mxu0 %v2505
        %v4246 = vpop.f32.mrb[0].mxu0
        %v4247 = vadd.f32 %v3539, %v4246
        %v4248 = vpop.f32.mrb[0].mxu0
        %4249 = vmatprep.mubr.f32.mxu0 %v2508
        %4250 = vmatmul.mubr.f32.gmra.mrb[0].mxu0 %v2507
        %v4251 = vpop.f32.mrb[0].mxu0
        %v4252 = vadd.f32 %v3556, %v4251
        %v4253 = vpop.f32.mrb[0].mxu0
        %4254 = vmatprep.mubr.f32.mxu0 %v2510
        %4255 = vmatmul.mubr.f32.gmra.mrb[0].mxu0 %v2509
        %v4256 = vpop.f32.mrb[0].mxu0
        %v4257 = vadd.f32 %v3573, %v4256
        %v4258 = vpop.f32.mrb[0].mxu0
        %4259 = vmatprep.mubr.f32.mxu0 %v2512
        %4260 = vmatmul.mubr.f32.gmra.mrb[0].mxu0 %v2511
        %v4261 = vpop.f32.mrb[0].mxu0
        %v4262 = vadd.f32 %v3590, %v4261
        %v4263 = vpop.f32.mrb[0].mxu0
        %4264 = vmatprep.mubr.f32.mxu0 %v2514
        %4265 = vmatmul.mubr.f32.gmra.mrb[0].mxu0 %v2513
        %v4266 = vpop.f32.mrb[0].mxu0
        %v4267 = vadd.f32 %v3607, %v4266
        %v4268 = vpop.f32.mrb[0].mxu0
        %4269 = vmatprep.mubr.f32.mxu0 %v2516
        %4270 = vmatmul.mubr.f32.gmra.mrb[0].mxu0 %v2515
        %v4271 = vpop.f32.mrb[0].mxu0
        %v4272 = vadd.f32 %v3624, %v4271
        %v4273 = vpop.f32.mrb[0].mxu0
        %4274 = vmatprep.mubr.f32.mxu0 %v2518
        %4275 = vmatmul.mubr.f32.gmra.mrb[0].mxu0 %v2517
        %v4276 = vpop.f32.mrb[0].mxu0
        %v4277 = vadd.f32 %v3641, %v4276
        %v4278 = vpop.f32.mrb[0].mxu0
        %4279 = vmatprep.mubr.f32.mxu0 %v2520
        %4280 = vmatmul.mubr.f32.gmra.mrb[0].mxu0 %v2519
        %v4281 = vpop.f32.mrb[0].mxu0
        %v4282 = vadd.f32 %v3658, %v4281
        %v4283 = vpop.f32.mrb[0].mxu0
        %4284 = vmatprep.mubr.f32.mxu0 %v2522
        %4285 = vmatmul.mubr.f32.gmra.mrb[0].mxu0 %v2521
        %v4286 = vpop.f32.mrb[0].mxu0
        %v4287 = vadd.f32 %v3675, %v4286
        %v4288 = vpop.f32.mrb[0].mxu0
        %4289 = vmatprep.mubr.f32.mxu0 %v2524
        %4290 = vmatmul.mubr.f32.gmra.mrb[0].mxu0 %v2523
        %v4291 = vpop.f32.mrb[0].mxu0
        %v4292 = vadd.f32 %v3692, %v4291
        %v4293 = vpop.f32.mrb[0].mxu0
        %4294 = vmatprep.mubr.f32.mxu0 %v2526
        %4295 = vmatmul.mubr.f32.gmra.mrb[0].mxu0 %v2525
        %v4296 = vpop.f32.mrb[0].mxu0
        %v4297 = vadd.f32 %v3709, %v4296
        %v4298 = vpop.f32.mrb[0].mxu0
        %4299 = vmatprep.mubr.f32.mxu0 %v2528
        %4300 = vmatmul.mubr.f32.gmra.mrb[0].mxu0 %v2527
        %v4301 = vpop.f32.mrb[0].mxu0
        %v4302 = vadd.f32 %v3726, %v4301
        %v4303 = vpop.f32.mrb[0].mxu0
        %4304 = vmatprep.mubr.f32.mxu0 %v2530
        %4305 = vmatmul.mubr.f32.gmra.mrb[0].mxu0 %v2529
        %v4306 = vpop.f32.mrb[0].mxu0
        %v4307 = vadd.f32 %v3743, %v4306
        %v4308 = vpop.f32.mrb[0].mxu0
        %4309 = vmatprep.mubr.f32.mxu0 %v2532
        %4310 = vmatmul.mubr.f32.gmra.mrb[0].mxu0 %v2531
        %v4311 = vpop.f32.mrb[0].mxu0
        %v4312 = vadd.f32 %v3760, %v4311
        %v4313 = vpop.f32.mrb[0].mxu0
        %4314 = vmatprep.mubr.f32.mxu0 %v2534
        %4315 = vmatmul.mubr.f32.gmra.mrb[0].mxu0 %v2533
        %v4316 = vpop.f32.mrb[0].mxu0
        %v4317 = vadd.f32 %v3777, %v4316
        %v4318 = vpop.f32.mrb[0].mxu0
        %4319 = vmatprep.mubr.f32.mxu0 %v2536
        %4320 = vmatmul.mubr.f32.gmra.mrb[0].mxu0 %v2535
        %v4321 = vpop.f32.mrb[0].mxu0
        %v4322 = vadd.f32 %v3794, %v4321
        %v4323 = vpop.f32.mrb[0].mxu0
        %4324 = vmatprep.mubr.f32.mxu0 %v2538
        %4325 = vmatmul.mubr.f32.gmra.mrb[0].mxu0 %v2537
        %v4326 = vpop.f32.mrb[0].mxu0
        %v4327 = vadd.f32 %v3811, %v4326
        %v4328 = vpop.f32.mrb[0].mxu0
        %4329 = vmatprep.mubr.f32.mxu0 %v2540
        %4330 = vmatmul.mubr.f32.gmra.mrb[0].mxu0 %v2539
        %v4331 = vpop.f32.mrb[0].mxu0
        %v4332 = vadd.f32 %v3828, %v4331
        %v4333 = vpop.f32.mrb[0].mxu0
        %4334 = vmatprep.mubr.f32.mxu0 %v2542
        %4335 = vmatmul.mubr.f32.gmra.mrb[0].mxu0 %v2541
        %v4336 = vpop.f32.mrb[0].mxu0
        %v4337 = vadd.f32 %v3845, %v4336
        %v4338 = vpop.f32.mrb[0].mxu0
        %4339 = vmatprep.mubr.f32.mxu0 %v2544
        %4340 = vmatmul.mubr.f32.gmra.mrb[0].mxu0 %v2543
        %v4341 = vpop.f32.mrb[0].mxu0
        %v4342 = vadd.f32 %v3862, %v4341
        %v4343 = vpop.f32.mrb[0].mxu0
        %4344 = vmatprep.mubr.f32.mxu0 %v2546
        %4345 = vmatmul.mubr.f32.gmra.mrb[0].mxu0 %v2545
        %v4346 = vpop.f32.mrb[0].mxu0
        %v4347 = vadd.f32 %v3879, %v4346
        %v4348 = vpop.f32.mrb[0].mxu0
        %4349 = vmatprep.mubr.f32.mxu0 %v2548
        %4350 = vmatmul.mubr.f32.gmra.mrb[0].mxu0 %v2547
        %v4351 = vpop.f32.mrb[0].mxu0
        %v4352 = vadd.f32 %v3896, %v4351
        %v4353 = vpop.f32.mrb[0].mxu0
        %4354 = vmatprep.mubr.f32.mxu0 %v2550
        %4355 = vmatmul.mubr.f32.gmra.mrb[0].mxu0 %v2549
        %v4356 = vpop.f32.mrb[0].mxu0
        %v4357 = vadd.f32 %v3913, %v4356
        %v4358 = vpop.f32.mrb[0].mxu0
        %4359 = vmatprep.mubr.f32.mxu0 %v2552
        %4360 = vmatmul.mubr.f32.gmra.mrb[0].mxu0 %v2551
        %v4361 = vpop.f32.mrb[0].mxu0
        %v4362 = vadd.f32 %v3930, %v4361
        %v4363 = vpop.f32.mrb[0].mxu0
        %4364 = vmatprep.mubr.f32.mxu0 %v2554
        %4365 = vmatmul.mubr.f32.gmra.mrb[0].mxu0 %v2553
        %v4366 = vpop.f32.mrb[0].mxu0
        %v4367 = vadd.f32 %v3947, %v4366
        %v4368 = vpop.f32.mrb[0].mxu0
        %4369 = vmatprep.mubr.f32.mxu0 %v2556
        %4370 = vmatmul.mubr.f32.gmra.mrb[0].mxu0 %v2555
        %v4371 = vpop.f32.mrb[0].mxu0
        %v4372 = vadd.f32 %v3964, %v4371
        %v4373 = vpop.f32.mrb[0].mxu0
        %4374 = vmatprep.mubr.f32.mxu0 %v2558
        %4375 = vmatmul.mubr.f32.gmra.mrb[0].mxu0 %v2557
        %v4376 = vpop.f32.mrb[0].mxu0
        %v4377 = vadd.f32 %v3981, %v4376
        %v4378 = vpop.f32.mrb[0].mxu0
        %4379 = vmatprep.mubr.f32.mxu0 %v2560
        %4380 = vmatmul.mubr.f32.gmra.mrb[0].mxu0 %v2559
        %v4381 = vpop.f32.mrb[0].mxu0
        %v4382 = vadd.f32 %v3998, %v4381
        %v4383 = vpop.f32.mrb[0].mxu0
        %4384 = vmatprep.mubr.f32.mxu0 %v2562
        %4385 = vmatmul.mubr.f32.gmra.mrb[0].mxu0 %v2561
        %v4386 = vpop.f32.mrb[0].mxu0
        %v4387 = vadd.f32 %v4015, %v4386
        %v4388 = vpop.f32.mrb[0].mxu0
        %4389 = vmatprep.mubr.f32.mxu0 %v2564
        %4390 = vmatmul.mubr.f32.gmra.mrb[0].mxu0 %v2563
        %v4391 = vpop.f32.mrb[0].mxu0
        %v4392 = vadd.f32 %v4032, %v4391
        %v4393 = vpop.f32.mrb[0].mxu0
        %4394 = vmatprep.mubr.f32.mxu0 %v2566
        %4395 = vmatmul.mubr.f32.gmra.mrb[0].mxu0 %v2565
        %v4396 = vpop.f32.mrb[0].mxu0
        %v4397 = vadd.f32 %v4049, %v4396
        %v4398 = vpop.f32.mrb[0].mxu0
        %4399 = vmatprep.mubr.f32.mxu0 %v2568
        %4400 = vmatmul.mubr.f32.gmra.mrb[0].mxu0 %v2567
        %v4401 = vpop.f32.mrb[0].mxu0
        %v4402 = vadd.f32 %v4066, %v4401
        %v4403 = vpop.f32.mrb[0].mxu0
        %4404 = vmatprep.mubr.f32.mxu0 %v2570
        %4405 = vmatmul.mubr.f32.gmra.mrb[0].mxu0 %v2569
        %v4406 = vpop.f32.mrb[0].mxu0
        %v4407 = vadd.f32 %v4083, %v4406
        %v4408 = vpop.f32.mrb[0].mxu0
        %4409 = vmatprep.mubr.f32.mxu0 %v2572
        %4410 = vmatmul.mubr.f32.gmra.mrb[0].mxu0 %v2571
        %v4411 = vpop.f32.mrb[0].mxu0
        %v4412 = vadd.f32 %v4100, %v4411
        %v4413 = vpop.f32.mrb[0].mxu0
        %4414 = vmatprep.mubr.f32.mxu0 %v2574
        %4415 = vmatmul.mubr.f32.gmra.mrb[0].mxu0 %v2573
        %v4416 = vpop.f32.mrb[0].mxu0
        %v4417 = vadd.f32 %v4108, %v4416
        %v4418 = vpop.f32.mrb[0].mxu0
        %4419 = vdwg.mxu0
        %v4461 = vcombine.high %v4217, %v4217
        %v4463 = vunpack.c.l.s4 1983009808
        %v4464 = vunpack.c.0.s8 %v4463
        %v4465 = vlaneseq
        %v4466 = vshrl.u32 %v4465, 7
        %v4467 = vsub.s32 %v4464, %v4466
        %v4468 = vrot.slane %v4217, %v4467
        %v4470 = vunpack.c.l.s4 1983009808
        %v4471 = vunpack.c.0.s8 %v4470
        %v4472 = vlaneseq
        %v4473 = vshrl.u32 %v4472, 7
        %v4474 = vsub.s32 %v4471, %v4473
        %v4475 = vrot.slane %v4461, %v4474
        %v4476 = vcombine.high %v4468, %v4468
        %v4477 = vcombine.high %v4475, %v4475
        %v4478 = vcombine.high %v4222, %v4222
        %v4480 = vunpack.c.l.s4 1983009808
        %v4481 = vunpack.c.0.s8 %v4480
        %v4482 = vlaneseq
        %v4483 = vshrl.u32 %v4482, 7
        %v4484 = vsub.s32 %v4481, %v4483
        %v4485 = vrot.slane %v4222, %v4484
        %v4487 = vunpack.c.l.s4 1983009808
        %v4488 = vunpack.c.0.s8 %v4487
        %v4489 = vlaneseq
        %v4490 = vshrl.u32 %v4489, 7
        %v4491 = vsub.s32 %v4488, %v4490
        %v4492 = vrot.slane %v4478, %v4491
        %v4493 = vcombine.high %v4485, %v4485
        %v4494 = vcombine.high %v4492, %v4492
        %v4495 = vcombine.high %v4227, %v4227
        %v4497 = vunpack.c.l.s4 1983009808
        %v4498 = vunpack.c.0.s8 %v4497
        %v4499 = vlaneseq
        %v4500 = vshrl.u32 %v4499, 7
        %v4501 = vsub.s32 %v4498, %v4500
        %v4502 = vrot.slane %v4227, %v4501
        %v4504 = vunpack.c.l.s4 1983009808
        %v4505 = vunpack.c.0.s8 %v4504
        %v4506 = vlaneseq
        %v4507 = vshrl.u32 %v4506, 7
        %v4508 = vsub.s32 %v4505, %v4507
        %v4509 = vrot.slane %v4495, %v4508
        %v4510 = vcombine.high %v4502, %v4502
        %v4511 = vcombine.high %v4509, %v4509
        %v4512 = vcombine.high %v4232, %v4232
        %v4514 = vunpack.c.l.s4 1983009808
        %v4515 = vunpack.c.0.s8 %v4514
        %v4516 = vlaneseq
        %v4517 = vshrl.u32 %v4516, 7
        %v4518 = vsub.s32 %v4515, %v4517
        %v4519 = vrot.slane %v4232, %v4518
        %v4521 = vunpack.c.l.s4 1983009808
        %v4522 = vunpack.c.0.s8 %v4521
        %v4523 = vlaneseq
        %v4524 = vshrl.u32 %v4523, 7
        %v4525 = vsub.s32 %v4522, %v4524
        %v4526 = vrot.slane %v4512, %v4525
        %v4527 = vcombine.high %v4519, %v4519
        %v4528 = vcombine.high %v4526, %v4526
        %v4529 = vcombine.high %v4237, %v4237
        %v4531 = vunpack.c.l.s4 1983009808
        %v4532 = vunpack.c.0.s8 %v4531
        %v4533 = vlaneseq
        %v4534 = vshrl.u32 %v4533, 7
        %v4535 = vsub.s32 %v4532, %v4534
        %v4536 = vrot.slane %v4237, %v4535
        %v4538 = vunpack.c.l.s4 1983009808
        %v4539 = vunpack.c.0.s8 %v4538
        %v4540 = vlaneseq
        %v4541 = vshrl.u32 %v4540, 7
        %v4542 = vsub.s32 %v4539, %v4541
        %v4543 = vrot.slane %v4529, %v4542
        %v4544 = vcombine.high %v4536, %v4536
        %v4545 = vcombine.high %v4543, %v4543
        %v4546 = vcombine.high %v4242, %v4242
        %v4548 = vunpack.c.l.s4 1983009808
        %v4549 = vunpack.c.0.s8 %v4548
        %v4550 = vlaneseq
        %v4551 = vshrl.u32 %v4550, 7
        %v4552 = vsub.s32 %v4549, %v4551
        %v4553 = vrot.slane %v4242, %v4552
        %v4555 = vunpack.c.l.s4 1983009808
        %v4556 = vunpack.c.0.s8 %v4555
        %v4557 = vlaneseq
        %v4558 = vshrl.u32 %v4557, 7
        %v4559 = vsub.s32 %v4556, %v4558
        %v4560 = vrot.slane %v4546, %v4559
        %v4561 = vcombine.high %v4553, %v4553
        %v4562 = vcombine.high %v4560, %v4560
        %v4563 = vcombine.high %v4247, %v4247
        %v4565 = vunpack.c.l.s4 1983009808
        %v4566 = vunpack.c.0.s8 %v4565
        %v4567 = vlaneseq
        %v4568 = vshrl.u32 %v4567, 7
        %v4569 = vsub.s32 %v4566, %v4568
        %v4570 = vrot.slane %v4247, %v4569
        %v4572 = vunpack.c.l.s4 1983009808
        %v4573 = vunpack.c.0.s8 %v4572
        %v4574 = vlaneseq
        %v4575 = vshrl.u32 %v4574, 7
        %v4576 = vsub.s32 %v4573, %v4575
        %v4577 = vrot.slane %v4563, %v4576
        %v4578 = vcombine.high %v4570, %v4570
        %v4579 = vcombine.high %v4577, %v4577
        %v4580 = vcombine.high %v4252, %v4252
        %v4582 = vunpack.c.l.s4 1983009808
        %v4583 = vunpack.c.0.s8 %v4582
        %v4584 = vlaneseq
        %v4585 = vshrl.u32 %v4584, 7
        %v4586 = vsub.s32 %v4583, %v4585
        %v4587 = vrot.slane %v4252, %v4586
        %v4589 = vunpack.c.l.s4 1983009808
        %v4590 = vunpack.c.0.s8 %v4589
        %v4591 = vlaneseq
        %v4592 = vshrl.u32 %v4591, 7
        %v4593 = vsub.s32 %v4590, %v4592
        %v4594 = vrot.slane %v4580, %v4593
        %v4595 = vcombine.high %v4587, %v4587
        %v4596 = vcombine.high %v4594, %v4594
        %v4597 = vcombine.high %v4257, %v4257
        %v4599 = vunpack.c.l.s4 1983009808
        %v4600 = vunpack.c.0.s8 %v4599
        %v4601 = vlaneseq
        %v4602 = vshrl.u32 %v4601, 7
        %v4603 = vsub.s32 %v4600, %v4602
        %v4604 = vrot.slane %v4257, %v4603
        %v4606 = vunpack.c.l.s4 1983009808
        %v4607 = vunpack.c.0.s8 %v4606
        %v4608 = vlaneseq
        %v4609 = vshrl.u32 %v4608, 7
        %v4610 = vsub.s32 %v4607, %v4609
        %v4611 = vrot.slane %v4597, %v4610
        %v4612 = vcombine.high %v4604, %v4604
        %v4613 = vcombine.high %v4611, %v4611
        %v4614 = vcombine.high %v4262, %v4262
        %v4616 = vunpack.c.l.s4 1983009808
        %v4617 = vunpack.c.0.s8 %v4616
        %v4618 = vlaneseq
        %v4619 = vshrl.u32 %v4618, 7
        %v4620 = vsub.s32 %v4617, %v4619
        %v4621 = vrot.slane %v4262, %v4620
        %v4623 = vunpack.c.l.s4 1983009808
        %v4624 = vunpack.c.0.s8 %v4623
        %v4625 = vlaneseq
        %v4626 = vshrl.u32 %v4625, 7
        %v4627 = vsub.s32 %v4624, %v4626
        %v4628 = vrot.slane %v4614, %v4627
        %v4629 = vcombine.high %v4621, %v4621
        %v4630 = vcombine.high %v4628, %v4628
        %v4631 = vcombine.high %v4267, %v4267
        %v4633 = vunpack.c.l.s4 1983009808
        %v4634 = vunpack.c.0.s8 %v4633
        %v4635 = vlaneseq
        %v4636 = vshrl.u32 %v4635, 7
        %v4637 = vsub.s32 %v4634, %v4636
        %v4638 = vrot.slane %v4267, %v4637
        %v4640 = vunpack.c.l.s4 1983009808
        %v4641 = vunpack.c.0.s8 %v4640
        %v4642 = vlaneseq
        %v4643 = vshrl.u32 %v4642, 7
        %v4644 = vsub.s32 %v4641, %v4643
        %v4645 = vrot.slane %v4631, %v4644
        %v4646 = vcombine.high %v4638, %v4638
        %v4647 = vcombine.high %v4645, %v4645
        %v4648 = vcombine.high %v4272, %v4272
        %v4650 = vunpack.c.l.s4 1983009808
        %v4651 = vunpack.c.0.s8 %v4650
        %v4652 = vlaneseq
        %v4653 = vshrl.u32 %v4652, 7
        %v4654 = vsub.s32 %v4651, %v4653
        %v4655 = vrot.slane %v4272, %v4654
        %v4657 = vunpack.c.l.s4 1983009808
        %v4658 = vunpack.c.0.s8 %v4657
        %v4659 = vlaneseq
        %v4660 = vshrl.u32 %v4659, 7
        %v4661 = vsub.s32 %v4658, %v4660
        %v4662 = vrot.slane %v4648, %v4661
        %v4663 = vcombine.high %v4655, %v4655
        %v4664 = vcombine.high %v4662, %v4662
        %v4665 = vcombine.high %v4277, %v4277
        %v4667 = vunpack.c.l.s4 1983009808
        %v4668 = vunpack.c.0.s8 %v4667
        %v4669 = vlaneseq
        %v4670 = vshrl.u32 %v4669, 7
        %v4671 = vsub.s32 %v4668, %v4670
        %v4672 = vrot.slane %v4277, %v4671
        %v4674 = vunpack.c.l.s4 1983009808
        %v4675 = vunpack.c.0.s8 %v4674
        %v4676 = vlaneseq
        %v4677 = vshrl.u32 %v4676, 7
        %v4678 = vsub.s32 %v4675, %v4677
        %v4679 = vrot.slane %v4665, %v4678
        %v4680 = vcombine.high %v4672, %v4672
        %v4681 = vcombine.high %v4679, %v4679
        %v4682 = vcombine.high %v4282, %v4282
        %v4684 = vunpack.c.l.s4 1983009808
        %v4685 = vunpack.c.0.s8 %v4684
        %v4686 = vlaneseq
        %v4687 = vshrl.u32 %v4686, 7
        %v4688 = vsub.s32 %v4685, %v4687
        %v4689 = vrot.slane %v4282, %v4688
        %v4691 = vunpack.c.l.s4 1983009808
        %v4692 = vunpack.c.0.s8 %v4691
        %v4693 = vlaneseq
        %v4694 = vshrl.u32 %v4693, 7
        %v4695 = vsub.s32 %v4692, %v4694
        %v4696 = vrot.slane %v4682, %v4695
        %v4697 = vcombine.high %v4689, %v4689
        %v4698 = vcombine.high %v4696, %v4696
        %v4699 = vcombine.high %v4287, %v4287
        %v4701 = vunpack.c.l.s4 1983009808
        %v4702 = vunpack.c.0.s8 %v4701
        %v4703 = vlaneseq
        %v4704 = vshrl.u32 %v4703, 7
        %v4705 = vsub.s32 %v4702, %v4704
        %v4706 = vrot.slane %v4287, %v4705
        %v4708 = vunpack.c.l.s4 1983009808
        %v4709 = vunpack.c.0.s8 %v4708
        %v4710 = vlaneseq
        %v4711 = vshrl.u32 %v4710, 7
        %v4712 = vsub.s32 %v4709, %v4711
        %v4713 = vrot.slane %v4699, %v4712
        %v4714 = vcombine.high %v4706, %v4706
        %v4715 = vcombine.high %v4713, %v4713
        %v4716 = vcombine.high %v4292, %v4292
        %v4718 = vunpack.c.l.s4 1983009808
        %v4719 = vunpack.c.0.s8 %v4718
        %v4720 = vlaneseq
        %v4721 = vshrl.u32 %v4720, 7
        %v4722 = vsub.s32 %v4719, %v4721
        %v4723 = vrot.slane %v4292, %v4722
        %v4725 = vunpack.c.l.s4 1983009808
        %v4726 = vunpack.c.0.s8 %v4725
        %v4727 = vlaneseq
        %v4728 = vshrl.u32 %v4727, 7
        %v4729 = vsub.s32 %v4726, %v4728
        %v4730 = vrot.slane %v4716, %v4729
        %v4731 = vcombine.high %v4723, %v4723
        %v4732 = vcombine.high %v4730, %v4730
        %v4733 = vcombine.high %v4297, %v4297
        %v4735 = vunpack.c.l.s4 1983009808
        %v4736 = vunpack.c.0.s8 %v4735
        %v4737 = vlaneseq
        %v4738 = vshrl.u32 %v4737, 7
        %v4739 = vsub.s32 %v4736, %v4738
        %v4740 = vrot.slane %v4297, %v4739
        %v4742 = vunpack.c.l.s4 1983009808
        %v4743 = vunpack.c.0.s8 %v4742
        %v4744 = vlaneseq
        %v4745 = vshrl.u32 %v4744, 7
        %v4746 = vsub.s32 %v4743, %v4745
        %v4747 = vrot.slane %v4733, %v4746
        %v4748 = vcombine.high %v4740, %v4740
        %v4749 = vcombine.high %v4747, %v4747
        %v4750 = vcombine.high %v4302, %v4302
        %v4752 = vunpack.c.l.s4 1983009808
        %v4753 = vunpack.c.0.s8 %v4752
        %v4754 = vlaneseq
        %v4755 = vshrl.u32 %v4754, 7
        %v4756 = vsub.s32 %v4753, %v4755
        %v4757 = vrot.slane %v4302, %v4756
        %v4759 = vunpack.c.l.s4 1983009808
        %v4760 = vunpack.c.0.s8 %v4759
        %v4761 = vlaneseq
        %v4762 = vshrl.u32 %v4761, 7
        %v4763 = vsub.s32 %v4760, %v4762
        %v4764 = vrot.slane %v4750, %v4763
        %v4765 = vcombine.high %v4757, %v4757
        %v4766 = vcombine.high %v4764, %v4764
        %v4767 = vcombine.high %v4307, %v4307
        %v4769 = vunpack.c.l.s4 1983009808
        %v4770 = vunpack.c.0.s8 %v4769
        %v4771 = vlaneseq
        %v4772 = vshrl.u32 %v4771, 7
        %v4773 = vsub.s32 %v4770, %v4772
        %v4774 = vrot.slane %v4307, %v4773
        %v4776 = vunpack.c.l.s4 1983009808
        %v4777 = vunpack.c.0.s8 %v4776
        %v4778 = vlaneseq
        %v4779 = vshrl.u32 %v4778, 7
        %v4780 = vsub.s32 %v4777, %v4779
        %v4781 = vrot.slane %v4767, %v4780
        %v4782 = vcombine.high %v4774, %v4774
        %v4783 = vcombine.high %v4781, %v4781
        %v4784 = vcombine.high %v4312, %v4312
        %v4786 = vunpack.c.l.s4 1983009808
        %v4787 = vunpack.c.0.s8 %v4786
        %v4788 = vlaneseq
        %v4789 = vshrl.u32 %v4788, 7
        %v4790 = vsub.s32 %v4787, %v4789
        %v4791 = vrot.slane %v4312, %v4790
        %v4793 = vunpack.c.l.s4 1983009808
        %v4794 = vunpack.c.0.s8 %v4793
        %v4795 = vlaneseq
        %v4796 = vshrl.u32 %v4795, 7
        %v4797 = vsub.s32 %v4794, %v4796
        %v4798 = vrot.slane %v4784, %v4797
        %v4799 = vcombine.high %v4791, %v4791
        %v4800 = vcombine.high %v4798, %v4798
        %v4801 = vcombine.high %v4317, %v4317
        %v4803 = vunpack.c.l.s4 1983009808
        %v4804 = vunpack.c.0.s8 %v4803
        %v4805 = vlaneseq
        %v4806 = vshrl.u32 %v4805, 7
        %v4807 = vsub.s32 %v4804, %v4806
        %v4808 = vrot.slane %v4317, %v4807
        %v4810 = vunpack.c.l.s4 1983009808
        %v4811 = vunpack.c.0.s8 %v4810
        %v4812 = vlaneseq
        %v4813 = vshrl.u32 %v4812, 7
        %v4814 = vsub.s32 %v4811, %v4813
        %v4815 = vrot.slane %v4801, %v4814
        %v4816 = vcombine.high %v4808, %v4808
        %v4817 = vcombine.high %v4815, %v4815
        %v4818 = vcombine.high %v4322, %v4322
        %v4820 = vunpack.c.l.s4 1983009808
        %v4821 = vunpack.c.0.s8 %v4820
        %v4822 = vlaneseq
        %v4823 = vshrl.u32 %v4822, 7
        %v4824 = vsub.s32 %v4821, %v4823
        %v4825 = vrot.slane %v4322, %v4824
        %v4827 = vunpack.c.l.s4 1983009808
        %v4828 = vunpack.c.0.s8 %v4827
        %v4829 = vlaneseq
        %v4830 = vshrl.u32 %v4829, 7
        %v4831 = vsub.s32 %v4828, %v4830
        %v4832 = vrot.slane %v4818, %v4831
        %v4833 = vcombine.high %v4825, %v4825
        %v4834 = vcombine.high %v4832, %v4832
        %v4835 = vcombine.high %v4327, %v4327
        %v4837 = vunpack.c.l.s4 1983009808
        %v4838 = vunpack.c.0.s8 %v4837
        %v4839 = vlaneseq
        %v4840 = vshrl.u32 %v4839, 7
        %v4841 = vsub.s32 %v4838, %v4840
        %v4842 = vrot.slane %v4327, %v4841
        %v4844 = vunpack.c.l.s4 1983009808
        %v4845 = vunpack.c.0.s8 %v4844
        %v4846 = vlaneseq
        %v4847 = vshrl.u32 %v4846, 7
        %v4848 = vsub.s32 %v4845, %v4847
        %v4849 = vrot.slane %v4835, %v4848
        %v4850 = vcombine.high %v4842, %v4842
        %v4851 = vcombine.high %v4849, %v4849
        %v4852 = vcombine.high %v4332, %v4332
        %v4854 = vunpack.c.l.s4 1983009808
        %v4855 = vunpack.c.0.s8 %v4854
        %v4856 = vlaneseq
        %v4857 = vshrl.u32 %v4856, 7
        %v4858 = vsub.s32 %v4855, %v4857
        %v4859 = vrot.slane %v4332, %v4858
        %v4861 = vunpack.c.l.s4 1983009808
        %v4862 = vunpack.c.0.s8 %v4861
        %v4863 = vlaneseq
        %v4864 = vshrl.u32 %v4863, 7
        %v4865 = vsub.s32 %v4862, %v4864
        %v4866 = vrot.slane %v4852, %v4865
        %v4867 = vcombine.high %v4859, %v4859
        %v4868 = vcombine.high %v4866, %v4866
        %v4869 = vcombine.high %v4337, %v4337
        %v4871 = vunpack.c.l.s4 1983009808
        %v4872 = vunpack.c.0.s8 %v4871
        %v4873 = vlaneseq
        %v4874 = vshrl.u32 %v4873, 7
        %v4875 = vsub.s32 %v4872, %v4874
        %v4876 = vrot.slane %v4337, %v4875
        %v4878 = vunpack.c.l.s4 1983009808
        %v4879 = vunpack.c.0.s8 %v4878
        %v4880 = vlaneseq
        %v4881 = vshrl.u32 %v4880, 7
        %v4882 = vsub.s32 %v4879, %v4881
        %v4883 = vrot.slane %v4869, %v4882
        %v4884 = vcombine.high %v4876, %v4876
        %v4885 = vcombine.high %v4883, %v4883
        %v4886 = vcombine.high %v4342, %v4342
        %v4888 = vunpack.c.l.s4 1983009808
        %v4889 = vunpack.c.0.s8 %v4888
        %v4890 = vlaneseq
        %v4891 = vshrl.u32 %v4890, 7
        %v4892 = vsub.s32 %v4889, %v4891
        %v4893 = vrot.slane %v4342, %v4892
        %v4895 = vunpack.c.l.s4 1983009808
        %v4896 = vunpack.c.0.s8 %v4895
        %v4897 = vlaneseq
        %v4898 = vshrl.u32 %v4897, 7
        %v4899 = vsub.s32 %v4896, %v4898
        %v4900 = vrot.slane %v4886, %v4899
        %v4901 = vcombine.high %v4893, %v4893
        %v4902 = vcombine.high %v4900, %v4900
        %v4903 = vcombine.high %v4347, %v4347
        %v4905 = vunpack.c.l.s4 1983009808
        %v4906 = vunpack.c.0.s8 %v4905
        %v4907 = vlaneseq
        %v4908 = vshrl.u32 %v4907, 7
        %v4909 = vsub.s32 %v4906, %v4908
        %v4910 = vrot.slane %v4347, %v4909
        %v4912 = vunpack.c.l.s4 1983009808
        %v4913 = vunpack.c.0.s8 %v4912
        %v4914 = vlaneseq
        %v4915 = vshrl.u32 %v4914, 7
        %v4916 = vsub.s32 %v4913, %v4915
        %v4917 = vrot.slane %v4903, %v4916
        %v4918 = vcombine.high %v4910, %v4910
        %v4919 = vcombine.high %v4917, %v4917
        %v4920 = vcombine.high %v4352, %v4352
        %v4922 = vunpack.c.l.s4 1983009808
        %v4923 = vunpack.c.0.s8 %v4922
        %v4924 = vlaneseq
        %v4925 = vshrl.u32 %v4924, 7
        %v4926 = vsub.s32 %v4923, %v4925
        %v4927 = vrot.slane %v4352, %v4926
        %v4929 = vunpack.c.l.s4 1983009808
        %v4930 = vunpack.c.0.s8 %v4929
        %v4931 = vlaneseq
        %v4932 = vshrl.u32 %v4931, 7
        %v4933 = vsub.s32 %v4930, %v4932
        %v4934 = vrot.slane %v4920, %v4933
        %v4935 = vcombine.high %v4927, %v4927
        %v4936 = vcombine.high %v4934, %v4934
        %v4937 = vcombine.high %v4357, %v4357
        %v4939 = vunpack.c.l.s4 1983009808
        %v4940 = vunpack.c.0.s8 %v4939
        %v4941 = vlaneseq
        %v4942 = vshrl.u32 %v4941, 7
        %v4943 = vsub.s32 %v4940, %v4942
        %v4944 = vrot.slane %v4357, %v4943
        %v4946 = vunpack.c.l.s4 1983009808
        %v4947 = vunpack.c.0.s8 %v4946
        %v4948 = vlaneseq
        %v4949 = vshrl.u32 %v4948, 7
        %v4950 = vsub.s32 %v4947, %v4949
        %v4951 = vrot.slane %v4937, %v4950
        %v4952 = vcombine.high %v4944, %v4944
        %v4953 = vcombine.high %v4951, %v4951
        %v4954 = vcombine.high %v4362, %v4362
        %v4956 = vunpack.c.l.s4 1983009808
        %v4957 = vunpack.c.0.s8 %v4956
        %v4958 = vlaneseq
        %v4959 = vshrl.u32 %v4958, 7
        %v4960 = vsub.s32 %v4957, %v4959
        %v4961 = vrot.slane %v4362, %v4960
        %v4963 = vunpack.c.l.s4 1983009808
        %v4964 = vunpack.c.0.s8 %v4963
        %v4965 = vlaneseq
        %v4966 = vshrl.u32 %v4965, 7
        %v4967 = vsub.s32 %v4964, %v4966
        %v4968 = vrot.slane %v4954, %v4967
        %v4969 = vcombine.high %v4961, %v4961
        %v4970 = vcombine.high %v4968, %v4968
        %v4971 = vcombine.high %v4367, %v4367
        %v4973 = vunpack.c.l.s4 1983009808
        %v4974 = vunpack.c.0.s8 %v4973
        %v4975 = vlaneseq
        %v4976 = vshrl.u32 %v4975, 7
        %v4977 = vsub.s32 %v4974, %v4976
        %v4978 = vrot.slane %v4367, %v4977
        %v4980 = vunpack.c.l.s4 1983009808
        %v4981 = vunpack.c.0.s8 %v4980
        %v4982 = vlaneseq
        %v4983 = vshrl.u32 %v4982, 7
        %v4984 = vsub.s32 %v4981, %v4983
        %v4985 = vrot.slane %v4971, %v4984
        %v4986 = vcombine.high %v4978, %v4978
        %v4987 = vcombine.high %v4985, %v4985
        %v4988 = vcombine.high %v4372, %v4372
        %v4990 = vunpack.c.l.s4 1983009808
        %v4991 = vunpack.c.0.s8 %v4990
        %v4992 = vlaneseq
        %v4993 = vshrl.u32 %v4992, 7
        %v4994 = vsub.s32 %v4991, %v4993
        %v4995 = vrot.slane %v4372, %v4994
        %v4997 = vunpack.c.l.s4 1983009808
        %v4998 = vunpack.c.0.s8 %v4997
        %v4999 = vlaneseq
        %v5000 = vshrl.u32 %v4999, 7
        %v5001 = vsub.s32 %v4998, %v5000
        %v5002 = vrot.slane %v4988, %v5001
        %v5003 = vcombine.high %v4995, %v4995
        %v5004 = vcombine.high %v5002, %v5002
        %v5005 = vcombine.high %v4377, %v4377
        %v5007 = vunpack.c.l.s4 1983009808
        %v5008 = vunpack.c.0.s8 %v5007
        %v5009 = vlaneseq
        %v5010 = vshrl.u32 %v5009, 7
        %v5011 = vsub.s32 %v5008, %v5010
        %v5012 = vrot.slane %v4377, %v5011
        %v5014 = vunpack.c.l.s4 1983009808
        %v5015 = vunpack.c.0.s8 %v5014
        %v5016 = vlaneseq
        %v5017 = vshrl.u32 %v5016, 7
        %v5018 = vsub.s32 %v5015, %v5017
        %v5019 = vrot.slane %v5005, %v5018
        %v5020 = vcombine.high %v5012, %v5012
        %v5021 = vcombine.high %v5019, %v5019
        %v5022 = vcombine.high %v4382, %v4382
        %v5024 = vunpack.c.l.s4 1983009808
        %v5025 = vunpack.c.0.s8 %v5024
        %v5026 = vlaneseq
        %v5027 = vshrl.u32 %v5026, 7
        %v5028 = vsub.s32 %v5025, %v5027
        %v5029 = vrot.slane %v4382, %v5028
        %v5031 = vunpack.c.l.s4 1983009808
        %v5032 = vunpack.c.0.s8 %v5031
        %v5033 = vlaneseq
        %v5034 = vshrl.u32 %v5033, 7
        %v5035 = vsub.s32 %v5032, %v5034
        %v5036 = vrot.slane %v5022, %v5035
        %v5037 = vcombine.high %v5029, %v5029
        %v5038 = vcombine.high %v5036, %v5036
        %v5039 = vcombine.high %v4387, %v4387
        %v5041 = vunpack.c.l.s4 1983009808
        %v5042 = vunpack.c.0.s8 %v5041
        %v5043 = vlaneseq
        %v5044 = vshrl.u32 %v5043, 7
        %v5045 = vsub.s32 %v5042, %v5044
        %v5046 = vrot.slane %v4387, %v5045
        %v5048 = vunpack.c.l.s4 1983009808
        %v5049 = vunpack.c.0.s8 %v5048
        %v5050 = vlaneseq
        %v5051 = vshrl.u32 %v5050, 7
        %v5052 = vsub.s32 %v5049, %v5051
        %v5053 = vrot.slane %v5039, %v5052
        %v5054 = vcombine.high %v5046, %v5046
        %v5055 = vcombine.high %v5053, %v5053
        %v5056 = vcombine.high %v4392, %v4392
        %v5058 = vunpack.c.l.s4 1983009808
        %v5059 = vunpack.c.0.s8 %v5058
        %v5060 = vlaneseq
        %v5061 = vshrl.u32 %v5060, 7
        %v5062 = vsub.s32 %v5059, %v5061
        %v5063 = vrot.slane %v4392, %v5062
        %v5065 = vunpack.c.l.s4 1983009808
        %v5066 = vunpack.c.0.s8 %v5065
        %v5067 = vlaneseq
        %v5068 = vshrl.u32 %v5067, 7
        %v5069 = vsub.s32 %v5066, %v5068
        %v5070 = vrot.slane %v5056, %v5069
        %v5071 = vcombine.high %v5063, %v5063
        %v5072 = vcombine.high %v5070, %v5070
        %v5073 = vcombine.high %v4397, %v4397
        %v5075 = vunpack.c.l.s4 1983009808
        %v5076 = vunpack.c.0.s8 %v5075
        %v5077 = vlaneseq
        %v5078 = vshrl.u32 %v5077, 7
        %v5079 = vsub.s32 %v5076, %v5078
        %v5080 = vrot.slane %v4397, %v5079
        %v5082 = vunpack.c.l.s4 1983009808
        %v5083 = vunpack.c.0.s8 %v5082
        %v5084 = vlaneseq
        %v5085 = vshrl.u32 %v5084, 7
        %v5086 = vsub.s32 %v5083, %v5085
        %v5087 = vrot.slane %v5073, %v5086
        %v5088 = vcombine.high %v5080, %v5080
        %v5089 = vcombine.high %v5087, %v5087
        %v5090 = vcombine.high %v4402, %v4402
        %v5092 = vunpack.c.l.s4 1983009808
        %v5093 = vunpack.c.0.s8 %v5092
        %v5094 = vlaneseq
        %v5095 = vshrl.u32 %v5094, 7
        %v5096 = vsub.s32 %v5093, %v5095
        %v5097 = vrot.slane %v4402, %v5096
        %v5099 = vunpack.c.l.s4 1983009808
        %v5100 = vunpack.c.0.s8 %v5099
        %v5101 = vlaneseq
        %v5102 = vshrl.u32 %v5101, 7
        %v5103 = vsub.s32 %v5100, %v5102
        %v5104 = vrot.slane %v5090, %v5103
        %v5105 = vcombine.high %v5097, %v5097
        %v5106 = vcombine.high %v5104, %v5104
        %v5107 = vcombine.high %v4407, %v4407
        %v5109 = vunpack.c.l.s4 1983009808
        %v5110 = vunpack.c.0.s8 %v5109
        %v5111 = vlaneseq
        %v5112 = vshrl.u32 %v5111, 7
        %v5113 = vsub.s32 %v5110, %v5112
        %v5114 = vrot.slane %v4407, %v5113
        %v5116 = vunpack.c.l.s4 1983009808
        %v5117 = vunpack.c.0.s8 %v5116
        %v5118 = vlaneseq
        %v5119 = vshrl.u32 %v5118, 7
        %v5120 = vsub.s32 %v5117, %v5119
        %v5121 = vrot.slane %v5107, %v5120
        %v5122 = vcombine.high %v5114, %v5114
        %v5123 = vcombine.high %v5121, %v5121
        %v5124 = vcombine.high %v4412, %v4412
        %v5126 = vunpack.c.l.s4 1983009808
        %v5127 = vunpack.c.0.s8 %v5126
        %v5128 = vlaneseq
        %v5129 = vshrl.u32 %v5128, 7
        %v5130 = vsub.s32 %v5127, %v5129
        %v5131 = vrot.slane %v4412, %v5130
        %v5133 = vunpack.c.l.s4 1983009808
        %v5134 = vunpack.c.0.s8 %v5133
        %v5135 = vlaneseq
        %v5136 = vshrl.u32 %v5135, 7
        %v5137 = vsub.s32 %v5134, %v5136
        %v5138 = vrot.slane %v5124, %v5137
        %v5139 = vcombine.high %v5131, %v5131
        %v5140 = vcombine.high %v5138, %v5138
        %v5142 = vunpack.c.l.s4 1983009808
        %v5143 = vunpack.c.0.s8 %v5142
        %v5144 = vlaneseq
        %v5145 = vshrl.u32 %v5144, 7
        %v5146 = vsub.s32 %v5143, %v5145
        %v5147 = vrot.slane %v4417, %v5146
        %v5148 = vcombine.high %v5147, %v5147
        %v5149 = vcombine.low %v4468, %v4476
        %v5150 = vcombine.low %v4475, %v4477
        %v5152 = vunpack.c.l.s4 1983009808
        %v5153 = vunpack.c.0.s8 %v5152
        %v5154 = vlaneseq
        %v5155 = vshrl.u32 %v5154, 7
        %v5156 = vsub.s32 %v5153, %v5155
        %v5157 = vrot.slane %v5149, %v5156
        %v5159 = vunpack.c.l.s4 1983009808
        %v5160 = vunpack.c.0.s8 %v5159
        %v5161 = vlaneseq
        %v5162 = vshrl.u32 %v5161, 7
        %v5163 = vsub.s32 %v5160, %v5162
        %v5164 = vrot.slane %v5150, %v5163
        %v5165 = vcombine.low %v5157, %v5164
        %v5166 = vcombine.low %v4485, %v4493
        %v5167 = vcombine.low %v4492, %v4494
        %v5169 = vunpack.c.l.s4 1983009808
        %v5170 = vunpack.c.0.s8 %v5169
        %v5171 = vlaneseq
        %v5172 = vshrl.u32 %v5171, 7
        %v5173 = vsub.s32 %v5170, %v5172
        %v5174 = vrot.slane %v5166, %v5173
        %v5176 = vunpack.c.l.s4 1983009808
        %v5177 = vunpack.c.0.s8 %v5176
        %v5178 = vlaneseq
        %v5179 = vshrl.u32 %v5178, 7
        %v5180 = vsub.s32 %v5177, %v5179
        %v5181 = vrot.slane %v5167, %v5180
        %v5182 = vcombine.low %v5174, %v5181
        %v5184 = vunpack.c.l.s4 1983009808
        %v5185 = vunpack.c.0.s8 %v5184
        %v5186 = vlaneseq
        %v5187 = vshrl.u32 %v5186, 7
        %v5188 = vsub.s32 %v5185, %v5187
        %v5189 = vrot.slane %v4502, %v5188
        %v5190 = vcombine.low %v4510, %v4509
        %v5191 = vcombine.low %v4511, %v4519
        %v5193 = vunpack.c.l.s4 1983009808
        %v5194 = vunpack.c.0.s8 %v5193
        %v5195 = vlaneseq
        %v5196 = vshrl.u32 %v5195, 7
        %v5197 = vsub.s32 %v5194, %v5196
        %v5198 = vrot.slane %v5190, %v5197
        %v5200 = vunpack.c.l.s4 1983009808
        %v5201 = vunpack.c.0.s8 %v5200
        %v5202 = vlaneseq
        %v5203 = vshrl.u32 %v5202, 7
        %v5204 = vsub.s32 %v5201, %v5203
        %v5205 = vrot.slane %v5191, %v5204
        %v5206 = vcombine.low %v5198, %v5205
        %v5207 = vcombine.low %v4527, %v4526
        %v5208 = vcombine.low %v4528, %v4536
        %v5210 = vunpack.c.l.s4 1983009808
        %v5211 = vunpack.c.0.s8 %v5210
        %v5212 = vlaneseq
        %v5213 = vshrl.u32 %v5212, 7
        %v5214 = vsub.s32 %v5211, %v5213
        %v5215 = vrot.slane %v5207, %v5214
        %v5217 = vunpack.c.l.s4 1983009808
        %v5218 = vunpack.c.0.s8 %v5217
        %v5219 = vlaneseq
        %v5220 = vshrl.u32 %v5219, 7
        %v5221 = vsub.s32 %v5218, %v5220
        %v5222 = vrot.slane %v5208, %v5221
        %v5223 = vcombine.low %v5215, %v5222
        %v5225 = vunpack.c.l.s4 1983009808
        %v5226 = vunpack.c.0.s8 %v5225
        %v5227 = vlaneseq
        %v5228 = vshrl.u32 %v5227, 7
        %v5229 = vsub.s32 %v5226, %v5228
        %v5230 = vrot.slane %v4544, %v5229
        %v5231 = vcombine.low %v4543, %v4545
        %v5232 = vcombine.low %v4553, %v4561
        %v5234 = vunpack.c.l.s4 1983009808
        %v5235 = vunpack.c.0.s8 %v5234
        %v5236 = vlaneseq
        %v5237 = vshrl.u32 %v5236, 7
        %v5238 = vsub.s32 %v5235, %v5237
        %v5239 = vrot.slane %v5231, %v5238
        %v5241 = vunpack.c.l.s4 1983009808
        %v5242 = vunpack.c.0.s8 %v5241
        %v5243 = vlaneseq
        %v5244 = vshrl.u32 %v5243, 7
        %v5245 = vsub.s32 %v5242, %v5244
        %v5246 = vrot.slane %v5232, %v5245
        %v5247 = vcombine.low %v5239, %v5246
        %v5248 = vcombine.low %v4560, %v4562
        %v5249 = vcombine.low %v4570, %v4578
        %v5251 = vunpack.c.l.s4 1983009808
        %v5252 = vunpack.c.0.s8 %v5251
        %v5253 = vlaneseq
        %v5254 = vshrl.u32 %v5253, 7
        %v5255 = vsub.s32 %v5252, %v5254
        %v5256 = vrot.slane %v5248, %v5255
        %v5258 = vunpack.c.l.s4 1983009808
        %v5259 = vunpack.c.0.s8 %v5258
        %v5260 = vlaneseq
        %v5261 = vshrl.u32 %v5260, 7
        %v5262 = vsub.s32 %v5259, %v5261
        %v5263 = vrot.slane %v5249, %v5262
        %v5264 = vcombine.low %v5256, %v5263
        %v5266 = vunpack.c.l.s4 1983009808
        %v5267 = vunpack.c.0.s8 %v5266
        %v5268 = vlaneseq
        %v5269 = vshrl.u32 %v5268, 7
        %v5270 = vsub.s32 %v5267, %v5269
        %v5271 = vrot.slane %v4577, %v5270
        %v5272 = vcombine.low %v4579, %v4587
        %v5273 = vcombine.low %v4595, %v4594
        %v5275 = vunpack.c.l.s4 1983009808
        %v5276 = vunpack.c.0.s8 %v5275
        %v5277 = vlaneseq
        %v5278 = vshrl.u32 %v5277, 7
        %v5279 = vsub.s32 %v5276, %v5278
        %v5280 = vrot.slane %v5272, %v5279
        %v5282 = vunpack.c.l.s4 1983009808
        %v5283 = vunpack.c.0.s8 %v5282
        %v5284 = vlaneseq
        %v5285 = vshrl.u32 %v5284, 7
        %v5286 = vsub.s32 %v5283, %v5285
        %v5287 = vrot.slane %v5273, %v5286
        %v5288 = vcombine.low %v5280, %v5287
        %v5289 = vcombine.low %v4596, %v4604
        %v5290 = vcombine.low %v4612, %v4611
        %v5292 = vunpack.c.l.s4 1983009808
        %v5293 = vunpack.c.0.s8 %v5292
        %v5294 = vlaneseq
        %v5295 = vshrl.u32 %v5294, 7
        %v5296 = vsub.s32 %v5293, %v5295
        %v5297 = vrot.slane %v5289, %v5296
        %v5299 = vunpack.c.l.s4 1983009808
        %v5300 = vunpack.c.0.s8 %v5299
        %v5301 = vlaneseq
        %v5302 = vshrl.u32 %v5301, 7
        %v5303 = vsub.s32 %v5300, %v5302
        %v5304 = vrot.slane %v5290, %v5303
        %v5305 = vcombine.low %v5297, %v5304
        %v5307 = vunpack.c.l.s4 1983009808
        %v5308 = vunpack.c.0.s8 %v5307
        %v5309 = vlaneseq
        %v5310 = vshrl.u32 %v5309, 7
        %v5311 = vsub.s32 %v5308, %v5310
        %v5312 = vrot.slane %v4613, %v5311
        %v5313 = vcombine.low %v4621, %v4629
        %v5314 = vcombine.low %v4628, %v4630
        %v5316 = vunpack.c.l.s4 1983009808
        %v5317 = vunpack.c.0.s8 %v5316
        %v5318 = vlaneseq
        %v5319 = vshrl.u32 %v5318, 7
        %v5320 = vsub.s32 %v5317, %v5319
        %v5321 = vrot.slane %v5313, %v5320
        %v5323 = vunpack.c.l.s4 1983009808
        %v5324 = vunpack.c.0.s8 %v5323
        %v5325 = vlaneseq
        %v5326 = vshrl.u32 %v5325, 7
        %v5327 = vsub.s32 %v5324, %v5326
        %v5328 = vrot.slane %v5314, %v5327
        %v5329 = vcombine.low %v5321, %v5328
        %v5330 = vcombine.low %v4638, %v4646
        %v5331 = vcombine.low %v4645, %v4647
        %v5333 = vunpack.c.l.s4 1983009808
        %v5334 = vunpack.c.0.s8 %v5333
        %v5335 = vlaneseq
        %v5336 = vshrl.u32 %v5335, 7
        %v5337 = vsub.s32 %v5334, %v5336
        %v5338 = vrot.slane %v5330, %v5337
        %v5340 = vunpack.c.l.s4 1983009808
        %v5341 = vunpack.c.0.s8 %v5340
        %v5342 = vlaneseq
        %v5343 = vshrl.u32 %v5342, 7
        %v5344 = vsub.s32 %v5341, %v5343
        %v5345 = vrot.slane %v5331, %v5344
        %v5346 = vcombine.low %v5338, %v5345
        %v5348 = vunpack.c.l.s4 1983009808
        %v5349 = vunpack.c.0.s8 %v5348
        %v5350 = vlaneseq
        %v5351 = vshrl.u32 %v5350, 7
        %v5352 = vsub.s32 %v5349, %v5351
        %v5353 = vrot.slane %v4655, %v5352
        %v5354 = vcombine.low %v4663, %v4662
        %v5355 = vcombine.low %v4664, %v4672
        %v5357 = vunpack.c.l.s4 1983009808
        %v5358 = vunpack.c.0.s8 %v5357
        %v5359 = vlaneseq
        %v5360 = vshrl.u32 %v5359, 7
        %v5361 = vsub.s32 %v5358, %v5360
        %v5362 = vrot.slane %v5354, %v5361
        %v5364 = vunpack.c.l.s4 1983009808
        %v5365 = vunpack.c.0.s8 %v5364
        %v5366 = vlaneseq
        %v5367 = vshrl.u32 %v5366, 7
        %v5368 = vsub.s32 %v5365, %v5367
        %v5369 = vrot.slane %v5355, %v5368
        %v5370 = vcombine.low %v5362, %v5369
        %v5371 = vcombine.low %v4680, %v4679
        %v5372 = vcombine.low %v4681, %v4689
        %v5374 = vunpack.c.l.s4 1983009808
        %v5375 = vunpack.c.0.s8 %v5374
        %v5376 = vlaneseq
        %v5377 = vshrl.u32 %v5376, 7
        %v5378 = vsub.s32 %v5375, %v5377
        %v5379 = vrot.slane %v5371, %v5378
        %v5381 = vunpack.c.l.s4 1983009808
        %v5382 = vunpack.c.0.s8 %v5381
        %v5383 = vlaneseq
        %v5384 = vshrl.u32 %v5383, 7
        %v5385 = vsub.s32 %v5382, %v5384
        %v5386 = vrot.slane %v5372, %v5385
        %v5387 = vcombine.low %v5379, %v5386
        %v5389 = vunpack.c.l.s4 1983009808
        %v5390 = vunpack.c.0.s8 %v5389
        %v5391 = vlaneseq
        %v5392 = vshrl.u32 %v5391, 7
        %v5393 = vsub.s32 %v5390, %v5392
        %v5394 = vrot.slane %v4697, %v5393
        %v5395 = vcombine.low %v4696, %v4698
        %v5396 = vcombine.low %v4706, %v4714
        %v5398 = vunpack.c.l.s4 1983009808
        %v5399 = vunpack.c.0.s8 %v5398
        %v5400 = vlaneseq
        %v5401 = vshrl.u32 %v5400, 7
        %v5402 = vsub.s32 %v5399, %v5401
        %v5403 = vrot.slane %v5395, %v5402
        %v5405 = vunpack.c.l.s4 1983009808
        %v5406 = vunpack.c.0.s8 %v5405
        %v5407 = vlaneseq
        %v5408 = vshrl.u32 %v5407, 7
        %v5409 = vsub.s32 %v5406, %v5408
        %v5410 = vrot.slane %v5396, %v5409
        %v5411 = vcombine.low %v5403, %v5410
        %v5412 = vcombine.low %v4713, %v4715
        %v5413 = vcombine.low %v4723, %v4731
        %v5415 = vunpack.c.l.s4 1983009808
        %v5416 = vunpack.c.0.s8 %v5415
        %v5417 = vlaneseq
        %v5418 = vshrl.u32 %v5417, 7
        %v5419 = vsub.s32 %v5416, %v5418
        %v5420 = vrot.slane %v5412, %v5419
        %v5422 = vunpack.c.l.s4 1983009808
        %v5423 = vunpack.c.0.s8 %v5422
        %v5424 = vlaneseq
        %v5425 = vshrl.u32 %v5424, 7
        %v5426 = vsub.s32 %v5423, %v5425
        %v5427 = vrot.slane %v5413, %v5426
        %v5428 = vcombine.low %v5420, %v5427
        %v5430 = vunpack.c.l.s4 1983009808
        %v5431 = vunpack.c.0.s8 %v5430
        %v5432 = vlaneseq
        %v5433 = vshrl.u32 %v5432, 7
        %v5434 = vsub.s32 %v5431, %v5433
        %v5435 = vrot.slane %v4730, %v5434
        %v5436 = vcombine.low %v4732, %v4740
        %v5437 = vcombine.low %v4748, %v4747
        %v5439 = vunpack.c.l.s4 1983009808
        %v5440 = vunpack.c.0.s8 %v5439
        %v5441 = vlaneseq
        %v5442 = vshrl.u32 %v5441, 7
        %v5443 = vsub.s32 %v5440, %v5442
        %v5444 = vrot.slane %v5436, %v5443
        %v5446 = vunpack.c.l.s4 1983009808
        %v5447 = vunpack.c.0.s8 %v5446
        %v5448 = vlaneseq
        %v5449 = vshrl.u32 %v5448, 7
        %v5450 = vsub.s32 %v5447, %v5449
        %v5451 = vrot.slane %v5437, %v5450
        %v5452 = vcombine.low %v5444, %v5451
        %v5453 = vcombine.low %v4749, %v4757
        %v5454 = vcombine.low %v4765, %v4764
        %v5456 = vunpack.c.l.s4 1983009808
        %v5457 = vunpack.c.0.s8 %v5456
        %v5458 = vlaneseq
        %v5459 = vshrl.u32 %v5458, 7
        %v5460 = vsub.s32 %v5457, %v5459
        %v5461 = vrot.slane %v5453, %v5460
        %v5463 = vunpack.c.l.s4 1983009808
        %v5464 = vunpack.c.0.s8 %v5463
        %v5465 = vlaneseq
        %v5466 = vshrl.u32 %v5465, 7
        %v5467 = vsub.s32 %v5464, %v5466
        %v5468 = vrot.slane %v5454, %v5467
        %v5469 = vcombine.low %v5461, %v5468
        %v5471 = vunpack.c.l.s4 1983009808
        %v5472 = vunpack.c.0.s8 %v5471
        %v5473 = vlaneseq
        %v5474 = vshrl.u32 %v5473, 7
        %v5475 = vsub.s32 %v5472, %v5474
        %v5476 = vrot.slane %v4766, %v5475
        %v5477 = vcombine.low %v4774, %v4782
        %v5478 = vcombine.low %v4781, %v4783
        %v5480 = vunpack.c.l.s4 1983009808
        %v5481 = vunpack.c.0.s8 %v5480
        %v5482 = vlaneseq
        %v5483 = vshrl.u32 %v5482, 7
        %v5484 = vsub.s32 %v5481, %v5483
        %v5485 = vrot.slane %v5477, %v5484
        %v5487 = vunpack.c.l.s4 1983009808
        %v5488 = vunpack.c.0.s8 %v5487
        %v5489 = vlaneseq
        %v5490 = vshrl.u32 %v5489, 7
        %v5491 = vsub.s32 %v5488, %v5490
        %v5492 = vrot.slane %v5478, %v5491
        %v5493 = vcombine.low %v5485, %v5492
        %v5494 = vcombine.low %v4791, %v4799
        %v5495 = vcombine.low %v4798, %v4800
        %v5497 = vunpack.c.l.s4 1983009808
        %v5498 = vunpack.c.0.s8 %v5497
        %v5499 = vlaneseq
        %v5500 = vshrl.u32 %v5499, 7
        %v5501 = vsub.s32 %v5498, %v5500
        %v5502 = vrot.slane %v5494, %v5501
        %v5504 = vunpack.c.l.s4 1983009808
        %v5505 = vunpack.c.0.s8 %v5504
        %v5506 = vlaneseq
        %v5507 = vshrl.u32 %v5506, 7
        %v5508 = vsub.s32 %v5505, %v5507
        %v5509 = vrot.slane %v5495, %v5508
        %v5510 = vcombine.low %v5502, %v5509
        %v5512 = vunpack.c.l.s4 1983009808
        %v5513 = vunpack.c.0.s8 %v5512
        %v5514 = vlaneseq
        %v5515 = vshrl.u32 %v5514, 7
        %v5516 = vsub.s32 %v5513, %v5515
        %v5517 = vrot.slane %v4808, %v5516
        %v5518 = vcombine.low %v4816, %v4815
        %v5519 = vcombine.low %v4817, %v4825
        %v5521 = vunpack.c.l.s4 1983009808
        %v5522 = vunpack.c.0.s8 %v5521
        %v5523 = vlaneseq
        %v5524 = vshrl.u32 %v5523, 7
        %v5525 = vsub.s32 %v5522, %v5524
        %v5526 = vrot.slane %v5518, %v5525
        %v5528 = vunpack.c.l.s4 1983009808
        %v5529 = vunpack.c.0.s8 %v5528
        %v5530 = vlaneseq
        %v5531 = vshrl.u32 %v5530, 7
        %v5532 = vsub.s32 %v5529, %v5531
        %v5533 = vrot.slane %v5519, %v5532
        %v5534 = vcombine.low %v5526, %v5533
        %v5535 = vcombine.low %v4833, %v4832
        %v5536 = vcombine.low %v4834, %v4842
        %v5538 = vunpack.c.l.s4 1983009808
        %v5539 = vunpack.c.0.s8 %v5538
        %v5540 = vlaneseq
        %v5541 = vshrl.u32 %v5540, 7
        %v5542 = vsub.s32 %v5539, %v5541
        %v5543 = vrot.slane %v5535, %v5542
        %v5545 = vunpack.c.l.s4 1983009808
        %v5546 = vunpack.c.0.s8 %v5545
        %v5547 = vlaneseq
        %v5548 = vshrl.u32 %v5547, 7
        %v5549 = vsub.s32 %v5546, %v5548
        %v5550 = vrot.slane %v5536, %v5549
        %v5551 = vcombine.low %v5543, %v5550
        %v5553 = vunpack.c.l.s4 1983009808
        %v5554 = vunpack.c.0.s8 %v5553
        %v5555 = vlaneseq
        %v5556 = vshrl.u32 %v5555, 7
        %v5557 = vsub.s32 %v5554, %v5556
        %v5558 = vrot.slane %v4850, %v5557
        %v5559 = vcombine.low %v4849, %v4851
        %v5560 = vcombine.low %v4859, %v4867
        %v5562 = vunpack.c.l.s4 1983009808
        %v5563 = vunpack.c.0.s8 %v5562
        %v5564 = vlaneseq
        %v5565 = vshrl.u32 %v5564, 7
        %v5566 = vsub.s32 %v5563, %v5565
        %v5567 = vrot.slane %v5559, %v5566
        %v5569 = vunpack.c.l.s4 1983009808
        %v5570 = vunpack.c.0.s8 %v5569
        %v5571 = vlaneseq
        %v5572 = vshrl.u32 %v5571, 7
        %v5573 = vsub.s32 %v5570, %v5572
        %v5574 = vrot.slane %v5560, %v5573
        %v5575 = vcombine.low %v5567, %v5574
        %v5576 = vcombine.low %v4866, %v4868
        %v5577 = vcombine.low %v4876, %v4884
        %v5579 = vunpack.c.l.s4 1983009808
        %v5580 = vunpack.c.0.s8 %v5579
        %v5581 = vlaneseq
        %v5582 = vshrl.u32 %v5581, 7
        %v5583 = vsub.s32 %v5580, %v5582
        %v5584 = vrot.slane %v5576, %v5583
        %v5586 = vunpack.c.l.s4 1983009808
        %v5587 = vunpack.c.0.s8 %v5586
        %v5588 = vlaneseq
        %v5589 = vshrl.u32 %v5588, 7
        %v5590 = vsub.s32 %v5587, %v5589
        %v5591 = vrot.slane %v5577, %v5590
        %v5592 = vcombine.low %v5584, %v5591
        %v5594 = vunpack.c.l.s4 1983009808
        %v5595 = vunpack.c.0.s8 %v5594
        %v5596 = vlaneseq
        %v5597 = vshrl.u32 %v5596, 7
        %v5598 = vsub.s32 %v5595, %v5597
        %v5599 = vrot.slane %v4883, %v5598
        %v5600 = vcombine.low %v4885, %v4893
        %v5601 = vcombine.low %v4901, %v4900
        %v5603 = vunpack.c.l.s4 1983009808
        %v5604 = vunpack.c.0.s8 %v5603
        %v5605 = vlaneseq
        %v5606 = vshrl.u32 %v5605, 7
        %v5607 = vsub.s32 %v5604, %v5606
        %v5608 = vrot.slane %v5600, %v5607
        %v5610 = vunpack.c.l.s4 1983009808
        %v5611 = vunpack.c.0.s8 %v5610
        %v5612 = vlaneseq
        %v5613 = vshrl.u32 %v5612, 7
        %v5614 = vsub.s32 %v5611, %v5613
        %v5615 = vrot.slane %v5601, %v5614
        %v5616 = vcombine.low %v5608, %v5615
        %v5617 = vcombine.low %v4902, %v4910
        %v5618 = vcombine.low %v4918, %v4917
        %v5620 = vunpack.c.l.s4 1983009808
        %v5621 = vunpack.c.0.s8 %v5620
        %v5622 = vlaneseq
        %v5623 = vshrl.u32 %v5622, 7
        %v5624 = vsub.s32 %v5621, %v5623
        %v5625 = vrot.slane %v5617, %v5624
        %v5627 = vunpack.c.l.s4 1983009808
        %v5628 = vunpack.c.0.s8 %v5627
        %v5629 = vlaneseq
        %v5630 = vshrl.u32 %v5629, 7
        %v5631 = vsub.s32 %v5628, %v5630
        %v5632 = vrot.slane %v5618, %v5631
        %v5633 = vcombine.low %v5625, %v5632
        %v5635 = vunpack.c.l.s4 1983009808
        %v5636 = vunpack.c.0.s8 %v5635
        %v5637 = vlaneseq
        %v5638 = vshrl.u32 %v5637, 7
        %v5639 = vsub.s32 %v5636, %v5638
        %v5640 = vrot.slane %v4919, %v5639
        %v5641 = vcombine.low %v4927, %v4935
        %v5642 = vcombine.low %v4934, %v4936
        %v5644 = vunpack.c.l.s4 1983009808
        %v5645 = vunpack.c.0.s8 %v5644
        %v5646 = vlaneseq
        %v5647 = vshrl.u32 %v5646, 7
        %v5648 = vsub.s32 %v5645, %v5647
        %v5649 = vrot.slane %v5641, %v5648
        %v5651 = vunpack.c.l.s4 1983009808
        %v5652 = vunpack.c.0.s8 %v5651
        %v5653 = vlaneseq
        %v5654 = vshrl.u32 %v5653, 7
        %v5655 = vsub.s32 %v5652, %v5654
        %v5656 = vrot.slane %v5642, %v5655
        %v5657 = vcombine.low %v5649, %v5656
        %v5658 = vcombine.low %v4944, %v4952
        %v5659 = vcombine.low %v4951, %v4953
        %v5661 = vunpack.c.l.s4 1983009808
        %v5662 = vunpack.c.0.s8 %v5661
        %v5663 = vlaneseq
        %v5664 = vshrl.u32 %v5663, 7
        %v5665 = vsub.s32 %v5662, %v5664
        %v5666 = vrot.slane %v5658, %v5665
        %v5668 = vunpack.c.l.s4 1983009808
        %v5669 = vunpack.c.0.s8 %v5668
        %v5670 = vlaneseq
        %v5671 = vshrl.u32 %v5670, 7
        %v5672 = vsub.s32 %v5669, %v5671
        %v5673 = vrot.slane %v5659, %v5672
        %v5674 = vcombine.low %v5666, %v5673
        %v5676 = vunpack.c.l.s4 1983009808
        %v5677 = vunpack.c.0.s8 %v5676
        %v5678 = vlaneseq
        %v5679 = vshrl.u32 %v5678, 7
        %v5680 = vsub.s32 %v5677, %v5679
        %v5681 = vrot.slane %v4961, %v5680
        %v5682 = vcombine.low %v4969, %v4968
        %v5683 = vcombine.low %v4970, %v4978
        %v5685 = vunpack.c.l.s4 1983009808
        %v5686 = vunpack.c.0.s8 %v5685
        %v5687 = vlaneseq
        %v5688 = vshrl.u32 %v5687, 7
        %v5689 = vsub.s32 %v5686, %v5688
        %v5690 = vrot.slane %v5682, %v5689
        %v5692 = vunpack.c.l.s4 1983009808
        %v5693 = vunpack.c.0.s8 %v5692
        %v5694 = vlaneseq
        %v5695 = vshrl.u32 %v5694, 7
        %v5696 = vsub.s32 %v5693, %v5695
        %v5697 = vrot.slane %v5683, %v5696
        %v5698 = vcombine.low %v5690, %v5697
        %v5699 = vcombine.low %v4986, %v4985
        %v5700 = vcombine.low %v4987, %v4995
        %v5702 = vunpack.c.l.s4 1983009808
        %v5703 = vunpack.c.0.s8 %v5702
        %v5704 = vlaneseq
        %v5705 = vshrl.u32 %v5704, 7
        %v5706 = vsub.s32 %v5703, %v5705
        %v5707 = vrot.slane %v5699, %v5706
        %v5709 = vunpack.c.l.s4 1983009808
        %v5710 = vunpack.c.0.s8 %v5709
        %v5711 = vlaneseq
        %v5712 = vshrl.u32 %v5711, 7
        %v5713 = vsub.s32 %v5710, %v5712
        %v5714 = vrot.slane %v5700, %v5713
        %v5715 = vcombine.low %v5707, %v5714
        %v5717 = vunpack.c.l.s4 1983009808
        %v5718 = vunpack.c.0.s8 %v5717
        %v5719 = vlaneseq
        %v5720 = vshrl.u32 %v5719, 7
        %v5721 = vsub.s32 %v5718, %v5720
        %v5722 = vrot.slane %v5003, %v5721
        %v5723 = vcombine.low %v5002, %v5004
        %v5724 = vcombine.low %v5012, %v5020
        %v5726 = vunpack.c.l.s4 1983009808
        %v5727 = vunpack.c.0.s8 %v5726
        %v5728 = vlaneseq
        %v5729 = vshrl.u32 %v5728, 7
        %v5730 = vsub.s32 %v5727, %v5729
        %v5731 = vrot.slane %v5723, %v5730
        %v5733 = vunpack.c.l.s4 1983009808
        %v5734 = vunpack.c.0.s8 %v5733
        %v5735 = vlaneseq
        %v5736 = vshrl.u32 %v5735, 7
        %v5737 = vsub.s32 %v5734, %v5736
        %v5738 = vrot.slane %v5724, %v5737
        %v5739 = vcombine.low %v5731, %v5738
        %v5740 = vcombine.low %v5019, %v5021
        %v5741 = vcombine.low %v5029, %v5037
        %v5743 = vunpack.c.l.s4 1983009808
        %v5744 = vunpack.c.0.s8 %v5743
        %v5745 = vlaneseq
        %v5746 = vshrl.u32 %v5745, 7
        %v5747 = vsub.s32 %v5744, %v5746
        %v5748 = vrot.slane %v5740, %v5747
        %v5750 = vunpack.c.l.s4 1983009808
        %v5751 = vunpack.c.0.s8 %v5750
        %v5752 = vlaneseq
        %v5753 = vshrl.u32 %v5752, 7
        %v5754 = vsub.s32 %v5751, %v5753
        %v5755 = vrot.slane %v5741, %v5754
        %v5756 = vcombine.low %v5748, %v5755
        %v5758 = vunpack.c.l.s4 1983009808
        %v5759 = vunpack.c.0.s8 %v5758
        %v5760 = vlaneseq
        %v5761 = vshrl.u32 %v5760, 7
        %v5762 = vsub.s32 %v5759, %v5761
        %v5763 = vrot.slane %v5036, %v5762
        %v5764 = vcombine.low %v5038, %v5046
        %v5765 = vcombine.low %v5054, %v5053
        %v5767 = vunpack.c.l.s4 1983009808
        %v5768 = vunpack.c.0.s8 %v5767
        %v5769 = vlaneseq
        %v5770 = vshrl.u32 %v5769, 7
        %v5771 = vsub.s32 %v5768, %v5770
        %v5772 = vrot.slane %v5764, %v5771
        %v5774 = vunpack.c.l.s4 1983009808
        %v5775 = vunpack.c.0.s8 %v5774
        %v5776 = vlaneseq
        %v5777 = vshrl.u32 %v5776, 7
        %v5778 = vsub.s32 %v5775, %v5777
        %v5779 = vrot.slane %v5765, %v5778
        %v5780 = vcombine.low %v5772, %v5779
        %v5781 = vcombine.low %v5055, %v5063
        %v5782 = vcombine.low %v5071, %v5070
        %v5784 = vunpack.c.l.s4 1983009808
        %v5785 = vunpack.c.0.s8 %v5784
        %v5786 = vlaneseq
        %v5787 = vshrl.u32 %v5786, 7
        %v5788 = vsub.s32 %v5785, %v5787
        %v5789 = vrot.slane %v5781, %v5788
        %v5791 = vunpack.c.l.s4 1983009808
        %v5792 = vunpack.c.0.s8 %v5791
        %v5793 = vlaneseq
        %v5794 = vshrl.u32 %v5793, 7
        %v5795 = vsub.s32 %v5792, %v5794
        %v5796 = vrot.slane %v5782, %v5795
        %v5797 = vcombine.low %v5789, %v5796
        %v5799 = vunpack.c.l.s4 1983009808
        %v5800 = vunpack.c.0.s8 %v5799
        %v5801 = vlaneseq
        %v5802 = vshrl.u32 %v5801, 7
        %v5803 = vsub.s32 %v5800, %v5802
        %v5804 = vrot.slane %v5072, %v5803
        %v5805 = vcombine.low %v5080, %v5088
        %v5806 = vcombine.low %v5087, %v5089
        %v5808 = vunpack.c.l.s4 1983009808
        %v5809 = vunpack.c.0.s8 %v5808
        %v5810 = vlaneseq
        %v5811 = vshrl.u32 %v5810, 7
        %v5812 = vsub.s32 %v5809, %v5811
        %v5813 = vrot.slane %v5805, %v5812
        %v5815 = vunpack.c.l.s4 1983009808
        %v5816 = vunpack.c.0.s8 %v5815
        %v5817 = vlaneseq
        %v5818 = vshrl.u32 %v5817, 7
        %v5819 = vsub.s32 %v5816, %v5818
        %v5820 = vrot.slane %v5806, %v5819
        %v5821 = vcombine.low %v5813, %v5820
        %v5822 = vcombine.low %v5097, %v5105
        %v5823 = vcombine.low %v5104, %v5106
        %v5825 = vunpack.c.l.s4 1983009808
        %v5826 = vunpack.c.0.s8 %v5825
        %v5827 = vlaneseq
        %v5828 = vshrl.u32 %v5827, 7
        %v5829 = vsub.s32 %v5826, %v5828
        %v5830 = vrot.slane %v5822, %v5829
        %v5832 = vunpack.c.l.s4 1983009808
        %v5833 = vunpack.c.0.s8 %v5832
        %v5834 = vlaneseq
        %v5835 = vshrl.u32 %v5834, 7
        %v5836 = vsub.s32 %v5833, %v5835
        %v5837 = vrot.slane %v5823, %v5836
        %v5838 = vcombine.low %v5830, %v5837
        %v5840 = vunpack.c.l.s4 1983009808
        %v5841 = vunpack.c.0.s8 %v5840
        %v5842 = vlaneseq
        %v5843 = vshrl.u32 %v5842, 7
        %v5844 = vsub.s32 %v5841, %v5843
        %v5845 = vrot.slane %v5114, %v5844
        %v5846 = vcombine.low %v5122, %v5121
        %v5847 = vcombine.low %v5123, %v5131
        %v5849 = vunpack.c.l.s4 1983009808
        %v5850 = vunpack.c.0.s8 %v5849
        %v5851 = vlaneseq
        %v5852 = vshrl.u32 %v5851, 7
        %v5853 = vsub.s32 %v5850, %v5852
        %v5854 = vrot.slane %v5846, %v5853
        %v5856 = vunpack.c.l.s4 1983009808
        %v5857 = vunpack.c.0.s8 %v5856
        %v5858 = vlaneseq
        %v5859 = vshrl.u32 %v5858, 7
        %v5860 = vsub.s32 %v5857, %v5859
        %v5861 = vrot.slane %v5847, %v5860
        %v5862 = vcombine.low %v5854, %v5861
        %v5863 = vcombine.low %v5139, %v5138
        %v5864 = vcombine.low %v5140, %v5147
        %v5866 = vunpack.c.l.s4 1983009808
        %v5867 = vunpack.c.0.s8 %v5866
        %v5868 = vlaneseq
        %v5869 = vshrl.u32 %v5868, 7
        %v5870 = vsub.s32 %v5867, %v5869
        %v5871 = vrot.slane %v5863, %v5870
        %v5873 = vunpack.c.l.s4 1983009808
        %v5874 = vunpack.c.0.s8 %v5873
        %v5875 = vlaneseq
        %v5876 = vshrl.u32 %v5875, 7
        %v5877 = vsub.s32 %v5874, %v5876
        %v5878 = vrot.slane %v5864, %v5877
        %v5879 = vcombine.low %v5871, %v5878
        %v5881 = vunpack.c.l.s4 1983009808
        %v5882 = vunpack.c.0.s8 %v5881
        %v5883 = vlaneseq
        %v5884 = vshrl.u32 %v5883, 7
        %v5885 = vsub.s32 %v5882, %v5884
        %v5886 = vrot.slane %v5148, %v5885
        %5941 = vst [vmem:[%s342] sm:$0xff] %v5165
        %5942 = vst [vmem:[%s342 + $0x8] sm:$0xff] %v5182
        %5943 = vst [vmem:[%s342 + $0x10] sm:$0x3] %v5189
        %5944 = vst [vmem:[%s342 + $0x18] sm:$0xff] %v5206
        %5945 = vst [vmem:[%s342 + $0x20] sm:$0xff] %v5223
        %5946 = vst [vmem:[%s342 + $0x28] sm:$0x3] %v5230
        %5947 = vst [vmem:[%s342 + $0x30] sm:$0xff] %v5247
        %5948 = vst [vmem:[%s342 + $0x38] sm:$0xff] %v5264
        %5949 = vst [vmem:[%s342 + $0x40] sm:$0x3] %v5271
        %5950 = vst [vmem:[%s342 + $0x48] sm:$0xff] %v5288
        %5951 = vst [vmem:[%s342 + $0x50] sm:$0xff] %v5305
        %5952 = vst [vmem:[%s342 + $0x58] sm:$0x3] %v5312
        %5953 = vst [vmem:[%s342 + $0x60] sm:$0xff] %v5329
        %5954 = vst [vmem:[%s342 + $0x68] sm:$0xff] %v5346
        %5955 = vst [vmem:[%s342 + $0x70] sm:$0x3] %v5353
        %5956 = vst [vmem:[%s342 + $0x78] sm:$0xff] %v5370
        %5957 = vst [vmem:[%s342 + $0x80] sm:$0xff] %v5387
        %5958 = vst [vmem:[%s342 + $0x88] sm:$0x3] %v5394
        %5959 = vst [vmem:[%s342 + $0x90] sm:$0xff] %v5411
        %5960 = vst [vmem:[%s342 + $0x98] sm:$0xff] %v5428
        %5961 = vst [vmem:[%s342 + $0xa0] sm:$0x3] %v5435
        %5962 = vst [vmem:[%s342 + $0xa8] sm:$0xff] %v5452
        %5963 = vst [vmem:[%s342 + $0xb0] sm:$0xff] %v5469
        %5964 = vst [vmem:[%s342 + $0xb8] sm:$0x3] %v5476
        %5965 = vst [vmem:[%s342 + $0xc0] sm:$0xff] %v5493
        %5966 = vst [vmem:[%s342 + $0xc8] sm:$0xff] %v5510
        %5967 = vst [vmem:[%s342 + $0xd0] sm:$0x3] %v5517
        %5968 = vst [vmem:[%s342 + $0xd8] sm:$0xff] %v5534
        %5969 = vst [vmem:[%s342 + $0xe0] sm:$0xff] %v5551
        %5970 = vst [vmem:[%s342 + $0xe8] sm:$0x3] %v5558
        %5971 = vst [vmem:[%s342 + $0xf0] sm:$0xff] %v5575
        %5972 = vst [vmem:[%s342 + $0xf8] sm:$0xff] %v5592
        %5973 = vst [vmem:[%s342 + $0x100] sm:$0x3] %v5599
        %5974 = vst [vmem:[%s342 + $0x108] sm:$0xff] %v5616
        %5975 = vst [vmem:[%s342 + $0x110] sm:$0xff] %v5633
        %5976 = vst [vmem:[%s342 + $0x118] sm:$0x3] %v5640
        %5977 = vst [vmem:[%s342 + $0x120] sm:$0xff] %v5657
        %5978 = vst [vmem:[%s342 + $0x128] sm:$0xff] %v5674
        %5979 = vst [vmem:[%s342 + $0x130] sm:$0x3] %v5681
        %5980 = vst [vmem:[%s342 + $0x138] sm:$0xff] %v5698
        %5981 = vst [vmem:[%s342 + $0x140] sm:$0xff] %v5715
        %5982 = vst [vmem:[%s342 + $0x148] sm:$0x3] %v5722
        %5983 = vst [vmem:[%s342 + $0x150] sm:$0xff] %v5739
        %5984 = vst [vmem:[%s342 + $0x158] sm:$0xff] %v5756
        %5985 = vst [vmem:[%s342 + $0x160] sm:$0x3] %v5763
        %5986 = vst [vmem:[%s342 + $0x168] sm:$0xff] %v5780
        %5987 = vst [vmem:[%s342 + $0x170] sm:$0xff] %v5797
        %5988 = vst [vmem:[%s342 + $0x178] sm:$0x3] %v5804
        %5989 = vst [vmem:[%s342 + $0x180] sm:$0xff] %v5821
        %5990 = vst [vmem:[%s342 + $0x188] sm:$0xff] %v5838
        %5991 = vst [vmem:[%s342 + $0x190] sm:$0x3] %v5845
        %5992 = vst [vmem:[%s342 + $0x198] sm:$0xff] %v5862
        %5993 = vst [vmem:[%s342 + $0x1a0] sm:$0xff] %v5879
        %5994 = vst [vmem:[%s342 + $0x1a8] sm:$0x3] %v5886
      $region60: #{repconv_forward.3} parent=47 // pred_fallthru
        _
      %s5995 = smul.u32 %s22, %s23
      %p5996 = scmp.lt.s32.totalorder %s5995, 1
      %s5997 = scalar_select %p5996, %s5995, 1
      %s5998 = smul.addr %s5997, 54
      %s5999 = smul.addr %s5998, 8
      %s6000 = scalar_lea.vmem %s7, %s5999
      // Predicated region
      $region61: #{repconv_forward.3} parent=47 // pred_check
        %p6001 = pneg %p215
      $region62: #{repconv_forward.3} parent=47 // pred_check_branch
        %6003 = sbr.rel (%p6001) target = $region64
      $region63: #{repconv_forward.3} parent=47 // pred_region
        %s6004 = smul.u32 %s22, %s23
      $region64: #{repconv_forward.3} parent=47 // pred_fallthru
        _
    $region48: #{repconv_forward.3} parent=5 // pred_fallthru
      _
    %p6005 = scmp.le.s32.totalorder 2, %s13
    // Predicated region
    $region65: #{repconv_forward.3} parent=5 // pred_check
      %p6006 = pneg %p6005
    $region66: #{repconv_forward.3} parent=5 // pred_check_branch
      %6008 = sbr.rel (%p6006) target = $region68
    $region67: #{repconv_forward.3} parent=5 // pred_region
      %s6009 = ssub.s32 %s13, 2
      // Predicated region
      $region69: #{repconv_forward.3} parent=67 // pred_check
        %p6010 = pneg %p221
      $region70: #{repconv_forward.3} parent=67 // pred_check_branch
        %6012 = sbr.rel (%p6010) target = $region72
      $region71: #{repconv_forward.3} parent=67 // pred_region
        %s6013 = smul.u32 %s24, %s25
        %p6014 = scmp.lt.s32.totalorder %s6013, 1
        %s6015 = scalar_select %p6014, %s6013, 1
        %s6016 = smul.addr %s6015, 54
        %s6017 = smul.addr %s6016, 8
        %s6018 = scalar_lea.vmem %s7, %s6017
      $region72: #{repconv_forward.3} parent=67 // pred_fallthru
        _
    $region68: #{repconv_forward.3} parent=5 // pred_fallthru
      _
  $region6: #{repconv_forward.3} parent=0 // loop_footer
    %s17 = sadd.s32 1, %s13
  $region7: #{repconv_forward.3} parent=0 // loop_footer_branch
    %12 = sbr.rel target = $region3
  $region8: #{repconv_forward.3} parent=0 // loop_exit
    _

// kernel: repconv_forward.2
$region0: #{repconv_forward.2}
  #allocation0 [shape = 'u32[]', space=smem, size = 0x4, offset = 0x4, fixed_abs, tag = 'smem constant byte address 0x4 - core index']
  #allocation1 [shape = 'u32[144,128]{1,0:T(1,128)}', space=vmem, size = 0x12000, scoped, tag = 'internal scratch']
  #allocation2 [shape = 'f32[2,256,128]{2,1,0:T(8,128)}', space=vmem, size = 0x40000, scoped, tag = 'scratch operand']
  #allocation3 [shape = 'f32[1,128]{1,0:T(1,128)}', space=vmem, size = 0x200, scoped, tag = 'scratch operand']
  #allocation4 [shape = 'f32[1,128]{1,0:T(1,128)}', space=vmem, size = 0x200, scoped, tag = 'scratch operand']
  %s0 = inlined_call_operand.vmem [shape: f32[2,18,18,128], index: 0, kind: input, shape index: {}]
  %s1 = inlined_call_operand.vmem [shape: f32[1152,128], index: 1, kind: input, shape index: {}]
  %s2 = inlined_call_operand.vmem [shape: f32[1,128], index: 2, kind: input, shape index: {}]
  %s3 = inlined_call_operand.vmem [shape: f32[1,128], index: 3, kind: input, shape index: {}]
  %s4 = inlined_call_operand.vmem [shape: f32[1,128], index: 4, kind: input, shape index: {}]
  %s5 = inlined_call_operand.vmem [shape: f32[324,256], index: 5, kind: input, shape index: {}]
  %s6 = inlined_call_operand.vmem [shape: f32[2,18,18,128], index: 6, kind: output, shape index: {}]
  %s7 = sld [smem:[#allocation0]]
  $region69: #{repconv_forward.2} parent=0
    _
  %s9 = ssub.s32 1, %s7
  %s10 = scalar_select 0, %s9, %s7
  loop: start=0, step=1, limit=6
  $region2: #{repconv_forward.2} parent=0 // loop_pre_header
    _
  $region3: #{repconv_forward.2} parent=0 // loop_header
    %s12 = sphi 0, %s16
    %p13 = scmp.ge.s32.totalorder %s12, 6
    %s19 = sphi 0, %s31
    %s20 = sphi 0, %s27
    %s21 = sphi 0, %s19
    %s22 = sphi 0, %s20
    %s23 = sphi 0, %s21
    %s24 = sphi 0, %s22
    %s40 = sphi 0, %s42
    %s43 = sphi 0, %s40
    %s44 = sphi 0, %s43
    %s60 = sphi 0, %s44
    %s64 = sphi 0, %s64
    %s66 = sphi 0, %s64
    %s67 = sphi 0, %s66
    %s81 = sphi 0, %s67
    %s85 = sphi 0, %s85
    %s87 = sphi 0, %s85
    %s88 = sphi 0, %s87
    %s102 = sphi 0, %s88
    %s106 = sphi 0, %s106
    %s108 = sphi 0, %s106
    %s109 = sphi 0, %s108
    %s123 = sphi 0, %s109
    %s127 = sphi 0, %s127
    %s129 = sphi 0, %s127
    %s130 = sphi 0, %s129
    %s144 = sphi 0, %s130
    %s148 = sphi 0, %s148
    %s150 = sphi 0, %s148
    %s151 = sphi 0, %s150
    %s165 = sphi 0, %s151
    %s173 = sphi 0, %s175
    %s176 = sphi 0, %s173
    %s177 = sphi 0, %s176
    %s193 = sphi 0, %s177
  $region4: #{repconv_forward.2} parent=0 // loop_header_branch
    %15 = sbr.rel (%p13) target = $region8
  $region5: #{repconv_forward.2} parent=0 // loop_body
    %s17 = ssub.s32 %s12, 1
    %s18 = ssub.s32 %s12, 2
    %s25 = sadd.s32 1, %s20
    %p26 = scmp.ge.s32.totalorder %s25, 2
    %s27 = scalar_select %p26, 0, %s25
    %s28 = sadd.s32 1, %s19
    %s29 = scalar_select %p26, %s28, %s19
    %p30 = scmp.ge.s32.totalorder %s29, 2
    %s31 = scalar_select %p30, 0, %s29
    %s32 = ssub.s32 1, %s19
    %s33 = smul.u32 %s32, %s20
    %s34 = sadd.s32 %s33, %s19
    %s35 = ssub.s32 1, %s31
    %s36 = smul.u32 %s35, %s27
    %s37 = sadd.s32 %s36, %s31
    %s38 = ssub.s32 %s34, %s37
    %p39 = scmp.eq.s32.totalorder %s38, 0
    %s41 = sadd.s32 %s40, 1
    %s42 = scalar_select %p39, %s40, %s41
    %p45 = pneg %p39
    %p46 = scmp.eq.s32.totalorder %s12, 3
    %p47 = por %p45, %p46
    %p48 = scmp.ne.s32.totalorder %s40, %s43
    %p49 = scmp.eq.s32.totalorder %s12, 0
    %p50 = por %p48, %p49
    %p51 = scmp.ne.s32.totalorder %s40, %s43
    %p52 = scmp.eq.s32.totalorder %s17, 3
    %p53 = por %p51, %p52
    %p54 = scmp.ne.s32.totalorder %s43, %s44
    %p55 = scmp.eq.s32.totalorder %s17, 0
    %p56 = por %p54, %p55
    %p57 = scmp.ne.s32.totalorder %s43, %s44
    %p58 = scmp.eq.s32.totalorder %s18, 3
    %p59 = por %p57, %p58
    %p61 = scmp.ne.s32.totalorder %s44, %s60
    %p62 = scmp.eq.s32.totalorder %s18, 0
    %p63 = por %p61, %p62
    %s65 = sadd.s32 %s64, 1
    %p68 = scmp.eq.s32.totalorder %s12, 3
    %p69 = scmp.ne.s32.totalorder %s64, %s66
    %p70 = scmp.eq.s32.totalorder %s12, 0
    %p71 = por %p69, %p70
    %p72 = scmp.ne.s32.totalorder %s64, %s66
    %p73 = scmp.eq.s32.totalorder %s17, 3
    %p74 = por %p72, %p73
    %p75 = scmp.ne.s32.totalorder %s66, %s67
    %p76 = scmp.eq.s32.totalorder %s17, 0
    %p77 = por %p75, %p76
    %p78 = scmp.ne.s32.totalorder %s66, %s67
    %p79 = scmp.eq.s32.totalorder %s18, 3
    %p80 = por %p78, %p79
    %p82 = scmp.ne.s32.totalorder %s67, %s81
    %p83 = scmp.eq.s32.totalorder %s18, 0
    %p84 = por %p82, %p83
    %s86 = sadd.s32 %s85, 1
    %p89 = scmp.eq.s32.totalorder %s12, 3
    %p90 = scmp.ne.s32.totalorder %s85, %s87
    %p91 = scmp.eq.s32.totalorder %s12, 0
    %p92 = por %p90, %p91
    %p93 = scmp.ne.s32.totalorder %s85, %s87
    %p94 = scmp.eq.s32.totalorder %s17, 3
    %p95 = por %p93, %p94
    %p96 = scmp.ne.s32.totalorder %s87, %s88
    %p97 = scmp.eq.s32.totalorder %s17, 0
    %p98 = por %p96, %p97
    %p99 = scmp.ne.s32.totalorder %s87, %s88
    %p100 = scmp.eq.s32.totalorder %s18, 3
    %p101 = por %p99, %p100
    %p103 = scmp.ne.s32.totalorder %s88, %s102
    %p104 = scmp.eq.s32.totalorder %s18, 0
    %p105 = por %p103, %p104
    %s107 = sadd.s32 %s106, 1
    %p110 = scmp.eq.s32.totalorder %s12, 3
    %p111 = scmp.ne.s32.totalorder %s106, %s108
    %p112 = scmp.eq.s32.totalorder %s12, 0
    %p113 = por %p111, %p112
    %p114 = scmp.ne.s32.totalorder %s106, %s108
    %p115 = scmp.eq.s32.totalorder %s17, 3
    %p116 = por %p114, %p115
    %p117 = scmp.ne.s32.totalorder %s108, %s109
    %p118 = scmp.eq.s32.totalorder %s17, 0
    %p119 = por %p117, %p118
    %p120 = scmp.ne.s32.totalorder %s108, %s109
    %p121 = scmp.eq.s32.totalorder %s18, 3
    %p122 = por %p120, %p121
    %p124 = scmp.ne.s32.totalorder %s109, %s123
    %p125 = scmp.eq.s32.totalorder %s18, 0
    %p126 = por %p124, %p125
    %s128 = sadd.s32 %s127, 1
    %p131 = scmp.eq.s32.totalorder %s12, 3
    %p132 = scmp.ne.s32.totalorder %s127, %s129
    %p133 = scmp.eq.s32.totalorder %s12, 0
    %p134 = por %p132, %p133
    %p135 = scmp.ne.s32.totalorder %s127, %s129
    %p136 = scmp.eq.s32.totalorder %s17, 3
    %p137 = por %p135, %p136
    %p138 = scmp.ne.s32.totalorder %s129, %s130
    %p139 = scmp.eq.s32.totalorder %s17, 0
    %p140 = por %p138, %p139
    %p141 = scmp.ne.s32.totalorder %s129, %s130
    %p142 = scmp.eq.s32.totalorder %s18, 3
    %p143 = por %p141, %p142
    %p145 = scmp.ne.s32.totalorder %s130, %s144
    %p146 = scmp.eq.s32.totalorder %s18, 0
    %p147 = por %p145, %p146
    %s149 = sadd.s32 %s148, 1
    %p152 = scmp.eq.s32.totalorder %s12, 3
    %p153 = scmp.ne.s32.totalorder %s148, %s150
    %p154 = scmp.eq.s32.totalorder %s12, 0
    %p155 = por %p153, %p154
    %p156 = scmp.ne.s32.totalorder %s148, %s150
    %p157 = scmp.eq.s32.totalorder %s17, 3
    %p158 = por %p156, %p157
    %p159 = scmp.ne.s32.totalorder %s150, %s151
    %p160 = scmp.eq.s32.totalorder %s17, 0
    %p161 = por %p159, %p160
    %p162 = scmp.ne.s32.totalorder %s150, %s151
    %p163 = scmp.eq.s32.totalorder %s18, 3
    %p164 = por %p162, %p163
    %p166 = scmp.ne.s32.totalorder %s151, %s165
    %p167 = scmp.eq.s32.totalorder %s18, 0
    %p168 = por %p166, %p167
    %s169 = smul.u32 %s19, %s20
    %s170 = smul.u32 %s31, %s27
    %s171 = ssub.s32 %s169, %s170
    %p172 = scmp.eq.s32.totalorder %s171, 0
    %s174 = sadd.s32 %s173, 1
    %s175 = scalar_select %p172, %s173, %s174
    %p178 = pneg %p172
    %p179 = scmp.eq.s32.totalorder %s12, 3
    %p180 = por %p178, %p179
    %p181 = scmp.ne.s32.totalorder %s173, %s176
    %p182 = scmp.eq.s32.totalorder %s12, 0
    %p183 = por %p181, %p182
    %p184 = scmp.ne.s32.totalorder %s173, %s176
    %p185 = scmp.eq.s32.totalorder %s17, 3
    %p186 = por %p184, %p185
    %p187 = scmp.ne.s32.totalorder %s176, %s177
    %p188 = scmp.eq.s32.totalorder %s17, 0
    %p189 = por %p187, %p188
    %p190 = scmp.ne.s32.totalorder %s176, %s177
    %p191 = scmp.eq.s32.totalorder %s18, 3
    %p192 = por %p190, %p191
    %p194 = scmp.ne.s32.totalorder %s177, %s193
    %p195 = scmp.eq.s32.totalorder %s18, 0
    %p196 = por %p194, %p195
    %p197 = scmp.le.s32.totalorder 1, %s12
    %p198 = scmp.lt.s32.totalorder %s12, 5
    %p199 = pnand %p197, %p198
    %p200 = pneg %p199
    // Predicated region
    $region9: #{repconv_forward.2} parent=5 // pred_check
      _
    $region10: #{repconv_forward.2} parent=5 // pred_check_branch
      %202 = sbr.rel (%p199) target = $region12
    $region11: #{repconv_forward.2} parent=5 // pred_region
      %s203 = ssub.s32 %s12, 1
      // Predicated region
      $region13: #{repconv_forward.2} parent=11 // pred_check
        %p204 = pneg %p77
      $region14: #{repconv_forward.2} parent=11 // pred_check_branch
        %206 = sbr.rel (%p204) target = $region16
      $region15: #{repconv_forward.2} parent=11 // pred_region
        _
      $region16: #{repconv_forward.2} parent=11 // pred_fallthru
        _
      // Predicated region
      $region17: #{repconv_forward.2} parent=11 // pred_check
        %p207 = pneg %p98
      $region18: #{repconv_forward.2} parent=11 // pred_check_branch
        %209 = sbr.rel (%p207) target = $region20
      $region19: #{repconv_forward.2} parent=11 // pred_region
        _
      $region20: #{repconv_forward.2} parent=11 // pred_fallthru
        _
      // Predicated region
      $region21: #{repconv_forward.2} parent=11 // pred_check
        %p210 = pneg %p119
      $region22: #{repconv_forward.2} parent=11 // pred_check_branch
        %212 = sbr.rel (%p210) target = $region24
      $region23: #{repconv_forward.2} parent=11 // pred_region
        _
      $region24: #{repconv_forward.2} parent=11 // pred_fallthru
        _
      // Predicated region
      $region25: #{repconv_forward.2} parent=11 // pred_check
        %p213 = pneg %p140
      $region26: #{repconv_forward.2} parent=11 // pred_check_branch
        %215 = sbr.rel (%p213) target = $region28
      $region27: #{repconv_forward.2} parent=11 // pred_region
        _
      $region28: #{repconv_forward.2} parent=11 // pred_fallthru
        _
      // Predicated region
      $region29: #{repconv_forward.2} parent=11 // pred_check
        %p216 = pneg %p161
      $region30: #{repconv_forward.2} parent=11 // pred_check_branch
        %218 = sbr.rel (%p216) target = $region32
      $region31: #{repconv_forward.2} parent=11 // pred_region
        _
      $region32: #{repconv_forward.2} parent=11 // pred_fallthru
        _
    $region12: #{repconv_forward.2} parent=5 // pred_fallthru
      _
    %p219 = scmp.lt.s32.totalorder %s12, 4
    // Predicated region
    $region33: #{repconv_forward.2} parent=5 // pred_check
      %p220 = pneg %p219
    $region34: #{repconv_forward.2} parent=5 // pred_check_branch
      %222 = sbr.rel (%p220) target = $region36
    $region35: #{repconv_forward.2} parent=5 // pred_region
      // Predicated region
      $region37: #{repconv_forward.2} parent=35 // pred_check
        %p223 = pneg %p50
      $region38: #{repconv_forward.2} parent=35 // pred_check_branch
        %225 = sbr.rel (%p223) target = $region40
      $region39: #{repconv_forward.2} parent=35 // pred_region
        %s226 = ssub.s32 1, %s19
        %s227 = smul.u32 %s226, %s20
        %s228 = sadd.s32 %s227, %s19
        %p229 = scmp.lt.s32.totalorder %s228, 1
        %s230 = scalar_select %p229, %s228, 1
        %s231 = smul.addr %s230, 54
        %s232 = smul.addr %s231, 8
        %s233 = scalar_lea.vmem %s0, %s232
        %s234 = ssub.s32 1, %s19
        %s235 = smul.u32 %s234, %s20
        %s236 = sadd.s32 %s235, %s19
      $region40: #{repconv_forward.2} parent=35 // pred_fallthru
        _
    $region36: #{repconv_forward.2} parent=5 // pred_fallthru
      _
    %p237 = scmp.le.s32.totalorder 1, %s12
    %p238 = scmp.lt.s32.totalorder %s12, 5
    %p239 = pnand %p237, %p238
    %p240 = pneg %p239
    // Predicated region
    $region41: #{repconv_forward.2} parent=5 // pred_check
      _
    $region42: #{repconv_forward.2} parent=5 // pred_check_branch
      %242 = sbr.rel (%p239) target = $region44
    $region43: #{repconv_forward.2} parent=5 // pred_region
      %s243 = ssub.s32 %s12, 1
      %s244 = ssub.s32 1, %s21
      %s245 = smul.u32 %s244, %s22
      %s246 = sadd.s32 %s245, %s21
      %p247 = scmp.lt.s32.totalorder %s246, 1
      %s248 = scalar_select %p247, %s246, 1
      %s249 = smul.addr %s248, 54
      %s250 = smul.addr %s249, 8
      %s251 = scalar_lea.vmem %s0, %s250
      %p252 = pneg %p56
      %p253 = pneg %p53
      %p254 = pneg %p77
      %p255 = pneg %p74
      %p256 = pneg %p98
      %p257 = pneg %p95
      %p258 = pneg %p119
      %p259 = pneg %p116
      %p260 = pneg %p140
      %p261 = pneg %p137
      %p262 = pneg %p161
      %p263 = pneg %p158
      %p264 = pneg %p189
      %p265 = pneg %p186
      %s266 = smul.u32 %s21, %s22
      %p267 = scmp.lt.s32.totalorder %s266, 1
      %s268 = scalar_select %p267, %s266, 1
      %s269 = smul.addr %s268, 54
      %s270 = smul.addr %s269, 8
      %s271 = scalar_lea.vmem %s6, %s270
      %s272 = ssub.s32 1, %s21
      %s273 = smul.u32 %s272, %s22
      %s274 = sadd.s32 %s273, %s21
      %p275 = scmp.lt.s32.totalorder %s274, 1
      %s276 = scalar_select %p275, %s274, 1
      %s277 = smul.addr %s276, 54
      %s278 = smul.addr %s277, 8
      %s279 = scalar_lea.vmem %s0, %s278
      %s280 = ssub.s32 1, %s21
      %s281 = smul.u32 %s280, %s22
      %s282 = sadd.s32 %s281, %s21
      %s283 = smul.u32 %s21, %s22
      %p284 = scmp.lt.s32.totalorder %s283, 1
      %s285 = scalar_select %p284, %s283, 1
      %s286 = smul.addr %s285, 54
      %s287 = smul.addr %s286, 8
      %s288 = scalar_lea.vmem %s6, %s287
      %s289 = smul.u32 %s21, %s22
      %p290 = scmp.eq.s32.totalorder %s21, 0
      // Predicated region
      $region45: #{repconv_forward.2} parent=43 // pred_check
        %p291 = pneg %p290
      $region46: #{repconv_forward.2} parent=43 // pred_check_branch
        %293 = sbr.rel (%p291) target = $region48
      $region47: #{repconv_forward.2} parent=43 // pred_region
        %p294 = scmp.eq.s32.totalorder %s22, 0
        // Predicated region
        $region49: #{repconv_forward.2} parent=47 // pred_check
          %p295 = pneg %p294
        $region50: #{repconv_forward.2} parent=47 // pred_check_branch
          %297 = sbr.rel (%p295) target = $region52
        $region51: #{repconv_forward.2} parent=47 // pred_region
          %298 = vst [vmem:[#allocation3] sm:$0x1] 0.0
          %299 = vst [vmem:[#allocation4] sm:$0x1] 0.0
        $region52: #{repconv_forward.2} parent=47 // pred_fallthru
          _
        %v300 = vld [vmem:[%s279] sm:$0xff]
        %v301 = vld [vmem:[%s279 + $0x8] sm:$0xff]
        %v302 = vld [vmem:[%s279 + $0x10] sm:$0x3]
        %v303 = vld [vmem:[%s279 + $0x18] sm:$0xff]
        %v304 = vld [vmem:[%s279 + $0x20] sm:$0xff]
        %v305 = vld [vmem:[%s279 + $0x28] sm:$0x3]
        %v306 = vld [vmem:[%s279 + $0x30] sm:$0xff]
        %v307 = vld [vmem:[%s279 + $0x38] sm:$0xff]
        %v308 = vld [vmem:[%s279 + $0x40] sm:$0x3]
        %v309 = vld [vmem:[%s279 + $0x48] sm:$0xff]
        %v310 = vld [vmem:[%s279 + $0x50] sm:$0xff]
        %v311 = vld [vmem:[%s279 + $0x58] sm:$0x3]
        %v312 = vld [vmem:[%s279 + $0x60] sm:$0xff]
        %v313 = vld [vmem:[%s279 + $0x68] sm:$0xff]
        %v314 = vld [vmem:[%s279 + $0x70] sm:$0x3]
        %v315 = vld [vmem:[%s279 + $0x78] sm:$0xff]
        %v316 = vld [vmem:[%s279 + $0x80] sm:$0xff]
        %v317 = vld [vmem:[%s279 + $0x88] sm:$0x3]
        %v318 = vld [vmem:[%s279 + $0x90] sm:$0xff]
        %v319 = vld [vmem:[%s279 + $0x98] sm:$0xff]
        %v320 = vld [vmem:[%s279 + $0xa0] sm:$0x3]
        %v321 = vld [vmem:[%s279 + $0xa8] sm:$0xff]
        %v322 = vld [vmem:[%s279 + $0xb0] sm:$0xff]
        %v323 = vld [vmem:[%s279 + $0xb8] sm:$0x3]
        %v324 = vld [vmem:[%s279 + $0xc0] sm:$0xff]
        %v325 = vld [vmem:[%s279 + $0xc8] sm:$0xff]
        %v326 = vld [vmem:[%s279 + $0xd0] sm:$0x3]
        %v327 = vld [vmem:[%s279 + $0xd8] sm:$0xff]
        %v328 = vld [vmem:[%s279 + $0xe0] sm:$0xff]
        %v329 = vld [vmem:[%s279 + $0xe8] sm:$0x3]
        %v330 = vld [vmem:[%s279 + $0xf0] sm:$0xff]
        %v331 = vld [vmem:[%s279 + $0xf8] sm:$0xff]
        %v332 = vld [vmem:[%s279 + $0x100] sm:$0x3]
        %v333 = vld [vmem:[%s279 + $0x108] sm:$0xff]
        %v334 = vld [vmem:[%s279 + $0x110] sm:$0xff]
        %v335 = vld [vmem:[%s279 + $0x118] sm:$0x3]
        %v336 = vld [vmem:[%s279 + $0x120] sm:$0xff]
        %v337 = vld [vmem:[%s279 + $0x128] sm:$0xff]
        %v338 = vld [vmem:[%s279 + $0x130] sm:$0x3]
        %v339 = vld [vmem:[%s279 + $0x138] sm:$0xff]
        %v340 = vld [vmem:[%s279 + $0x140] sm:$0xff]
        %v341 = vld [vmem:[%s279 + $0x148] sm:$0x3]
        %v342 = vld [vmem:[%s279 + $0x150] sm:$0xff]
        %v343 = vld [vmem:[%s279 + $0x158] sm:$0xff]
        %v344 = vld [vmem:[%s279 + $0x160] sm:$0x3]
        %v345 = vld [vmem:[%s279 + $0x168] sm:$0xff]
        %v346 = vld [vmem:[%s279 + $0x170] sm:$0xff]
        %v347 = vld [vmem:[%s279 + $0x178] sm:$0x3]
        %v348 = vld [vmem:[%s279 + $0x180] sm:$0xff]
        %v349 = vld [vmem:[%s279 + $0x188] sm:$0xff]
        %v350 = vld [vmem:[%s279 + $0x190] sm:$0x3]
        %v351 = vld [vmem:[%s279 + $0x198] sm:$0xff]
        %v352 = vld [vmem:[%s279 + $0x1a0] sm:$0xff]
        %v353 = vld [vmem:[%s279 + $0x1a8] sm:$0x3]
        %vm402 = vcmask 1046528
        %v403 = vrot.slane %v300, 1
        %v404 = vrot.slane %v301, 1
        %v405 = vsel %vm402, %v403, %v404
        %v406 = vrot.slane %v302, 1
        %v407 = vsel %vm402, %v404, %v406
        %v408 = vrot.slane %v303, 1
        %v409 = vrot.slane %v304, 1
        %v410 = vsel %vm402, %v408, %v409
        %v411 = vrot.slane %v305, 1
        %v412 = vsel %vm402, %v409, %v411
        %v413 = vrot.slane %v306, 1
        %v414 = vrot.slane %v307, 1
        %v415 = vsel %vm402, %v413, %v414
        %v416 = vrot.slane %v308, 1
        %v417 = vsel %vm402, %v414, %v416
        %v418 = vrot.slane %v309, 1
        %v419 = vrot.slane %v310, 1
        %v420 = vsel %vm402, %v418, %v419
        %v421 = vrot.slane %v311, 1
        %v422 = vsel %vm402, %v419, %v421
        %v423 = vrot.slane %v312, 1
        %v424 = vrot.slane %v313, 1
        %v425 = vsel %vm402, %v423, %v424
        %v426 = vrot.slane %v314, 1
        %v427 = vsel %vm402, %v424, %v426
        %v428 = vrot.slane %v315, 1
        %v429 = vrot.slane %v316, 1
        %v430 = vsel %vm402, %v428, %v429
        %v431 = vrot.slane %v317, 1
        %v432 = vsel %vm402, %v429, %v431
        %v433 = vrot.slane %v318, 1
        %v434 = vrot.slane %v319, 1
        %v435 = vsel %vm402, %v433, %v434
        %v436 = vrot.slane %v320, 1
        %v437 = vsel %vm402, %v434, %v436
        %v438 = vrot.slane %v321, 1
        %v439 = vrot.slane %v322, 1
        %v440 = vsel %vm402, %v438, %v439
        %v441 = vrot.slane %v323, 1
        %v442 = vsel %vm402, %v439, %v441
        %v443 = vrot.slane %v324, 1
        %v444 = vrot.slane %v325, 1
        %v445 = vsel %vm402, %v443, %v444
        %v446 = vrot.slane %v326, 1
        %v447 = vsel %vm402, %v444, %v446
        %v448 = vrot.slane %v327, 1
        %v449 = vrot.slane %v328, 1
        %v450 = vsel %vm402, %v448, %v449
        %v451 = vrot.slane %v329, 1
        %v452 = vsel %vm402, %v449, %v451
        %v453 = vrot.slane %v330, 1
        %v454 = vrot.slane %v331, 1
        %v455 = vsel %vm402, %v453, %v454
        %v456 = vrot.slane %v332, 1
        %v457 = vsel %vm402, %v454, %v456
        %v458 = vrot.slane %v333, 1
        %v459 = vrot.slane %v334, 1
        %v460 = vsel %vm402, %v458, %v459
        %v461 = vrot.slane %v335, 1
        %v462 = vsel %vm402, %v459, %v461
        %v463 = vrot.slane %v336, 1
        %v464 = vrot.slane %v337, 1
        %v465 = vsel %vm402, %v463, %v464
        %v466 = vrot.slane %v338, 1
        %v467 = vsel %vm402, %v464, %v466
        %v468 = vrot.slane %v339, 1
        %v469 = vrot.slane %v340, 1
        %v470 = vsel %vm402, %v468, %v469
        %v471 = vrot.slane %v341, 1
        %v472 = vsel %vm402, %v469, %v471
        %v473 = vrot.slane %v342, 1
        %v474 = vrot.slane %v343, 1
        %v475 = vsel %vm402, %v473, %v474
        %v476 = vrot.slane %v344, 1
        %v477 = vsel %vm402, %v474, %v476
        %v478 = vrot.slane %v345, 1
        %v479 = vrot.slane %v346, 1
        %v480 = vsel %vm402, %v478, %v479
        %v481 = vrot.slane %v347, 1
        %v482 = vsel %vm402, %v479, %v481
        %vm515 = vcmask 1045504
        %v516 = vrot.slane %v300, 2
        %v517 = vrot.slane %v301, 2
        %v518 = vsel %vm515, %v516, %v517
        %v519 = vrot.slane %v302, 2
        %v520 = vsel %vm515, %v517, %v519
        %v521 = vrot.slane %v303, 2
        %v522 = vrot.slane %v304, 2
        %v523 = vsel %vm515, %v521, %v522
        %v524 = vrot.slane %v305, 2
        %v525 = vsel %vm515, %v522, %v524
        %v526 = vrot.slane %v306, 2
        %v527 = vrot.slane %v307, 2
        %v528 = vsel %vm515, %v526, %v527
        %v529 = vrot.slane %v308, 2
        %v530 = vsel %vm515, %v527, %v529
        %v531 = vrot.slane %v309, 2
        %v532 = vrot.slane %v310, 2
        %v533 = vsel %vm515, %v531, %v532
        %v534 = vrot.slane %v311, 2
        %v535 = vsel %vm515, %v532, %v534
        %v536 = vrot.slane %v312, 2
        %v537 = vrot.slane %v313, 2
        %v538 = vsel %vm515, %v536, %v537
        %v539 = vrot.slane %v314, 2
        %v540 = vsel %vm515, %v537, %v539
        %v541 = vrot.slane %v315, 2
        %v542 = vrot.slane %v316, 2
        %v543 = vsel %vm515, %v541, %v542
        %v544 = vrot.slane %v317, 2
        %v545 = vsel %vm515, %v542, %v544
        %v546 = vrot.slane %v318, 2
        %v547 = vrot.slane %v319, 2
        %v548 = vsel %vm515, %v546, %v547
        %v549 = vrot.slane %v320, 2
        %v550 = vsel %vm515, %v547, %v549
        %v551 = vrot.slane %v321, 2
        %v552 = vrot.slane %v322, 2
        %v553 = vsel %vm515, %v551, %v552
        %v554 = vrot.slane %v323, 2
        %v555 = vsel %vm515, %v552, %v554
        %v556 = vrot.slane %v324, 2
        %v557 = vrot.slane %v325, 2
        %v558 = vsel %vm515, %v556, %v557
        %v559 = vrot.slane %v326, 2
        %v560 = vsel %vm515, %v557, %v559
        %v561 = vrot.slane %v327, 2
        %v562 = vrot.slane %v328, 2
        %v563 = vsel %vm515, %v561, %v562
        %v564 = vrot.slane %v329, 2
        %v565 = vsel %vm515, %v562, %v564
        %v566 = vrot.slane %v330, 2
        %v567 = vrot.slane %v331, 2
        %v568 = vsel %vm515, %v566, %v567
        %v569 = vrot.slane %v332, 2
        %v570 = vsel %vm515, %v567, %v569
        %v571 = vrot.slane %v333, 2
        %v572 = vrot.slane %v334, 2
        %v573 = vsel %vm515, %v571, %v572
        %v574 = vrot.slane %v335, 2
        %v575 = vsel %vm515, %v572, %v574
        %v576 = vrot.slane %v336, 2
        %v577 = vrot.slane %v337, 2
        %v578 = vsel %vm515, %v576, %v577
        %v579 = vrot.slane %v338, 2
        %v580 = vsel %vm515, %v577, %v579
        %v581 = vrot.slane %v339, 2
        %v582 = vrot.slane %v340, 2
        %v583 = vsel %vm515, %v581, %v582
        %v584 = vrot.slane %v341, 2
        %v585 = vsel %vm515, %v582, %v584
        %v586 = vrot.slane %v342, 2
        %v587 = vrot.slane %v343, 2
        %v588 = vsel %vm515, %v586, %v587
        %v589 = vrot.slane %v344, 2
        %v590 = vsel %vm515, %v587, %v589
        %v591 = vrot.slane %v345, 2
        %v592 = vrot.slane %v346, 2
        %v593 = vsel %vm515, %v591, %v592
        %v594 = vrot.slane %v347, 2
        %v595 = vsel %vm515, %v592, %v594
        %v631 = vrot.slane %v348, 1
        %v632 = vrot.slane %v349, 1
        %v633 = vsel %vm402, %v631, %v632
        %v634 = vrot.slane %v350, 1
        %v635 = vsel %vm402, %v632, %v634
        %v638 = vrot.slane %v348, 2
        %v639 = vrot.slane %v349, 2
        %v640 = vsel %vm515, %v638, %v639
        %v641 = vrot.slane %v350, 2
        %v642 = vsel %vm515, %v639, %v641
        %v648 = vrot.slane %v351, 1
        %v649 = vrot.slane %v352, 1
        %v650 = vsel %vm402, %v648, %v649
        %v651 = vrot.slane %v353, 1
        %v652 = vsel %vm402, %v649, %v651
        %v655 = vrot.slane %v351, 2
        %v656 = vrot.slane %v352, 2
        %v657 = vsel %vm515, %v655, %v656
        %v658 = vrot.slane %v353, 2
        %v659 = vsel %vm515, %v656, %v658
        %v662 = vld [vmem:[%s1] sm:$0xff]
        %v663 = vld [vmem:[%s1 + $0x8] sm:$0xff]
        %v664 = vld [vmem:[%s1 + $0x10] sm:$0xff]
        %v665 = vld [vmem:[%s1 + $0x18] sm:$0xff]
        %v666 = vld [vmem:[%s1 + $0x20] sm:$0xff]
        %v667 = vld [vmem:[%s1 + $0x28] sm:$0xff]
        %v668 = vld [vmem:[%s1 + $0x30] sm:$0xff]
        %v669 = vld [vmem:[%s1 + $0x38] sm:$0xff]
        %v670 = vld [vmem:[%s1 + $0x40] sm:$0xff]
        %v671 = vld [vmem:[%s1 + $0x48] sm:$0xff]
        %v672 = vld [vmem:[%s1 + $0x50] sm:$0xff]
        %v673 = vld [vmem:[%s1 + $0x58] sm:$0xff]
        %v674 = vld [vmem:[%s1 + $0x60] sm:$0xff]
        %v675 = vld [vmem:[%s1 + $0x68] sm:$0xff]
        %v676 = vld [vmem:[%s1 + $0x70] sm:$0xff]
        %v677 = vld [vmem:[%s1 + $0x78] sm:$0xff]
        %v678 = vld [vmem:[%s1 + $0x80] sm:$0xff]
        %v679 = vld [vmem:[%s1 + $0x88] sm:$0xff]
        %v680 = vld [vmem:[%s1 + $0x90] sm:$0xff]
        %v681 = vld [vmem:[%s1 + $0x98] sm:$0xff]
        %v682 = vld [vmem:[%s1 + $0xa0] sm:$0xff]
        %v683 = vld [vmem:[%s1 + $0xa8] sm:$0xff]
        %v684 = vld [vmem:[%s1 + $0xb0] sm:$0xff]
        %v685 = vld [vmem:[%s1 + $0xb8] sm:$0xff]
        %v686 = vld [vmem:[%s1 + $0xc0] sm:$0xff]
        %v687 = vld [vmem:[%s1 + $0xc8] sm:$0xff]
        %v688 = vld [vmem:[%s1 + $0xd0] sm:$0xff]
        %v689 = vld [vmem:[%s1 + $0xd8] sm:$0xff]
        %v690 = vld [vmem:[%s1 + $0xe0] sm:$0xff]
        %v691 = vld [vmem:[%s1 + $0xe8] sm:$0xff]
        %v692 = vld [vmem:[%s1 + $0xf0] sm:$0xff]
        %v693 = vld [vmem:[%s1 + $0xf8] sm:$0xff]
        %v694 = vld [vmem:[%s1 + $0x100] sm:$0xff]
        %v695 = vld [vmem:[%s1 + $0x108] sm:$0xff]
        %v696 = vld [vmem:[%s1 + $0x110] sm:$0xff]
        %v697 = vld [vmem:[%s1 + $0x118] sm:$0xff]
        %v698 = vld [vmem:[%s1 + $0x120] sm:$0xff]
        %v699 = vld [vmem:[%s1 + $0x128] sm:$0xff]
        %v700 = vld [vmem:[%s1 + $0x130] sm:$0xff]
        %v701 = vld [vmem:[%s1 + $0x138] sm:$0xff]
        %v702 = vld [vmem:[%s1 + $0x140] sm:$0xff]
        %v703 = vld [vmem:[%s1 + $0x148] sm:$0xff]
        %v704 = vld [vmem:[%s1 + $0x150] sm:$0xff]
        %v705 = vld [vmem:[%s1 + $0x158] sm:$0xff]
        %v706 = vld [vmem:[%s1 + $0x160] sm:$0xff]
        %v707 = vld [vmem:[%s1 + $0x168] sm:$0xff]
        %v708 = vld [vmem:[%s1 + $0x170] sm:$0xff]
        %v709 = vld [vmem:[%s1 + $0x178] sm:$0xff]
        %v710 = vld [vmem:[%s1 + $0x180] sm:$0xff]
        %v711 = vld [vmem:[%s1 + $0x188] sm:$0xff]
        %v712 = vld [vmem:[%s1 + $0x190] sm:$0xff]
        %v713 = vld [vmem:[%s1 + $0x198] sm:$0xff]
        %v714 = vld [vmem:[%s1 + $0x1a0] sm:$0xff]
        %v715 = vld [vmem:[%s1 + $0x1a8] sm:$0xff]
        %v716 = vld [vmem:[%s1 + $0x1b0] sm:$0xff]
        %v717 = vld [vmem:[%s1 + $0x1b8] sm:$0xff]
        %v718 = vld [vmem:[%s1 + $0x1c0] sm:$0xff]
        %v719 = vld [vmem:[%s1 + $0x1c8] sm:$0xff]
        %v720 = vld [vmem:[%s1 + $0x1d0] sm:$0xff]
        %v721 = vld [vmem:[%s1 + $0x1d8] sm:$0xff]
        %v722 = vld [vmem:[%s1 + $0x1e0] sm:$0xff]
        %v723 = vld [vmem:[%s1 + $0x1e8] sm:$0xff]
        %v724 = vld [vmem:[%s1 + $0x1f0] sm:$0xff]
        %v725 = vld [vmem:[%s1 + $0x1f8] sm:$0xff]
        %v726 = vld [vmem:[%s1 + $0x200] sm:$0xff]
        %v727 = vld [vmem:[%s1 + $0x208] sm:$0xff]
        %v728 = vld [vmem:[%s1 + $0x210] sm:$0xff]
        %v729 = vld [vmem:[%s1 + $0x218] sm:$0xff]
        %v730 = vld [vmem:[%s1 + $0x220] sm:$0xff]
        %v731 = vld [vmem:[%s1 + $0x228] sm:$0xff]
        %v732 = vld [vmem:[%s1 + $0x230] sm:$0xff]
        %v733 = vld [vmem:[%s1 + $0x238] sm:$0xff]
        %v734 = vld [vmem:[%s1 + $0x240] sm:$0xff]
        %v735 = vld [vmem:[%s1 + $0x248] sm:$0xff]
        %v736 = vld [vmem:[%s1 + $0x250] sm:$0xff]
        %v737 = vld [vmem:[%s1 + $0x258] sm:$0xff]
        %v738 = vld [vmem:[%s1 + $0x260] sm:$0xff]
        %v739 = vld [vmem:[%s1 + $0x268] sm:$0xff]
        %v740 = vld [vmem:[%s1 + $0x270] sm:$0xff]
        %v741 = vld [vmem:[%s1 + $0x278] sm:$0xff]
        %v742 = vld [vmem:[%s1 + $0x280] sm:$0xff]
        %v743 = vld [vmem:[%s1 + $0x288] sm:$0xff]
        %v744 = vld [vmem:[%s1 + $0x290] sm:$0xff]
        %v745 = vld [vmem:[%s1 + $0x298] sm:$0xff]
        %v746 = vld [vmem:[%s1 + $0x2a0] sm:$0xff]
        %v747 = vld [vmem:[%s1 + $0x2a8] sm:$0xff]
        %v748 = vld [vmem:[%s1 + $0x2b0] sm:$0xff]
        %v749 = vld [vmem:[%s1 + $0x2b8] sm:$0xff]
        %v750 = vld [vmem:[%s1 + $0x2c0] sm:$0xff]
        %v751 = vld [vmem:[%s1 + $0x2c8] sm:$0xff]
        %v752 = vld [vmem:[%s1 + $0x2d0] sm:$0xff]
        %v753 = vld [vmem:[%s1 + $0x2d8] sm:$0xff]
        %v754 = vld [vmem:[%s1 + $0x2e0] sm:$0xff]
        %v755 = vld [vmem:[%s1 + $0x2e8] sm:$0xff]
        %v756 = vld [vmem:[%s1 + $0x2f0] sm:$0xff]
        %v757 = vld [vmem:[%s1 + $0x2f8] sm:$0xff]
        %v758 = vld [vmem:[%s1 + $0x300] sm:$0xff]
        %v759 = vld [vmem:[%s1 + $0x308] sm:$0xff]
        %v760 = vld [vmem:[%s1 + $0x310] sm:$0xff]
        %v761 = vld [vmem:[%s1 + $0x318] sm:$0xff]
        %v762 = vld [vmem:[%s1 + $0x320] sm:$0xff]
        %v763 = vld [vmem:[%s1 + $0x328] sm:$0xff]
        %v764 = vld [vmem:[%s1 + $0x330] sm:$0xff]
        %v765 = vld [vmem:[%s1 + $0x338] sm:$0xff]
        %v766 = vld [vmem:[%s1 + $0x340] sm:$0xff]
        %v767 = vld [vmem:[%s1 + $0x348] sm:$0xff]
        %v768 = vld [vmem:[%s1 + $0x350] sm:$0xff]
        %v769 = vld [vmem:[%s1 + $0x358] sm:$0xff]
        %v770 = vld [vmem:[%s1 + $0x360] sm:$0xff]
        %v771 = vld [vmem:[%s1 + $0x368] sm:$0xff]
        %v772 = vld [vmem:[%s1 + $0x370] sm:$0xff]
        %v773 = vld [vmem:[%s1 + $0x378] sm:$0xff]
        %v774 = vld [vmem:[%s1 + $0x380] sm:$0xff]
        %v775 = vld [vmem:[%s1 + $0x388] sm:$0xff]
        %v776 = vld [vmem:[%s1 + $0x390] sm:$0xff]
        %v777 = vld [vmem:[%s1 + $0x398] sm:$0xff]
        %v778 = vld [vmem:[%s1 + $0x3a0] sm:$0xff]
        %v779 = vld [vmem:[%s1 + $0x3a8] sm:$0xff]
        %v780 = vld [vmem:[%s1 + $0x3b0] sm:$0xff]
        %v781 = vld [vmem:[%s1 + $0x3b8] sm:$0xff]
        %v782 = vld [vmem:[%s1 + $0x3c0] sm:$0xff]
        %v783 = vld [vmem:[%s1 + $0x3c8] sm:$0xff]
        %v784 = vld [vmem:[%s1 + $0x3d0] sm:$0xff]
        %v785 = vld [vmem:[%s1 + $0x3d8] sm:$0xff]
        %v786 = vld [vmem:[%s1 + $0x3e0] sm:$0xff]
        %v787 = vld [vmem:[%s1 + $0x3e8] sm:$0xff]
        %v788 = vld [vmem:[%s1 + $0x3f0] sm:$0xff]
        %v789 = vld [vmem:[%s1 + $0x3f8] sm:$0xff]
        %v790 = vld [vmem:[%s1 + $0x400] sm:$0xff]
        %v791 = vld [vmem:[%s1 + $0x408] sm:$0xff]
        %v792 = vld [vmem:[%s1 + $0x410] sm:$0xff]
        %v793 = vld [vmem:[%s1 + $0x418] sm:$0xff]
        %v794 = vld [vmem:[%s1 + $0x420] sm:$0xff]
        %v795 = vld [vmem:[%s1 + $0x428] sm:$0xff]
        %v796 = vld [vmem:[%s1 + $0x430] sm:$0xff]
        %v797 = vld [vmem:[%s1 + $0x438] sm:$0xff]
        %v798 = vld [vmem:[%s1 + $0x440] sm:$0xff]
        %v799 = vld [vmem:[%s1 + $0x448] sm:$0xff]
        %v800 = vld [vmem:[%s1 + $0x450] sm:$0xff]
        %v801 = vld [vmem:[%s1 + $0x458] sm:$0xff]
        %v802 = vld [vmem:[%s1 + $0x460] sm:$0xff]
        %v803 = vld [vmem:[%s1 + $0x468] sm:$0xff]
        %v804 = vld [vmem:[%s1 + $0x470] sm:$0xff]
        %v805 = vld [vmem:[%s1 + $0x478] sm:$0xff]
        %v806 = vld [vmem:[%s2] sm:$0x1]
        %v808 = vlaneseq
        %v809 = vshrl.u32 %v808, 7
        %v810 = vsub.s32 0, %v809
        %v811 = vrot.slane %v806, %v810
        %813 = vmatprep.subr.mxu0 0.0
        %814 = vmatpush1.msra.mxu0 %v662
        %815 = vmatprep.subr.mxu0 0.0
        %816 = vmatpush1.msra.mxu0 %v663
        %817 = vmatprep.subr.mxu0 0.0
        %818 = vmatpush1.msra.mxu0 %v664
        %819 = vmatprep.subr.mxu0 0.0
        %820 = vmatpush1.msra.mxu0 %v665
        %821 = vmatprep.subr.mxu0 0.0
        %822 = vmatpush1.msra.mxu0 %v666
        %823 = vmatprep.subr.mxu0 0.0
        %824 = vmatpush1.msra.mxu0 %v667
        %825 = vmatprep.subr.mxu0 0.0
        %826 = vmatpush1.msra.mxu0 %v668
        %827 = vmatprep.subr.mxu0 0.0
        %828 = vmatpush1.msra.mxu0 %v669
        %829 = vmatprep.subr.mxu0 0.0
        %830 = vmatpush1.msra.mxu0 %v670
        %831 = vmatprep.subr.mxu0 0.0
        %832 = vmatpush1.msra.mxu0 %v671
        %833 = vmatprep.subr.mxu0 0.0
        %834 = vmatpush1.msra.mxu0 %v672
        %835 = vmatprep.subr.mxu0 0.0
        %836 = vmatpush1.msra.mxu0 %v673
        %837 = vmatprep.subr.mxu0 0.0
        %838 = vmatpush1.msra.mxu0 %v674
        %839 = vmatprep.subr.mxu0 0.0
        %840 = vmatpush1.msra.mxu0 %v675
        %841 = vmatprep.subr.mxu0 0.0
        %842 = vmatpush1.msra.mxu0 %v676
        %843 = vmatprep.subr.mxu0 0.0
        %844 = vmatpush1.msra.mxu0 %v677
        %845 = vmatprep.subr.mxu0 0.0
        %846 = vmatpush1.msra.mxu0 %v678
        %847 = vmatprep.subr.mxu0 0.0
        %848 = vmatpush1.msra.mxu0 %v679
        %849 = vmatprep.subr.mxu0 0.0
        %850 = vmatpush1.msra.mxu0 %v680
        %851 = vmatprep.subr.mxu0 0.0
        %852 = vmatpush1.msra.mxu0 %v681
        %853 = vmatprep.subr.mxu0 0.0
        %854 = vmatpush1.msra.mxu0 %v682
        %855 = vmatprep.subr.mxu0 0.0
        %856 = vmatpush1.msra.mxu0 %v683
        %857 = vmatprep.subr.mxu0 0.0
        %858 = vmatpush1.msra.mxu0 %v684
        %859 = vmatprep.subr.mxu0 0.0
        %860 = vmatpush1.msra.mxu0 %v685
        %861 = vmatprep.subr.mxu0 0.0
        %862 = vmatpush1.msra.mxu0 %v686
        %863 = vmatprep.subr.mxu0 0.0
        %864 = vmatpush1.msra.mxu0 %v687
        %865 = vmatprep.subr.mxu0 0.0
        %866 = vmatpush1.msra.mxu0 %v688
        %867 = vmatprep.subr.mxu0 0.0
        %868 = vmatpush1.msra.mxu0 %v689
        %869 = vmatprep.subr.mxu0 0.0
        %870 = vmatpush1.msra.mxu0 %v690
        %871 = vmatprep.subr.mxu0 0.0
        %872 = vmatpush1.msra.mxu0 %v691
        %873 = vmatprep.subr.mxu0 0.0
        %874 = vmatpush1.msra.mxu0 %v692
        %875 = vmatprep.subr.mxu0 0.0
        %876 = vmatpush1.msra.mxu0 %v693
        %877 = vmatprep.mubr.f32.mxu0 %v405
        %878 = vmatmul.mubr.f32.gmra.mrb[0].mxu0 %v300
        %v879 = vpop.f32.mrb[0].mxu0
        %v880 = vadd.f32 %v811, %v879
        %v881 = vpop.f32.mrb[0].mxu0
        %882 = vmatprep.mubr.f32.mxu0 %v407
        %883 = vmatmul.mubr.f32.gmra.mrb[0].mxu0 %v301
        %v884 = vpop.f32.mrb[0].mxu0
        %v885 = vadd.f32 %v811, %v884
        %v886 = vpop.f32.mrb[0].mxu0
        %887 = vmatprep.mubr.f32.mxu0 %v410
        %888 = vmatmul.mubr.f32.gmra.mrb[0].mxu0 %v303
        %v889 = vpop.f32.mrb[0].mxu0
        %v890 = vadd.f32 %v811, %v889
        %v891 = vpop.f32.mrb[0].mxu0
        %892 = vmatprep.mubr.f32.mxu0 %v412
        %893 = vmatmul.mubr.f32.gmra.mrb[0].mxu0 %v304
        %v894 = vpop.f32.mrb[0].mxu0
        %v895 = vadd.f32 %v811, %v894
        %v896 = vpop.f32.mrb[0].mxu0
        %897 = vmatprep.mubr.f32.mxu0 %v415
        %898 = vmatmul.mubr.f32.gmra.mrb[0].mxu0 %v306
        %v899 = vpop.f32.mrb[0].mxu0
        %v900 = vadd.f32 %v811, %v899
        %v901 = vpop.f32.mrb[0].mxu0
        %902 = vmatprep.mubr.f32.mxu0 %v417
        %903 = vmatmul.mubr.f32.gmra.mrb[0].mxu0 %v307
        %v904 = vpop.f32.mrb[0].mxu0
        %v905 = vadd.f32 %v811, %v904
        %v906 = vpop.f32.mrb[0].mxu0
        %907 = vmatprep.mubr.f32.mxu0 %v420
        %908 = vmatmul.mubr.f32.gmra.mrb[0].mxu0 %v309
        %v909 = vpop.f32.mrb[0].mxu0
        %v910 = vadd.f32 %v811, %v909
        %v911 = vpop.f32.mrb[0].mxu0
        %912 = vmatprep.mubr.f32.mxu0 %v422
        %913 = vmatmul.mubr.f32.gmra.mrb[0].mxu0 %v310
        %v914 = vpop.f32.mrb[0].mxu0
        %v915 = vadd.f32 %v811, %v914
        %v916 = vpop.f32.mrb[0].mxu0
        %917 = vmatprep.mubr.f32.mxu0 %v425
        %918 = vmatmul.mubr.f32.gmra.mrb[0].mxu0 %v312
        %v919 = vpop.f32.mrb[0].mxu0
        %v920 = vadd.f32 %v811, %v919
        %v921 = vpop.f32.mrb[0].mxu0
        %922 = vmatprep.mubr.f32.mxu0 %v427
        %923 = vmatmul.mubr.f32.gmra.mrb[0].mxu0 %v313
        %v924 = vpop.f32.mrb[0].mxu0
        %v925 = vadd.f32 %v811, %v924
        %v926 = vpop.f32.mrb[0].mxu0
        %927 = vmatprep.mubr.f32.mxu0 %v430
        %928 = vmatmul.mubr.f32.gmra.mrb[0].mxu0 %v315
        %v929 = vpop.f32.mrb[0].mxu0
        %v930 = vadd.f32 %v811, %v929
        %v931 = vpop.f32.mrb[0].mxu0
        %932 = vmatprep.mubr.f32.mxu0 %v432
        %933 = vmatmul.mubr.f32.gmra.mrb[0].mxu0 %v316
        %v934 = vpop.f32.mrb[0].mxu0
        %v935 = vadd.f32 %v811, %v934
        %v936 = vpop.f32.mrb[0].mxu0
        %937 = vmatprep.mubr.f32.mxu0 %v435
        %938 = vmatmul.mubr.f32.gmra.mrb[0].mxu0 %v318
        %v939 = vpop.f32.mrb[0].mxu0
        %v940 = vadd.f32 %v811, %v939
        %v941 = vpop.f32.mrb[0].mxu0
        %942 = vmatprep.mubr.f32.mxu0 %v437
        %943 = vmatmul.mubr.f32.gmra.mrb[0].mxu0 %v319
        %v944 = vpop.f32.mrb[0].mxu0
        %v945 = vadd.f32 %v811, %v944
        %v946 = vpop.f32.mrb[0].mxu0
        %947 = vmatprep.mubr.f32.mxu0 %v440
        %948 = vmatmul.mubr.f32.gmra.mrb[0].mxu0 %v321
        %v949 = vpop.f32.mrb[0].mxu0
        %v950 = vadd.f32 %v811, %v949
        %v951 = vpop.f32.mrb[0].mxu0
        %952 = vmatprep.mubr.f32.mxu0 %v442
        %953 = vmatmul.mubr.f32.gmra.mrb[0].mxu0 %v322
        %v954 = vpop.f32.mrb[0].mxu0
        %v955 = vadd.f32 %v811, %v954
        %v956 = vpop.f32.mrb[0].mxu0
        %957 = vmatprep.mubr.f32.mxu0 %v445
        %958 = vmatmul.mubr.f32.gmra.mrb[0].mxu0 %v324
        %v959 = vpop.f32.mrb[0].mxu0
        %v960 = vadd.f32 %v811, %v959
        %v961 = vpop.f32.mrb[0].mxu0
        %962 = vmatprep.mubr.f32.mxu0 %v447
        %963 = vmatmul.mubr.f32.gmra.mrb[0].mxu0 %v325
        %v964 = vpop.f32.mrb[0].mxu0
        %v965 = vadd.f32 %v811, %v964
        %v966 = vpop.f32.mrb[0].mxu0
        %967 = vmatprep.mubr.f32.mxu0 %v450
        %968 = vmatmul.mubr.f32.gmra.mrb[0].mxu0 %v327
        %v969 = vpop.f32.mrb[0].mxu0
        %v970 = vadd.f32 %v811, %v969
        %v971 = vpop.f32.mrb[0].mxu0
        %972 = vmatprep.mubr.f32.mxu0 %v452
        %973 = vmatmul.mubr.f32.gmra.mrb[0].mxu0 %v328
        %v974 = vpop.f32.mrb[0].mxu0
        %v975 = vadd.f32 %v811, %v974
        %v976 = vpop.f32.mrb[0].mxu0
        %977 = vmatprep.mubr.f32.mxu0 %v455
        %978 = vmatmul.mubr.f32.gmra.mrb[0].mxu0 %v330
        %v979 = vpop.f32.mrb[0].mxu0
        %v980 = vadd.f32 %v811, %v979
        %v981 = vpop.f32.mrb[0].mxu0
        %982 = vmatprep.mubr.f32.mxu0 %v457
        %983 = vmatmul.mubr.f32.gmra.mrb[0].mxu0 %v331
        %v984 = vpop.f32.mrb[0].mxu0
        %v985 = vadd.f32 %v811, %v984
        %v986 = vpop.f32.mrb[0].mxu0
        %987 = vmatprep.mubr.f32.mxu0 %v460
        %988 = vmatmul.mubr.f32.gmra.mrb[0].mxu0 %v333
        %v989 = vpop.f32.mrb[0].mxu0
        %v990 = vadd.f32 %v811, %v989
        %v991 = vpop.f32.mrb[0].mxu0
        %992 = vmatprep.mubr.f32.mxu0 %v462
        %993 = vmatmul.mubr.f32.gmra.mrb[0].mxu0 %v334
        %v994 = vpop.f32.mrb[0].mxu0
        %v995 = vadd.f32 %v811, %v994
        %v996 = vpop.f32.mrb[0].mxu0
        %997 = vmatprep.mubr.f32.mxu0 %v465
        %998 = vmatmul.mubr.f32.gmra.mrb[0].mxu0 %v336
        %v999 = vpop.f32.mrb[0].mxu0
        %v1000 = vadd.f32 %v811, %v999
        %v1001 = vpop.f32.mrb[0].mxu0
        %1002 = vmatprep.mubr.f32.mxu0 %v467
        %1003 = vmatmul.mubr.f32.gmra.mrb[0].mxu0 %v337
        %v1004 = vpop.f32.mrb[0].mxu0
        %v1005 = vadd.f32 %v811, %v1004
        %v1006 = vpop.f32.mrb[0].mxu0
        %1007 = vmatprep.mubr.f32.mxu0 %v470
        %1008 = vmatmul.mubr.f32.gmra.mrb[0].mxu0 %v339
        %v1009 = vpop.f32.mrb[0].mxu0
        %v1010 = vadd.f32 %v811, %v1009
        %v1011 = vpop.f32.mrb[0].mxu0
        %1012 = vmatprep.mubr.f32.mxu0 %v472
        %1013 = vmatmul.mubr.f32.gmra.mrb[0].mxu0 %v340
        %v1014 = vpop.f32.mrb[0].mxu0
        %v1015 = vadd.f32 %v811, %v1014
        %v1016 = vpop.f32.mrb[0].mxu0
        %1017 = vmatprep.mubr.f32.mxu0 %v475
        %1018 = vmatmul.mubr.f32.gmra.mrb[0].mxu0 %v342
        %v1019 = vpop.f32.mrb[0].mxu0
        %v1020 = vadd.f32 %v811, %v1019
        %v1021 = vpop.f32.mrb[0].mxu0
        %1022 = vmatprep.mubr.f32.mxu0 %v477
        %1023 = vmatmul.mubr.f32.gmra.mrb[0].mxu0 %v343
        %v1024 = vpop.f32.mrb[0].mxu0
        %v1025 = vadd.f32 %v811, %v1024
        %v1026 = vpop.f32.mrb[0].mxu0
        %1027 = vmatprep.mubr.f32.mxu0 %v480
        %1028 = vmatmul.mubr.f32.gmra.mrb[0].mxu0 %v345
        %v1029 = vpop.f32.mrb[0].mxu0
        %v1030 = vadd.f32 %v811, %v1029
        %v1031 = vpop.f32.mrb[0].mxu0
        %1032 = vmatprep.mubr.f32.mxu0 %v482
        %1033 = vmatmul.mubr.f32.gmra.mrb[0].mxu0 %v346
        %v1034 = vpop.f32.mrb[0].mxu0
        %v1035 = vadd.f32 %v811, %v1034
        %v1036 = vpop.f32.mrb[0].mxu0
        %1037 = vdwg.mxu0
        %1038 = vmatprep.subr.mxu0 0.0
        %1039 = vmatpush1.msra.mxu0 %v694
        %1040 = vmatprep.subr.mxu0 0.0
        %1041 = vmatpush1.msra.mxu0 %v695
        %1042 = vmatprep.subr.mxu0 0.0
        %1043 = vmatpush1.msra.mxu0 %v696
        %1044 = vmatprep.subr.mxu0 0.0
        %1045 = vmatpush1.msra.mxu0 %v697
        %1046 = vmatprep.subr.mxu0 0.0
        %1047 = vmatpush1.msra.mxu0 %v698
        %1048 = vmatprep.subr.mxu0 0.0
        %1049 = vmatpush1.msra.mxu0 %v699
        %1050 = vmatprep.subr.mxu0 0.0
        %1051 = vmatpush1.msra.mxu0 %v700
        %1052 = vmatprep.subr.mxu0 0.0
        %1053 = vmatpush1.msra.mxu0 %v701
        %1054 = vmatprep.subr.mxu0 0.0
        %1055 = vmatpush1.msra.mxu0 %v702
        %1056 = vmatprep.subr.mxu0 0.0
        %1057 = vmatpush1.msra.mxu0 %v703
        %1058 = vmatprep.subr.mxu0 0.0
        %1059 = vmatpush1.msra.mxu0 %v704
        %1060 = vmatprep.subr.mxu0 0.0
        %1061 = vmatpush1.msra.mxu0 %v705
        %1062 = vmatprep.subr.mxu0 0.0
        %1063 = vmatpush1.msra.mxu0 %v706
        %1064 = vmatprep.subr.mxu0 0.0
        %1065 = vmatpush1.msra.mxu0 %v707
        %1066 = vmatprep.subr.mxu0 0.0
        %1067 = vmatpush1.msra.mxu0 %v708
        %1068 = vmatprep.subr.mxu0 0.0
        %1069 = vmatpush1.msra.mxu0 %v709
        %1070 = vmatprep.subr.mxu0 0.0
        %1071 = vmatpush1.msra.mxu0 %v710
        %1072 = vmatprep.subr.mxu0 0.0
        %1073 = vmatpush1.msra.mxu0 %v711
        %1074 = vmatprep.subr.mxu0 0.0
        %1075 = vmatpush1.msra.mxu0 %v712
        %1076 = vmatprep.subr.mxu0 0.0
        %1077 = vmatpush1.msra.mxu0 %v713
        %1078 = vmatprep.subr.mxu0 0.0
        %1079 = vmatpush1.msra.mxu0 %v714
        %1080 = vmatprep.subr.mxu0 0.0
        %1081 = vmatpush1.msra.mxu0 %v715
        %1082 = vmatprep.subr.mxu0 0.0
        %1083 = vmatpush1.msra.mxu0 %v716
        %1084 = vmatprep.subr.mxu0 0.0
        %1085 = vmatpush1.msra.mxu0 %v717
        %1086 = vmatprep.subr.mxu0 0.0
        %1087 = vmatpush1.msra.mxu0 %v718
        %1088 = vmatprep.subr.mxu0 0.0
        %1089 = vmatpush1.msra.mxu0 %v719
        %1090 = vmatprep.subr.mxu0 0.0
        %1091 = vmatpush1.msra.mxu0 %v720
        %1092 = vmatprep.subr.mxu0 0.0
        %1093 = vmatpush1.msra.mxu0 %v721
        %1094 = vmatprep.subr.mxu0 0.0
        %1095 = vmatpush1.msra.mxu0 %v722
        %1096 = vmatprep.subr.mxu0 0.0
        %1097 = vmatpush1.msra.mxu0 %v723
        %1098 = vmatprep.subr.mxu0 0.0
        %1099 = vmatpush1.msra.mxu0 %v724
        %1100 = vmatprep.subr.mxu0 0.0
        %1101 = vmatpush1.msra.mxu0 %v725
        %1102 = vmatprep.mubr.f32.mxu0 %v303
        %1103 = vmatmul.mubr.f32.gmra.mrb[0].mxu0 %v518
        %v1104 = vpop.f32.mrb[0].mxu0
        %v1105 = vadd.f32 %v880, %v1104
        %v1106 = vpop.f32.mrb[0].mxu0
        %1107 = vmatprep.mubr.f32.mxu0 %v304
        %1108 = vmatmul.mubr.f32.gmra.mrb[0].mxu0 %v520
        %v1109 = vpop.f32.mrb[0].mxu0
        %v1110 = vadd.f32 %v885, %v1109
        %v1111 = vpop.f32.mrb[0].mxu0
        %1112 = vmatprep.mubr.f32.mxu0 %v306
        %1113 = vmatmul.mubr.f32.gmra.mrb[0].mxu0 %v523
        %v1114 = vpop.f32.mrb[0].mxu0
        %v1115 = vadd.f32 %v890, %v1114
        %v1116 = vpop.f32.mrb[0].mxu0
        %1117 = vmatprep.mubr.f32.mxu0 %v307
        %1118 = vmatmul.mubr.f32.gmra.mrb[0].mxu0 %v525
        %v1119 = vpop.f32.mrb[0].mxu0
        %v1120 = vadd.f32 %v895, %v1119
        %v1121 = vpop.f32.mrb[0].mxu0
        %1122 = vmatprep.mubr.f32.mxu0 %v309
        %1123 = vmatmul.mubr.f32.gmra.mrb[0].mxu0 %v528
        %v1124 = vpop.f32.mrb[0].mxu0
        %v1125 = vadd.f32 %v900, %v1124
        %v1126 = vpop.f32.mrb[0].mxu0
        %1127 = vmatprep.mubr.f32.mxu0 %v310
        %1128 = vmatmul.mubr.f32.gmra.mrb[0].mxu0 %v530
        %v1129 = vpop.f32.mrb[0].mxu0
        %v1130 = vadd.f32 %v905, %v1129
        %v1131 = vpop.f32.mrb[0].mxu0
        %1132 = vmatprep.mubr.f32.mxu0 %v312
        %1133 = vmatmul.mubr.f32.gmra.mrb[0].mxu0 %v533
        %v1134 = vpop.f32.mrb[0].mxu0
        %v1135 = vadd.f32 %v910, %v1134
        %v1136 = vpop.f32.mrb[0].mxu0
        %1137 = vmatprep.mubr.f32.mxu0 %v313
        %1138 = vmatmul.mubr.f32.gmra.mrb[0].mxu0 %v535
        %v1139 = vpop.f32.mrb[0].mxu0
        %v1140 = vadd.f32 %v915, %v1139
        %v1141 = vpop.f32.mrb[0].mxu0
        %1142 = vmatprep.mubr.f32.mxu0 %v315
        %1143 = vmatmul.mubr.f32.gmra.mrb[0].mxu0 %v538
        %v1144 = vpop.f32.mrb[0].mxu0
        %v1145 = vadd.f32 %v920, %v1144
        %v1146 = vpop.f32.mrb[0].mxu0
        %1147 = vmatprep.mubr.f32.mxu0 %v316
        %1148 = vmatmul.mubr.f32.gmra.mrb[0].mxu0 %v540
        %v1149 = vpop.f32.mrb[0].mxu0
        %v1150 = vadd.f32 %v925, %v1149
        %v1151 = vpop.f32.mrb[0].mxu0
        %1152 = vmatprep.mubr.f32.mxu0 %v318
        %1153 = vmatmul.mubr.f32.gmra.mrb[0].mxu0 %v543
        %v1154 = vpop.f32.mrb[0].mxu0
        %v1155 = vadd.f32 %v930, %v1154
        %v1156 = vpop.f32.mrb[0].mxu0
        %1157 = vmatprep.mubr.f32.mxu0 %v319
        %1158 = vmatmul.mubr.f32.gmra.mrb[0].mxu0 %v545
        %v1159 = vpop.f32.mrb[0].mxu0
        %v1160 = vadd.f32 %v935, %v1159
        %v1161 = vpop.f32.mrb[0].mxu0
        %1162 = vmatprep.mubr.f32.mxu0 %v321
        %1163 = vmatmul.mubr.f32.gmra.mrb[0].mxu0 %v548
        %v1164 = vpop.f32.mrb[0].mxu0
        %v1165 = vadd.f32 %v940, %v1164
        %v1166 = vpop.f32.mrb[0].mxu0
        %1167 = vmatprep.mubr.f32.mxu0 %v322
        %1168 = vmatmul.mubr.f32.gmra.mrb[0].mxu0 %v550
        %v1169 = vpop.f32.mrb[0].mxu0
        %v1170 = vadd.f32 %v945, %v1169
        %v1171 = vpop.f32.mrb[0].mxu0
        %1172 = vmatprep.mubr.f32.mxu0 %v324
        %1173 = vmatmul.mubr.f32.gmra.mrb[0].mxu0 %v553
        %v1174 = vpop.f32.mrb[0].mxu0
        %v1175 = vadd.f32 %v950, %v1174
        %v1176 = vpop.f32.mrb[0].mxu0
        %1177 = vmatprep.mubr.f32.mxu0 %v325
        %1178 = vmatmul.mubr.f32.gmra.mrb[0].mxu0 %v555
        %v1179 = vpop.f32.mrb[0].mxu0
        %v1180 = vadd.f32 %v955, %v1179
        %v1181 = vpop.f32.mrb[0].mxu0
        %1182 = vmatprep.mubr.f32.mxu0 %v327
        %1183 = vmatmul.mubr.f32.gmra.mrb[0].mxu0 %v558
        %v1184 = vpop.f32.mrb[0].mxu0
        %v1185 = vadd.f32 %v960, %v1184
        %v1186 = vpop.f32.mrb[0].mxu0
        %1187 = vmatprep.mubr.f32.mxu0 %v328
        %1188 = vmatmul.mubr.f32.gmra.mrb[0].mxu0 %v560
        %v1189 = vpop.f32.mrb[0].mxu0
        %v1190 = vadd.f32 %v965, %v1189
        %v1191 = vpop.f32.mrb[0].mxu0
        %1192 = vmatprep.mubr.f32.mxu0 %v330
        %1193 = vmatmul.mubr.f32.gmra.mrb[0].mxu0 %v563
        %v1194 = vpop.f32.mrb[0].mxu0
        %v1195 = vadd.f32 %v970, %v1194
        %v1196 = vpop.f32.mrb[0].mxu0
        %1197 = vmatprep.mubr.f32.mxu0 %v331
        %1198 = vmatmul.mubr.f32.gmra.mrb[0].mxu0 %v565
        %v1199 = vpop.f32.mrb[0].mxu0
        %v1200 = vadd.f32 %v975, %v1199
        %v1201 = vpop.f32.mrb[0].mxu0
        %1202 = vmatprep.mubr.f32.mxu0 %v333
        %1203 = vmatmul.mubr.f32.gmra.mrb[0].mxu0 %v568
        %v1204 = vpop.f32.mrb[0].mxu0
        %v1205 = vadd.f32 %v980, %v1204
        %v1206 = vpop.f32.mrb[0].mxu0
        %1207 = vmatprep.mubr.f32.mxu0 %v334
        %1208 = vmatmul.mubr.f32.gmra.mrb[0].mxu0 %v570
        %v1209 = vpop.f32.mrb[0].mxu0
        %v1210 = vadd.f32 %v985, %v1209
        %v1211 = vpop.f32.mrb[0].mxu0
        %1212 = vmatprep.mubr.f32.mxu0 %v336
        %1213 = vmatmul.mubr.f32.gmra.mrb[0].mxu0 %v573
        %v1214 = vpop.f32.mrb[0].mxu0
        %v1215 = vadd.f32 %v990, %v1214
        %v1216 = vpop.f32.mrb[0].mxu0
        %1217 = vmatprep.mubr.f32.mxu0 %v337
        %1218 = vmatmul.mubr.f32.gmra.mrb[0].mxu0 %v575
        %v1219 = vpop.f32.mrb[0].mxu0
        %v1220 = vadd.f32 %v995, %v1219
        %v1221 = vpop.f32.mrb[0].mxu0
        %1222 = vmatprep.mubr.f32.mxu0 %v339
        %1223 = vmatmul.mubr.f32.gmra.mrb[0].mxu0 %v578
        %v1224 = vpop.f32.mrb[0].mxu0
        %v1225 = vadd.f32 %v1000, %v1224
        %v1226 = vpop.f32.mrb[0].mxu0
        %1227 = vmatprep.mubr.f32.mxu0 %v340
        %1228 = vmatmul.mubr.f32.gmra.mrb[0].mxu0 %v580
        %v1229 = vpop.f32.mrb[0].mxu0
        %v1230 = vadd.f32 %v1005, %v1229
        %v1231 = vpop.f32.mrb[0].mxu0
        %1232 = vmatprep.mubr.f32.mxu0 %v342
        %1233 = vmatmul.mubr.f32.gmra.mrb[0].mxu0 %v583
        %v1234 = vpop.f32.mrb[0].mxu0
        %v1235 = vadd.f32 %v1010, %v1234
        %v1236 = vpop.f32.mrb[0].mxu0
        %1237 = vmatprep.mubr.f32.mxu0 %v343
        %1238 = vmatmul.mubr.f32.gmra.mrb[0].mxu0 %v585
        %v1239 = vpop.f32.mrb[0].mxu0
        %v1240 = vadd.f32 %v1015, %v1239
        %v1241 = vpop.f32.mrb[0].mxu0
        %1242 = vmatprep.mubr.f32.mxu0 %v345
        %1243 = vmatmul.mubr.f32.gmra.mrb[0].mxu0 %v588
        %v1244 = vpop.f32.mrb[0].mxu0
        %v1245 = vadd.f32 %v1020, %v1244
        %v1246 = vpop.f32.mrb[0].mxu0
        %1247 = vmatprep.mubr.f32.mxu0 %v346
        %1248 = vmatmul.mubr.f32.gmra.mrb[0].mxu0 %v590
        %v1249 = vpop.f32.mrb[0].mxu0
        %v1250 = vadd.f32 %v1025, %v1249
        %v1251 = vpop.f32.mrb[0].mxu0
        %1252 = vmatprep.mubr.f32.mxu0 %v348
        %1253 = vmatmul.mubr.f32.gmra.mrb[0].mxu0 %v593
        %v1254 = vpop.f32.mrb[0].mxu0
        %v1255 = vadd.f32 %v1030, %v1254
        %v1256 = vpop.f32.mrb[0].mxu0
        %1257 = vmatprep.mubr.f32.mxu0 %v349
        %1258 = vmatmul.mubr.f32.gmra.mrb[0].mxu0 %v595
        %v1259 = vpop.f32.mrb[0].mxu0
        %v1260 = vadd.f32 %v1035, %v1259
        %v1261 = vpop.f32.mrb[0].mxu0
        %1262 = vdwg.mxu0
        %1263 = vmatprep.subr.mxu0 0.0
        %1264 = vmatpush1.msra.mxu0 %v726
        %1265 = vmatprep.subr.mxu0 0.0
        %1266 = vmatpush1.msra.mxu0 %v727
        %1267 = vmatprep.subr.mxu0 0.0
        %1268 = vmatpush1.msra.mxu0 %v728
        %1269 = vmatprep.subr.mxu0 0.0
        %1270 = vmatpush1.msra.mxu0 %v729
        %1271 = vmatprep.subr.mxu0 0.0
        %1272 = vmatpush1.msra.mxu0 %v730
        %1273 = vmatprep.subr.mxu0 0.0
        %1274 = vmatpush1.msra.mxu0 %v731
        %1275 = vmatprep.subr.mxu0 0.0
        %1276 = vmatpush1.msra.mxu0 %v732
        %1277 = vmatprep.subr.mxu0 0.0
        %1278 = vmatpush1.msra.mxu0 %v733
        %1279 = vmatprep.subr.mxu0 0.0
        %1280 = vmatpush1.msra.mxu0 %v734
        %1281 = vmatprep.subr.mxu0 0.0
        %1282 = vmatpush1.msra.mxu0 %v735
        %1283 = vmatprep.subr.mxu0 0.0
        %1284 = vmatpush1.msra.mxu0 %v736
        %1285 = vmatprep.subr.mxu0 0.0
        %1286 = vmatpush1.msra.mxu0 %v737
        %1287 = vmatprep.subr.mxu0 0.0
        %1288 = vmatpush1.msra.mxu0 %v738
        %1289 = vmatprep.subr.mxu0 0.0
        %1290 = vmatpush1.msra.mxu0 %v739
        %1291 = vmatprep.subr.mxu0 0.0
        %1292 = vmatpush1.msra.mxu0 %v740
        %1293 = vmatprep.subr.mxu0 0.0
        %1294 = vmatpush1.msra.mxu0 %v741
        %1295 = vmatprep.subr.mxu0 0.0
        %1296 = vmatpush1.msra.mxu0 %v742
        %1297 = vmatprep.subr.mxu0 0.0
        %1298 = vmatpush1.msra.mxu0 %v743
        %1299 = vmatprep.subr.mxu0 0.0
        %1300 = vmatpush1.msra.mxu0 %v744
        %1301 = vmatprep.subr.mxu0 0.0
        %1302 = vmatpush1.msra.mxu0 %v745
        %1303 = vmatprep.subr.mxu0 0.0
        %1304 = vmatpush1.msra.mxu0 %v746
        %1305 = vmatprep.subr.mxu0 0.0
        %1306 = vmatpush1.msra.mxu0 %v747
        %1307 = vmatprep.subr.mxu0 0.0
        %1308 = vmatpush1.msra.mxu0 %v748
        %1309 = vmatprep.subr.mxu0 0.0
        %1310 = vmatpush1.msra.mxu0 %v749
        %1311 = vmatprep.subr.mxu0 0.0
        %1312 = vmatpush1.msra.mxu0 %v750
        %1313 = vmatprep.subr.mxu0 0.0
        %1314 = vmatpush1.msra.mxu0 %v751
        %1315 = vmatprep.subr.mxu0 0.0
        %1316 = vmatpush1.msra.mxu0 %v752
        %1317 = vmatprep.subr.mxu0 0.0
        %1318 = vmatpush1.msra.mxu0 %v753
        %1319 = vmatprep.subr.mxu0 0.0
        %1320 = vmatpush1.msra.mxu0 %v754
        %1321 = vmatprep.subr.mxu0 0.0
        %1322 = vmatpush1.msra.mxu0 %v755
        %1323 = vmatprep.subr.mxu0 0.0
        %1324 = vmatpush1.msra.mxu0 %v756
        %1325 = vmatprep.subr.mxu0 0.0
        %1326 = vmatpush1.msra.mxu0 %v757
        %1327 = vmatprep.mubr.f32.mxu0 %v523
        %1328 = vmatmul.mubr.f32.gmra.mrb[0].mxu0 %v410
        %v1329 = vpop.f32.mrb[0].mxu0
        %v1330 = vadd.f32 %v1105, %v1329
        %v1331 = vpop.f32.mrb[0].mxu0
        %1332 = vmatprep.mubr.f32.mxu0 %v525
        %1333 = vmatmul.mubr.f32.gmra.mrb[0].mxu0 %v412
        %v1334 = vpop.f32.mrb[0].mxu0
        %v1335 = vadd.f32 %v1110, %v1334
        %v1336 = vpop.f32.mrb[0].mxu0
        %1337 = vmatprep.mubr.f32.mxu0 %v528
        %1338 = vmatmul.mubr.f32.gmra.mrb[0].mxu0 %v415
        %v1339 = vpop.f32.mrb[0].mxu0
        %v1340 = vadd.f32 %v1115, %v1339
        %v1341 = vpop.f32.mrb[0].mxu0
        %1342 = vmatprep.mubr.f32.mxu0 %v530
        %1343 = vmatmul.mubr.f32.gmra.mrb[0].mxu0 %v417
        %v1344 = vpop.f32.mrb[0].mxu0
        %v1345 = vadd.f32 %v1120, %v1344
        %v1346 = vpop.f32.mrb[0].mxu0
        %1347 = vmatprep.mubr.f32.mxu0 %v533
        %1348 = vmatmul.mubr.f32.gmra.mrb[0].mxu0 %v420
        %v1349 = vpop.f32.mrb[0].mxu0
        %v1350 = vadd.f32 %v1125, %v1349
        %v1351 = vpop.f32.mrb[0].mxu0
        %1352 = vmatprep.mubr.f32.mxu0 %v535
        %1353 = vmatmul.mubr.f32.gmra.mrb[0].mxu0 %v422
        %v1354 = vpop.f32.mrb[0].mxu0
        %v1355 = vadd.f32 %v1130, %v1354
        %v1356 = vpop.f32.mrb[0].mxu0
        %1357 = vmatprep.mubr.f32.mxu0 %v538
        %1358 = vmatmul.mubr.f32.gmra.mrb[0].mxu0 %v425
        %v1359 = vpop.f32.mrb[0].mxu0
        %v1360 = vadd.f32 %v1135, %v1359
        %v1361 = vpop.f32.mrb[0].mxu0
        %1362 = vmatprep.mubr.f32.mxu0 %v540
        %1363 = vmatmul.mubr.f32.gmra.mrb[0].mxu0 %v427
        %v1364 = vpop.f32.mrb[0].mxu0
        %v1365 = vadd.f32 %v1140, %v1364
        %v1366 = vpop.f32.mrb[0].mxu0
        %1367 = vmatprep.mubr.f32.mxu0 %v543
        %1368 = vmatmul.mubr.f32.gmra.mrb[0].mxu0 %v430
        %v1369 = vpop.f32.mrb[0].mxu0
        %v1370 = vadd.f32 %v1145, %v1369
        %v1371 = vpop.f32.mrb[0].mxu0
        %1372 = vmatprep.mubr.f32.mxu0 %v545
        %1373 = vmatmul.mubr.f32.gmra.mrb[0].mxu0 %v432
        %v1374 = vpop.f32.mrb[0].mxu0
        %v1375 = vadd.f32 %v1150, %v1374
        %v1376 = vpop.f32.mrb[0].mxu0
        %1377 = vmatprep.mubr.f32.mxu0 %v548
        %1378 = vmatmul.mubr.f32.gmra.mrb[0].mxu0 %v435
        %v1379 = vpop.f32.mrb[0].mxu0
        %v1380 = vadd.f32 %v1155, %v1379
        %v1381 = vpop.f32.mrb[0].mxu0
        %1382 = vmatprep.mubr.f32.mxu0 %v550
        %1383 = vmatmul.mubr.f32.gmra.mrb[0].mxu0 %v437
        %v1384 = vpop.f32.mrb[0].mxu0
        %v1385 = vadd.f32 %v1160, %v1384
        %v1386 = vpop.f32.mrb[0].mxu0
        %1387 = vmatprep.mubr.f32.mxu0 %v553
        %1388 = vmatmul.mubr.f32.gmra.mrb[0].mxu0 %v440
        %v1389 = vpop.f32.mrb[0].mxu0
        %v1390 = vadd.f32 %v1165, %v1389
        %v1391 = vpop.f32.mrb[0].mxu0
        %1392 = vmatprep.mubr.f32.mxu0 %v555
        %1393 = vmatmul.mubr.f32.gmra.mrb[0].mxu0 %v442
        %v1394 = vpop.f32.mrb[0].mxu0
        %v1395 = vadd.f32 %v1170, %v1394
        %v1396 = vpop.f32.mrb[0].mxu0
        %1397 = vmatprep.mubr.f32.mxu0 %v558
        %1398 = vmatmul.mubr.f32.gmra.mrb[0].mxu0 %v445
        %v1399 = vpop.f32.mrb[0].mxu0
        %v1400 = vadd.f32 %v1175, %v1399
        %v1401 = vpop.f32.mrb[0].mxu0
        %1402 = vmatprep.mubr.f32.mxu0 %v560
        %1403 = vmatmul.mubr.f32.gmra.mrb[0].mxu0 %v447
        %v1404 = vpop.f32.mrb[0].mxu0
        %v1405 = vadd.f32 %v1180, %v1404
        %v1406 = vpop.f32.mrb[0].mxu0
        %1407 = vmatprep.mubr.f32.mxu0 %v563
        %1408 = vmatmul.mubr.f32.gmra.mrb[0].mxu0 %v450
        %v1409 = vpop.f32.mrb[0].mxu0
        %v1410 = vadd.f32 %v1185, %v1409
        %v1411 = vpop.f32.mrb[0].mxu0
        %1412 = vmatprep.mubr.f32.mxu0 %v565
        %1413 = vmatmul.mubr.f32.gmra.mrb[0].mxu0 %v452
        %v1414 = vpop.f32.mrb[0].mxu0
        %v1415 = vadd.f32 %v1190, %v1414
        %v1416 = vpop.f32.mrb[0].mxu0
        %1417 = vmatprep.mubr.f32.mxu0 %v568
        %1418 = vmatmul.mubr.f32.gmra.mrb[0].mxu0 %v455
        %v1419 = vpop.f32.mrb[0].mxu0
        %v1420 = vadd.f32 %v1195, %v1419
        %v1421 = vpop.f32.mrb[0].mxu0
        %1422 = vmatprep.mubr.f32.mxu0 %v570
        %1423 = vmatmul.mubr.f32.gmra.mrb[0].mxu0 %v457
        %v1424 = vpop.f32.mrb[0].mxu0
        %v1425 = vadd.f32 %v1200, %v1424
        %v1426 = vpop.f32.mrb[0].mxu0
        %1427 = vmatprep.mubr.f32.mxu0 %v573
        %1428 = vmatmul.mubr.f32.gmra.mrb[0].mxu0 %v460
        %v1429 = vpop.f32.mrb[0].mxu0
        %v1430 = vadd.f32 %v1205, %v1429
        %v1431 = vpop.f32.mrb[0].mxu0
        %1432 = vmatprep.mubr.f32.mxu0 %v575
        %1433 = vmatmul.mubr.f32.gmra.mrb[0].mxu0 %v462
        %v1434 = vpop.f32.mrb[0].mxu0
        %v1435 = vadd.f32 %v1210, %v1434
        %v1436 = vpop.f32.mrb[0].mxu0
        %1437 = vmatprep.mubr.f32.mxu0 %v578
        %1438 = vmatmul.mubr.f32.gmra.mrb[0].mxu0 %v465
        %v1439 = vpop.f32.mrb[0].mxu0
        %v1440 = vadd.f32 %v1215, %v1439
        %v1441 = vpop.f32.mrb[0].mxu0
        %1442 = vmatprep.mubr.f32.mxu0 %v580
        %1443 = vmatmul.mubr.f32.gmra.mrb[0].mxu0 %v467
        %v1444 = vpop.f32.mrb[0].mxu0
        %v1445 = vadd.f32 %v1220, %v1444
        %v1446 = vpop.f32.mrb[0].mxu0
        %1447 = vmatprep.mubr.f32.mxu0 %v583
        %1448 = vmatmul.mubr.f32.gmra.mrb[0].mxu0 %v470
        %v1449 = vpop.f32.mrb[0].mxu0
        %v1450 = vadd.f32 %v1225, %v1449
        %v1451 = vpop.f32.mrb[0].mxu0
        %1452 = vmatprep.mubr.f32.mxu0 %v585
        %1453 = vmatmul.mubr.f32.gmra.mrb[0].mxu0 %v472
        %v1454 = vpop.f32.mrb[0].mxu0
        %v1455 = vadd.f32 %v1230, %v1454
        %v1456 = vpop.f32.mrb[0].mxu0
        %1457 = vmatprep.mubr.f32.mxu0 %v588
        %1458 = vmatmul.mubr.f32.gmra.mrb[0].mxu0 %v475
        %v1459 = vpop.f32.mrb[0].mxu0
        %v1460 = vadd.f32 %v1235, %v1459
        %v1461 = vpop.f32.mrb[0].mxu0
        %1462 = vmatprep.mubr.f32.mxu0 %v590
        %1463 = vmatmul.mubr.f32.gmra.mrb[0].mxu0 %v477
        %v1464 = vpop.f32.mrb[0].mxu0
        %v1465 = vadd.f32 %v1240, %v1464
        %v1466 = vpop.f32.mrb[0].mxu0
        %1467 = vmatprep.mubr.f32.mxu0 %v593
        %1468 = vmatmul.mubr.f32.gmra.mrb[0].mxu0 %v480
        %v1469 = vpop.f32.mrb[0].mxu0
        %v1470 = vadd.f32 %v1245, %v1469
        %v1471 = vpop.f32.mrb[0].mxu0
        %1472 = vmatprep.mubr.f32.mxu0 %v595
        %1473 = vmatmul.mubr.f32.gmra.mrb[0].mxu0 %v482
        %v1474 = vpop.f32.mrb[0].mxu0
        %v1475 = vadd.f32 %v1250, %v1474
        %v1476 = vpop.f32.mrb[0].mxu0
        %1477 = vmatprep.mubr.f32.mxu0 %v640
        %1478 = vmatmul.mubr.f32.gmra.mrb[0].mxu0 %v633
        %v1479 = vpop.f32.mrb[0].mxu0
        %v1480 = vadd.f32 %v1255, %v1479
        %v1481 = vpop.f32.mrb[0].mxu0
        %1482 = vmatprep.mubr.f32.mxu0 %v642
        %1483 = vmatmul.mubr.f32.gmra.mrb[0].mxu0 %v635
        %v1484 = vpop.f32.mrb[0].mxu0
        %v1485 = vadd.f32 %v1260, %v1484
        %v1486 = vpop.f32.mrb[0].mxu0
        %1487 = vdwg.mxu0
        %1488 = vmatprep.subr.mxu0 0.0
        %1489 = vmatpush1.msra.mxu0 %v758
        %1490 = vmatprep.subr.mxu0 0.0
        %1491 = vmatpush1.msra.mxu0 %v759
        %1492 = vmatprep.subr.mxu0 0.0
        %1493 = vmatpush1.msra.mxu0 %v760
        %1494 = vmatprep.subr.mxu0 0.0
        %1495 = vmatpush1.msra.mxu0 %v761
        %1496 = vmatprep.subr.mxu0 0.0
        %1497 = vmatpush1.msra.mxu0 %v762
        %1498 = vmatprep.subr.mxu0 0.0
        %1499 = vmatpush1.msra.mxu0 %v763
        %1500 = vmatprep.subr.mxu0 0.0
        %1501 = vmatpush1.msra.mxu0 %v764
        %1502 = vmatprep.subr.mxu0 0.0
        %1503 = vmatpush1.msra.mxu0 %v765
        %1504 = vmatprep.subr.mxu0 0.0
        %1505 = vmatpush1.msra.mxu0 %v766
        %1506 = vmatprep.subr.mxu0 0.0
        %1507 = vmatpush1.msra.mxu0 %v767
        %1508 = vmatprep.subr.mxu0 0.0
        %1509 = vmatpush1.msra.mxu0 %v768
        %1510 = vmatprep.subr.mxu0 0.0
        %1511 = vmatpush1.msra.mxu0 %v769
        %1512 = vmatprep.subr.mxu0 0.0
        %1513 = vmatpush1.msra.mxu0 %v770
        %1514 = vmatprep.subr.mxu0 0.0
        %1515 = vmatpush1.msra.mxu0 %v771
        %1516 = vmatprep.subr.mxu0 0.0
        %1517 = vmatpush1.msra.mxu0 %v772
        %1518 = vmatprep.subr.mxu0 0.0
        %1519 = vmatpush1.msra.mxu0 %v773
        %1520 = vmatprep.subr.mxu0 0.0
        %1521 = vmatpush1.msra.mxu0 %v774
        %1522 = vmatprep.subr.mxu0 0.0
        %1523 = vmatpush1.msra.mxu0 %v775
        %1524 = vmatprep.subr.mxu0 0.0
        %1525 = vmatpush1.msra.mxu0 %v776
        %1526 = vmatprep.subr.mxu0 0.0
        %1527 = vmatpush1.msra.mxu0 %v777
        %1528 = vmatprep.subr.mxu0 0.0
        %1529 = vmatpush1.msra.mxu0 %v778
        %1530 = vmatprep.subr.mxu0 0.0
        %1531 = vmatpush1.msra.mxu0 %v779
        %1532 = vmatprep.subr.mxu0 0.0
        %1533 = vmatpush1.msra.mxu0 %v780
        %1534 = vmatprep.subr.mxu0 0.0
        %1535 = vmatpush1.msra.mxu0 %v781
        %1536 = vmatprep.subr.mxu0 0.0
        %1537 = vmatpush1.msra.mxu0 %v782
        %1538 = vmatprep.subr.mxu0 0.0
        %1539 = vmatpush1.msra.mxu0 %v783
        %1540 = vmatprep.subr.mxu0 0.0
        %1541 = vmatpush1.msra.mxu0 %v784
        %1542 = vmatprep.subr.mxu0 0.0
        %1543 = vmatpush1.msra.mxu0 %v785
        %1544 = vmatprep.subr.mxu0 0.0
        %1545 = vmatpush1.msra.mxu0 %v786
        %1546 = vmatprep.subr.mxu0 0.0
        %1547 = vmatpush1.msra.mxu0 %v787
        %1548 = vmatprep.subr.mxu0 0.0
        %1549 = vmatpush1.msra.mxu0 %v788
        %1550 = vmatprep.subr.mxu0 0.0
        %1551 = vmatpush1.msra.mxu0 %v789
        %1552 = vmatprep.mubr.f32.mxu0 %v415
        %1553 = vmatmul.mubr.f32.gmra.mrb[0].mxu0 %v306
        %v1554 = vpop.f32.mrb[0].mxu0
        %v1555 = vadd.f32 %v1330, %v1554
        %v1556 = vpop.f32.mrb[0].mxu0
        %1557 = vmatprep.mubr.f32.mxu0 %v417
        %1558 = vmatmul.mubr.f32.gmra.mrb[0].mxu0 %v307
        %v1559 = vpop.f32.mrb[0].mxu0
        %v1560 = vadd.f32 %v1335, %v1559
        %v1561 = vpop.f32.mrb[0].mxu0
        %1562 = vmatprep.mubr.f32.mxu0 %v420
        %1563 = vmatmul.mubr.f32.gmra.mrb[0].mxu0 %v309
        %v1564 = vpop.f32.mrb[0].mxu0
        %v1565 = vadd.f32 %v1340, %v1564
        %v1566 = vpop.f32.mrb[0].mxu0
        %1567 = vmatprep.mubr.f32.mxu0 %v422
        %1568 = vmatmul.mubr.f32.gmra.mrb[0].mxu0 %v310
        %v1569 = vpop.f32.mrb[0].mxu0
        %v1570 = vadd.f32 %v1345, %v1569
        %v1571 = vpop.f32.mrb[0].mxu0
        %1572 = vmatprep.mubr.f32.mxu0 %v425
        %1573 = vmatmul.mubr.f32.gmra.mrb[0].mxu0 %v312
        %v1574 = vpop.f32.mrb[0].mxu0
        %v1575 = vadd.f32 %v1350, %v1574
        %v1576 = vpop.f32.mrb[0].mxu0
        %1577 = vmatprep.mubr.f32.mxu0 %v427
        %1578 = vmatmul.mubr.f32.gmra.mrb[0].mxu0 %v313
        %v1579 = vpop.f32.mrb[0].mxu0
        %v1580 = vadd.f32 %v1355, %v1579
        %v1581 = vpop.f32.mrb[0].mxu0
        %1582 = vmatprep.mubr.f32.mxu0 %v430
        %1583 = vmatmul.mubr.f32.gmra.mrb[0].mxu0 %v315
        %v1584 = vpop.f32.mrb[0].mxu0
        %v1585 = vadd.f32 %v1360, %v1584
        %v1586 = vpop.f32.mrb[0].mxu0
        %1587 = vmatprep.mubr.f32.mxu0 %v432
        %1588 = vmatmul.mubr.f32.gmra.mrb[0].mxu0 %v316
        %v1589 = vpop.f32.mrb[0].mxu0
        %v1590 = vadd.f32 %v1365, %v1589
        %v1591 = vpop.f32.mrb[0].mxu0
        %1592 = vmatprep.mubr.f32.mxu0 %v435
        %1593 = vmatmul.mubr.f32.gmra.mrb[0].mxu0 %v318
        %v1594 = vpop.f32.mrb[0].mxu0
        %v1595 = vadd.f32 %v1370, %v1594
        %v1596 = vpop.f32.mrb[0].mxu0
        %1597 = vmatprep.mubr.f32.mxu0 %v437
        %1598 = vmatmul.mubr.f32.gmra.mrb[0].mxu0 %v319
        %v1599 = vpop.f32.mrb[0].mxu0
        %v1600 = vadd.f32 %v1375, %v1599
        %v1601 = vpop.f32.mrb[0].mxu0
        %1602 = vmatprep.mubr.f32.mxu0 %v440
        %1603 = vmatmul.mubr.f32.gmra.mrb[0].mxu0 %v321
        %v1604 = vpop.f32.mrb[0].mxu0
        %v1605 = vadd.f32 %v1380, %v1604
        %v1606 = vpop.f32.mrb[0].mxu0
        %1607 = vmatprep.mubr.f32.mxu0 %v442
        %1608 = vmatmul.mubr.f32.gmra.mrb[0].mxu0 %v322
        %v1609 = vpop.f32.mrb[0].mxu0
        %v1610 = vadd.f32 %v1385, %v1609
        %v1611 = vpop.f32.mrb[0].mxu0
        %1612 = vmatprep.mubr.f32.mxu0 %v445
        %1613 = vmatmul.mubr.f32.gmra.mrb[0].mxu0 %v324
        %v1614 = vpop.f32.mrb[0].mxu0
        %v1615 = vadd.f32 %v1390, %v1614
        %v1616 = vpop.f32.mrb[0].mxu0
        %1617 = vmatprep.mubr.f32.mxu0 %v447
        %1618 = vmatmul.mubr.f32.gmra.mrb[0].mxu0 %v325
        %v1619 = vpop.f32.mrb[0].mxu0
        %v1620 = vadd.f32 %v1395, %v1619
        %v1621 = vpop.f32.mrb[0].mxu0
        %1622 = vmatprep.mubr.f32.mxu0 %v450
        %1623 = vmatmul.mubr.f32.gmra.mrb[0].mxu0 %v327
        %v1624 = vpop.f32.mrb[0].mxu0
        %v1625 = vadd.f32 %v1400, %v1624
        %v1626 = vpop.f32.mrb[0].mxu0
        %1627 = vmatprep.mubr.f32.mxu0 %v452
        %1628 = vmatmul.mubr.f32.gmra.mrb[0].mxu0 %v328
        %v1629 = vpop.f32.mrb[0].mxu0
        %v1630 = vadd.f32 %v1405, %v1629
        %v1631 = vpop.f32.mrb[0].mxu0
        %1632 = vmatprep.mubr.f32.mxu0 %v455
        %1633 = vmatmul.mubr.f32.gmra.mrb[0].mxu0 %v330
        %v1634 = vpop.f32.mrb[0].mxu0
        %v1635 = vadd.f32 %v1410, %v1634
        %v1636 = vpop.f32.mrb[0].mxu0
        %1637 = vmatprep.mubr.f32.mxu0 %v457
        %1638 = vmatmul.mubr.f32.gmra.mrb[0].mxu0 %v331
        %v1639 = vpop.f32.mrb[0].mxu0
        %v1640 = vadd.f32 %v1415, %v1639
        %v1641 = vpop.f32.mrb[0].mxu0
        %1642 = vmatprep.mubr.f32.mxu0 %v460
        %1643 = vmatmul.mubr.f32.gmra.mrb[0].mxu0 %v333
        %v1644 = vpop.f32.mrb[0].mxu0
        %v1645 = vadd.f32 %v1420, %v1644
        %v1646 = vpop.f32.mrb[0].mxu0
        %1647 = vmatprep.mubr.f32.mxu0 %v462
        %1648 = vmatmul.mubr.f32.gmra.mrb[0].mxu0 %v334
        %v1649 = vpop.f32.mrb[0].mxu0
        %v1650 = vadd.f32 %v1425, %v1649
        %v1651 = vpop.f32.mrb[0].mxu0
        %1652 = vmatprep.mubr.f32.mxu0 %v465
        %1653 = vmatmul.mubr.f32.gmra.mrb[0].mxu0 %v336
        %v1654 = vpop.f32.mrb[0].mxu0
        %v1655 = vadd.f32 %v1430, %v1654
        %v1656 = vpop.f32.mrb[0].mxu0
        %1657 = vmatprep.mubr.f32.mxu0 %v467
        %1658 = vmatmul.mubr.f32.gmra.mrb[0].mxu0 %v337
        %v1659 = vpop.f32.mrb[0].mxu0
        %v1660 = vadd.f32 %v1435, %v1659
        %v1661 = vpop.f32.mrb[0].mxu0
        %1662 = vmatprep.mubr.f32.mxu0 %v470
        %1663 = vmatmul.mubr.f32.gmra.mrb[0].mxu0 %v339
        %v1664 = vpop.f32.mrb[0].mxu0
        %v1665 = vadd.f32 %v1440, %v1664
        %v1666 = vpop.f32.mrb[0].mxu0
        %1667 = vmatprep.mubr.f32.mxu0 %v472
        %1668 = vmatmul.mubr.f32.gmra.mrb[0].mxu0 %v340
        %v1669 = vpop.f32.mrb[0].mxu0
        %v1670 = vadd.f32 %v1445, %v1669
        %v1671 = vpop.f32.mrb[0].mxu0
        %1672 = vmatprep.mubr.f32.mxu0 %v475
        %1673 = vmatmul.mubr.f32.gmra.mrb[0].mxu0 %v342
        %v1674 = vpop.f32.mrb[0].mxu0
        %v1675 = vadd.f32 %v1450, %v1674
        %v1676 = vpop.f32.mrb[0].mxu0
        %1677 = vmatprep.mubr.f32.mxu0 %v477
        %1678 = vmatmul.mubr.f32.gmra.mrb[0].mxu0 %v343
        %v1679 = vpop.f32.mrb[0].mxu0
        %v1680 = vadd.f32 %v1455, %v1679
        %v1681 = vpop.f32.mrb[0].mxu0
        %1682 = vmatprep.mubr.f32.mxu0 %v480
        %1683 = vmatmul.mubr.f32.gmra.mrb[0].mxu0 %v345
        %v1684 = vpop.f32.mrb[0].mxu0
        %v1685 = vadd.f32 %v1460, %v1684
        %v1686 = vpop.f32.mrb[0].mxu0
        %1687 = vmatprep.mubr.f32.mxu0 %v482
        %1688 = vmatmul.mubr.f32.gmra.mrb[0].mxu0 %v346
        %v1689 = vpop.f32.mrb[0].mxu0
        %v1690 = vadd.f32 %v1465, %v1689
        %v1691 = vpop.f32.mrb[0].mxu0
        %1692 = vmatprep.mubr.f32.mxu0 %v633
        %1693 = vmatmul.mubr.f32.gmra.mrb[0].mxu0 %v348
        %v1694 = vpop.f32.mrb[0].mxu0
        %v1695 = vadd.f32 %v1470, %v1694
        %v1696 = vpop.f32.mrb[0].mxu0
        %1697 = vmatprep.mubr.f32.mxu0 %v635
        %1698 = vmatmul.mubr.f32.gmra.mrb[0].mxu0 %v349
        %v1699 = vpop.f32.mrb[0].mxu0
        %v1700 = vadd.f32 %v1475, %v1699
        %v1701 = vpop.f32.mrb[0].mxu0
        %1702 = vmatprep.mubr.f32.mxu0 %v650
        %1703 = vmatmul.mubr.f32.gmra.mrb[0].mxu0 %v351
        %v1704 = vpop.f32.mrb[0].mxu0
        %v1705 = vadd.f32 %v1480, %v1704
        %v1706 = vpop.f32.mrb[0].mxu0
        %1707 = vmatprep.mubr.f32.mxu0 %v652
        %1708 = vmatmul.mubr.f32.gmra.mrb[0].mxu0 %v352
        %v1709 = vpop.f32.mrb[0].mxu0
        %v1710 = vadd.f32 %v1485, %v1709
        %v1711 = vpop.f32.mrb[0].mxu0
        %1712 = vdwg.mxu0
        %1713 = vmatprep.subr.mxu0 0.0
        %1714 = vmatpush1.msra.mxu0 %v790
        %1715 = vmatprep.subr.mxu0 0.0
        %1716 = vmatpush1.msra.mxu0 %v791
        %1717 = vmatprep.subr.mxu0 0.0
        %1718 = vmatpush1.msra.mxu0 %v792
        %1719 = vmatprep.subr.mxu0 0.0
        %1720 = vmatpush1.msra.mxu0 %v793
        %1721 = vmatprep.subr.mxu0 0.0
        %1722 = vmatpush1.msra.mxu0 %v794
        %1723 = vmatprep.subr.mxu0 0.0
        %1724 = vmatpush1.msra.mxu0 %v795
        %1725 = vmatprep.subr.mxu0 0.0
        %1726 = vmatpush1.msra.mxu0 %v796
        %1727 = vmatprep.subr.mxu0 0.0
        %1728 = vmatpush1.msra.mxu0 %v797
        %1729 = vmatprep.subr.mxu0 0.0
        %1730 = vmatpush1.msra.mxu0 %v798
        %1731 = vmatprep.subr.mxu0 0.0
        %1732 = vmatpush1.msra.mxu0 %v799
        %1733 = vmatprep.subr.mxu0 0.0
        %1734 = vmatpush1.msra.mxu0 %v800
        %1735 = vmatprep.subr.mxu0 0.0
        %1736 = vmatpush1.msra.mxu0 %v801
        %1737 = vmatprep.subr.mxu0 0.0
        %1738 = vmatpush1.msra.mxu0 %v802
        %1739 = vmatprep.subr.mxu0 0.0
        %1740 = vmatpush1.msra.mxu0 %v803
        %1741 = vmatprep.subr.mxu0 0.0
        %1742 = vmatpush1.msra.mxu0 %v804
        %1743 = vmatprep.subr.mxu0 0.0
        %1744 = vmatpush1.msra.mxu0 %v805
        %1745 = vmatprep.subr.mxu0 0.0
        %1746 = vmatpush1.msra.mxu0 0.0
        %1747 = vmatprep.subr.mxu0 0.0
        %1748 = vmatpush1.msra.mxu0 0.0
        %1749 = vmatprep.subr.mxu0 0.0
        %1750 = vmatpush1.msra.mxu0 0.0
        %1751 = vmatprep.subr.mxu0 0.0
        %1752 = vmatpush1.msra.mxu0 0.0
        %1753 = vmatprep.subr.mxu0 0.0
        %1754 = vmatpush1.msra.mxu0 0.0
        %1755 = vmatprep.subr.mxu0 0.0
        %1756 = vmatpush1.msra.mxu0 0.0
        %1757 = vmatprep.subr.mxu0 0.0
        %1758 = vmatpush1.msra.mxu0 0.0
        %1759 = vmatprep.subr.mxu0 0.0
        %1760 = vmatpush1.msra.mxu0 0.0
        %1761 = vmatprep.subr.mxu0 0.0
        %1762 = vmatpush1.msra.mxu0 0.0
        %1763 = vmatprep.subr.mxu0 0.0
        %1764 = vmatpush1.msra.mxu0 0.0
        %1765 = vmatprep.subr.mxu0 0.0
        %1766 = vmatpush1.msra.mxu0 0.0
        %1767 = vmatprep.subr.mxu0 0.0
        %1768 = vmatpush1.msra.mxu0 0.0
        %1769 = vmatprep.subr.mxu0 0.0
        %1770 = vmatpush1.msra.mxu0 0.0
        %1771 = vmatprep.subr.mxu0 0.0
        %1772 = vmatpush1.msra.mxu0 0.0
        %1773 = vmatprep.subr.mxu0 0.0
        %1774 = vmatpush1.msra.mxu0 0.0
        %1775 = vmatprep.subr.mxu0 0.0
        %1776 = vmatpush1.msra.mxu0 0.0
        %1777 = vmatprep.mubr.f32.mxu0 0.0
        %1778 = vmatmul.mubr.f32.gmra.mrb[0].mxu0 %v528
        %v1779 = vpop.f32.mrb[0].mxu0
        %v1780 = vadd.f32 %v1555, %v1779
        %v1781 = vpop.f32.mrb[0].mxu0
        %1782 = vmatprep.mubr.f32.mxu0 0.0
        %1783 = vmatmul.mubr.f32.gmra.mrb[0].mxu0 %v530
        %v1784 = vpop.f32.mrb[0].mxu0
        %v1785 = vadd.f32 %v1560, %v1784
        %v1786 = vpop.f32.mrb[0].mxu0
        %1787 = vmatprep.mubr.f32.mxu0 0.0
        %1788 = vmatmul.mubr.f32.gmra.mrb[0].mxu0 %v533
        %v1789 = vpop.f32.mrb[0].mxu0
        %v1790 = vadd.f32 %v1565, %v1789
        %v1791 = vpop.f32.mrb[0].mxu0
        %1792 = vmatprep.mubr.f32.mxu0 0.0
        %1793 = vmatmul.mubr.f32.gmra.mrb[0].mxu0 %v535
        %v1794 = vpop.f32.mrb[0].mxu0
        %v1795 = vadd.f32 %v1570, %v1794
        %v1796 = vpop.f32.mrb[0].mxu0
        %1797 = vmatprep.mubr.f32.mxu0 0.0
        %1798 = vmatmul.mubr.f32.gmra.mrb[0].mxu0 %v538
        %v1799 = vpop.f32.mrb[0].mxu0
        %v1800 = vadd.f32 %v1575, %v1799
        %v1801 = vpop.f32.mrb[0].mxu0
        %1802 = vmatprep.mubr.f32.mxu0 0.0
        %1803 = vmatmul.mubr.f32.gmra.mrb[0].mxu0 %v540
        %v1804 = vpop.f32.mrb[0].mxu0
        %v1805 = vadd.f32 %v1580, %v1804
        %v1806 = vpop.f32.mrb[0].mxu0
        %1807 = vmatprep.mubr.f32.mxu0 0.0
        %1808 = vmatmul.mubr.f32.gmra.mrb[0].mxu0 %v543
        %v1809 = vpop.f32.mrb[0].mxu0
        %v1810 = vadd.f32 %v1585, %v1809
        %v1811 = vpop.f32.mrb[0].mxu0
        %1812 = vmatprep.mubr.f32.mxu0 0.0
        %1813 = vmatmul.mubr.f32.gmra.mrb[0].mxu0 %v545
        %v1814 = vpop.f32.mrb[0].mxu0
        %v1815 = vadd.f32 %v1590, %v1814
        %v1816 = vpop.f32.mrb[0].mxu0
        %1817 = vmatprep.mubr.f32.mxu0 0.0
        %1818 = vmatmul.mubr.f32.gmra.mrb[0].mxu0 %v548
        %v1819 = vpop.f32.mrb[0].mxu0
        %v1820 = vadd.f32 %v1595, %v1819
        %v1821 = vpop.f32.mrb[0].mxu0
        %1822 = vmatprep.mubr.f32.mxu0 0.0
        %1823 = vmatmul.mubr.f32.gmra.mrb[0].mxu0 %v550
        %v1824 = vpop.f32.mrb[0].mxu0
        %v1825 = vadd.f32 %v1600, %v1824
        %v1826 = vpop.f32.mrb[0].mxu0
        %1827 = vmatprep.mubr.f32.mxu0 0.0
        %1828 = vmatmul.mubr.f32.gmra.mrb[0].mxu0 %v553
        %v1829 = vpop.f32.mrb[0].mxu0
        %v1830 = vadd.f32 %v1605, %v1829
        %v1831 = vpop.f32.mrb[0].mxu0
        %1832 = vmatprep.mubr.f32.mxu0 0.0
        %1833 = vmatmul.mubr.f32.gmra.mrb[0].mxu0 %v555
        %v1834 = vpop.f32.mrb[0].mxu0
        %v1835 = vadd.f32 %v1610, %v1834
        %v1836 = vpop.f32.mrb[0].mxu0
        %1837 = vmatprep.mubr.f32.mxu0 0.0
        %1838 = vmatmul.mubr.f32.gmra.mrb[0].mxu0 %v558
        %v1839 = vpop.f32.mrb[0].mxu0
        %v1840 = vadd.f32 %v1615, %v1839
        %v1841 = vpop.f32.mrb[0].mxu0
        %1842 = vmatprep.mubr.f32.mxu0 0.0
        %1843 = vmatmul.mubr.f32.gmra.mrb[0].mxu0 %v560
        %v1844 = vpop.f32.mrb[0].mxu0
        %v1845 = vadd.f32 %v1620, %v1844
        %v1846 = vpop.f32.mrb[0].mxu0
        %1847 = vmatprep.mubr.f32.mxu0 0.0
        %1848 = vmatmul.mubr.f32.gmra.mrb[0].mxu0 %v563
        %v1849 = vpop.f32.mrb[0].mxu0
        %v1850 = vadd.f32 %v1625, %v1849
        %v1851 = vpop.f32.mrb[0].mxu0
        %1852 = vmatprep.mubr.f32.mxu0 0.0
        %1853 = vmatmul.mubr.f32.gmra.mrb[0].mxu0 %v565
        %v1854 = vpop.f32.mrb[0].mxu0
        %v1855 = vadd.f32 %v1630, %v1854
        %v1856 = vpop.f32.mrb[0].mxu0
        %1857 = vmatprep.mubr.f32.mxu0 0.0
        %1858 = vmatmul.mubr.f32.gmra.mrb[0].mxu0 %v568
        %v1859 = vpop.f32.mrb[0].mxu0
        %v1860 = vadd.f32 %v1635, %v1859
        %v1861 = vpop.f32.mrb[0].mxu0
        %1862 = vmatprep.mubr.f32.mxu0 0.0
        %1863 = vmatmul.mubr.f32.gmra.mrb[0].mxu0 %v570
        %v1864 = vpop.f32.mrb[0].mxu0
        %v1865 = vadd.f32 %v1640, %v1864
        %v1866 = vpop.f32.mrb[0].mxu0
        %1867 = vmatprep.mubr.f32.mxu0 0.0
        %1868 = vmatmul.mubr.f32.gmra.mrb[0].mxu0 %v573
        %v1869 = vpop.f32.mrb[0].mxu0
        %v1870 = vadd.f32 %v1645, %v1869
        %v1871 = vpop.f32.mrb[0].mxu0
        %1872 = vmatprep.mubr.f32.mxu0 0.0
        %1873 = vmatmul.mubr.f32.gmra.mrb[0].mxu0 %v575
        %v1874 = vpop.f32.mrb[0].mxu0
        %v1875 = vadd.f32 %v1650, %v1874
        %v1876 = vpop.f32.mrb[0].mxu0
        %1877 = vmatprep.mubr.f32.mxu0 0.0
        %1878 = vmatmul.mubr.f32.gmra.mrb[0].mxu0 %v578
        %v1879 = vpop.f32.mrb[0].mxu0
        %v1880 = vadd.f32 %v1655, %v1879
        %v1881 = vpop.f32.mrb[0].mxu0
        %1882 = vmatprep.mubr.f32.mxu0 0.0
        %1883 = vmatmul.mubr.f32.gmra.mrb[0].mxu0 %v580
        %v1884 = vpop.f32.mrb[0].mxu0
        %v1885 = vadd.f32 %v1660, %v1884
        %v1886 = vpop.f32.mrb[0].mxu0
        %1887 = vmatprep.mubr.f32.mxu0 0.0
        %1888 = vmatmul.mubr.f32.gmra.mrb[0].mxu0 %v583
        %v1889 = vpop.f32.mrb[0].mxu0
        %v1890 = vadd.f32 %v1665, %v1889
        %v1891 = vpop.f32.mrb[0].mxu0
        %1892 = vmatprep.mubr.f32.mxu0 0.0
        %1893 = vmatmul.mubr.f32.gmra.mrb[0].mxu0 %v585
        %v1894 = vpop.f32.mrb[0].mxu0
        %v1895 = vadd.f32 %v1670, %v1894
        %v1896 = vpop.f32.mrb[0].mxu0
        %1897 = vmatprep.mubr.f32.mxu0 0.0
        %1898 = vmatmul.mubr.f32.gmra.mrb[0].mxu0 %v588
        %v1899 = vpop.f32.mrb[0].mxu0
        %v1900 = vadd.f32 %v1675, %v1899
        %v1901 = vpop.f32.mrb[0].mxu0
        %1902 = vmatprep.mubr.f32.mxu0 0.0
        %1903 = vmatmul.mubr.f32.gmra.mrb[0].mxu0 %v590
        %v1904 = vpop.f32.mrb[0].mxu0
        %v1905 = vadd.f32 %v1680, %v1904
        %v1906 = vpop.f32.mrb[0].mxu0
        %1907 = vmatprep.mubr.f32.mxu0 0.0
        %1908 = vmatmul.mubr.f32.gmra.mrb[0].mxu0 %v593
        %v1909 = vpop.f32.mrb[0].mxu0
        %v1910 = vadd.f32 %v1685, %v1909
        %v1911 = vpop.f32.mrb[0].mxu0
        %1912 = vmatprep.mubr.f32.mxu0 0.0
        %1913 = vmatmul.mubr.f32.gmra.mrb[0].mxu0 %v595
        %v1914 = vpop.f32.mrb[0].mxu0
        %v1915 = vadd.f32 %v1690, %v1914
        %v1916 = vpop.f32.mrb[0].mxu0
        %1917 = vmatprep.mubr.f32.mxu0 0.0
        %1918 = vmatmul.mubr.f32.gmra.mrb[0].mxu0 %v640
        %v1919 = vpop.f32.mrb[0].mxu0
        %v1920 = vadd.f32 %v1695, %v1919
        %v1921 = vpop.f32.mrb[0].mxu0
        %1922 = vmatprep.mubr.f32.mxu0 0.0
        %1923 = vmatmul.mubr.f32.gmra.mrb[0].mxu0 %v642
        %v1924 = vpop.f32.mrb[0].mxu0
        %v1925 = vadd.f32 %v1700, %v1924
        %v1926 = vpop.f32.mrb[0].mxu0
        %1927 = vmatprep.mubr.f32.mxu0 0.0
        %1928 = vmatmul.mubr.f32.gmra.mrb[0].mxu0 %v657
        %v1929 = vpop.f32.mrb[0].mxu0
        %v1930 = vadd.f32 %v1705, %v1929
        %v1931 = vpop.f32.mrb[0].mxu0
        %1932 = vmatprep.mubr.f32.mxu0 0.0
        %1933 = vmatmul.mubr.f32.gmra.mrb[0].mxu0 %v659
        %v1934 = vpop.f32.mrb[0].mxu0
        %v1935 = vadd.f32 %v1710, %v1934
        %v1936 = vpop.f32.mrb[0].mxu0
        %1937 = vdwg.mxu0
        %v1938 = vsub.f32 0.0, %v1780
        %v1939 = vsub.f32 0.0, %v1785
        %v1940 = vsub.f32 0.0, %v1790
        %v1941 = vsub.f32 0.0, %v1795
        %v1942 = vsub.f32 0.0, %v1800
        %v1943 = vsub.f32 0.0, %v1805
        %v1944 = vsub.f32 0.0, %v1810
        %v1945 = vsub.f32 0.0, %v1815
        %v1946 = vsub.f32 0.0, %v1820
        %v1947 = vsub.f32 0.0, %v1825
        %v1948 = vsub.f32 0.0, %v1830
        %v1949 = vsub.f32 0.0, %v1835
        %v1950 = vsub.f32 0.0, %v1840
        %v1951 = vsub.f32 0.0, %v1845
        %v1952 = vsub.f32 0.0, %v1850
        %v1953 = vsub.f32 0.0, %v1855
        %v1954 = vsub.f32 0.0, %v1860
        %v1955 = vsub.f32 0.0, %v1865
        %v1956 = vsub.f32 0.0, %v1870
        %v1957 = vsub.f32 0.0, %v1875
        %v1958 = vsub.f32 0.0, %v1880
        %v1959 = vsub.f32 0.0, %v1885
        %v1960 = vsub.f32 0.0, %v1890
        %v1961 = vsub.f32 0.0, %v1895
        %v1962 = vsub.f32 0.0, %v1900
        %v1963 = vsub.f32 0.0, %v1905
        %v1964 = vsub.f32 0.0, %v1910
        %v1965 = vsub.f32 0.0, %v1915
        %v1966 = vsub.f32 0.0, %v1920
        %v1967 = vsub.f32 0.0, %v1925
        %v1968 = vsub.f32 0.0, %v1930
        %v1969 = vsub.f32 0.0, %v1935
        %v1970 = vmul.f32 %v1938, 1.442695
        %v1971 = vpow.pop %v1970
        %v1972 = vmul.f32 %v1939, 1.442695
        %v1973 = vpow.pop %v1972
        %v1974 = vmul.f32 %v1940, 1.442695
        %v1975 = vpow.pop %v1974
        %v1976 = vmul.f32 %v1941, 1.442695
        %v1977 = vpow.pop %v1976
        %v1978 = vmul.f32 %v1942, 1.442695
        %v1979 = vpow.pop %v1978
        %v1980 = vmul.f32 %v1943, 1.442695
        %v1981 = vpow.pop %v1980
        %v1982 = vmul.f32 %v1944, 1.442695
        %v1983 = vpow.pop %v1982
        %v1984 = vmul.f32 %v1945, 1.442695
        %v1985 = vpow.pop %v1984
        %v1986 = vmul.f32 %v1946, 1.442695
        %v1987 = vpow.pop %v1986
        %v1988 = vmul.f32 %v1947, 1.442695
        %v1989 = vpow.pop %v1988
        %v1990 = vmul.f32 %v1948, 1.442695
        %v1991 = vpow.pop %v1990
        %v1992 = vmul.f32 %v1949, 1.442695
        %v1993 = vpow.pop %v1992
        %v1994 = vmul.f32 %v1950, 1.442695
        %v1995 = vpow.pop %v1994
        %v1996 = vmul.f32 %v1951, 1.442695
        %v1997 = vpow.pop %v1996
        %v1998 = vmul.f32 %v1952, 1.442695
        %v1999 = vpow.pop %v1998
        %v2000 = vmul.f32 %v1953, 1.442695
        %v2001 = vpow.pop %v2000
        %v2002 = vmul.f32 %v1954, 1.442695
        %v2003 = vpow.pop %v2002
        %v2004 = vmul.f32 %v1955, 1.442695
        %v2005 = vpow.pop %v2004
        %v2006 = vmul.f32 %v1956, 1.442695
        %v2007 = vpow.pop %v2006
        %v2008 = vmul.f32 %v1957, 1.442695
        %v2009 = vpow.pop %v2008
        %v2010 = vmul.f32 %v1958, 1.442695
        %v2011 = vpow.pop %v2010
        %v2012 = vmul.f32 %v1959, 1.442695
        %v2013 = vpow.pop %v2012
        %v2014 = vmul.f32 %v1960, 1.442695
        %v2015 = vpow.pop %v2014
        %v2016 = vmul.f32 %v1961, 1.442695
        %v2017 = vpow.pop %v2016
        %v2018 = vmul.f32 %v1962, 1.442695
        %v2019 = vpow.pop %v2018
        %v2020 = vmul.f32 %v1963, 1.442695
        %v2021 = vpow.pop %v2020
        %v2022 = vmul.f32 %v1964, 1.442695
        %v2023 = vpow.pop %v2022
        %v2024 = vmul.f32 %v1965, 1.442695
        %v2025 = vpow.pop %v2024
        %v2026 = vmul.f32 %v1966, 1.442695
        %v2027 = vpow.pop %v2026
        %v2028 = vmul.f32 %v1967, 1.442695
        %v2029 = vpow.pop %v2028
        %v2030 = vmul.f32 %v1968, 1.442695
        %v2031 = vpow.pop %v2030
        %v2032 = vmul.f32 %v1969, 1.442695
        %v2033 = vpow.pop %v2032
        %v2034 = vadd.f32 %v1971, 1.0
        %v2035 = vadd.f32 %v1973, 1.0
        %v2036 = vadd.f32 %v1975, 1.0
        %v2037 = vadd.f32 %v1977, 1.0
        %v2038 = vadd.f32 %v1979, 1.0
        %v2039 = vadd.f32 %v1981, 1.0
        %v2040 = vadd.f32 %v1983, 1.0
        %v2041 = vadd.f32 %v1985, 1.0
        %v2042 = vadd.f32 %v1987, 1.0
        %v2043 = vadd.f32 %v1989, 1.0
        %v2044 = vadd.f32 %v1991, 1.0
        %v2045 = vadd.f32 %v1993, 1.0
        %v2046 = vadd.f32 %v1995, 1.0
        %v2047 = vadd.f32 %v1997, 1.0
        %v2048 = vadd.f32 %v1999, 1.0
        %v2049 = vadd.f32 %v2001, 1.0
        %v2050 = vadd.f32 %v2003, 1.0
        %v2051 = vadd.f32 %v2005, 1.0
        %v2052 = vadd.f32 %v2007, 1.0
        %v2053 = vadd.f32 %v2009, 1.0
        %v2054 = vadd.f32 %v2011, 1.0
        %v2055 = vadd.f32 %v2013, 1.0
        %v2056 = vadd.f32 %v2015, 1.0
        %v2057 = vadd.f32 %v2017, 1.0
        %v2058 = vadd.f32 %v2019, 1.0
        %v2059 = vadd.f32 %v2021, 1.0
        %v2060 = vadd.f32 %v2023, 1.0
        %v2061 = vadd.f32 %v2025, 1.0
        %v2062 = vadd.f32 %v2027, 1.0
        %v2063 = vadd.f32 %v2029, 1.0
        %v2064 = vadd.f32 %v2031, 1.0
        %v2065 = vadd.f32 %v2033, 1.0
        %v2066 = vrcp.pop %v2034
        %v2067 = vrcp.pop %v2035
        %v2068 = vrcp.pop %v2036
        %v2069 = vrcp.pop %v2037
        %v2070 = vrcp.pop %v2038
        %v2071 = vrcp.pop %v2039
        %v2072 = vrcp.pop %v2040
        %v2073 = vrcp.pop %v2041
        %v2074 = vrcp.pop %v2042
        %v2075 = vrcp.pop %v2043
        %v2076 = vrcp.pop %v2044
        %v2077 = vrcp.pop %v2045
        %v2078 = vrcp.pop %v2046
        %v2079 = vrcp.pop %v2047
        %v2080 = vrcp.pop %v2048
        %v2081 = vrcp.pop %v2049
        %v2082 = vrcp.pop %v2050
        %v2083 = vrcp.pop %v2051
        %v2084 = vrcp.pop %v2052
        %v2085 = vrcp.pop %v2053
        %v2086 = vrcp.pop %v2054
        %v2087 = vrcp.pop %v2055
        %v2088 = vrcp.pop %v2056
        %v2089 = vrcp.pop %v2057
        %v2090 = vrcp.pop %v2058
        %v2091 = vrcp.pop %v2059
        %v2092 = vrcp.pop %v2060
        %v2093 = vrcp.pop %v2061
        %v2094 = vrcp.pop %v2062
        %v2095 = vrcp.pop %v2063
        %v2096 = vrcp.pop %v2064
        %v2097 = vrcp.pop %v2065
        %v2098 = vmul.f32 %v1780, %v2066
        %v2099 = vmul.f32 %v1785, %v2067
        %v2100 = vmul.f32 %v1790, %v2068
        %v2101 = vmul.f32 %v1795, %v2069
        %v2102 = vmul.f32 %v1800, %v2070
        %v2103 = vmul.f32 %v1805, %v2071
        %v2104 = vmul.f32 %v1810, %v2072
        %v2105 = vmul.f32 %v1815, %v2073
        %v2106 = vmul.f32 %v1820, %v2074
        %v2107 = vmul.f32 %v1825, %v2075
        %v2108 = vmul.f32 %v1830, %v2076
        %v2109 = vmul.f32 %v1835, %v2077
        %v2110 = vmul.f32 %v1840, %v2078
        %v2111 = vmul.f32 %v1845, %v2079
        %v2112 = vmul.f32 %v1850, %v2080
        %v2113 = vmul.f32 %v1855, %v2081
        %v2114 = vmul.f32 %v1860, %v2082
        %v2115 = vmul.f32 %v1865, %v2083
        %v2116 = vmul.f32 %v1870, %v2084
        %v2117 = vmul.f32 %v1875, %v2085
        %v2118 = vmul.f32 %v1880, %v2086
        %v2119 = vmul.f32 %v1885, %v2087
        %v2120 = vmul.f32 %v1890, %v2088
        %v2121 = vmul.f32 %v1895, %v2089
        %v2122 = vmul.f32 %v1900, %v2090
        %v2123 = vmul.f32 %v1905, %v2091
        %v2124 = vmul.f32 %v1910, %v2092
        %v2125 = vmul.f32 %v1915, %v2093
        %v2126 = vmul.f32 %v1920, %v2094
        %v2127 = vmul.f32 %v1925, %v2095
        %v2128 = vmul.f32 %v1930, %v2096
        %v2129 = vmul.f32 %v1935, %v2097
        %s2130 = smul.u32 %s22, 256
        %s2131 = scalar_lea.vmem [#allocation2], %s2130
        %2132 = vst [vmem:[%s2131] sm:$0xff] %v2098
        %2133 = vst [vmem:[%s2131 + $0x8] sm:$0xff] %v2099
        %2134 = vst [vmem:[%s2131 + $0x10] sm:$0xff] %v2100
        %2135 = vst [vmem:[%s2131 + $0x18] sm:$0xff] %v2101
        %2136 = vst [vmem:[%s2131 + $0x20] sm:$0xff] %v2102
        %2137 = vst [vmem:[%s2131 + $0x28] sm:$0xff] %v2103
        %2138 = vst [vmem:[%s2131 + $0x30] sm:$0xff] %v2104
        %2139 = vst [vmem:[%s2131 + $0x38] sm:$0xff] %v2105
        %2140 = vst [vmem:[%s2131 + $0x40] sm:$0xff] %v2106
        %2141 = vst [vmem:[%s2131 + $0x48] sm:$0xff] %v2107
        %2142 = vst [vmem:[%s2131 + $0x50] sm:$0xff] %v2108
        %2143 = vst [vmem:[%s2131 + $0x58] sm:$0xff] %v2109
        %2144 = vst [vmem:[%s2131 + $0x60] sm:$0xff] %v2110
        %2145 = vst [vmem:[%s2131 + $0x68] sm:$0xff] %v2111
        %2146 = vst [vmem:[%s2131 + $0x70] sm:$0xff] %v2112
        %2147 = vst [vmem:[%s2131 + $0x78] sm:$0xff] %v2113
        %2148 = vst [vmem:[%s2131 + $0x80] sm:$0xff] %v2114
        %2149 = vst [vmem:[%s2131 + $0x88] sm:$0xff] %v2115
        %2150 = vst [vmem:[%s2131 + $0x90] sm:$0xff] %v2116
        %2151 = vst [vmem:[%s2131 + $0x98] sm:$0xff] %v2117
        %2152 = vst [vmem:[%s2131 + $0xa0] sm:$0xff] %v2118
        %2153 = vst [vmem:[%s2131 + $0xa8] sm:$0xff] %v2119
        %2154 = vst [vmem:[%s2131 + $0xb0] sm:$0xff] %v2120
        %2155 = vst [vmem:[%s2131 + $0xb8] sm:$0xff] %v2121
        %2156 = vst [vmem:[%s2131 + $0xc0] sm:$0xff] %v2122
        %2157 = vst [vmem:[%s2131 + $0xc8] sm:$0xff] %v2123
        %2158 = vst [vmem:[%s2131 + $0xd0] sm:$0xff] %v2124
        %2159 = vst [vmem:[%s2131 + $0xd8] sm:$0xff] %v2125
        %2160 = vst [vmem:[%s2131 + $0xe0] sm:$0xff] %v2126
        %2161 = vst [vmem:[%s2131 + $0xe8] sm:$0xff] %v2127
        %2162 = vst [vmem:[%s2131 + $0xf0] sm:$0xff] %v2128
        %2163 = vst [vmem:[%s2131 + $0xf8] sm:$0xff] %v2129
        %v2164 = vld [vmem:[#allocation3] sm:$0x1]
        %v2165 = vadd.f32 %v2098, %v2099
        %v2166 = vadd.f32 %v2165, %v2100
        %v2167 = vadd.f32 %v2166, %v2101
        %v2168 = vadd.f32 %v2167, %v2102
        %v2169 = vadd.f32 %v2168, %v2103
        %v2170 = vadd.f32 %v2169, %v2104
        %v2171 = vadd.f32 %v2170, %v2105
        %v2172 = vadd.f32 %v2171, %v2106
        %v2173 = vadd.f32 %v2172, %v2107
        %v2174 = vadd.f32 %v2173, %v2108
        %v2175 = vadd.f32 %v2174, %v2109
        %v2176 = vadd.f32 %v2175, %v2110
        %v2177 = vadd.f32 %v2176, %v2111
        %v2178 = vadd.f32 %v2177, %v2112
        %v2179 = vadd.f32 %v2178, %v2113
        %v2180 = vadd.f32 %v2179, %v2114
        %v2181 = vadd.f32 %v2180, %v2115
        %v2182 = vadd.f32 %v2181, %v2116
        %v2183 = vadd.f32 %v2182, %v2117
        %v2184 = vadd.f32 %v2183, %v2118
        %v2185 = vadd.f32 %v2184, %v2119
        %v2186 = vadd.f32 %v2185, %v2120
        %v2187 = vadd.f32 %v2186, %v2121
        %v2188 = vadd.f32 %v2187, %v2122
        %v2189 = vadd.f32 %v2188, %v2123
        %v2190 = vadd.f32 %v2189, %v2124
        %v2191 = vadd.f32 %v2190, %v2125
        %v2192 = vadd.f32 %v2191, %v2126
        %v2193 = vadd.f32 %v2192, %v2127
        %v2194 = vadd.f32 %v2193, %v2128
        %v2195 = vadd.f32 %v2194, %v2129
        %v2196 = vrot.slane %v2195, 4
        %v2197 = vadd.f32 %v2195, %v2196
        %v2198 = vrot.slane %v2197, 2
        %v2199 = vadd.f32 %v2197, %v2198
        %v2200 = vrot.slane %v2199, 1
        %v2201 = vadd.f32 %v2199, %v2200
        %v2202 = vadd.f32 %v2164, %v2201
        %2203 = vst [vmem:[#allocation3] sm:$0x1] %v2202
        %v2204 = vld [vmem:[#allocation4] sm:$0x1]
        %v2205 = vmul.f32 %v2098, %v2098
        %v2206 = vmul.f32 %v2099, %v2099
        %v2207 = vmul.f32 %v2100, %v2100
        %v2208 = vmul.f32 %v2101, %v2101
        %v2209 = vmul.f32 %v2102, %v2102
        %v2210 = vmul.f32 %v2103, %v2103
        %v2211 = vmul.f32 %v2104, %v2104
        %v2212 = vmul.f32 %v2105, %v2105
        %v2213 = vmul.f32 %v2106, %v2106
        %v2214 = vmul.f32 %v2107, %v2107
        %v2215 = vmul.f32 %v2108, %v2108
        %v2216 = vmul.f32 %v2109, %v2109
        %v2217 = vmul.f32 %v2110, %v2110
        %v2218 = vmul.f32 %v2111, %v2111
        %v2219 = vmul.f32 %v2112, %v2112
        %v2220 = vmul.f32 %v2113, %v2113
        %v2221 = vmul.f32 %v2114, %v2114
        %v2222 = vmul.f32 %v2115, %v2115
        %v2223 = vmul.f32 %v2116, %v2116
        %v2224 = vmul.f32 %v2117, %v2117
        %v2225 = vmul.f32 %v2118, %v2118
        %v2226 = vmul.f32 %v2119, %v2119
        %v2227 = vmul.f32 %v2120, %v2120
        %v2228 = vmul.f32 %v2121, %v2121
        %v2229 = vmul.f32 %v2122, %v2122
        %v2230 = vmul.f32 %v2123, %v2123
        %v2231 = vmul.f32 %v2124, %v2124
        %v2232 = vmul.f32 %v2125, %v2125
        %v2233 = vmul.f32 %v2126, %v2126
        %v2234 = vmul.f32 %v2127, %v2127
        %v2235 = vmul.f32 %v2128, %v2128
        %v2236 = vmul.f32 %v2129, %v2129
        %v2237 = vadd.f32 %v2205, %v2206
        %v2238 = vadd.f32 %v2237, %v2207
        %v2239 = vadd.f32 %v2238, %v2208
        %v2240 = vadd.f32 %v2239, %v2209
        %v2241 = vadd.f32 %v2240, %v2210
        %v2242 = vadd.f32 %v2241, %v2211
        %v2243 = vadd.f32 %v2242, %v2212
        %v2244 = vadd.f32 %v2243, %v2213
        %v2245 = vadd.f32 %v2244, %v2214
        %v2246 = vadd.f32 %v2245, %v2215
        %v2247 = vadd.f32 %v2246, %v2216
        %v2248 = vadd.f32 %v2247, %v2217
        %v2249 = vadd.f32 %v2248, %v2218
        %v2250 = vadd.f32 %v2249, %v2219
        %v2251 = vadd.f32 %v2250, %v2220
        %v2252 = vadd.f32 %v2251, %v2221
        %v2253 = vadd.f32 %v2252, %v2222
        %v2254 = vadd.f32 %v2253, %v2223
        %v2255 = vadd.f32 %v2254, %v2224
        %v2256 = vadd.f32 %v2255, %v2225
        %v2257 = vadd.f32 %v2256, %v2226
        %v2258 = vadd.f32 %v2257, %v2227
        %v2259 = vadd.f32 %v2258, %v2228
        %v2260 = vadd.f32 %v2259, %v2229
        %v2261 = vadd.f32 %v2260, %v2230
        %v2262 = vadd.f32 %v2261, %v2231
        %v2263 = vadd.f32 %v2262, %v2232
        %v2264 = vadd.f32 %v2263, %v2233
        %v2265 = vadd.f32 %v2264, %v2234
        %v2266 = vadd.f32 %v2265, %v2235
        %v2267 = vadd.f32 %v2266, %v2236
        %v2268 = vrot.slane %v2267, 4
        %v2269 = vadd.f32 %v2267, %v2268
        %v2270 = vrot.slane %v2269, 2
        %v2271 = vadd.f32 %v2269, %v2270
        %v2272 = vrot.slane %v2271, 1
        %v2273 = vadd.f32 %v2271, %v2272
        %v2274 = vadd.f32 %v2204, %v2273
        %2275 = vst [vmem:[#allocation4] sm:$0x1] %v2274
      $region48: #{repconv_forward.2} parent=43 // pred_fallthru
        _
      %p2276 = scmp.eq.s32.totalorder %s21, 1
      // Predicated region
      $region53: #{repconv_forward.2} parent=43 // pred_check
        %p2277 = pneg %p2276
      $region54: #{repconv_forward.2} parent=43 // pred_check_branch
        %2279 = sbr.rel (%p2277) target = $region56
      $region55: #{repconv_forward.2} parent=43 // pred_region
        %s2280 = smul.u32 %s22, 256
        %s2281 = scalar_lea.vmem [#allocation2], %s2280
        %v2282 = vld [vmem:[%s2281] sm:$0xff]
        %v2283 = vld [vmem:[%s2281 + $0x8] sm:$0xff]
        %v2284 = vld [vmem:[%s2281 + $0x10] sm:$0xff]
        %v2285 = vld [vmem:[%s2281 + $0x18] sm:$0xff]
        %v2286 = vld [vmem:[%s2281 + $0x20] sm:$0xff]
        %v2287 = vld [vmem:[%s2281 + $0x28] sm:$0xff]
        %v2288 = vld [vmem:[%s2281 + $0x30] sm:$0xff]
        %v2289 = vld [vmem:[%s2281 + $0x38] sm:$0xff]
        %v2290 = vld [vmem:[%s2281 + $0x40] sm:$0xff]
        %v2291 = vld [vmem:[%s2281 + $0x48] sm:$0xff]
        %v2292 = vld [vmem:[%s2281 + $0x50] sm:$0xff]
        %v2293 = vld [vmem:[%s2281 + $0x58] sm:$0xff]
        %v2294 = vld [vmem:[%s2281 + $0x60] sm:$0xff]
        %v2295 = vld [vmem:[%s2281 + $0x68] sm:$0xff]
        %v2296 = vld [vmem:[%s2281 + $0x70] sm:$0xff]
        %v2297 = vld [vmem:[%s2281 + $0x78] sm:$0xff]
        %v2298 = vld [vmem:[%s2281 + $0x80] sm:$0xff]
        %v2299 = vld [vmem:[%s2281 + $0x88] sm:$0xff]
        %v2300 = vld [vmem:[%s2281 + $0x90] sm:$0xff]
        %v2301 = vld [vmem:[%s2281 + $0x98] sm:$0xff]
        %v2302 = vld [vmem:[%s2281 + $0xa0] sm:$0xff]
        %v2303 = vld [vmem:[%s2281 + $0xa8] sm:$0xff]
        %v2304 = vld [vmem:[%s2281 + $0xb0] sm:$0xff]
        %v2305 = vld [vmem:[%s2281 + $0xb8] sm:$0xff]
        %v2306 = vld [vmem:[%s2281 + $0xc0] sm:$0xff]
        %v2307 = vld [vmem:[%s2281 + $0xc8] sm:$0xff]
        %v2308 = vld [vmem:[%s2281 + $0xd0] sm:$0xff]
        %v2309 = vld [vmem:[%s2281 + $0xd8] sm:$0xff]
        %v2310 = vld [vmem:[%s2281 + $0xe0] sm:$0xff]
        %v2311 = vld [vmem:[%s2281 + $0xe8] sm:$0xff]
        %v2312 = vld [vmem:[%s2281 + $0xf0] sm:$0xff]
        %v2313 = vld [vmem:[%s2281 + $0xf8] sm:$0xff]
        %v2314 = vld [vmem:[#allocation3] sm:$0x1]
        %v2315 = vmul.f32 %v2314, 0.001953125
        %v2316 = vld [vmem:[#allocation4] sm:$0x1]
        %v2317 = vmul.f32 %v2316, 0.001953125
        %v2318 = vmul.f32 %v2315, %v2315
        %v2319 = vsub.f32 %v2317, %v2318
        %v2320 = vadd.f32 %v2319, 1e-05
        %v2321 = vrsqrt.pop %v2320
        %v2322 = vld [vmem:[%s3] sm:$0x1]
        %v2323 = vmul.f32 %v2321, %v2322
        %v2325 = vlaneseq
        %v2326 = vshrl.u32 %v2325, 7
        %v2327 = vsub.s32 0, %v2326
        %v2328 = vrot.slane %v2315, %v2327
        %v2330 = vsub.f32 %v2282, %v2328
        %v2331 = vsub.f32 %v2283, %v2328
        %v2332 = vsub.f32 %v2284, %v2328
        %v2333 = vsub.f32 %v2285, %v2328
        %v2334 = vsub.f32 %v2286, %v2328
        %v2335 = vsub.f32 %v2287, %v2328
        %v2336 = vsub.f32 %v2288, %v2328
        %v2337 = vsub.f32 %v2289, %v2328
        %v2338 = vsub.f32 %v2290, %v2328
        %v2339 = vsub.f32 %v2291, %v2328
        %v2340 = vsub.f32 %v2292, %v2328
        %v2341 = vsub.f32 %v2293, %v2328
        %v2342 = vsub.f32 %v2294, %v2328
        %v2343 = vsub.f32 %v2295, %v2328
        %v2344 = vsub.f32 %v2296, %v2328
        %v2345 = vsub.f32 %v2297, %v2328
        %v2346 = vsub.f32 %v2298, %v2328
        %v2347 = vsub.f32 %v2299, %v2328
        %v2348 = vsub.f32 %v2300, %v2328
        %v2349 = vsub.f32 %v2301, %v2328
        %v2350 = vsub.f32 %v2302, %v2328
        %v2351 = vsub.f32 %v2303, %v2328
        %v2352 = vsub.f32 %v2304, %v2328
        %v2353 = vsub.f32 %v2305, %v2328
        %v2354 = vsub.f32 %v2306, %v2328
        %v2355 = vsub.f32 %v2307, %v2328
        %v2356 = vsub.f32 %v2308, %v2328
        %v2357 = vsub.f32 %v2309, %v2328
        %v2358 = vsub.f32 %v2310, %v2328
        %v2359 = vsub.f32 %v2311, %v2328
        %v2360 = vsub.f32 %v2312, %v2328
        %v2361 = vsub.f32 %v2313, %v2328
        %v2363 = vlaneseq
        %v2364 = vshrl.u32 %v2363, 7
        %v2365 = vsub.s32 0, %v2364
        %v2366 = vrot.slane %v2323, %v2365
        %v2368 = vmul.f32 %v2330, %v2366
        %v2369 = vmul.f32 %v2331, %v2366
        %v2370 = vmul.f32 %v2332, %v2366
        %v2371 = vmul.f32 %v2333, %v2366
        %v2372 = vmul.f32 %v2334, %v2366
        %v2373 = vmul.f32 %v2335, %v2366
        %v2374 = vmul.f32 %v2336, %v2366
        %v2375 = vmul.f32 %v2337, %v2366
        %v2376 = vmul.f32 %v2338, %v2366
        %v2377 = vmul.f32 %v2339, %v2366
        %v2378 = vmul.f32 %v2340, %v2366
        %v2379 = vmul.f32 %v2341, %v2366
        %v2380 = vmul.f32 %v2342, %v2366
        %v2381 = vmul.f32 %v2343, %v2366
        %v2382 = vmul.f32 %v2344, %v2366
        %v2383 = vmul.f32 %v2345, %v2366
        %v2384 = vmul.f32 %v2346, %v2366
        %v2385 = vmul.f32 %v2347, %v2366
        %v2386 = vmul.f32 %v2348, %v2366
        %v2387 = vmul.f32 %v2349, %v2366
        %v2388 = vmul.f32 %v2350, %v2366
        %v2389 = vmul.f32 %v2351, %v2366
        %v2390 = vmul.f32 %v2352, %v2366
        %v2391 = vmul.f32 %v2353, %v2366
        %v2392 = vmul.f32 %v2354, %v2366
        %v2393 = vmul.f32 %v2355, %v2366
        %v2394 = vmul.f32 %v2356, %v2366
        %v2395 = vmul.f32 %v2357, %v2366
        %v2396 = vmul.f32 %v2358, %v2366
        %v2397 = vmul.f32 %v2359, %v2366
        %v2398 = vmul.f32 %v2360, %v2366
        %v2399 = vmul.f32 %v2361, %v2366
        %v2400 = vld [vmem:[%s4] sm:$0x1]
        %v2402 = vlaneseq
        %v2403 = vshrl.u32 %v2402, 7
        %v2404 = vsub.s32 0, %v2403
        %v2405 = vrot.slane %v2400, %v2404
        %v2407 = vadd.f32 %v2368, %v2405
        %v2408 = vadd.f32 %v2369, %v2405
        %v2409 = vadd.f32 %v2370, %v2405
        %v2410 = vadd.f32 %v2371, %v2405
        %v2411 = vadd.f32 %v2372, %v2405
        %v2412 = vadd.f32 %v2373, %v2405
        %v2413 = vadd.f32 %v2374, %v2405
        %v2414 = vadd.f32 %v2375, %v2405
        %v2415 = vadd.f32 %v2376, %v2405
        %v2416 = vadd.f32 %v2377, %v2405
        %v2417 = vadd.f32 %v2378, %v2405
        %v2418 = vadd.f32 %v2379, %v2405
        %v2419 = vadd.f32 %v2380, %v2405
        %v2420 = vadd.f32 %v2381, %v2405
        %v2421 = vadd.f32 %v2382, %v2405
        %v2422 = vadd.f32 %v2383, %v2405
        %v2423 = vadd.f32 %v2384, %v2405
        %v2424 = vadd.f32 %v2385, %v2405
        %v2425 = vadd.f32 %v2386, %v2405
        %v2426 = vadd.f32 %v2387, %v2405
        %v2427 = vadd.f32 %v2388, %v2405
        %v2428 = vadd.f32 %v2389, %v2405
        %v2429 = vadd.f32 %v2390, %v2405
        %v2430 = vadd.f32 %v2391, %v2405
        %v2431 = vadd.f32 %v2392, %v2405
        %v2432 = vadd.f32 %v2393, %v2405
        %v2433 = vadd.f32 %v2394, %v2405
        %v2434 = vadd.f32 %v2395, %v2405
        %v2435 = vadd.f32 %v2396, %v2405
        %v2436 = vadd.f32 %v2397, %v2405
        %v2437 = vadd.f32 %v2398, %v2405
        %v2438 = vadd.f32 %v2399, %v2405
        %v2439 = vld [vmem:[%s5] sm:$0xff]
        %v2440 = vld [vmem:[%s5 + $0x8] sm:$0xff]
        %v2441 = vld [vmem:[%s5 + $0x10] sm:$0xff]
        %v2442 = vld [vmem:[%s5 + $0x18] sm:$0xff]
        %v2443 = vld [vmem:[%s5 + $0x20] sm:$0xff]
        %v2444 = vld [vmem:[%s5 + $0x28] sm:$0xff]
        %v2445 = vld [vmem:[%s5 + $0x30] sm:$0xff]
        %v2446 = vld [vmem:[%s5 + $0x38] sm:$0xff]
        %v2447 = vld [vmem:[%s5 + $0x40] sm:$0xff]
        %v2448 = vld [vmem:[%s5 + $0x48] sm:$0xff]
        %v2449 = vld [vmem:[%s5 + $0x50] sm:$0xff]
        %v2450 = vld [vmem:[%s5 + $0x58] sm:$0xff]
        %v2451 = vld [vmem:[%s5 + $0x60] sm:$0xff]
        %v2452 = vld [vmem:[%s5 + $0x68] sm:$0xff]
        %v2453 = vld [vmem:[%s5 + $0x70] sm:$0xff]
        %v2454 = vld [vmem:[%s5 + $0x78] sm:$0xff]
        %v2455 = vld [vmem:[%s5 + $0x80] sm:$0xff]
        %v2456 = vld [vmem:[%s5 + $0x88] sm:$0xff]
        %v2457 = vld [vmem:[%s5 + $0x90] sm:$0xff]
        %v2458 = vld [vmem:[%s5 + $0x98] sm:$0xff]
        %v2459 = vld [vmem:[%s5 + $0xa0] sm:$0xff]
        %v2460 = vld [vmem:[%s5 + $0xa8] sm:$0xff]
        %v2461 = vld [vmem:[%s5 + $0xb0] sm:$0xff]
        %v2462 = vld [vmem:[%s5 + $0xb8] sm:$0xff]
        %v2463 = vld [vmem:[%s5 + $0xc0] sm:$0xff]
        %v2464 = vld [vmem:[%s5 + $0xc8] sm:$0xff]
        %v2465 = vld [vmem:[%s5 + $0xd0] sm:$0xff]
        %v2466 = vld [vmem:[%s5 + $0xd8] sm:$0xff]
        %v2467 = vld [vmem:[%s5 + $0xe0] sm:$0xff]
        %v2468 = vld [vmem:[%s5 + $0xe8] sm:$0xff]
        %v2469 = vld [vmem:[%s5 + $0xf0] sm:$0xff]
        %v2470 = vld [vmem:[%s5 + $0xf8] sm:$0xff]
        %v2471 = vld [vmem:[%s5 + $0x100] sm:$0xff]
        %v2472 = vld [vmem:[%s5 + $0x108] sm:$0xff]
        %v2473 = vld [vmem:[%s5 + $0x110] sm:$0xff]
        %v2474 = vld [vmem:[%s5 + $0x118] sm:$0xff]
        %v2475 = vld [vmem:[%s5 + $0x120] sm:$0xff]
        %v2476 = vld [vmem:[%s5 + $0x128] sm:$0xff]
        %v2477 = vld [vmem:[%s5 + $0x130] sm:$0xff]
        %v2478 = vld [vmem:[%s5 + $0x138] sm:$0xff]
        %v2479 = vld [vmem:[%s5 + $0x140] sm:$0xff]
        %v2480 = vld [vmem:[%s5 + $0x148] sm:$0xff]
        %v2481 = vld [vmem:[%s5 + $0x150] sm:$0xff]
        %v2482 = vld [vmem:[%s5 + $0x158] sm:$0xff]
        %v2483 = vld [vmem:[%s5 + $0x160] sm:$0xff]
        %v2484 = vld [vmem:[%s5 + $0x168] sm:$0xff]
        %v2485 = vld [vmem:[%s5 + $0x170] sm:$0xff]
        %v2486 = vld [vmem:[%s5 + $0x178] sm:$0xff]
        %v2487 = vld [vmem:[%s5 + $0x180] sm:$0xff]
        %v2488 = vld [vmem:[%s5 + $0x188] sm:$0xff]
        %v2489 = vld [vmem:[%s5 + $0x190] sm:$0xff]
        %v2490 = vld [vmem:[%s5 + $0x198] sm:$0xff]
        %v2491 = vld [vmem:[%s5 + $0x1a0] sm:$0xff]
        %v2492 = vld [vmem:[%s5 + $0x1a8] sm:$0xff]
        %v2493 = vld [vmem:[%s5 + $0x1b0] sm:$0xff]
        %v2494 = vld [vmem:[%s5 + $0x1b8] sm:$0xff]
        %v2495 = vld [vmem:[%s5 + $0x1c0] sm:$0xff]
        %v2496 = vld [vmem:[%s5 + $0x1c8] sm:$0xff]
        %v2497 = vld [vmem:[%s5 + $0x1d0] sm:$0xff]
        %v2498 = vld [vmem:[%s5 + $0x1d8] sm:$0xff]
        %v2499 = vld [vmem:[%s5 + $0x1e0] sm:$0xff]
        %v2500 = vld [vmem:[%s5 + $0x1e8] sm:$0xff]
        %v2501 = vld [vmem:[%s5 + $0x1f0] sm:$0xff]
        %v2502 = vld [vmem:[%s5 + $0x1f8] sm:$0xff]
        %v2503 = vld [vmem:[%s5 + $0x200] sm:$0xff]
        %v2504 = vld [vmem:[%s5 + $0x208] sm:$0xff]
        %v2505 = vld [vmem:[%s5 + $0x210] sm:$0xff]
        %v2506 = vld [vmem:[%s5 + $0x218] sm:$0xff]
        %v2507 = vld [vmem:[%s5 + $0x220] sm:$0xff]
        %v2508 = vld [vmem:[%s5 + $0x228] sm:$0xff]
        %v2509 = vld [vmem:[%s5 + $0x230] sm:$0xff]
        %v2510 = vld [vmem:[%s5 + $0x238] sm:$0xff]
        %v2511 = vld [vmem:[%s5 + $0x240] sm:$0xff]
        %v2512 = vld [vmem:[%s5 + $0x248] sm:$0xff]
        %v2513 = vld [vmem:[%s5 + $0x250] sm:$0xff]
        %v2514 = vld [vmem:[%s5 + $0x258] sm:$0xff]
        %v2515 = vld [vmem:[%s5 + $0x260] sm:$0xff]
        %v2516 = vld [vmem:[%s5 + $0x268] sm:$0xff]
        %v2517 = vld [vmem:[%s5 + $0x270] sm:$0xff]
        %v2518 = vld [vmem:[%s5 + $0x278] sm:$0xff]
        %v2519 = vld [vmem:[%s5 + $0x280] sm:$0xf]
        %v2520 = vld [vmem:[%s5 + $0x288] sm:$0xf]
        %2521 = vmatprep.subr.mxu0 0.0
        %2522 = vmatpush1.msra.mxu0 %v2407
        %2523 = vmatprep.subr.mxu0 0.0
        %2524 = vmatpush1.msra.mxu0 %v2408
        %2525 = vmatprep.subr.mxu0 0.0
        %2526 = vmatpush1.msra.mxu0 %v2409
        %2527 = vmatprep.subr.mxu0 0.0
        %2528 = vmatpush1.msra.mxu0 %v2410
        %2529 = vmatprep.subr.mxu0 0.0
        %2530 = vmatpush1.msra.mxu0 %v2411
        %2531 = vmatprep.subr.mxu0 0.0
        %2532 = vmatpush1.msra.mxu0 %v2412
        %2533 = vmatprep.subr.mxu0 0.0
        %2534 = vmatpush1.msra.mxu0 %v2413
        %2535 = vmatprep.subr.mxu0 0.0
        %2536 = vmatpush1.msra.mxu0 %v2414
        %2537 = vmatprep.subr.mxu0 0.0
        %2538 = vmatpush1.msra.mxu0 %v2415
        %2539 = vmatprep.subr.mxu0 0.0
        %2540 = vmatpush1.msra.mxu0 %v2416
        %2541 = vmatprep.subr.mxu0 0.0
        %2542 = vmatpush1.msra.mxu0 %v2417
        %2543 = vmatprep.subr.mxu0 0.0
        %2544 = vmatpush1.msra.mxu0 %v2418
        %2545 = vmatprep.subr.mxu0 0.0
        %2546 = vmatpush1.msra.mxu0 %v2419
        %2547 = vmatprep.subr.mxu0 0.0
        %2548 = vmatpush1.msra.mxu0 %v2420
        %2549 = vmatprep.subr.mxu0 0.0
        %2550 = vmatpush1.msra.mxu0 %v2421
        %2551 = vmatprep.subr.mxu0 0.0
        %2552 = vmatpush1.msra.mxu0 %v2422
        %2553 = vmatprep.subr.mxu0 0.0
        %2554 = vmatpush1.msra.mxu0 %v2423
        %2555 = vmatprep.subr.mxu0 0.0
        %2556 = vmatpush1.msra.mxu0 %v2424
        %2557 = vmatprep.subr.mxu0 0.0
        %2558 = vmatpush1.msra.mxu0 %v2425
        %2559 = vmatprep.subr.mxu0 0.0
        %2560 = vmatpush1.msra.mxu0 %v2426
        %2561 = vmatprep.subr.mxu0 0.0
        %2562 = vmatpush1.msra.mxu0 %v2427
        %2563 = vmatprep.subr.mxu0 0.0
        %2564 = vmatpush1.msra.mxu0 %v2428
        %2565 = vmatprep.subr.mxu0 0.0
        %2566 = vmatpush1.msra.mxu0 %v2429
        %2567 = vmatprep.subr.mxu0 0.0
        %2568 = vmatpush1.msra.mxu0 %v2430
        %2569 = vmatprep.subr.mxu0 0.0
        %2570 = vmatpush1.msra.mxu0 %v2431
        %2571 = vmatprep.subr.mxu0 0.0
        %2572 = vmatpush1.msra.mxu0 %v2432
        %2573 = vmatprep.subr.mxu0 0.0
        %2574 = vmatpush1.msra.mxu0 %v2433
        %2575 = vmatprep.subr.mxu0 0.0
        %2576 = vmatpush1.msra.mxu0 %v2434
        %2577 = vmatprep.subr.mxu0 0.0
        %2578 = vmatpush1.msra.mxu0 %v2435
        %2579 = vmatprep.subr.mxu0 0.0
        %2580 = vmatpush1.msra.mxu0 %v2436
        %2581 = vmatprep.subr.mxu0 0.0
        %2582 = vmatpush1.msra.mxu0 %v2437
        %2583 = vmatprep.subr.mxu0 0.0
        %2584 = vmatpush1.msra.mxu0 %v2438
        %2585 = vmatprep.mubr.f32.mxu0 %v2440
        %2586 = vmatmul.mubr.f32.gmra.mrb[0].mxu0 %v2439
        %v2587 = vpop.f32.mrb[0].mxu0
        %v2588 = vadd.f32 0.0, %v2587
        %v2589 = vpop.f32.mrb[0].mxu0
        %2590 = vmatprep.mubr.f32.mxu0 %v2442
        %2591 = vmatmul.mubr.f32.gmra.mrb[0].mxu0 %v2441
        %v2592 = vpop.f32.mrb[0].mxu0
        %v2593 = vadd.f32 0.0, %v2592
        %v2594 = vpop.f32.mrb[0].mxu0
        %2595 = vmatprep.mubr.f32.mxu0 %v2444
        %2596 = vmatmul.mubr.f32.gmra.mrb[0].mxu0 %v2443
        %v2597 = vpop.f32.mrb[0].mxu0
        %v2598 = vadd.f32 0.0, %v2597
        %v2599 = vpop.f32.mrb[0].mxu0
        %2600 = vmatprep.mubr.f32.mxu0 %v2446
        %2601 = vmatmul.mubr.f32.gmra.mrb[0].mxu0 %v2445
        %v2602 = vpop.f32.mrb[0].mxu0
        %v2603 = vadd.f32 0.0, %v2602
        %v2604 = vpop.f32.mrb[0].mxu0
        %2605 = vmatprep.mubr.f32.mxu0 %v2448
        %2606 = vmatmul.mubr.f32.gmra.mrb[0].mxu0 %v2447
        %v2607 = vpop.f32.mrb[0].mxu0
        %v2608 = vadd.f32 0.0, %v2607
        %v2609 = vpop.f32.mrb[0].mxu0
        %2610 = vmatprep.mubr.f32.mxu0 %v2450
        %2611 = vmatmul.mubr.f32.gmra.mrb[0].mxu0 %v2449
        %v2612 = vpop.f32.mrb[0].mxu0
        %v2613 = vadd.f32 0.0, %v2612
        %v2614 = vpop.f32.mrb[0].mxu0
        %2615 = vmatprep.mubr.f32.mxu0 %v2452
        %2616 = vmatmul.mubr.f32.gmra.mrb[0].mxu0 %v2451
        %v2617 = vpop.f32.mrb[0].mxu0
        %v2618 = vadd.f32 0.0, %v2617
        %v2619 = vpop.f32.mrb[0].mxu0
        %2620 = vmatprep.mubr.f32.mxu0 %v2454
        %2621 = vmatmul.mubr.f32.gmra.mrb[0].mxu0 %v2453
        %v2622 = vpop.f32.mrb[0].mxu0
        %v2623 = vadd.f32 0.0, %v2622
        %v2624 = vpop.f32.mrb[0].mxu0
        %2625 = vmatprep.mubr.f32.mxu0 %v2456
        %2626 = vmatmul.mubr.f32.gmra.mrb[0].mxu0 %v2455
        %v2627 = vpop.f32.mrb[0].mxu0
        %v2628 = vadd.f32 0.0, %v2627
        %v2629 = vpop.f32.mrb[0].mxu0
        %2630 = vmatprep.mubr.f32.mxu0 %v2458
        %2631 = vmatmul.mubr.f32.gmra.mrb[0].mxu0 %v2457
        %v2632 = vpop.f32.mrb[0].mxu0
        %v2633 = vadd.f32 0.0, %v2632
        %v2634 = vpop.f32.mrb[0].mxu0
        %2635 = vmatprep.mubr.f32.mxu0 %v2460
        %2636 = vmatmul.mubr.f32.gmra.mrb[0].mxu0 %v2459
        %v2637 = vpop.f32.mrb[0].mxu0
        %v2638 = vadd.f32 0.0, %v2637
        %v2639 = vpop.f32.mrb[0].mxu0
        %2640 = vmatprep.mubr.f32.mxu0 %v2462
        %2641 = vmatmul.mubr.f32.gmra.mrb[0].mxu0 %v2461
        %v2642 = vpop.f32.mrb[0].mxu0
        %v2643 = vadd.f32 0.0, %v2642
        %v2644 = vpop.f32.mrb[0].mxu0
        %2645 = vmatprep.mubr.f32.mxu0 %v2464
        %2646 = vmatmul.mubr.f32.gmra.mrb[0].mxu0 %v2463
        %v2647 = vpop.f32.mrb[0].mxu0
        %v2648 = vadd.f32 0.0, %v2647
        %v2649 = vpop.f32.mrb[0].mxu0
        %2650 = vmatprep.mubr.f32.mxu0 %v2466
        %2651 = vmatmul.mubr.f32.gmra.mrb[0].mxu0 %v2465
        %v2652 = vpop.f32.mrb[0].mxu0
        %v2653 = vadd.f32 0.0, %v2652
        %v2654 = vpop.f32.mrb[0].mxu0
        %2655 = vmatprep.mubr.f32.mxu0 %v2468
        %2656 = vmatmul.mubr.f32.gmra.mrb[0].mxu0 %v2467
        %v2657 = vpop.f32.mrb[0].mxu0
        %v2658 = vadd.f32 0.0, %v2657
        %v2659 = vpop.f32.mrb[0].mxu0
        %2660 = vmatprep.mubr.f32.mxu0 %v2470
        %2661 = vmatmul.mubr.f32.gmra.mrb[0].mxu0 %v2469
        %v2662 = vpop.f32.mrb[0].mxu0
        %v2663 = vadd.f32 0.0, %v2662
        %v2664 = vpop.f32.mrb[0].mxu0
        %2665 = vmatprep.mubr.f32.mxu0 %v2472
        %2666 = vmatmul.mubr.f32.gmra.mrb[0].mxu0 %v2471
        %v2667 = vpop.f32.mrb[0].mxu0
        %v2668 = vadd.f32 0.0, %v2667
        %v2669 = vpop.f32.mrb[0].mxu0
        %2670 = vmatprep.mubr.f32.mxu0 %v2474
        %2671 = vmatmul.mubr.f32.gmra.mrb[0].mxu0 %v2473
        %v2672 = vpop.f32.mrb[0].mxu0
        %v2673 = vadd.f32 0.0, %v2672
        %v2674 = vpop.f32.mrb[0].mxu0
        %2675 = vmatprep.mubr.f32.mxu0 %v2476
        %2676 = vmatmul.mubr.f32.gmra.mrb[0].mxu0 %v2475
        %v2677 = vpop.f32.mrb[0].mxu0
        %v2678 = vadd.f32 0.0, %v2677
        %v2679 = vpop.f32.mrb[0].mxu0
        %2680 = vmatprep.mubr.f32.mxu0 %v2478
        %2681 = vmatmul.mubr.f32.gmra.mrb[0].mxu0 %v2477
        %v2682 = vpop.f32.mrb[0].mxu0
        %v2683 = vadd.f32 0.0, %v2682
        %v2684 = vpop.f32.mrb[0].mxu0
        %2685 = vmatprep.mubr.f32.mxu0 %v2480
        %2686 = vmatmul.mubr.f32.gmra.mrb[0].mxu0 %v2479
        %v2687 = vpop.f32.mrb[0].mxu0
        %v2688 = vadd.f32 0.0, %v2687
        %v2689 = vpop.f32.mrb[0].mxu0
        %2690 = vmatprep.mubr.f32.mxu0 %v2482
        %2691 = vmatmul.mubr.f32.gmra.mrb[0].mxu0 %v2481
        %v2692 = vpop.f32.mrb[0].mxu0
        %v2693 = vadd.f32 0.0, %v2692
        %v2694 = vpop.f32.mrb[0].mxu0
        %2695 = vmatprep.mubr.f32.mxu0 %v2484
        %2696 = vmatmul.mubr.f32.gmra.mrb[0].mxu0 %v2483
        %v2697 = vpop.f32.mrb[0].mxu0
        %v2698 = vadd.f32 0.0, %v2697
        %v2699 = vpop.f32.mrb[0].mxu0
        %2700 = vmatprep.mubr.f32.mxu0 %v2486
        %2701 = vmatmul.mubr.f32.gmra.mrb[0].mxu0 %v2485
        %v2702 = vpop.f32.mrb[0].mxu0
        %v2703 = vadd.f32 0.0, %v2702
        %v2704 = vpop.f32.mrb[0].mxu0
        %2705 = vmatprep.mubr.f32.mxu0 %v2488
        %2706 = vmatmul.mubr.f32.gmra.mrb[0].mxu0 %v2487
        %v2707 = vpop.f32.mrb[0].mxu0
        %v2708 = vadd.f32 0.0, %v2707
        %v2709 = vpop.f32.mrb[0].mxu0
        %2710 = vmatprep.mubr.f32.mxu0 %v2490
        %2711 = vmatmul.mubr.f32.gmra.mrb[0].mxu0 %v2489
        %v2712 = vpop.f32.mrb[0].mxu0
        %v2713 = vadd.f32 0.0, %v2712
        %v2714 = vpop.f32.mrb[0].mxu0
        %2715 = vmatprep.mubr.f32.mxu0 %v2492
        %2716 = vmatmul.mubr.f32.gmra.mrb[0].mxu0 %v2491
        %v2717 = vpop.f32.mrb[0].mxu0
        %v2718 = vadd.f32 0.0, %v2717
        %v2719 = vpop.f32.mrb[0].mxu0
        %2720 = vmatprep.mubr.f32.mxu0 %v2494
        %2721 = vmatmul.mubr.f32.gmra.mrb[0].mxu0 %v2493
        %v2722 = vpop.f32.mrb[0].mxu0
        %v2723 = vadd.f32 0.0, %v2722
        %v2724 = vpop.f32.mrb[0].mxu0
        %2725 = vmatprep.mubr.f32.mxu0 %v2496
        %2726 = vmatmul.mubr.f32.gmra.mrb[0].mxu0 %v2495
        %v2727 = vpop.f32.mrb[0].mxu0
        %v2728 = vadd.f32 0.0, %v2727
        %v2729 = vpop.f32.mrb[0].mxu0
        %2730 = vmatprep.mubr.f32.mxu0 %v2498
        %2731 = vmatmul.mubr.f32.gmra.mrb[0].mxu0 %v2497
        %v2732 = vpop.f32.mrb[0].mxu0
        %v2733 = vadd.f32 0.0, %v2732
        %v2734 = vpop.f32.mrb[0].mxu0
        %2735 = vmatprep.mubr.f32.mxu0 %v2500
        %2736 = vmatmul.mubr.f32.gmra.mrb[0].mxu0 %v2499
        %v2737 = vpop.f32.mrb[0].mxu0
        %v2738 = vadd.f32 0.0, %v2737
        %v2739 = vpop.f32.mrb[0].mxu0
        %2740 = vmatprep.mubr.f32.mxu0 %v2502
        %2741 = vmatmul.mubr.f32.gmra.mrb[0].mxu0 %v2501
        %v2742 = vpop.f32.mrb[0].mxu0
        %v2743 = vadd.f32 0.0, %v2742
        %v2744 = vpop.f32.mrb[0].mxu0
        %2745 = vmatprep.mubr.f32.mxu0 %v2504
        %2746 = vmatmul.mubr.f32.gmra.mrb[0].mxu0 %v2503
        %v2747 = vpop.f32.mrb[0].mxu0
        %v2748 = vadd.f32 0.0, %v2747
        %v2749 = vpop.f32.mrb[0].mxu0
        %2750 = vmatprep.mubr.f32.mxu0 %v2506
        %2751 = vmatmul.mubr.f32.gmra.mrb[0].mxu0 %v2505
        %v2752 = vpop.f32.mrb[0].mxu0
        %v2753 = vadd.f32 0.0, %v2752
        %v2754 = vpop.f32.mrb[0].mxu0
        %2755 = vmatprep.mubr.f32.mxu0 %v2508
        %2756 = vmatmul.mubr.f32.gmra.mrb[0].mxu0 %v2507
        %v2757 = vpop.f32.mrb[0].mxu0
        %v2758 = vadd.f32 0.0, %v2757
        %v2759 = vpop.f32.mrb[0].mxu0
        %2760 = vmatprep.mubr.f32.mxu0 %v2510
        %2761 = vmatmul.mubr.f32.gmra.mrb[0].mxu0 %v2509
        %v2762 = vpop.f32.mrb[0].mxu0
        %v2763 = vadd.f32 0.0, %v2762
        %v2764 = vpop.f32.mrb[0].mxu0
        %2765 = vmatprep.mubr.f32.mxu0 %v2512
        %2766 = vmatmul.mubr.f32.gmra.mrb[0].mxu0 %v2511
        %v2767 = vpop.f32.mrb[0].mxu0
        %v2768 = vadd.f32 0.0, %v2767
        %v2769 = vpop.f32.mrb[0].mxu0
        %2770 = vmatprep.mubr.f32.mxu0 %v2514
        %2771 = vmatmul.mubr.f32.gmra.mrb[0].mxu0 %v2513
        %v2772 = vpop.f32.mrb[0].mxu0
        %v2773 = vadd.f32 0.0, %v2772
        %v2774 = vpop.f32.mrb[0].mxu0
        %2775 = vmatprep.mubr.f32.mxu0 %v2516
        %2776 = vmatmul.mubr.f32.gmra.mrb[0].mxu0 %v2515
        %v2777 = vpop.f32.mrb[0].mxu0
        %v2778 = vadd.f32 0.0, %v2777
        %v2779 = vpop.f32.mrb[0].mxu0
        %2780 = vmatprep.mubr.f32.mxu0 %v2518
        %2781 = vmatmul.mubr.f32.gmra.mrb[0].mxu0 %v2517
        %v2782 = vpop.f32.mrb[0].mxu0
        %v2783 = vadd.f32 0.0, %v2782
        %v2784 = vpop.f32.mrb[0].mxu0
        %2785 = vmatprep.mubr.f32.mxu0 %v2520
        %2786 = vmatmul.mubr.f32.gmra.mrb[0].mxu0 %v2519
        %v2787 = vpop.f32.mrb[0].mxu0
        %v2788 = vadd.f32 0.0, %v2787
        %v2789 = vpop.f32.mrb[0].mxu0
        %2790 = vdwg.mxu0
        %v2832 = vcombine.high %v2588, %v2588
        %v2834 = vunpack.c.l.s4 1983009808
        %v2835 = vunpack.c.0.s8 %v2834
        %v2836 = vlaneseq
        %v2837 = vshrl.u32 %v2836, 7
        %v2838 = vsub.s32 %v2835, %v2837
        %v2839 = vrot.slane %v2588, %v2838
        %v2841 = vunpack.c.l.s4 1983009808
        %v2842 = vunpack.c.0.s8 %v2841
        %v2843 = vlaneseq
        %v2844 = vshrl.u32 %v2843, 7
        %v2845 = vsub.s32 %v2842, %v2844
        %v2846 = vrot.slane %v2832, %v2845
        %v2847 = vcombine.high %v2839, %v2839
        %v2848 = vcombine.high %v2846, %v2846
        %v2849 = vcombine.high %v2593, %v2593
        %v2851 = vunpack.c.l.s4 1983009808
        %v2852 = vunpack.c.0.s8 %v2851
        %v2853 = vlaneseq
        %v2854 = vshrl.u32 %v2853, 7
        %v2855 = vsub.s32 %v2852, %v2854
        %v2856 = vrot.slane %v2593, %v2855
        %v2858 = vunpack.c.l.s4 1983009808
        %v2859 = vunpack.c.0.s8 %v2858
        %v2860 = vlaneseq
        %v2861 = vshrl.u32 %v2860, 7
        %v2862 = vsub.s32 %v2859, %v2861
        %v2863 = vrot.slane %v2849, %v2862
        %v2864 = vcombine.high %v2856, %v2856
        %v2865 = vcombine.high %v2863, %v2863
        %v2866 = vcombine.high %v2598, %v2598
        %v2868 = vunpack.c.l.s4 1983009808
        %v2869 = vunpack.c.0.s8 %v2868
        %v2870 = vlaneseq
        %v2871 = vshrl.u32 %v2870, 7
        %v2872 = vsub.s32 %v2869, %v2871
        %v2873 = vrot.slane %v2598, %v2872
        %v2875 = vunpack.c.l.s4 1983009808
        %v2876 = vunpack.c.0.s8 %v2875
        %v2877 = vlaneseq
        %v2878 = vshrl.u32 %v2877, 7
        %v2879 = vsub.s32 %v2876, %v2878
        %v2880 = vrot.slane %v2866, %v2879
        %v2881 = vcombine.high %v2873, %v2873
        %v2882 = vcombine.high %v2880, %v2880
        %v2883 = vcombine.high %v2603, %v2603
        %v2885 = vunpack.c.l.s4 1983009808
        %v2886 = vunpack.c.0.s8 %v2885
        %v2887 = vlaneseq
        %v2888 = vshrl.u32 %v2887, 7
        %v2889 = vsub.s32 %v2886, %v2888
        %v2890 = vrot.slane %v2603, %v2889
        %v2892 = vunpack.c.l.s4 1983009808
        %v2893 = vunpack.c.0.s8 %v2892
        %v2894 = vlaneseq
        %v2895 = vshrl.u32 %v2894, 7
        %v2896 = vsub.s32 %v2893, %v2895
        %v2897 = vrot.slane %v2883, %v2896
        %v2898 = vcombine.high %v2890, %v2890
        %v2899 = vcombine.high %v2897, %v2897
        %v2900 = vcombine.high %v2608, %v2608
        %v2902 = vunpack.c.l.s4 1983009808
        %v2903 = vunpack.c.0.s8 %v2902
        %v2904 = vlaneseq
        %v2905 = vshrl.u32 %v2904, 7
        %v2906 = vsub.s32 %v2903, %v2905
        %v2907 = vrot.slane %v2608, %v2906
        %v2909 = vunpack.c.l.s4 1983009808
        %v2910 = vunpack.c.0.s8 %v2909
        %v2911 = vlaneseq
        %v2912 = vshrl.u32 %v2911, 7
        %v2913 = vsub.s32 %v2910, %v2912
        %v2914 = vrot.slane %v2900, %v2913
        %v2915 = vcombine.high %v2907, %v2907
        %v2916 = vcombine.high %v2914, %v2914
        %v2917 = vcombine.high %v2613, %v2613
        %v2919 = vunpack.c.l.s4 1983009808
        %v2920 = vunpack.c.0.s8 %v2919
        %v2921 = vlaneseq
        %v2922 = vshrl.u32 %v2921, 7
        %v2923 = vsub.s32 %v2920, %v2922
        %v2924 = vrot.slane %v2613, %v2923
        %v2926 = vunpack.c.l.s4 1983009808
        %v2927 = vunpack.c.0.s8 %v2926
        %v2928 = vlaneseq
        %v2929 = vshrl.u32 %v2928, 7
        %v2930 = vsub.s32 %v2927, %v2929
        %v2931 = vrot.slane %v2917, %v2930
        %v2932 = vcombine.high %v2924, %v2924
        %v2933 = vcombine.high %v2931, %v2931
        %v2934 = vcombine.high %v2618, %v2618
        %v2936 = vunpack.c.l.s4 1983009808
        %v2937 = vunpack.c.0.s8 %v2936
        %v2938 = vlaneseq
        %v2939 = vshrl.u32 %v2938, 7
        %v2940 = vsub.s32 %v2937, %v2939
        %v2941 = vrot.slane %v2618, %v2940
        %v2943 = vunpack.c.l.s4 1983009808
        %v2944 = vunpack.c.0.s8 %v2943
        %v2945 = vlaneseq
        %v2946 = vshrl.u32 %v2945, 7
        %v2947 = vsub.s32 %v2944, %v2946
        %v2948 = vrot.slane %v2934, %v2947
        %v2949 = vcombine.high %v2941, %v2941
        %v2950 = vcombine.high %v2948, %v2948
        %v2951 = vcombine.high %v2623, %v2623
        %v2953 = vunpack.c.l.s4 1983009808
        %v2954 = vunpack.c.0.s8 %v2953
        %v2955 = vlaneseq
        %v2956 = vshrl.u32 %v2955, 7
        %v2957 = vsub.s32 %v2954, %v2956
        %v2958 = vrot.slane %v2623, %v2957
        %v2960 = vunpack.c.l.s4 1983009808
        %v2961 = vunpack.c.0.s8 %v2960
        %v2962 = vlaneseq
        %v2963 = vshrl.u32 %v2962, 7
        %v2964 = vsub.s32 %v2961, %v2963
        %v2965 = vrot.slane %v2951, %v2964
        %v2966 = vcombine.high %v2958, %v2958
        %v2967 = vcombine.high %v2965, %v2965
        %v2968 = vcombine.high %v2628, %v2628
        %v2970 = vunpack.c.l.s4 1983009808
        %v2971 = vunpack.c.0.s8 %v2970
        %v2972 = vlaneseq
        %v2973 = vshrl.u32 %v2972, 7
        %v2974 = vsub.s32 %v2971, %v2973
        %v2975 = vrot.slane %v2628, %v2974
        %v2977 = vunpack.c.l.s4 1983009808
        %v2978 = vunpack.c.0.s8 %v2977
        %v2979 = vlaneseq
        %v2980 = vshrl.u32 %v2979, 7
        %v2981 = vsub.s32 %v2978, %v2980
        %v2982 = vrot.slane %v2968, %v2981
        %v2983 = vcombine.high %v2975, %v2975
        %v2984 = vcombine.high %v2982, %v2982
        %v2985 = vcombine.high %v2633, %v2633
        %v2987 = vunpack.c.l.s4 1983009808
        %v2988 = vunpack.c.0.s8 %v2987
        %v2989 = vlaneseq
        %v2990 = vshrl.u32 %v2989, 7
        %v2991 = vsub.s32 %v2988, %v2990
        %v2992 = vrot.slane %v2633, %v2991
        %v2994 = vunpack.c.l.s4 1983009808
        %v2995 = vunpack.c.0.s8 %v2994
        %v2996 = vlaneseq
        %v2997 = vshrl.u32 %v2996, 7
        %v2998 = vsub.s32 %v2995, %v2997
        %v2999 = vrot.slane %v2985, %v2998
        %v3000 = vcombine.high %v2992, %v2992
        %v3001 = vcombine.high %v2999, %v2999
        %v3002 = vcombine.high %v2638, %v2638
        %v3004 = vunpack.c.l.s4 1983009808
        %v3005 = vunpack.c.0.s8 %v3004
        %v3006 = vlaneseq
        %v3007 = vshrl.u32 %v3006, 7
        %v3008 = vsub.s32 %v3005, %v3007
        %v3009 = vrot.slane %v2638, %v3008
        %v3011 = vunpack.c.l.s4 1983009808
        %v3012 = vunpack.c.0.s8 %v3011
        %v3013 = vlaneseq
        %v3014 = vshrl.u32 %v3013, 7
        %v3015 = vsub.s32 %v3012, %v3014
        %v3016 = vrot.slane %v3002, %v3015
        %v3017 = vcombine.high %v3009, %v3009
        %v3018 = vcombine.high %v3016, %v3016
        %v3019 = vcombine.high %v2643, %v2643
        %v3021 = vunpack.c.l.s4 1983009808
        %v3022 = vunpack.c.0.s8 %v3021
        %v3023 = vlaneseq
        %v3024 = vshrl.u32 %v3023, 7
        %v3025 = vsub.s32 %v3022, %v3024
        %v3026 = vrot.slane %v2643, %v3025
        %v3028 = vunpack.c.l.s4 1983009808
        %v3029 = vunpack.c.0.s8 %v3028
        %v3030 = vlaneseq
        %v3031 = vshrl.u32 %v3030, 7
        %v3032 = vsub.s32 %v3029, %v3031
        %v3033 = vrot.slane %v3019, %v3032
        %v3034 = vcombine.high %v3026, %v3026
        %v3035 = vcombine.high %v3033, %v3033
        %v3036 = vcombine.high %v2648, %v2648
        %v3038 = vunpack.c.l.s4 1983009808
        %v3039 = vunpack.c.0.s8 %v3038
        %v3040 = vlaneseq
        %v3041 = vshrl.u32 %v3040, 7
        %v3042 = vsub.s32 %v3039, %v3041
        %v3043 = vrot.slane %v2648, %v3042
        %v3045 = vunpack.c.l.s4 1983009808
        %v3046 = vunpack.c.0.s8 %v3045
        %v3047 = vlaneseq
        %v3048 = vshrl.u32 %v3047, 7
        %v3049 = vsub.s32 %v3046, %v3048
        %v3050 = vrot.slane %v3036, %v3049
        %v3051 = vcombine.high %v3043, %v3043
        %v3052 = vcombine.high %v3050, %v3050
        %v3053 = vcombine.high %v2653, %v2653
        %v3055 = vunpack.c.l.s4 1983009808
        %v3056 = vunpack.c.0.s8 %v3055
        %v3057 = vlaneseq
        %v3058 = vshrl.u32 %v3057, 7
        %v3059 = vsub.s32 %v3056, %v3058
        %v3060 = vrot.slane %v2653, %v3059
        %v3062 = vunpack.c.l.s4 1983009808
        %v3063 = vunpack.c.0.s8 %v3062
        %v3064 = vlaneseq
        %v3065 = vshrl.u32 %v3064, 7
        %v3066 = vsub.s32 %v3063, %v3065
        %v3067 = vrot.slane %v3053, %v3066
        %v3068 = vcombine.high %v3060, %v3060
        %v3069 = vcombine.high %v3067, %v3067
        %v3070 = vcombine.high %v2658, %v2658
        %v3072 = vunpack.c.l.s4 1983009808
        %v3073 = vunpack.c.0.s8 %v3072
        %v3074 = vlaneseq
        %v3075 = vshrl.u32 %v3074, 7
        %v3076 = vsub.s32 %v3073, %v3075
        %v3077 = vrot.slane %v2658, %v3076
        %v3079 = vunpack.c.l.s4 1983009808
        %v3080 = vunpack.c.0.s8 %v3079
        %v3081 = vlaneseq
        %v3082 = vshrl.u32 %v3081, 7
        %v3083 = vsub.s32 %v3080, %v3082
        %v3084 = vrot.slane %v3070, %v3083
        %v3085 = vcombine.high %v3077, %v3077
        %v3086 = vcombine.high %v3084, %v3084
        %v3087 = vcombine.high %v2663, %v2663
        %v3089 = vunpack.c.l.s4 1983009808
        %v3090 = vunpack.c.0.s8 %v3089
        %v3091 = vlaneseq
        %v3092 = vshrl.u32 %v3091, 7
        %v3093 = vsub.s32 %v3090, %v3092
        %v3094 = vrot.slane %v2663, %v3093
        %v3096 = vunpack.c.l.s4 1983009808
        %v3097 = vunpack.c.0.s8 %v3096
        %v3098 = vlaneseq
        %v3099 = vshrl.u32 %v3098, 7
        %v3100 = vsub.s32 %v3097, %v3099
        %v3101 = vrot.slane %v3087, %v3100
        %v3102 = vcombine.high %v3094, %v3094
        %v3103 = vcombine.high %v3101, %v3101
        %v3104 = vcombine.high %v2668, %v2668
        %v3106 = vunpack.c.l.s4 1983009808
        %v3107 = vunpack.c.0.s8 %v3106
        %v3108 = vlaneseq
        %v3109 = vshrl.u32 %v3108, 7
        %v3110 = vsub.s32 %v3107, %v3109
        %v3111 = vrot.slane %v2668, %v3110
        %v3113 = vunpack.c.l.s4 1983009808
        %v3114 = vunpack.c.0.s8 %v3113
        %v3115 = vlaneseq
        %v3116 = vshrl.u32 %v3115, 7
        %v3117 = vsub.s32 %v3114, %v3116
        %v3118 = vrot.slane %v3104, %v3117
        %v3119 = vcombine.high %v3111, %v3111
        %v3120 = vcombine.high %v3118, %v3118
        %v3121 = vcombine.high %v2673, %v2673
        %v3123 = vunpack.c.l.s4 1983009808
        %v3124 = vunpack.c.0.s8 %v3123
        %v3125 = vlaneseq
        %v3126 = vshrl.u32 %v3125, 7
        %v3127 = vsub.s32 %v3124, %v3126
        %v3128 = vrot.slane %v2673, %v3127
        %v3130 = vunpack.c.l.s4 1983009808
        %v3131 = vunpack.c.0.s8 %v3130
        %v3132 = vlaneseq
        %v3133 = vshrl.u32 %v3132, 7
        %v3134 = vsub.s32 %v3131, %v3133
        %v3135 = vrot.slane %v3121, %v3134
        %v3136 = vcombine.high %v3128, %v3128
        %v3137 = vcombine.high %v3135, %v3135
        %v3138 = vcombine.high %v2678, %v2678
        %v3140 = vunpack.c.l.s4 1983009808
        %v3141 = vunpack.c.0.s8 %v3140
        %v3142 = vlaneseq
        %v3143 = vshrl.u32 %v3142, 7
        %v3144 = vsub.s32 %v3141, %v3143
        %v3145 = vrot.slane %v2678, %v3144
        %v3147 = vunpack.c.l.s4 1983009808
        %v3148 = vunpack.c.0.s8 %v3147
        %v3149 = vlaneseq
        %v3150 = vshrl.u32 %v3149, 7
        %v3151 = vsub.s32 %v3148, %v3150
        %v3152 = vrot.slane %v3138, %v3151
        %v3153 = vcombine.high %v3145, %v3145
        %v3154 = vcombine.high %v3152, %v3152
        %v3155 = vcombine.high %v2683, %v2683
        %v3157 = vunpack.c.l.s4 1983009808
        %v3158 = vunpack.c.0.s8 %v3157
        %v3159 = vlaneseq
        %v3160 = vshrl.u32 %v3159, 7
        %v3161 = vsub.s32 %v3158, %v3160
        %v3162 = vrot.slane %v2683, %v3161
        %v3164 = vunpack.c.l.s4 1983009808
        %v3165 = vunpack.c.0.s8 %v3164
        %v3166 = vlaneseq
        %v3167 = vshrl.u32 %v3166, 7
        %v3168 = vsub.s32 %v3165, %v3167
        %v3169 = vrot.slane %v3155, %v3168
        %v3170 = vcombine.high %v3162, %v3162
        %v3171 = vcombine.high %v3169, %v3169
        %v3172 = vcombine.high %v2688, %v2688
        %v3174 = vunpack.c.l.s4 1983009808
        %v3175 = vunpack.c.0.s8 %v3174
        %v3176 = vlaneseq
        %v3177 = vshrl.u32 %v3176, 7
        %v3178 = vsub.s32 %v3175, %v3177
        %v3179 = vrot.slane %v2688, %v3178
        %v3181 = vunpack.c.l.s4 1983009808
        %v3182 = vunpack.c.0.s8 %v3181
        %v3183 = vlaneseq
        %v3184 = vshrl.u32 %v3183, 7
        %v3185 = vsub.s32 %v3182, %v3184
        %v3186 = vrot.slane %v3172, %v3185
        %v3187 = vcombine.high %v3179, %v3179
        %v3188 = vcombine.high %v3186, %v3186
        %v3189 = vcombine.high %v2693, %v2693
        %v3191 = vunpack.c.l.s4 1983009808
        %v3192 = vunpack.c.0.s8 %v3191
        %v3193 = vlaneseq
        %v3194 = vshrl.u32 %v3193, 7
        %v3195 = vsub.s32 %v3192, %v3194
        %v3196 = vrot.slane %v2693, %v3195
        %v3198 = vunpack.c.l.s4 1983009808
        %v3199 = vunpack.c.0.s8 %v3198
        %v3200 = vlaneseq
        %v3201 = vshrl.u32 %v3200, 7
        %v3202 = vsub.s32 %v3199, %v3201
        %v3203 = vrot.slane %v3189, %v3202
        %v3204 = vcombine.high %v3196, %v3196
        %v3205 = vcombine.high %v3203, %v3203
        %v3206 = vcombine.high %v2698, %v2698
        %v3208 = vunpack.c.l.s4 1983009808
        %v3209 = vunpack.c.0.s8 %v3208
        %v3210 = vlaneseq
        %v3211 = vshrl.u32 %v3210, 7
        %v3212 = vsub.s32 %v3209, %v3211
        %v3213 = vrot.slane %v2698, %v3212
        %v3215 = vunpack.c.l.s4 1983009808
        %v3216 = vunpack.c.0.s8 %v3215
        %v3217 = vlaneseq
        %v3218 = vshrl.u32 %v3217, 7
        %v3219 = vsub.s32 %v3216, %v3218
        %v3220 = vrot.slane %v3206, %v3219
        %v3221 = vcombine.high %v3213, %v3213
        %v3222 = vcombine.high %v3220, %v3220
        %v3223 = vcombine.high %v2703, %v2703
        %v3225 = vunpack.c.l.s4 1983009808
        %v3226 = vunpack.c.0.s8 %v3225
        %v3227 = vlaneseq
        %v3228 = vshrl.u32 %v3227, 7
        %v3229 = vsub.s32 %v3226, %v3228
        %v3230 = vrot.slane %v2703, %v3229
        %v3232 = vunpack.c.l.s4 1983009808
        %v3233 = vunpack.c.0.s8 %v3232
        %v3234 = vlaneseq
        %v3235 = vshrl.u32 %v3234, 7
        %v3236 = vsub.s32 %v3233, %v3235
        %v3237 = vrot.slane %v3223, %v3236
        %v3238 = vcombine.high %v3230, %v3230
        %v3239 = vcombine.high %v3237, %v3237
        %v3240 = vcombine.high %v2708, %v2708
        %v3242 = vunpack.c.l.s4 1983009808
        %v3243 = vunpack.c.0.s8 %v3242
        %v3244 = vlaneseq
        %v3245 = vshrl.u32 %v3244, 7
        %v3246 = vsub.s32 %v3243, %v3245
        %v3247 = vrot.slane %v2708, %v3246
        %v3249 = vunpack.c.l.s4 1983009808
        %v3250 = vunpack.c.0.s8 %v3249
        %v3251 = vlaneseq
        %v3252 = vshrl.u32 %v3251, 7
        %v3253 = vsub.s32 %v3250, %v3252
        %v3254 = vrot.slane %v3240, %v3253
        %v3255 = vcombine.high %v3247, %v3247
        %v3256 = vcombine.high %v3254, %v3254
        %v3257 = vcombine.high %v2713, %v2713
        %v3259 = vunpack.c.l.s4 1983009808
        %v3260 = vunpack.c.0.s8 %v3259
        %v3261 = vlaneseq
        %v3262 = vshrl.u32 %v3261, 7
        %v3263 = vsub.s32 %v3260, %v3262
        %v3264 = vrot.slane %v2713, %v3263
        %v3266 = vunpack.c.l.s4 1983009808
        %v3267 = vunpack.c.0.s8 %v3266
        %v3268 = vlaneseq
        %v3269 = vshrl.u32 %v3268, 7
        %v3270 = vsub.s32 %v3267, %v3269
        %v3271 = vrot.slane %v3257, %v3270
        %v3272 = vcombine.high %v3264, %v3264
        %v3273 = vcombine.high %v3271, %v3271
        %v3274 = vcombine.high %v2718, %v2718
        %v3276 = vunpack.c.l.s4 1983009808
        %v3277 = vunpack.c.0.s8 %v3276
        %v3278 = vlaneseq
        %v3279 = vshrl.u32 %v3278, 7
        %v3280 = vsub.s32 %v3277, %v3279
        %v3281 = vrot.slane %v2718, %v3280
        %v3283 = vunpack.c.l.s4 1983009808
        %v3284 = vunpack.c.0.s8 %v3283
        %v3285 = vlaneseq
        %v3286 = vshrl.u32 %v3285, 7
        %v3287 = vsub.s32 %v3284, %v3286
        %v3288 = vrot.slane %v3274, %v3287
        %v3289 = vcombine.high %v3281, %v3281
        %v3290 = vcombine.high %v3288, %v3288
        %v3291 = vcombine.high %v2723, %v2723
        %v3293 = vunpack.c.l.s4 1983009808
        %v3294 = vunpack.c.0.s8 %v3293
        %v3295 = vlaneseq
        %v3296 = vshrl.u32 %v3295, 7
        %v3297 = vsub.s32 %v3294, %v3296
        %v3298 = vrot.slane %v2723, %v3297
        %v3300 = vunpack.c.l.s4 1983009808
        %v3301 = vunpack.c.0.s8 %v3300
        %v3302 = vlaneseq
        %v3303 = vshrl.u32 %v3302, 7
        %v3304 = vsub.s32 %v3301, %v3303
        %v3305 = vrot.slane %v3291, %v3304
        %v3306 = vcombine.high %v3298, %v3298
        %v3307 = vcombine.high %v3305, %v3305
        %v3308 = vcombine.high %v2728, %v2728
        %v3310 = vunpack.c.l.s4 1983009808
        %v3311 = vunpack.c.0.s8 %v3310
        %v3312 = vlaneseq
        %v3313 = vshrl.u32 %v3312, 7
        %v3314 = vsub.s32 %v3311, %v3313
        %v3315 = vrot.slane %v2728, %v3314
        %v3317 = vunpack.c.l.s4 1983009808
        %v3318 = vunpack.c.0.s8 %v3317
        %v3319 = vlaneseq
        %v3320 = vshrl.u32 %v3319, 7
        %v3321 = vsub.s32 %v3318, %v3320
        %v3322 = vrot.slane %v3308, %v3321
        %v3323 = vcombine.high %v3315, %v3315
        %v3324 = vcombine.high %v3322, %v3322
        %v3325 = vcombine.high %v2733, %v2733
        %v3327 = vunpack.c.l.s4 1983009808
        %v3328 = vunpack.c.0.s8 %v3327
        %v3329 = vlaneseq
        %v3330 = vshrl.u32 %v3329, 7
        %v3331 = vsub.s32 %v3328, %v3330
        %v3332 = vrot.slane %v2733, %v3331
        %v3334 = vunpack.c.l.s4 1983009808
        %v3335 = vunpack.c.0.s8 %v3334
        %v3336 = vlaneseq
        %v3337 = vshrl.u32 %v3336, 7
        %v3338 = vsub.s32 %v3335, %v3337
        %v3339 = vrot.slane %v3325, %v3338
        %v3340 = vcombine.high %v3332, %v3332
        %v3341 = vcombine.high %v3339, %v3339
        %v3342 = vcombine.high %v2738, %v2738
        %v3344 = vunpack.c.l.s4 1983009808
        %v3345 = vunpack.c.0.s8 %v3344
        %v3346 = vlaneseq
        %v3347 = vshrl.u32 %v3346, 7
        %v3348 = vsub.s32 %v3345, %v3347
        %v3349 = vrot.slane %v2738, %v3348
        %v3351 = vunpack.c.l.s4 1983009808
        %v3352 = vunpack.c.0.s8 %v3351
        %v3353 = vlaneseq
        %v3354 = vshrl.u32 %v3353, 7
        %v3355 = vsub.s32 %v3352, %v3354
        %v3356 = vrot.slane %v3342, %v3355
        %v3357 = vcombine.high %v3349, %v3349
        %v3358 = vcombine.high %v3356, %v3356
        %v3359 = vcombine.high %v2743, %v2743
        %v3361 = vunpack.c.l.s4 1983009808
        %v3362 = vunpack.c.0.s8 %v3361
        %v3363 = vlaneseq
        %v3364 = vshrl.u32 %v3363, 7
        %v3365 = vsub.s32 %v3362, %v3364
        %v3366 = vrot.slane %v2743, %v3365
        %v3368 = vunpack.c.l.s4 1983009808
        %v3369 = vunpack.c.0.s8 %v3368
        %v3370 = vlaneseq
        %v3371 = vshrl.u32 %v3370, 7
        %v3372 = vsub.s32 %v3369, %v3371
        %v3373 = vrot.slane %v3359, %v3372
        %v3374 = vcombine.high %v3366, %v3366
        %v3375 = vcombine.high %v3373, %v3373
        %v3376 = vcombine.high %v2748, %v2748
        %v3378 = vunpack.c.l.s4 1983009808
        %v3379 = vunpack.c.0.s8 %v3378
        %v3380 = vlaneseq
        %v3381 = vshrl.u32 %v3380, 7
        %v3382 = vsub.s32 %v3379, %v3381
        %v3383 = vrot.slane %v2748, %v3382
        %v3385 = vunpack.c.l.s4 1983009808
        %v3386 = vunpack.c.0.s8 %v3385
        %v3387 = vlaneseq
        %v3388 = vshrl.u32 %v3387, 7
        %v3389 = vsub.s32 %v3386, %v3388
        %v3390 = vrot.slane %v3376, %v3389
        %v3391 = vcombine.high %v3383, %v3383
        %v3392 = vcombine.high %v3390, %v3390
        %v3393 = vcombine.high %v2753, %v2753
        %v3395 = vunpack.c.l.s4 1983009808
        %v3396 = vunpack.c.0.s8 %v3395
        %v3397 = vlaneseq
        %v3398 = vshrl.u32 %v3397, 7
        %v3399 = vsub.s32 %v3396, %v3398
        %v3400 = vrot.slane %v2753, %v3399
        %v3402 = vunpack.c.l.s4 1983009808
        %v3403 = vunpack.c.0.s8 %v3402
        %v3404 = vlaneseq
        %v3405 = vshrl.u32 %v3404, 7
        %v3406 = vsub.s32 %v3403, %v3405
        %v3407 = vrot.slane %v3393, %v3406
        %v3408 = vcombine.high %v3400, %v3400
        %v3409 = vcombine.high %v3407, %v3407
        %v3410 = vcombine.high %v2758, %v2758
        %v3412 = vunpack.c.l.s4 1983009808
        %v3413 = vunpack.c.0.s8 %v3412
        %v3414 = vlaneseq
        %v3415 = vshrl.u32 %v3414, 7
        %v3416 = vsub.s32 %v3413, %v3415
        %v3417 = vrot.slane %v2758, %v3416
        %v3419 = vunpack.c.l.s4 1983009808
        %v3420 = vunpack.c.0.s8 %v3419
        %v3421 = vlaneseq
        %v3422 = vshrl.u32 %v3421, 7
        %v3423 = vsub.s32 %v3420, %v3422
        %v3424 = vrot.slane %v3410, %v3423
        %v3425 = vcombine.high %v3417, %v3417
        %v3426 = vcombine.high %v3424, %v3424
        %v3427 = vcombine.high %v2763, %v2763
        %v3429 = vunpack.c.l.s4 1983009808
        %v3430 = vunpack.c.0.s8 %v3429
        %v3431 = vlaneseq
        %v3432 = vshrl.u32 %v3431, 7
        %v3433 = vsub.s32 %v3430, %v3432
        %v3434 = vrot.slane %v2763, %v3433
        %v3436 = vunpack.c.l.s4 1983009808
        %v3437 = vunpack.c.0.s8 %v3436
        %v3438 = vlaneseq
        %v3439 = vshrl.u32 %v3438, 7
        %v3440 = vsub.s32 %v3437, %v3439
        %v3441 = vrot.slane %v3427, %v3440
        %v3442 = vcombine.high %v3434, %v3434
        %v3443 = vcombine.high %v3441, %v3441
        %v3444 = vcombine.high %v2768, %v2768
        %v3446 = vunpack.c.l.s4 1983009808
        %v3447 = vunpack.c.0.s8 %v3446
        %v3448 = vlaneseq
        %v3449 = vshrl.u32 %v3448, 7
        %v3450 = vsub.s32 %v3447, %v3449
        %v3451 = vrot.slane %v2768, %v3450
        %v3453 = vunpack.c.l.s4 1983009808
        %v3454 = vunpack.c.0.s8 %v3453
        %v3455 = vlaneseq
        %v3456 = vshrl.u32 %v3455, 7
        %v3457 = vsub.s32 %v3454, %v3456
        %v3458 = vrot.slane %v3444, %v3457
        %v3459 = vcombine.high %v3451, %v3451
        %v3460 = vcombine.high %v3458, %v3458
        %v3461 = vcombine.high %v2773, %v2773
        %v3463 = vunpack.c.l.s4 1983009808
        %v3464 = vunpack.c.0.s8 %v3463
        %v3465 = vlaneseq
        %v3466 = vshrl.u32 %v3465, 7
        %v3467 = vsub.s32 %v3464, %v3466
        %v3468 = vrot.slane %v2773, %v3467
        %v3470 = vunpack.c.l.s4 1983009808
        %v3471 = vunpack.c.0.s8 %v3470
        %v3472 = vlaneseq
        %v3473 = vshrl.u32 %v3472, 7
        %v3474 = vsub.s32 %v3471, %v3473
        %v3475 = vrot.slane %v3461, %v3474
        %v3476 = vcombine.high %v3468, %v3468
        %v3477 = vcombine.high %v3475, %v3475
        %v3478 = vcombine.high %v2778, %v2778
        %v3480 = vunpack.c.l.s4 1983009808
        %v3481 = vunpack.c.0.s8 %v3480
        %v3482 = vlaneseq
        %v3483 = vshrl.u32 %v3482, 7
        %v3484 = vsub.s32 %v3481, %v3483
        %v3485 = vrot.slane %v2778, %v3484
        %v3487 = vunpack.c.l.s4 1983009808
        %v3488 = vunpack.c.0.s8 %v3487
        %v3489 = vlaneseq
        %v3490 = vshrl.u32 %v3489, 7
        %v3491 = vsub.s32 %v3488, %v3490
        %v3492 = vrot.slane %v3478, %v3491
        %v3493 = vcombine.high %v3485, %v3485
        %v3494 = vcombine.high %v3492, %v3492
        %v3495 = vcombine.high %v2783, %v2783
        %v3497 = vunpack.c.l.s4 1983009808
        %v3498 = vunpack.c.0.s8 %v3497
        %v3499 = vlaneseq
        %v3500 = vshrl.u32 %v3499, 7
        %v3501 = vsub.s32 %v3498, %v3500
        %v3502 = vrot.slane %v2783, %v3501
        %v3504 = vunpack.c.l.s4 1983009808
        %v3505 = vunpack.c.0.s8 %v3504
        %v3506 = vlaneseq
        %v3507 = vshrl.u32 %v3506, 7
        %v3508 = vsub.s32 %v3505, %v3507
        %v3509 = vrot.slane %v3495, %v3508
        %v3510 = vcombine.high %v3502, %v3502
        %v3511 = vcombine.high %v3509, %v3509
        %v3513 = vunpack.c.l.s4 1983009808
        %v3514 = vunpack.c.0.s8 %v3513
        %v3515 = vlaneseq
        %v3516 = vshrl.u32 %v3515, 7
        %v3517 = vsub.s32 %v3514, %v3516
        %v3518 = vrot.slane %v2788, %v3517
        %v3519 = vcombine.high %v3518, %v3518
        %v3520 = vcombine.low %v2839, %v2847
        %v3521 = vcombine.low %v2846, %v2848
        %v3523 = vunpack.c.l.s4 1983009808
        %v3524 = vunpack.c.0.s8 %v3523
        %v3525 = vlaneseq
        %v3526 = vshrl.u32 %v3525, 7
        %v3527 = vsub.s32 %v3524, %v3526
        %v3528 = vrot.slane %v3520, %v3527
        %v3530 = vunpack.c.l.s4 1983009808
        %v3531 = vunpack.c.0.s8 %v3530
        %v3532 = vlaneseq
        %v3533 = vshrl.u32 %v3532, 7
        %v3534 = vsub.s32 %v3531, %v3533
        %v3535 = vrot.slane %v3521, %v3534
        %v3536 = vcombine.low %v3528, %v3535
        %v3537 = vcombine.low %v2856, %v2864
        %v3538 = vcombine.low %v2863, %v2865
        %v3540 = vunpack.c.l.s4 1983009808
        %v3541 = vunpack.c.0.s8 %v3540
        %v3542 = vlaneseq
        %v3543 = vshrl.u32 %v3542, 7
        %v3544 = vsub.s32 %v3541, %v3543
        %v3545 = vrot.slane %v3537, %v3544
        %v3547 = vunpack.c.l.s4 1983009808
        %v3548 = vunpack.c.0.s8 %v3547
        %v3549 = vlaneseq
        %v3550 = vshrl.u32 %v3549, 7
        %v3551 = vsub.s32 %v3548, %v3550
        %v3552 = vrot.slane %v3538, %v3551
        %v3553 = vcombine.low %v3545, %v3552
        %v3555 = vunpack.c.l.s4 1983009808
        %v3556 = vunpack.c.0.s8 %v3555
        %v3557 = vlaneseq
        %v3558 = vshrl.u32 %v3557, 7
        %v3559 = vsub.s32 %v3556, %v3558
        %v3560 = vrot.slane %v2873, %v3559
        %v3561 = vcombine.low %v2881, %v2880
        %v3562 = vcombine.low %v2882, %v2890
        %v3564 = vunpack.c.l.s4 1983009808
        %v3565 = vunpack.c.0.s8 %v3564
        %v3566 = vlaneseq
        %v3567 = vshrl.u32 %v3566, 7
        %v3568 = vsub.s32 %v3565, %v3567
        %v3569 = vrot.slane %v3561, %v3568
        %v3571 = vunpack.c.l.s4 1983009808
        %v3572 = vunpack.c.0.s8 %v3571
        %v3573 = vlaneseq
        %v3574 = vshrl.u32 %v3573, 7
        %v3575 = vsub.s32 %v3572, %v3574
        %v3576 = vrot.slane %v3562, %v3575
        %v3577 = vcombine.low %v3569, %v3576
        %v3578 = vcombine.low %v2898, %v2897
        %v3579 = vcombine.low %v2899, %v2907
        %v3581 = vunpack.c.l.s4 1983009808
        %v3582 = vunpack.c.0.s8 %v3581
        %v3583 = vlaneseq
        %v3584 = vshrl.u32 %v3583, 7
        %v3585 = vsub.s32 %v3582, %v3584
        %v3586 = vrot.slane %v3578, %v3585
        %v3588 = vunpack.c.l.s4 1983009808
        %v3589 = vunpack.c.0.s8 %v3588
        %v3590 = vlaneseq
        %v3591 = vshrl.u32 %v3590, 7
        %v3592 = vsub.s32 %v3589, %v3591
        %v3593 = vrot.slane %v3579, %v3592
        %v3594 = vcombine.low %v3586, %v3593
        %v3596 = vunpack.c.l.s4 1983009808
        %v3597 = vunpack.c.0.s8 %v3596
        %v3598 = vlaneseq
        %v3599 = vshrl.u32 %v3598, 7
        %v3600 = vsub.s32 %v3597, %v3599
        %v3601 = vrot.slane %v2915, %v3600
        %v3602 = vcombine.low %v2914, %v2916
        %v3603 = vcombine.low %v2924, %v2932
        %v3605 = vunpack.c.l.s4 1983009808
        %v3606 = vunpack.c.0.s8 %v3605
        %v3607 = vlaneseq
        %v3608 = vshrl.u32 %v3607, 7
        %v3609 = vsub.s32 %v3606, %v3608
        %v3610 = vrot.slane %v3602, %v3609
        %v3612 = vunpack.c.l.s4 1983009808
        %v3613 = vunpack.c.0.s8 %v3612
        %v3614 = vlaneseq
        %v3615 = vshrl.u32 %v3614, 7
        %v3616 = vsub.s32 %v3613, %v3615
        %v3617 = vrot.slane %v3603, %v3616
        %v3618 = vcombine.low %v3610, %v3617
        %v3619 = vcombine.low %v2931, %v2933
        %v3620 = vcombine.low %v2941, %v2949
        %v3622 = vunpack.c.l.s4 1983009808
        %v3623 = vunpack.c.0.s8 %v3622
        %v3624 = vlaneseq
        %v3625 = vshrl.u32 %v3624, 7
        %v3626 = vsub.s32 %v3623, %v3625
        %v3627 = vrot.slane %v3619, %v3626
        %v3629 = vunpack.c.l.s4 1983009808
        %v3630 = vunpack.c.0.s8 %v3629
        %v3631 = vlaneseq
        %v3632 = vshrl.u32 %v3631, 7
        %v3633 = vsub.s32 %v3630, %v3632
        %v3634 = vrot.slane %v3620, %v3633
        %v3635 = vcombine.low %v3627, %v3634
        %v3637 = vunpack.c.l.s4 1983009808
        %v3638 = vunpack.c.0.s8 %v3637
        %v3639 = vlaneseq
        %v3640 = vshrl.u32 %v3639, 7
        %v3641 = vsub.s32 %v3638, %v3640
        %v3642 = vrot.slane %v2948, %v3641
        %v3643 = vcombine.low %v2950, %v2958
        %v3644 = vcombine.low %v2966, %v2965
        %v3646 = vunpack.c.l.s4 1983009808
        %v3647 = vunpack.c.0.s8 %v3646
        %v3648 = vlaneseq
        %v3649 = vshrl.u32 %v3648, 7
        %v3650 = vsub.s32 %v3647, %v3649
        %v3651 = vrot.slane %v3643, %v3650
        %v3653 = vunpack.c.l.s4 1983009808
        %v3654 = vunpack.c.0.s8 %v3653
        %v3655 = vlaneseq
        %v3656 = vshrl.u32 %v3655, 7
        %v3657 = vsub.s32 %v3654, %v3656
        %v3658 = vrot.slane %v3644, %v3657
        %v3659 = vcombine.low %v3651, %v3658
        %v3660 = vcombine.low %v2967, %v2975
        %v3661 = vcombine.low %v2983, %v2982
        %v3663 = vunpack.c.l.s4 1983009808
        %v3664 = vunpack.c.0.s8 %v3663
        %v3665 = vlaneseq
        %v3666 = vshrl.u32 %v3665, 7
        %v3667 = vsub.s32 %v3664, %v3666
        %v3668 = vrot.slane %v3660, %v3667
        %v3670 = vunpack.c.l.s4 1983009808
        %v3671 = vunpack.c.0.s8 %v3670
        %v3672 = vlaneseq
        %v3673 = vshrl.u32 %v3672, 7
        %v3674 = vsub.s32 %v3671, %v3673
        %v3675 = vrot.slane %v3661, %v3674
        %v3676 = vcombine.low %v3668, %v3675
        %v3678 = vunpack.c.l.s4 1983009808
        %v3679 = vunpack.c.0.s8 %v3678
        %v3680 = vlaneseq
        %v3681 = vshrl.u32 %v3680, 7
        %v3682 = vsub.s32 %v3679, %v3681
        %v3683 = vrot.slane %v2984, %v3682
        %v3684 = vcombine.low %v2992, %v3000
        %v3685 = vcombine.low %v2999, %v3001
        %v3687 = vunpack.c.l.s4 1983009808
        %v3688 = vunpack.c.0.s8 %v3687
        %v3689 = vlaneseq
        %v3690 = vshrl.u32 %v3689, 7
        %v3691 = vsub.s32 %v3688, %v3690
        %v3692 = vrot.slane %v3684, %v3691
        %v3694 = vunpack.c.l.s4 1983009808
        %v3695 = vunpack.c.0.s8 %v3694
        %v3696 = vlaneseq
        %v3697 = vshrl.u32 %v3696, 7
        %v3698 = vsub.s32 %v3695, %v3697
        %v3699 = vrot.slane %v3685, %v3698
        %v3700 = vcombine.low %v3692, %v3699
        %v3701 = vcombine.low %v3009, %v3017
        %v3702 = vcombine.low %v3016, %v3018
        %v3704 = vunpack.c.l.s4 1983009808
        %v3705 = vunpack.c.0.s8 %v3704
        %v3706 = vlaneseq
        %v3707 = vshrl.u32 %v3706, 7
        %v3708 = vsub.s32 %v3705, %v3707
        %v3709 = vrot.slane %v3701, %v3708
        %v3711 = vunpack.c.l.s4 1983009808
        %v3712 = vunpack.c.0.s8 %v3711
        %v3713 = vlaneseq
        %v3714 = vshrl.u32 %v3713, 7
        %v3715 = vsub.s32 %v3712, %v3714
        %v3716 = vrot.slane %v3702, %v3715
        %v3717 = vcombine.low %v3709, %v3716
        %v3719 = vunpack.c.l.s4 1983009808
        %v3720 = vunpack.c.0.s8 %v3719
        %v3721 = vlaneseq
        %v3722 = vshrl.u32 %v3721, 7
        %v3723 = vsub.s32 %v3720, %v3722
        %v3724 = vrot.slane %v3026, %v3723
        %v3725 = vcombine.low %v3034, %v3033
        %v3726 = vcombine.low %v3035, %v3043
        %v3728 = vunpack.c.l.s4 1983009808
        %v3729 = vunpack.c.0.s8 %v3728
        %v3730 = vlaneseq
        %v3731 = vshrl.u32 %v3730, 7
        %v3732 = vsub.s32 %v3729, %v3731
        %v3733 = vrot.slane %v3725, %v3732
        %v3735 = vunpack.c.l.s4 1983009808
        %v3736 = vunpack.c.0.s8 %v3735
        %v3737 = vlaneseq
        %v3738 = vshrl.u32 %v3737, 7
        %v3739 = vsub.s32 %v3736, %v3738
        %v3740 = vrot.slane %v3726, %v3739
        %v3741 = vcombine.low %v3733, %v3740
        %v3742 = vcombine.low %v3051, %v3050
        %v3743 = vcombine.low %v3052, %v3060
        %v3745 = vunpack.c.l.s4 1983009808
        %v3746 = vunpack.c.0.s8 %v3745
        %v3747 = vlaneseq
        %v3748 = vshrl.u32 %v3747, 7
        %v3749 = vsub.s32 %v3746, %v3748
        %v3750 = vrot.slane %v3742, %v3749
        %v3752 = vunpack.c.l.s4 1983009808
        %v3753 = vunpack.c.0.s8 %v3752
        %v3754 = vlaneseq
        %v3755 = vshrl.u32 %v3754, 7
        %v3756 = vsub.s32 %v3753, %v3755
        %v3757 = vrot.slane %v3743, %v3756
        %v3758 = vcombine.low %v3750, %v3757
        %v3760 = vunpack.c.l.s4 1983009808
        %v3761 = vunpack.c.0.s8 %v3760
        %v3762 = vlaneseq
        %v3763 = vshrl.u32 %v3762, 7
        %v3764 = vsub.s32 %v3761, %v3763
        %v3765 = vrot.slane %v3068, %v3764
        %v3766 = vcombine.low %v3067, %v3069
        %v3767 = vcombine.low %v3077, %v3085
        %v3769 = vunpack.c.l.s4 1983009808
        %v3770 = vunpack.c.0.s8 %v3769
        %v3771 = vlaneseq
        %v3772 = vshrl.u32 %v3771, 7
        %v3773 = vsub.s32 %v3770, %v3772
        %v3774 = vrot.slane %v3766, %v3773
        %v3776 = vunpack.c.l.s4 1983009808
        %v3777 = vunpack.c.0.s8 %v3776
        %v3778 = vlaneseq
        %v3779 = vshrl.u32 %v3778, 7
        %v3780 = vsub.s32 %v3777, %v3779
        %v3781 = vrot.slane %v3767, %v3780
        %v3782 = vcombine.low %v3774, %v3781
        %v3783 = vcombine.low %v3084, %v3086
        %v3784 = vcombine.low %v3094, %v3102
        %v3786 = vunpack.c.l.s4 1983009808
        %v3787 = vunpack.c.0.s8 %v3786
        %v3788 = vlaneseq
        %v3789 = vshrl.u32 %v3788, 7
        %v3790 = vsub.s32 %v3787, %v3789
        %v3791 = vrot.slane %v3783, %v3790
        %v3793 = vunpack.c.l.s4 1983009808
        %v3794 = vunpack.c.0.s8 %v3793
        %v3795 = vlaneseq
        %v3796 = vshrl.u32 %v3795, 7
        %v3797 = vsub.s32 %v3794, %v3796
        %v3798 = vrot.slane %v3784, %v3797
        %v3799 = vcombine.low %v3791, %v3798
        %v3801 = vunpack.c.l.s4 1983009808
        %v3802 = vunpack.c.0.s8 %v3801
        %v3803 = vlaneseq
        %v3804 = vshrl.u32 %v3803, 7
        %v3805 = vsub.s32 %v3802, %v3804
        %v3806 = vrot.slane %v3101, %v3805
        %v3807 = vcombine.low %v3103, %v3111
        %v3808 = vcombine.low %v3119, %v3118
        %v3810 = vunpack.c.l.s4 1983009808
        %v3811 = vunpack.c.0.s8 %v3810
        %v3812 = vlaneseq
        %v3813 = vshrl.u32 %v3812, 7
        %v3814 = vsub.s32 %v3811, %v3813
        %v3815 = vrot.slane %v3807, %v3814
        %v3817 = vunpack.c.l.s4 1983009808
        %v3818 = vunpack.c.0.s8 %v3817
        %v3819 = vlaneseq
        %v3820 = vshrl.u32 %v3819, 7
        %v3821 = vsub.s32 %v3818, %v3820
        %v3822 = vrot.slane %v3808, %v3821
        %v3823 = vcombine.low %v3815, %v3822
        %v3824 = vcombine.low %v3120, %v3128
        %v3825 = vcombine.low %v3136, %v3135
        %v3827 = vunpack.c.l.s4 1983009808
        %v3828 = vunpack.c.0.s8 %v3827
        %v3829 = vlaneseq
        %v3830 = vshrl.u32 %v3829, 7
        %v3831 = vsub.s32 %v3828, %v3830
        %v3832 = vrot.slane %v3824, %v3831
        %v3834 = vunpack.c.l.s4 1983009808
        %v3835 = vunpack.c.0.s8 %v3834
        %v3836 = vlaneseq
        %v3837 = vshrl.u32 %v3836, 7
        %v3838 = vsub.s32 %v3835, %v3837
        %v3839 = vrot.slane %v3825, %v3838
        %v3840 = vcombine.low %v3832, %v3839
        %v3842 = vunpack.c.l.s4 1983009808
        %v3843 = vunpack.c.0.s8 %v3842
        %v3844 = vlaneseq
        %v3845 = vshrl.u32 %v3844, 7
        %v3846 = vsub.s32 %v3843, %v3845
        %v3847 = vrot.slane %v3137, %v3846
        %v3848 = vcombine.low %v3145, %v3153
        %v3849 = vcombine.low %v3152, %v3154
        %v3851 = vunpack.c.l.s4 1983009808
        %v3852 = vunpack.c.0.s8 %v3851
        %v3853 = vlaneseq
        %v3854 = vshrl.u32 %v3853, 7
        %v3855 = vsub.s32 %v3852, %v3854
        %v3856 = vrot.slane %v3848, %v3855
        %v3858 = vunpack.c.l.s4 1983009808
        %v3859 = vunpack.c.0.s8 %v3858
        %v3860 = vlaneseq
        %v3861 = vshrl.u32 %v3860, 7
        %v3862 = vsub.s32 %v3859, %v3861
        %v3863 = vrot.slane %v3849, %v3862
        %v3864 = vcombine.low %v3856, %v3863
        %v3865 = vcombine.low %v3162, %v3170
        %v3866 = vcombine.low %v3169, %v3171
        %v3868 = vunpack.c.l.s4 1983009808
        %v3869 = vunpack.c.0.s8 %v3868
        %v3870 = vlaneseq
        %v3871 = vshrl.u32 %v3870, 7
        %v3872 = vsub.s32 %v3869, %v3871
        %v3873 = vrot.slane %v3865, %v3872
        %v3875 = vunpack.c.l.s4 1983009808
        %v3876 = vunpack.c.0.s8 %v3875
        %v3877 = vlaneseq
        %v3878 = vshrl.u32 %v3877, 7
        %v3879 = vsub.s32 %v3876, %v3878
        %v3880 = vrot.slane %v3866, %v3879
        %v3881 = vcombine.low %v3873, %v3880
        %v3883 = vunpack.c.l.s4 1983009808
        %v3884 = vunpack.c.0.s8 %v3883
        %v3885 = vlaneseq
        %v3886 = vshrl.u32 %v3885, 7
        %v3887 = vsub.s32 %v3884, %v3886
        %v3888 = vrot.slane %v3179, %v3887
        %v3889 = vcombine.low %v3187, %v3186
        %v3890 = vcombine.low %v3188, %v3196
        %v3892 = vunpack.c.l.s4 1983009808
        %v3893 = vunpack.c.0.s8 %v3892
        %v3894 = vlaneseq
        %v3895 = vshrl.u32 %v3894, 7
        %v3896 = vsub.s32 %v3893, %v3895
        %v3897 = vrot.slane %v3889, %v3896
        %v3899 = vunpack.c.l.s4 1983009808
        %v3900 = vunpack.c.0.s8 %v3899
        %v3901 = vlaneseq
        %v3902 = vshrl.u32 %v3901, 7
        %v3903 = vsub.s32 %v3900, %v3902
        %v3904 = vrot.slane %v3890, %v3903
        %v3905 = vcombine.low %v3897, %v3904
        %v3906 = vcombine.low %v3204, %v3203
        %v3907 = vcombine.low %v3205, %v3213
        %v3909 = vunpack.c.l.s4 1983009808
        %v3910 = vunpack.c.0.s8 %v3909
        %v3911 = vlaneseq
        %v3912 = vshrl.u32 %v3911, 7
        %v3913 = vsub.s32 %v3910, %v3912
        %v3914 = vrot.slane %v3906, %v3913
        %v3916 = vunpack.c.l.s4 1983009808
        %v3917 = vunpack.c.0.s8 %v3916
        %v3918 = vlaneseq
        %v3919 = vshrl.u32 %v3918, 7
        %v3920 = vsub.s32 %v3917, %v3919
        %v3921 = vrot.slane %v3907, %v3920
        %v3922 = vcombine.low %v3914, %v3921
        %v3924 = vunpack.c.l.s4 1983009808
        %v3925 = vunpack.c.0.s8 %v3924
        %v3926 = vlaneseq
        %v3927 = vshrl.u32 %v3926, 7
        %v3928 = vsub.s32 %v3925, %v3927
        %v3929 = vrot.slane %v3221, %v3928
        %v3930 = vcombine.low %v3220, %v3222
        %v3931 = vcombine.low %v3230, %v3238
        %v3933 = vunpack.c.l.s4 1983009808
        %v3934 = vunpack.c.0.s8 %v3933
        %v3935 = vlaneseq
        %v3936 = vshrl.u32 %v3935, 7
        %v3937 = vsub.s32 %v3934, %v3936
        %v3938 = vrot.slane %v3930, %v3937
        %v3940 = vunpack.c.l.s4 1983009808
        %v3941 = vunpack.c.0.s8 %v3940
        %v3942 = vlaneseq
        %v3943 = vshrl.u32 %v3942, 7
        %v3944 = vsub.s32 %v3941, %v3943
        %v3945 = vrot.slane %v3931, %v3944
        %v3946 = vcombine.low %v3938, %v3945
        %v3947 = vcombine.low %v3237, %v3239
        %v3948 = vcombine.low %v3247, %v3255
        %v3950 = vunpack.c.l.s4 1983009808
        %v3951 = vunpack.c.0.s8 %v3950
        %v3952 = vlaneseq
        %v3953 = vshrl.u32 %v3952, 7
        %v3954 = vsub.s32 %v3951, %v3953
        %v3955 = vrot.slane %v3947, %v3954
        %v3957 = vunpack.c.l.s4 1983009808
        %v3958 = vunpack.c.0.s8 %v3957
        %v3959 = vlaneseq
        %v3960 = vshrl.u32 %v3959, 7
        %v3961 = vsub.s32 %v3958, %v3960
        %v3962 = vrot.slane %v3948, %v3961
        %v3963 = vcombine.low %v3955, %v3962
        %v3965 = vunpack.c.l.s4 1983009808
        %v3966 = vunpack.c.0.s8 %v3965
        %v3967 = vlaneseq
        %v3968 = vshrl.u32 %v3967, 7
        %v3969 = vsub.s32 %v3966, %v3968
        %v3970 = vrot.slane %v3254, %v3969
        %v3971 = vcombine.low %v3256, %v3264
        %v3972 = vcombine.low %v3272, %v3271
        %v3974 = vunpack.c.l.s4 1983009808
        %v3975 = vunpack.c.0.s8 %v3974
        %v3976 = vlaneseq
        %v3977 = vshrl.u32 %v3976, 7
        %v3978 = vsub.s32 %v3975, %v3977
        %v3979 = vrot.slane %v3971, %v3978
        %v3981 = vunpack.c.l.s4 1983009808
        %v3982 = vunpack.c.0.s8 %v3981
        %v3983 = vlaneseq
        %v3984 = vshrl.u32 %v3983, 7
        %v3985 = vsub.s32 %v3982, %v3984
        %v3986 = vrot.slane %v3972, %v3985
        %v3987 = vcombine.low %v3979, %v3986
        %v3988 = vcombine.low %v3273, %v3281
        %v3989 = vcombine.low %v3289, %v3288
        %v3991 = vunpack.c.l.s4 1983009808
        %v3992 = vunpack.c.0.s8 %v3991
        %v3993 = vlaneseq
        %v3994 = vshrl.u32 %v3993, 7
        %v3995 = vsub.s32 %v3992, %v3994
        %v3996 = vrot.slane %v3988, %v3995
        %v3998 = vunpack.c.l.s4 1983009808
        %v3999 = vunpack.c.0.s8 %v3998
        %v4000 = vlaneseq
        %v4001 = vshrl.u32 %v4000, 7
        %v4002 = vsub.s32 %v3999, %v4001
        %v4003 = vrot.slane %v3989, %v4002
        %v4004 = vcombine.low %v3996, %v4003
        %v4006 = vunpack.c.l.s4 1983009808
        %v4007 = vunpack.c.0.s8 %v4006
        %v4008 = vlaneseq
        %v4009 = vshrl.u32 %v4008, 7
        %v4010 = vsub.s32 %v4007, %v4009
        %v4011 = vrot.slane %v3290, %v4010
        %v4012 = vcombine.low %v3298, %v3306
        %v4013 = vcombine.low %v3305, %v3307
        %v4015 = vunpack.c.l.s4 1983009808
        %v4016 = vunpack.c.0.s8 %v4015
        %v4017 = vlaneseq
        %v4018 = vshrl.u32 %v4017, 7
        %v4019 = vsub.s32 %v4016, %v4018
        %v4020 = vrot.slane %v4012, %v4019
        %v4022 = vunpack.c.l.s4 1983009808
        %v4023 = vunpack.c.0.s8 %v4022
        %v4024 = vlaneseq
        %v4025 = vshrl.u32 %v4024, 7
        %v4026 = vsub.s32 %v4023, %v4025
        %v4027 = vrot.slane %v4013, %v4026
        %v4028 = vcombine.low %v4020, %v4027
        %v4029 = vcombine.low %v3315, %v3323
        %v4030 = vcombine.low %v3322, %v3324
        %v4032 = vunpack.c.l.s4 1983009808
        %v4033 = vunpack.c.0.s8 %v4032
        %v4034 = vlaneseq
        %v4035 = vshrl.u32 %v4034, 7
        %v4036 = vsub.s32 %v4033, %v4035
        %v4037 = vrot.slane %v4029, %v4036
        %v4039 = vunpack.c.l.s4 1983009808
        %v4040 = vunpack.c.0.s8 %v4039
        %v4041 = vlaneseq
        %v4042 = vshrl.u32 %v4041, 7
        %v4043 = vsub.s32 %v4040, %v4042
        %v4044 = vrot.slane %v4030, %v4043
        %v4045 = vcombine.low %v4037, %v4044
        %v4047 = vunpack.c.l.s4 1983009808
        %v4048 = vunpack.c.0.s8 %v4047
        %v4049 = vlaneseq
        %v4050 = vshrl.u32 %v4049, 7
        %v4051 = vsub.s32 %v4048, %v4050
        %v4052 = vrot.slane %v3332, %v4051
        %v4053 = vcombine.low %v3340, %v3339
        %v4054 = vcombine.low %v3341, %v3349
        %v4056 = vunpack.c.l.s4 1983009808
        %v4057 = vunpack.c.0.s8 %v4056
        %v4058 = vlaneseq
        %v4059 = vshrl.u32 %v4058, 7
        %v4060 = vsub.s32 %v4057, %v4059
        %v4061 = vrot.slane %v4053, %v4060
        %v4063 = vunpack.c.l.s4 1983009808
        %v4064 = vunpack.c.0.s8 %v4063
        %v4065 = vlaneseq
        %v4066 = vshrl.u32 %v4065, 7
        %v4067 = vsub.s32 %v4064, %v4066
        %v4068 = vrot.slane %v4054, %v4067
        %v4069 = vcombine.low %v4061, %v4068
        %v4070 = vcombine.low %v3357, %v3356
        %v4071 = vcombine.low %v3358, %v3366
        %v4073 = vunpack.c.l.s4 1983009808
        %v4074 = vunpack.c.0.s8 %v4073
        %v4075 = vlaneseq
        %v4076 = vshrl.u32 %v4075, 7
        %v4077 = vsub.s32 %v4074, %v4076
        %v4078 = vrot.slane %v4070, %v4077
        %v4080 = vunpack.c.l.s4 1983009808
        %v4081 = vunpack.c.0.s8 %v4080
        %v4082 = vlaneseq
        %v4083 = vshrl.u32 %v4082, 7
        %v4084 = vsub.s32 %v4081, %v4083
        %v4085 = vrot.slane %v4071, %v4084
        %v4086 = vcombine.low %v4078, %v4085
        %v4088 = vunpack.c.l.s4 1983009808
        %v4089 = vunpack.c.0.s8 %v4088
        %v4090 = vlaneseq
        %v4091 = vshrl.u32 %v4090, 7
        %v4092 = vsub.s32 %v4089, %v4091
        %v4093 = vrot.slane %v3374, %v4092
        %v4094 = vcombine.low %v3373, %v3375
        %v4095 = vcombine.low %v3383, %v3391
        %v4097 = vunpack.c.l.s4 1983009808
        %v4098 = vunpack.c.0.s8 %v4097
        %v4099 = vlaneseq
        %v4100 = vshrl.u32 %v4099, 7
        %v4101 = vsub.s32 %v4098, %v4100
        %v4102 = vrot.slane %v4094, %v4101
        %v4104 = vunpack.c.l.s4 1983009808
        %v4105 = vunpack.c.0.s8 %v4104
        %v4106 = vlaneseq
        %v4107 = vshrl.u32 %v4106, 7
        %v4108 = vsub.s32 %v4105, %v4107
        %v4109 = vrot.slane %v4095, %v4108
        %v4110 = vcombine.low %v4102, %v4109
        %v4111 = vcombine.low %v3390, %v3392
        %v4112 = vcombine.low %v3400, %v3408
        %v4114 = vunpack.c.l.s4 1983009808
        %v4115 = vunpack.c.0.s8 %v4114
        %v4116 = vlaneseq
        %v4117 = vshrl.u32 %v4116, 7
        %v4118 = vsub.s32 %v4115, %v4117
        %v4119 = vrot.slane %v4111, %v4118
        %v4121 = vunpack.c.l.s4 1983009808
        %v4122 = vunpack.c.0.s8 %v4121
        %v4123 = vlaneseq
        %v4124 = vshrl.u32 %v4123, 7
        %v4125 = vsub.s32 %v4122, %v4124
        %v4126 = vrot.slane %v4112, %v4125
        %v4127 = vcombine.low %v4119, %v4126
        %v4129 = vunpack.c.l.s4 1983009808
        %v4130 = vunpack.c.0.s8 %v4129
        %v4131 = vlaneseq
        %v4132 = vshrl.u32 %v4131, 7
        %v4133 = vsub.s32 %v4130, %v4132
        %v4134 = vrot.slane %v3407, %v4133
        %v4135 = vcombine.low %v3409, %v3417
        %v4136 = vcombine.low %v3425, %v3424
        %v4138 = vunpack.c.l.s4 1983009808
        %v4139 = vunpack.c.0.s8 %v4138
        %v4140 = vlaneseq
        %v4141 = vshrl.u32 %v4140, 7
        %v4142 = vsub.s32 %v4139, %v4141
        %v4143 = vrot.slane %v4135, %v4142
        %v4145 = vunpack.c.l.s4 1983009808
        %v4146 = vunpack.c.0.s8 %v4145
        %v4147 = vlaneseq
        %v4148 = vshrl.u32 %v4147, 7
        %v4149 = vsub.s32 %v4146, %v4148
        %v4150 = vrot.slane %v4136, %v4149
        %v4151 = vcombine.low %v4143, %v4150
        %v4152 = vcombine.low %v3426, %v3434
        %v4153 = vcombine.low %v3442, %v3441
        %v4155 = vunpack.c.l.s4 1983009808
        %v4156 = vunpack.c.0.s8 %v4155
        %v4157 = vlaneseq
        %v4158 = vshrl.u32 %v4157, 7
        %v4159 = vsub.s32 %v4156, %v4158
        %v4160 = vrot.slane %v4152, %v4159
        %v4162 = vunpack.c.l.s4 1983009808
        %v4163 = vunpack.c.0.s8 %v4162
        %v4164 = vlaneseq
        %v4165 = vshrl.u32 %v4164, 7
        %v4166 = vsub.s32 %v4163, %v4165
        %v4167 = vrot.slane %v4153, %v4166
        %v4168 = vcombine.low %v4160, %v4167
        %v4170 = vunpack.c.l.s4 1983009808
        %v4171 = vunpack.c.0.s8 %v4170
        %v4172 = vlaneseq
        %v4173 = vshrl.u32 %v4172, 7
        %v4174 = vsub.s32 %v4171, %v4173
        %v4175 = vrot.slane %v3443, %v4174
        %v4176 = vcombine.low %v3451, %v3459
        %v4177 = vcombine.low %v3458, %v3460
        %v4179 = vunpack.c.l.s4 1983009808
        %v4180 = vunpack.c.0.s8 %v4179
        %v4181 = vlaneseq
        %v4182 = vshrl.u32 %v4181, 7
        %v4183 = vsub.s32 %v4180, %v4182
        %v4184 = vrot.slane %v4176, %v4183
        %v4186 = vunpack.c.l.s4 1983009808
        %v4187 = vunpack.c.0.s8 %v4186
        %v4188 = vlaneseq
        %v4189 = vshrl.u32 %v4188, 7
        %v4190 = vsub.s32 %v4187, %v4189
        %v4191 = vrot.slane %v4177, %v4190
        %v4192 = vcombine.low %v4184, %v4191
        %v4193 = vcombine.low %v3468, %v3476
        %v4194 = vcombine.low %v3475, %v3477
        %v4196 = vunpack.c.l.s4 1983009808
        %v4197 = vunpack.c.0.s8 %v4196
        %v4198 = vlaneseq
        %v4199 = vshrl.u32 %v4198, 7
        %v4200 = vsub.s32 %v4197, %v4199
        %v4201 = vrot.slane %v4193, %v4200
        %v4203 = vunpack.c.l.s4 1983009808
        %v4204 = vunpack.c.0.s8 %v4203
        %v4205 = vlaneseq
        %v4206 = vshrl.u32 %v4205, 7
        %v4207 = vsub.s32 %v4204, %v4206
        %v4208 = vrot.slane %v4194, %v4207
        %v4209 = vcombine.low %v4201, %v4208
        %v4211 = vunpack.c.l.s4 1983009808
        %v4212 = vunpack.c.0.s8 %v4211
        %v4213 = vlaneseq
        %v4214 = vshrl.u32 %v4213, 7
        %v4215 = vsub.s32 %v4212, %v4214
        %v4216 = vrot.slane %v3485, %v4215
        %v4217 = vcombine.low %v3493, %v3492
        %v4218 = vcombine.low %v3494, %v3502
        %v4220 = vunpack.c.l.s4 1983009808
        %v4221 = vunpack.c.0.s8 %v4220
        %v4222 = vlaneseq
        %v4223 = vshrl.u32 %v4222, 7
        %v4224 = vsub.s32 %v4221, %v4223
        %v4225 = vrot.slane %v4217, %v4224
        %v4227 = vunpack.c.l.s4 1983009808
        %v4228 = vunpack.c.0.s8 %v4227
        %v4229 = vlaneseq
        %v4230 = vshrl.u32 %v4229, 7
        %v4231 = vsub.s32 %v4228, %v4230
        %v4232 = vrot.slane %v4218, %v4231
        %v4233 = vcombine.low %v4225, %v4232
        %v4234 = vcombine.low %v3510, %v3509
        %v4235 = vcombine.low %v3511, %v3518
        %v4237 = vunpack.c.l.s4 1983009808
        %v4238 = vunpack.c.0.s8 %v4237
        %v4239 = vlaneseq
        %v4240 = vshrl.u32 %v4239, 7
        %v4241 = vsub.s32 %v4238, %v4240
        %v4242 = vrot.slane %v4234, %v4241
        %v4244 = vunpack.c.l.s4 1983009808
        %v4245 = vunpack.c.0.s8 %v4244
        %v4246 = vlaneseq
        %v4247 = vshrl.u32 %v4246, 7
        %v4248 = vsub.s32 %v4245, %v4247
        %v4249 = vrot.slane %v4235, %v4248
        %v4250 = vcombine.low %v4242, %v4249
        %v4252 = vunpack.c.l.s4 1983009808
        %v4253 = vunpack.c.0.s8 %v4252
        %v4254 = vlaneseq
        %v4255 = vshrl.u32 %v4254, 7
        %v4256 = vsub.s32 %v4253, %v4255
        %v4257 = vrot.slane %v3519, %v4256
        %4312 = vst [vmem:[%s288] sm:$0xff] %v3536
        %4313 = vst [vmem:[%s288 + $0x8] sm:$0xff] %v3553
        %4314 = vst [vmem:[%s288 + $0x10] sm:$0x3] %v3560
        %4315 = vst [vmem:[%s288 + $0x18] sm:$0xff] %v3577
        %4316 = vst [vmem:[%s288 + $0x20] sm:$0xff] %v3594
        %4317 = vst [vmem:[%s288 + $0x28] sm:$0x3] %v3601
        %4318 = vst [vmem:[%s288 + $0x30] sm:$0xff] %v3618
        %4319 = vst [vmem:[%s288 + $0x38] sm:$0xff] %v3635
        %4320 = vst [vmem:[%s288 + $0x40] sm:$0x3] %v3642
        %4321 = vst [vmem:[%s288 + $0x48] sm:$0xff] %v3659
        %4322 = vst [vmem:[%s288 + $0x50] sm:$0xff] %v3676
        %4323 = vst [vmem:[%s288 + $0x58] sm:$0x3] %v3683
        %4324 = vst [vmem:[%s288 + $0x60] sm:$0xff] %v3700
        %4325 = vst [vmem:[%s288 + $0x68] sm:$0xff] %v3717
        %4326 = vst [vmem:[%s288 + $0x70] sm:$0x3] %v3724
        %4327 = vst [vmem:[%s288 + $0x78] sm:$0xff] %v3741
        %4328 = vst [vmem:[%s288 + $0x80] sm:$0xff] %v3758
        %4329 = vst [vmem:[%s288 + $0x88] sm:$0x3] %v3765
        %4330 = vst [vmem:[%s288 + $0x90] sm:$0xff] %v3782
        %4331 = vst [vmem:[%s288 + $0x98] sm:$0xff] %v3799
        %4332 = vst [vmem:[%s288 + $0xa0] sm:$0x3] %v3806
        %4333 = vst [vmem:[%s288 + $0xa8] sm:$0xff] %v3823
        %4334 = vst [vmem:[%s288 + $0xb0] sm:$0xff] %v3840
        %4335 = vst [vmem:[%s288 + $0xb8] sm:$0x3] %v3847
        %4336 = vst [vmem:[%s288 + $0xc0] sm:$0xff] %v3864
        %4337 = vst [vmem:[%s288 + $0xc8] sm:$0xff] %v3881
        %4338 = vst [vmem:[%s288 + $0xd0] sm:$0x3] %v3888
        %4339 = vst [vmem:[%s288 + $0xd8] sm:$0xff] %v3905
        %4340 = vst [vmem:[%s288 + $0xe0] sm:$0xff] %v3922
        %4341 = vst [vmem:[%s288 + $0xe8] sm:$0x3] %v3929
        %4342 = vst [vmem:[%s288 + $0xf0] sm:$0xff] %v3946
        %4343 = vst [vmem:[%s288 + $0xf8] sm:$0xff] %v3963
        %4344 = vst [vmem:[%s288 + $0x100] sm:$0x3] %v3970
        %4345 = vst [vmem:[%s288 + $0x108] sm:$0xff] %v3987
        %4346 = vst [vmem:[%s288 + $0x110] sm:$0xff] %v4004
        %4347 = vst [vmem:[%s288 + $0x118] sm:$0x3] %v4011
        %4348 = vst [vmem:[%s288 + $0x120] sm:$0xff] %v4028
        %4349 = vst [vmem:[%s288 + $0x128] sm:$0xff] %v4045
        %4350 = vst [vmem:[%s288 + $0x130] sm:$0x3] %v4052
        %4351 = vst [vmem:[%s288 + $0x138] sm:$0xff] %v4069
        %4352 = vst [vmem:[%s288 + $0x140] sm:$0xff] %v4086
        %4353 = vst [vmem:[%s288 + $0x148] sm:$0x3] %v4093
        %4354 = vst [vmem:[%s288 + $0x150] sm:$0xff] %v4110
        %4355 = vst [vmem:[%s288 + $0x158] sm:$0xff] %v4127
        %4356 = vst [vmem:[%s288 + $0x160] sm:$0x3] %v4134
        %4357 = vst [vmem:[%s288 + $0x168] sm:$0xff] %v4151
        %4358 = vst [vmem:[%s288 + $0x170] sm:$0xff] %v4168
        %4359 = vst [vmem:[%s288 + $0x178] sm:$0x3] %v4175
        %4360 = vst [vmem:[%s288 + $0x180] sm:$0xff] %v4192
        %4361 = vst [vmem:[%s288 + $0x188] sm:$0xff] %v4209
        %4362 = vst [vmem:[%s288 + $0x190] sm:$0x3] %v4216
        %4363 = vst [vmem:[%s288 + $0x198] sm:$0xff] %v4233
        %4364 = vst [vmem:[%s288 + $0x1a0] sm:$0xff] %v4250
        %4365 = vst [vmem:[%s288 + $0x1a8] sm:$0x3] %v4257
      $region56: #{repconv_forward.2} parent=43 // pred_fallthru
        _
      %s4366 = smul.u32 %s21, %s22
      %p4367 = scmp.lt.s32.totalorder %s4366, 1
      %s4368 = scalar_select %p4367, %s4366, 1
      %s4369 = smul.addr %s4368, 54
      %s4370 = smul.addr %s4369, 8
      %s4371 = scalar_lea.vmem %s6, %s4370
      // Predicated region
      $region57: #{repconv_forward.2} parent=43 // pred_check
        %p4372 = pneg %p186
      $region58: #{repconv_forward.2} parent=43 // pred_check_branch
        %4374 = sbr.rel (%p4372) target = $region60
      $region59: #{repconv_forward.2} parent=43 // pred_region
        %s4375 = smul.u32 %s21, %s22
      $region60: #{repconv_forward.2} parent=43 // pred_fallthru
        _
    $region44: #{repconv_forward.2} parent=5 // pred_fallthru
      _
    %p4376 = scmp.le.s32.totalorder 2, %s12
    // Predicated region
    $region61: #{repconv_forward.2} parent=5 // pred_check
      %p4377 = pneg %p4376
    $region62: #{repconv_forward.2} parent=5 // pred_check_branch
      %4379 = sbr.rel (%p4377) target = $region64
    $region63: #{repconv_forward.2} parent=5 // pred_region
      %s4380 = ssub.s32 %s12, 2
      // Predicated region
      $region65: #{repconv_forward.2} parent=63 // pred_check
        %p4381 = pneg %p192
      $region66: #{repconv_forward.2} parent=63 // pred_check_branch
        %4383 = sbr.rel (%p4381) target = $region68
      $region67: #{repconv_forward.2} parent=63 // pred_region
        %s4384 = smul.u32 %s23, %s24
        %p4385 = scmp.lt.s32.totalorder %s4384, 1
        %s4386 = scalar_select %p4385, %s4384, 1
        %s4387 = smul.addr %s4386, 54
        %s4388 = smul.addr %s4387, 8
        %s4389 = scalar_lea.vmem %s6, %s4388
      $region68: #{repconv_forward.2} parent=63 // pred_fallthru
        _
    $region64: #{repconv_forward.2} parent=5 // pred_fallthru
      _
  $region6: #{repconv_forward.2} parent=0 // loop_footer
    %s16 = sadd.s32 1, %s12
  $region7: #{repconv_forward.2} parent=0 // loop_footer_branch
    %11 = sbr.rel target = $region3
  $region8: #{repconv_forward.2} parent=0 // loop_exit
    _

</llo_original>
